<compile_context>
chip_gen: v5e
topology: v5e:2x2
jax: 0.10.0
libtpu: 0.0.40
codegen_flags: <defaults>
</compile_context>

<pallas_src>
import functools

import numpy as np
import jax
import jax.numpy as jnp
from jax import lax
from jax.experimental import pallas as pl
from jax.experimental.pallas import tpu as pltpu

BN_EPS = 1e-5
LEAKY_SLOPE = 0.01


# ---------------------------------------------------------------------------
# Fused ConvBlock kernel: [maxpool 2x2] -> conv3x3+BN+LReLU -> conv3x3+BN+LReLU
# ---------------------------------------------------------------------------
def conv_block_kernel(pool, x_ref, w1_ref, b1_ref, w2_ref, b2_ref,
                      o_ref, pad1_ref, pad2_ref):
    """One batch element per grid step.

    x_ref:    (1, Hin, Win, Cin)     NHWC input tile (Hin=2H, Win=2W if pool)
    w1_ref:   (9*Cin, C1)            im2col-flattened HWIO conv1 weights,
                                     BN scale pre-folded per output channel
    b1_ref:   (1, C1)                folded shift = beta + scale*(bias - mean)
    w2_ref:   (9*C1, C2)             conv2 weights (scale folded)
    b2_ref:   (1, C2)
    o_ref:    (1, H*W, C2)           flattened-spatial output
    pad1_ref: (H+2, W+2, Cin)  VMEM  zero-padded conv1 input
    pad2_ref: (H+2, W+2, C1)   VMEM  zero-padded conv2 input
    """
    H = pad1_ref.shape[0] - 2
    W = pad1_ref.shape[1] - 2
    Cin = pad1_ref.shape[2]
    C1 = pad2_ref.shape[2]

    # Zero the padded scratch buffers once; only the interior is rewritten per
    # grid step, so the 1-pixel zero border persists across iterations.
    @pl.when(pl.program_id(0) == 0)
    def _():
        pad1_ref[...] = jnp.zeros(pad1_ref.shape, pad1_ref.dtype)
        pad2_ref[...] = jnp.zeros(pad2_ref.shape, pad2_ref.dtype)

    x = x_ref[0]                                    # (Hin, Win, Cin)
    if pool:
        # 2x2 max pool, stride 2 (reshape-based; no strided loads).
        xr = x.reshape(H, 2, 2 * W, Cin)
        xh = jnp.maximum(xr[:, 0], xr[:, 1])        # pool rows -> (H, 2W, Cin)
        xw = xh.reshape(H, W, 2, Cin)
        x = jnp.max(xw, axis=2)                     # pool cols -> (H, W, Cin)

    def conv3x3(inp, pad_ref, w_ref, b_ref, cin):
        # write interior (padding=1 border already zero) — stays in VMEM
        pad_ref[1:H + 1, 1:W + 1, :] = inp
        xp = pad_ref[...]
        # im2col: lane-concatenate the 9 taps -> single MXU matmul with K=9*cin
        patch = jnp.concatenate(
            [xp[dh:dh + H, dw:dw + W, :] for dh in range(3) for dw in range(3)],
            axis=-1).reshape(H * W, 9 * cin)
        acc = jnp.dot(patch, w_ref[...], preferred_element_type=jnp.float32)
        # BN scale is folded into the weights; epilogue = add shift + LeakyReLU
        y = acc + b_ref[...]
        return jnp.where(y >= 0, y, LEAKY_SLOPE * y)

    y1 = conv3x3(x, pad1_ref, w1_ref, b1_ref, Cin)                      # (H*W, C1)
    # nn.Dropout: identity in eval mode
    y2 = conv3x3(y1.reshape(H, W, C1), pad2_ref, w2_ref, b2_ref, C1)    # (H*W, C2)
    o_ref[...] = y2[None].astype(o_ref.dtype)


# ---------------------------------------------------------------------------
# Wrapper: fold BN into weights/bias, flatten weights, call the fused kernel
# ---------------------------------------------------------------------------
def _fold_bn(layer):
    """Return (scale, shift); scale folds into conv weights, shift is the bias."""
    scale = layer["gamma"] / jnp.sqrt(layer["var"] + BN_EPS)
    shift = layer["beta"] + scale * (layer["b"] - layer["mean"])
    return scale.reshape(1, -1), shift.reshape(1, -1)


def conv_block_apply(x, block, pool):
    """x: (N, Hin, Win, Cin) NHWC float32 -> (N, H, W, C2)."""
    N, Hin, Win, Cin = x.shape
    H, W = (Hin // 2, Win // 2) if pool else (Hin, Win)
    w1 = block["conv1"]["w"]          # (3, 3, Cin, C1) HWIO
    w2 = block["conv2"]["w"]          # (3, 3, C1, C2)
    C1, C2 = w1.shape[3], w2.shape[3]
    s1, b1 = _fold_bn(block["conv1"])
    s2, b2 = _fold_bn(block["conv2"])
    # fold BN scale (per output channel) into the flattened conv weights
    w1f = w1.reshape(9 * Cin, C1) * s1   # matches kernel's (dh, dw, ci) tap order
    w2f = w2.reshape(9 * C1, C2) * s2

    out = pl.pallas_call(
        functools.partial(conv_block_kernel, pool),
        out_shape=jax.ShapeDtypeStruct((N, H * W, C2), x.dtype),
        grid=(N,),
        in_specs=[
            pl.BlockSpec((1, Hin, Win, Cin), lambda n: (n, 0, 0, 0)),
            pl.BlockSpec((9 * Cin, C1), lambda n: (0, 0)),
            pl.BlockSpec((1, C1), lambda n: (0, 0)),
            pl.BlockSpec((9 * C1, C2), lambda n: (0, 0)),
            pl.BlockSpec((1, C2), lambda n: (0, 0)),
        ],
        out_specs=pl.BlockSpec((1, H * W, C2), lambda n: (n, 0, 0)),
        scratch_shapes=[
            pltpu.VMEM((H + 2, W + 2, Cin), jnp.float32),
            pltpu.VMEM((H + 2, W + 2, C1), jnp.float32),
        ],
        compiler_params=pltpu.CompilerParams(dimension_semantics=("arbitrary",)),
    )(x, w1f, b1, w2f, b2)
    # (N, H*W, C2) and (N, H, W, C2) share a row-major layout: free reshape.
    return out.reshape(N, H, W, C2)


# ---------------------------------------------------------------------------
# Encoder forward
# ---------------------------------------------------------------------------
def encoder_forward_impl(x_nchw, enc_params):
    x = jnp.transpose(x_nchw, (0, 2, 3, 1))                  # NCHW -> NHWC
    feats = []
    for i, block in enumerate(enc_params):
        x = conv_block_apply(x, block, pool=(i > 0))         # DownBlock = pool + ConvBlock
        feats.append(x)
    return [jnp.transpose(t, (0, 3, 1, 2)) for t in feats]   # back to NCHW


encoder_forward = jax.jit(encoder_forward_impl)


# ---------------------------------------------------------------------------
# Parameter construction (deterministic, synthetic)
# ---------------------------------------------------------------------------
def init_conv_layer(key, cin, cout):
    k = jax.random.split(key, 6)
    w_oihw = 0.1 * jax.random.normal(k[0], (cout, cin, 3, 3), jnp.float32)  # torch layout
    w = jnp.transpose(w_oihw, (2, 3, 1, 0))                                 # -> HWIO
    b = 0.1 * jax.random.normal(k[1], (cout,), jnp.float32)
    gamma = 1.0 + 0.1 * jax.random.normal(k[2], (cout,), jnp.float32)
    beta = 0.1 * jax.random.normal(k[3], (cout,), jnp.float32)
    mean = 0.1 * jax.random.normal(k[4], (cout,), jnp.float32)
    var = 1.0 + jnp.abs(0.1 * jax.random.normal(k[5], (cout,), jnp.float32))
    return dict(w=w, b=b, gamma=gamma, beta=beta, mean=mean, var=var)


def init_conv_block(key, cin, cout):
    k1, k2 = jax.random.split(key)
    return dict(conv1=init_conv_layer(k1, cin, cout),
                conv2=init_conv_layer(k2, cout, cout))


def init_encoder(key, in_chns, ft_chns):
    keys = jax.random.split(key, 5)
    chans = [in_chns] + list(ft_chns)
    return [init_conv_block(keys[i], chans[i], chans[i + 1]) for i in range(5)]


# ---------------------------------------------------------------------------
# Pure-JAX reference (for numerical verification)
# ---------------------------------------------------------------------------
def ref_conv_layer(x, layer):
    y = lax.conv_general_dilated(
        x, layer["w"], (1, 1), "SAME",
        dimension_numbers=("NHWC", "HWIO", "NHWC")) + layer["b"]
    y = (y - layer["mean"]) / jnp.sqrt(layer["var"] + BN_EPS) * layer["gamma"] + layer["beta"]
    return jnp.where(y >= 0, y, LEAKY_SLOPE * y)


def ref_conv_block(x, block):
    return ref_conv_layer(ref_conv_layer(x, block["conv1"]), block["conv2"])


def ref_maxpool(x):
    return lax.reduce_window(x, -jnp.inf, lax.max, (1, 2, 2, 1), (1, 2, 2, 1), "VALID")


def ref_encoder(x_nchw, enc_params):
    x = jnp.transpose(x_nchw, (0, 2, 3, 1))
    outs = []
    for i in range(5):
        if i > 0:
            x = ref_maxpool(x)
        x = ref_conv_block(x, enc_params[i])
        outs.append(jnp.transpose(x, (0, 3, 1, 2)))
    return outs


# ---------------------------------------------------------------------------
if __name__ == "__main__":
    params = {
        "in_chns": 4,
        "feature_chns": [8, 16, 32, 32, 64],
        "class_num": 2,
        "bilinear": True,
        "dropout": [0.05, 0.1, 0.2, 0.3, 0.5],
    }

    key = jax.random.PRNGKey(0)
    kx, kp = jax.random.split(key)
    x = jax.random.normal(kx, (2, params["in_chns"], 16, 16), jnp.float32)  # NCHW
    enc_params = init_encoder(kp, params["in_chns"], params["feature_chns"])

    outs = encoder_forward(x, enc_params)
    outs = [jax.block_until_ready(o) for o in outs]

    # correctness check against pure-JAX reference
    refs = ref_encoder(x, enc_params)
    for o, r in zip(outs, refs):
        assert o.shape == r.shape, (o.shape, r.shape)
        np.testing.assert_allclose(np.asarray(o), np.asarray(r), rtol=1e-3, atol=1e-3)

    print("KERNEL_OK")
</pallas_src>

<mosaic_0001>
module attributes {stable_mosaic.version = 11 : i64} {
  func.func @conv_block_kernel(%arg0: i32, %arg1: memref<1x4x4x32xf32, #tpu.memory_space<vmem>>, %arg2: memref<288x32xf32, #tpu.memory_space<vmem>>, %arg3: memref<1x32xf32, #tpu.memory_space<vmem>>, %arg4: memref<288x32xf32, #tpu.memory_space<vmem>>, %arg5: memref<1x32xf32, #tpu.memory_space<vmem>>, %arg6: memref<1x4x32xf32, #tpu.memory_space<vmem>>, %arg7: memref<4x4x32xf32, #tpu.memory_space<vmem>>, %arg8: memref<4x4x32xf32, #tpu.memory_space<vmem>>) attributes {dimension_semantics = [#tpu.dimension_semantics<arbitrary>], iteration_bounds = array<i64: 2>, scalar_prefetch = 0 : i64, scratch_operands = 2 : i64, tpu.core_type = #tpu.core_type<tc>, window_params = [{transform_indices = @transform_0, window_bounds = array<i64: 1, 4, 4, 32>}, {pipeline_mode = #tpu.pipeline_mode<synchronous>, transform_indices = @transform_1, window_bounds = array<i64: 288, 32>}, {pipeline_mode = #tpu.pipeline_mode<synchronous>, transform_indices = @transform_2, window_bounds = array<i64: 1, 32>}, {pipeline_mode = #tpu.pipeline_mode<synchronous>, transform_indices = @transform_3, window_bounds = array<i64: 288, 32>}, {pipeline_mode = #tpu.pipeline_mode<synchronous>, transform_indices = @transform_4, window_bounds = array<i64: 1, 32>}, {transform_indices = @transform_5, window_bounds = array<i64: 1, 4, 32>}]} {
    %c0_i32 = arith.constant 0 : i32
    %0 = arith.cmpi eq, %arg0, %c0_i32 : i32
    %1 = arith.extui %0 : i1 to i32
    %c0_i32_0 = arith.constant 0 : i32
    %2 = arith.cmpi ne, %1, %c0_i32_0 : i32
    scf.if %2 {
      %cst_32 = arith.constant 0.000000e+00 : f32
      %62 = vector.broadcast %cst_32 : f32 to vector<4x4x32xf32>
      %c0_33 = arith.constant 0 : index
      %c0_34 = arith.constant 0 : index
      %c0_35 = arith.constant 0 : index
      %63 = vector.load %arg7[%c0_33, %c0_34, %c0_35] : memref<4x4x32xf32, #tpu.memory_space<vmem>>, vector<4x4x32xf32>
      tpu.vector_store %arg7[%c0_33, %c0_34, %c0_35], %62 {strides = array<i32>} : memref<4x4x32xf32, #tpu.memory_space<vmem>>, vector<4x4x32xf32>,
      %cst_36 = arith.constant 0.000000e+00 : f32
      %64 = vector.broadcast %cst_36 : f32 to vector<4x4x32xf32>
      %c0_37 = arith.constant 0 : index
      %c0_38 = arith.constant 0 : index
      %c0_39 = arith.constant 0 : index
      %65 = vector.load %arg8[%c0_37, %c0_38, %c0_39] : memref<4x4x32xf32, #tpu.memory_space<vmem>>, vector<4x4x32xf32>
      tpu.vector_store %arg8[%c0_37, %c0_38, %c0_39], %64 {strides = array<i32>} : memref<4x4x32xf32, #tpu.memory_space<vmem>>, vector<4x4x32xf32>,
    } else {
    }
    %c0 = arith.constant 0 : index
    %c0_1 = arith.constant 0 : index
    %c0_2 = arith.constant 0 : index
    %c0_3 = arith.constant 0 : index
    %3 = vector.load %arg1[%c0, %c0_1, %c0_2, %c0_3] : memref<1x4x4x32xf32, #tpu.memory_space<vmem>>, vector<1x4x4x32xf32>
    %4 = vector.shape_cast %3 : vector<1x4x4x32xf32> to vector<4x4x32xf32>
    %5 = vector.shape_cast %4 : vector<4x4x32xf32> to vector<2x2x4x32xf32>
    %6 = vector.extract_strided_slice %5 {offsets = [0, 0, 0, 0], sizes = [2, 1, 4, 32], strides = [1, 1, 1, 1]} : vector<2x2x4x32xf32> to vector<2x1x4x32xf32>
    %7 = vector.shape_cast %6 : vector<2x1x4x32xf32> to vector<2x4x32xf32>
    %8 = vector.extract_strided_slice %5 {offsets = [0, 1, 0, 0], sizes = [2, 1, 4, 32], strides = [1, 1, 1, 1]} : vector<2x2x4x32xf32> to vector<2x1x4x32xf32>
    %9 = vector.shape_cast %8 : vector<2x1x4x32xf32> to vector<2x4x32xf32>
    %10 = arith.maximumf %7, %9 : vector<2x4x32xf32>
    %11 = vector.shape_cast %10 : vector<2x4x32xf32> to vector<2x2x2x32xf32>
    %cst = arith.constant dense<0xFF800000> : vector<2x2x32xf32>
    %12 = vector.multi_reduction <maximumf>, %11, %cst [2] : vector<2x2x2x32xf32> to vector<2x2x32xf32>
    %c1 = arith.constant 1 : index
    %c1_4 = arith.constant 1 : index
    %c0_5 = arith.constant 0 : index
    %13 = vector.load %arg7[%c1, %c1_4, %c0_5] : memref<4x4x32xf32, #tpu.memory_space<vmem>>, vector<2x2x32xf32>
    tpu.vector_store %arg7[%c1, %c1_4, %c0_5], %12 {strides = array<i32>} : memref<4x4x32xf32, #tpu.memory_space<vmem>>, vector<2x2x32xf32>,
    %c0_6 = arith.constant 0 : index
    %c0_7 = arith.constant 0 : index
    %c0_8 = arith.constant 0 : index
    %14 = vector.load %arg7[%c0_6, %c0_7, %c0_8] : memref<4x4x32xf32, #tpu.memory_space<vmem>>, vector<4x4x32xf32>
    %15 = vector.extract_strided_slice %14 {offsets = [0, 0, 0], sizes = [2, 2, 32], strides = [1, 1, 1]} : vector<4x4x32xf32> to vector<2x2x32xf32>
    %16 = vector.extract_strided_slice %14 {offsets = [0, 1, 0], sizes = [2, 2, 32], strides = [1, 1, 1]} : vector<4x4x32xf32> to vector<2x2x32xf32>
    %17 = vector.extract_strided_slice %14 {offsets = [0, 2, 0], sizes = [2, 2, 32], strides = [1, 1, 1]} : vector<4x4x32xf32> to vector<2x2x32xf32>
    %18 = vector.extract_strided_slice %14 {offsets = [1, 0, 0], sizes = [2, 2, 32], strides = [1, 1, 1]} : vector<4x4x32xf32> to vector<2x2x32xf32>
    %19 = vector.extract_strided_slice %14 {offsets = [1, 1, 0], sizes = [2, 2, 32], strides = [1, 1, 1]} : vector<4x4x32xf32> to vector<2x2x32xf32>
    %20 = vector.extract_strided_slice %14 {offsets = [1, 2, 0], sizes = [2, 2, 32], strides = [1, 1, 1]} : vector<4x4x32xf32> to vector<2x2x32xf32>
    %21 = vector.extract_strided_slice %14 {offsets = [2, 0, 0], sizes = [2, 2, 32], strides = [1, 1, 1]} : vector<4x4x32xf32> to vector<2x2x32xf32>
    %22 = vector.extract_strided_slice %14 {offsets = [2, 1, 0], sizes = [2, 2, 32], strides = [1, 1, 1]} : vector<4x4x32xf32> to vector<2x2x32xf32>
    %23 = vector.extract_strided_slice %14 {offsets = [2, 2, 0], sizes = [2, 2, 32], strides = [1, 1, 1]} : vector<4x4x32xf32> to vector<2x2x32xf32>
    %24 = tpu.concatenate %15, %16, %17, %18, %19, %20, %21, %22, %23 in 2 : vector<2x2x32xf32>, vector<2x2x32xf32>, vector<2x2x32xf32>, vector<2x2x32xf32>, vector<2x2x32xf32>, vector<2x2x32xf32>, vector<2x2x32xf32>, vector<2x2x32xf32>, vector<2x2x32xf32> -> vector<2x2x288xf32>
    %25 = vector.shape_cast %24 : vector<2x2x288xf32> to vector<4x288xf32>
    %c0_9 = arith.constant 0 : index
    %c0_10 = arith.constant 0 : index
    %26 = vector.load %arg2[%c0_9, %c0_10] : memref<288x32xf32, #tpu.memory_space<vmem>>, vector<288x32xf32>
    %cst_11 = arith.constant dense<0.000000e+00> : vector<4x32xf32>
    %27 = tpu.matmul %25, %26, %cst_11 {dimension_numbers = #tpu.dot_dimension_numbers<[1], [0], [0], [1], [0, 0, 1, 1], [], []>} : vector<4x288xf32>, vector<288x32xf32>, vector<4x32xf32> -> vector<4x32xf32>
    %c0_12 = arith.constant 0 : index
    %c0_13 = arith.constant 0 : index
    %28 = vector.load %arg3[%c0_12, %c0_13] : memref<1x32xf32, #tpu.memory_space<vmem>>, vector<1x32xf32>
    %29 = vector.broadcast %28 : vector<1x32xf32> to vector<4x32xf32>
    %30 = arith.addf %27, %29 : vector<4x32xf32>
    %cst_14 = arith.constant 0.000000e+00 : f32
    %31 = vector.broadcast %cst_14 : f32 to vector<4x32xf32>
    %32 = arith.cmpf oge, %30, %31 : vector<4x32xf32>
    %cst_15 = arith.constant 0.00999999977 : f32
    %33 = vector.broadcast %cst_15 : f32 to vector<4x32xf32>
    %34 = arith.mulf %33, %30 : vector<4x32xf32>
    %35 = arith.select %32, %30, %34 : vector<4x32xi1>, vector<4x32xf32>
    %36 = vector.shape_cast %35 : vector<4x32xf32> to vector<2x2x32xf32>
    %c1_16 = arith.constant 1 : index
    %c1_17 = arith.constant 1 : index
    %c0_18 = arith.constant 0 : index
    %37 = vector.load %arg8[%c1_16, %c1_17, %c0_18] : memref<4x4x32xf32, #tpu.memory_space<vmem>>, vector<2x2x32xf32>
    tpu.vector_store %arg8[%c1_16, %c1_17, %c0_18], %36 {strides = array<i32>} : memref<4x4x32xf32, #tpu.memory_space<vmem>>, vector<2x2x32xf32>,
    %c0_19 = arith.constant 0 : index
    %c0_20 = arith.constant 0 : index
    %c0_21 = arith.constant 0 : index
    %38 = vector.load %arg8[%c0_19, %c0_20, %c0_21] : memref<4x4x32xf32, #tpu.memory_space<vmem>>, vector<4x4x32xf32>
    %39 = vector.extract_strided_slice %38 {offsets = [0, 0, 0], sizes = [2, 2, 32], strides = [1, 1, 1]} : vector<4x4x32xf32> to vector<2x2x32xf32>
    %40 = vector.extract_strided_slice %38 {offsets = [0, 1, 0], sizes = [2, 2, 32], strides = [1, 1, 1]} : vector<4x4x32xf32> to vector<2x2x32xf32>
    %41 = vector.extract_strided_slice %38 {offsets = [0, 2, 0], sizes = [2, 2, 32], strides = [1, 1, 1]} : vector<4x4x32xf32> to vector<2x2x32xf32>
    %42 = vector.extract_strided_slice %38 {offsets = [1, 0, 0], sizes = [2, 2, 32], strides = [1, 1, 1]} : vector<4x4x32xf32> to vector<2x2x32xf32>
    %43 = vector.extract_strided_slice %38 {offsets = [1, 1, 0], sizes = [2, 2, 32], strides = [1, 1, 1]} : vector<4x4x32xf32> to vector<2x2x32xf32>
    %44 = vector.extract_strided_slice %38 {offsets = [1, 2, 0], sizes = [2, 2, 32], strides = [1, 1, 1]} : vector<4x4x32xf32> to vector<2x2x32xf32>
    %45 = vector.extract_strided_slice %38 {offsets = [2, 0, 0], sizes = [2, 2, 32], strides = [1, 1, 1]} : vector<4x4x32xf32> to vector<2x2x32xf32>
    %46 = vector.extract_strided_slice %38 {offsets = [2, 1, 0], sizes = [2, 2, 32], strides = [1, 1, 1]} : vector<4x4x32xf32> to vector<2x2x32xf32>
    %47 = vector.extract_strided_slice %38 {offsets = [2, 2, 0], sizes = [2, 2, 32], strides = [1, 1, 1]} : vector<4x4x32xf32> to vector<2x2x32xf32>
    %48 = tpu.concatenate %39, %40, %41, %42, %43, %44, %45, %46, %47 in 2 : vector<2x2x32xf32>, vector<2x2x32xf32>, vector<2x2x32xf32>, vector<2x2x32xf32>, vector<2x2x32xf32>, vector<2x2x32xf32>, vector<2x2x32xf32>, vector<2x2x32xf32>, vector<2x2x32xf32> -> vector<2x2x288xf32>
    %49 = vector.shape_cast %48 : vector<2x2x288xf32> to vector<4x288xf32>
    %c0_22 = arith.constant 0 : index
    %c0_23 = arith.constant 0 : index
    %50 = vector.load %arg4[%c0_22, %c0_23] : memref<288x32xf32, #tpu.memory_space<vmem>>, vector<288x32xf32>
    %cst_24 = arith.constant dense<0.000000e+00> : vector<4x32xf32>
    %51 = tpu.matmul %49, %50, %cst_24 {dimension_numbers = #tpu.dot_dimension_numbers<[1], [0], [0], [1], [0, 0, 1, 1], [], []>} : vector<4x288xf32>, vector<288x32xf32>, vector<4x32xf32> -> vector<4x32xf32>
    %c0_25 = arith.constant 0 : index
    %c0_26 = arith.constant 0 : index
    %52 = vector.load %arg5[%c0_25, %c0_26] : memref<1x32xf32, #tpu.memory_space<vmem>>, vector<1x32xf32>
    %53 = vector.broadcast %52 : vector<1x32xf32> to vector<4x32xf32>
    %54 = arith.addf %51, %53 : vector<4x32xf32>
    %cst_27 = arith.constant 0.000000e+00 : f32
    %55 = vector.broadcast %cst_27 : f32 to vector<4x32xf32>
    %56 = arith.cmpf oge, %54, %55 : vector<4x32xf32>
    %cst_28 = arith.constant 0.00999999977 : f32
    %57 = vector.broadcast %cst_28 : f32 to vector<4x32xf32>
    %58 = arith.mulf %57, %54 : vector<4x32xf32>
    %59 = arith.select %56, %54, %58 : vector<4x32xi1>, vector<4x32xf32>
    %60 = vector.shape_cast %59 : vector<4x32xf32> to vector<1x4x32xf32>
    %c0_29 = arith.constant 0 : index
    %c0_30 = arith.constant 0 : index
    %c0_31 = arith.constant 0 : index
    %61 = vector.load %arg6[%c0_29, %c0_30, %c0_31] : memref<1x4x32xf32, #tpu.memory_space<vmem>>, vector<1x4x32xf32>
    tpu.vector_store %arg6[%c0_29, %c0_30, %c0_31], %60 {strides = array<i32>} : memref<1x4x32xf32, #tpu.memory_space<vmem>>, vector<1x4x32xf32>,
    return
  }
  func.func @transform_0(%arg0: i32) -> (i32, i32, i32, i32) {
    %c0_i32 = arith.constant 0 : i32
    %c0_i32_0 = arith.constant 0 : i32
    %c0_i32_1 = arith.constant 0 : i32
    %c0_i32_2 = arith.constant 0 : i32
    return %arg0, %c0_i32, %c0_i32_0, %c0_i32_1 : i32, i32, i32, i32
  }
  func.func @transform_1(%arg0: i32) -> (i32, i32) {
    %c0_i32 = arith.constant 0 : i32
    %c0_i32_0 = arith.constant 0 : i32
    %c0_i32_1 = arith.constant 0 : i32
    return %c0_i32, %c0_i32_0 : i32, i32
  }
  func.func @transform_2(%arg0: i32) -> (i32, i32) {
    %c0_i32 = arith.constant 0 : i32
    %c0_i32_0 = arith.constant 0 : i32
    %c0_i32_1 = arith.constant 0 : i32
    return %c0_i32, %c0_i32_0 : i32, i32
  }
  func.func @transform_3(%arg0: i32) -> (i32, i32) {
    %c0_i32 = arith.constant 0 : i32
    %c0_i32_0 = arith.constant 0 : i32
    %c0_i32_1 = arith.constant 0 : i32
    return %c0_i32, %c0_i32_0 : i32, i32
  }
  func.func @transform_4(%arg0: i32) -> (i32, i32) {
    %c0_i32 = arith.constant 0 : i32
    %c0_i32_0 = arith.constant 0 : i32
    %c0_i32_1 = arith.constant 0 : i32
    return %c0_i32, %c0_i32_0 : i32, i32
  }
  func.func @transform_5(%arg0: i32) -> (i32, i32, i32) {
    %c0_i32 = arith.constant 0 : i32
    %c0_i32_0 = arith.constant 0 : i32
    %c0_i32_1 = arith.constant 0 : i32
    return %arg0, %c0_i32, %c0_i32_0 : i32, i32, i32
  }
}

module attributes {stable_mosaic.version = 11 : i64} {
  func.func @conv_block_kernel(%arg0: i32, %arg1: memref<1x16x16x4xf32, #tpu.memory_space<vmem>>, %arg2: memref<36x8xf32, #tpu.memory_space<vmem>>, %arg3: memref<1x8xf32, #tpu.memory_space<vmem>>, %arg4: memref<72x8xf32, #tpu.memory_space<vmem>>, %arg5: memref<1x8xf32, #tpu.memory_space<vmem>>, %arg6: memref<1x256x8xf32, #tpu.memory_space<vmem>>, %arg7: memref<18x18x4xf32, #tpu.memory_space<vmem>>, %arg8: memref<18x18x8xf32, #tpu.memory_space<vmem>>) attributes {dimension_semantics = [#tpu.dimension_semantics<arbitrary>], iteration_bounds = array<i64: 2>, scalar_prefetch = 0 : i64, scratch_operands = 2 : i64, tpu.core_type = #tpu.core_type<tc>, window_params = [{transform_indices = @transform_0, window_bounds = array<i64: 1, 16, 16, 4>}, {pipeline_mode = #tpu.pipeline_mode<synchronous>, transform_indices = @transform_1, window_bounds = array<i64: 36, 8>}, {pipeline_mode = #tpu.pipeline_mode<synchronous>, transform_indices = @transform_2, window_bounds = array<i64: 1, 8>}, {pipeline_mode = #tpu.pipeline_mode<synchronous>, transform_indices = @transform_3, window_bounds = array<i64: 72, 8>}, {pipeline_mode = #tpu.pipeline_mode<synchronous>, transform_indices = @transform_4, window_bounds = array<i64: 1, 8>}, {transform_indices = @transform_5, window_bounds = array<i64: 1, 256, 8>}]} {
    %c0_i32 = arith.constant 0 : i32
    %0 = arith.cmpi eq, %arg0, %c0_i32 : i32
    %1 = arith.extui %0 : i1 to i32
    %c0_i32_0 = arith.constant 0 : i32
    %2 = arith.cmpi ne, %1, %c0_i32_0 : i32
    scf.if %2 {
      %cst_31 = arith.constant 0.000000e+00 : f32
      %54 = vector.broadcast %cst_31 : f32 to vector<18x18x4xf32>
      %c0_32 = arith.constant 0 : index
      %c0_33 = arith.constant 0 : index
      %c0_34 = arith.constant 0 : index
      %55 = vector.load %arg7[%c0_32, %c0_33, %c0_34] : memref<18x18x4xf32, #tpu.memory_space<vmem>>, vector<18x18x4xf32>
      tpu.vector_store %arg7[%c0_32, %c0_33, %c0_34], %54 {strides = array<i32>} : memref<18x18x4xf32, #tpu.memory_space<vmem>>, vector<18x18x4xf32>,
      %cst_35 = arith.constant 0.000000e+00 : f32
      %56 = vector.broadcast %cst_35 : f32 to vector<18x18x8xf32>
      %c0_36 = arith.constant 0 : index
      %c0_37 = arith.constant 0 : index
      %c0_38 = arith.constant 0 : index
      %57 = vector.load %arg8[%c0_36, %c0_37, %c0_38] : memref<18x18x8xf32, #tpu.memory_space<vmem>>, vector<18x18x8xf32>
      tpu.vector_store %arg8[%c0_36, %c0_37, %c0_38], %56 {strides = array<i32>} : memref<18x18x8xf32, #tpu.memory_space<vmem>>, vector<18x18x8xf32>,
    } else {
    }
    %c0 = arith.constant 0 : index
    %c0_1 = arith.constant 0 : index
    %c0_2 = arith.constant 0 : index
    %c0_3 = arith.constant 0 : index
    %3 = vector.load %arg1[%c0, %c0_1, %c0_2, %c0_3] : memref<1x16x16x4xf32, #tpu.memory_space<vmem>>, vector<1x16x16x4xf32>
    %4 = vector.shape_cast %3 : vector<1x16x16x4xf32> to vector<16x16x4xf32>
    %c1 = arith.constant 1 : index
    %c1_4 = arith.constant 1 : index
    %c0_5 = arith.constant 0 : index
    %5 = vector.load %arg7[%c1, %c1_4, %c0_5] : memref<18x18x4xf32, #tpu.memory_space<vmem>>, vector<16x16x4xf32>
    tpu.vector_store %arg7[%c1, %c1_4, %c0_5], %4 {strides = array<i32>} : memref<18x18x4xf32, #tpu.memory_space<vmem>>, vector<16x16x4xf32>,
    %c0_6 = arith.constant 0 : index
    %c0_7 = arith.constant 0 : index
    %c0_8 = arith.constant 0 : index
    %6 = vector.load %arg7[%c0_6, %c0_7, %c0_8] : memref<18x18x4xf32, #tpu.memory_space<vmem>>, vector<18x18x4xf32>
    %7 = vector.extract_strided_slice %6 {offsets = [0, 0, 0], sizes = [16, 16, 4], strides = [1, 1, 1]} : vector<18x18x4xf32> to vector<16x16x4xf32>
    %8 = vector.extract_strided_slice %6 {offsets = [0, 1, 0], sizes = [16, 16, 4], strides = [1, 1, 1]} : vector<18x18x4xf32> to vector<16x16x4xf32>
    %9 = vector.extract_strided_slice %6 {offsets = [0, 2, 0], sizes = [16, 16, 4], strides = [1, 1, 1]} : vector<18x18x4xf32> to vector<16x16x4xf32>
    %10 = vector.extract_strided_slice %6 {offsets = [1, 0, 0], sizes = [16, 16, 4], strides = [1, 1, 1]} : vector<18x18x4xf32> to vector<16x16x4xf32>
    %11 = vector.extract_strided_slice %6 {offsets = [1, 1, 0], sizes = [16, 16, 4], strides = [1, 1, 1]} : vector<18x18x4xf32> to vector<16x16x4xf32>
    %12 = vector.extract_strided_slice %6 {offsets = [1, 2, 0], sizes = [16, 16, 4], strides = [1, 1, 1]} : vector<18x18x4xf32> to vector<16x16x4xf32>
    %13 = vector.extract_strided_slice %6 {offsets = [2, 0, 0], sizes = [16, 16, 4], strides = [1, 1, 1]} : vector<18x18x4xf32> to vector<16x16x4xf32>
    %14 = vector.extract_strided_slice %6 {offsets = [2, 1, 0], sizes = [16, 16, 4], strides = [1, 1, 1]} : vector<18x18x4xf32> to vector<16x16x4xf32>
    %15 = vector.extract_strided_slice %6 {offsets = [2, 2, 0], sizes = [16, 16, 4], strides = [1, 1, 1]} : vector<18x18x4xf32> to vector<16x16x4xf32>
    %16 = tpu.concatenate %7, %8, %9, %10, %11, %12, %13, %14, %15 in 2 : vector<16x16x4xf32>, vector<16x16x4xf32>, vector<16x16x4xf32>, vector<16x16x4xf32>, vector<16x16x4xf32>, vector<16x16x4xf32>, vector<16x16x4xf32>, vector<16x16x4xf32>, vector<16x16x4xf32> -> vector<16x16x36xf32>
    %17 = vector.shape_cast %16 : vector<16x16x36xf32> to vector<256x36xf32>
    %c0_9 = arith.constant 0 : index
    %c0_10 = arith.constant 0 : index
    %18 = vector.load %arg2[%c0_9, %c0_10] : memref<36x8xf32, #tpu.memory_space<vmem>>, vector<36x8xf32>
    %cst = arith.constant dense<0.000000e+00> : vector<256x8xf32>
    %19 = tpu.matmul %17, %18, %cst {dimension_numbers = #tpu.dot_dimension_numbers<[1], [0], [0], [1], [0, 0, 1, 1], [], []>} : vector<256x36xf32>, vector<36x8xf32>, vector<256x8xf32> -> vector<256x8xf32>
    %c0_11 = arith.constant 0 : index
    %c0_12 = arith.constant 0 : index
    %20 = vector.load %arg3[%c0_11, %c0_12] : memref<1x8xf32, #tpu.memory_space<vmem>>, vector<1x8xf32>
    %21 = vector.broadcast %20 : vector<1x8xf32> to vector<256x8xf32>
    %22 = arith.addf %19, %21 : vector<256x8xf32>
    %cst_13 = arith.constant 0.000000e+00 : f32
    %23 = vector.broadcast %cst_13 : f32 to vector<256x8xf32>
    %24 = arith.cmpf oge, %22, %23 : vector<256x8xf32>
    %cst_14 = arith.constant 0.00999999977 : f32
    %25 = vector.broadcast %cst_14 : f32 to vector<256x8xf32>
    %26 = arith.mulf %25, %22 : vector<256x8xf32>
    %27 = arith.select %24, %22, %26 : vector<256x8xi1>, vector<256x8xf32>
    %28 = vector.shape_cast %27 : vector<256x8xf32> to vector<16x16x8xf32>
    %c1_15 = arith.constant 1 : index
    %c1_16 = arith.constant 1 : index
    %c0_17 = arith.constant 0 : index
    %29 = vector.load %arg8[%c1_15, %c1_16, %c0_17] : memref<18x18x8xf32, #tpu.memory_space<vmem>>, vector<16x16x8xf32>
    tpu.vector_store %arg8[%c1_15, %c1_16, %c0_17], %28 {strides = array<i32>} : memref<18x18x8xf32, #tpu.memory_space<vmem>>, vector<16x16x8xf32>,
    %c0_18 = arith.constant 0 : index
    %c0_19 = arith.constant 0 : index
    %c0_20 = arith.constant 0 : index
    %30 = vector.load %arg8[%c0_18, %c0_19, %c0_20] : memref<18x18x8xf32, #tpu.memory_space<vmem>>, vector<18x18x8xf32>
    %31 = vector.extract_strided_slice %30 {offsets = [0, 0, 0], sizes = [16, 16, 8], strides = [1, 1, 1]} : vector<18x18x8xf32> to vector<16x16x8xf32>
    %32 = vector.extract_strided_slice %30 {offsets = [0, 1, 0], sizes = [16, 16, 8], strides = [1, 1, 1]} : vector<18x18x8xf32> to vector<16x16x8xf32>
    %33 = vector.extract_strided_slice %30 {offsets = [0, 2, 0], sizes = [16, 16, 8], strides = [1, 1, 1]} : vector<18x18x8xf32> to vector<16x16x8xf32>
    %34 = vector.extract_strided_slice %30 {offsets = [1, 0, 0], sizes = [16, 16, 8], strides = [1, 1, 1]} : vector<18x18x8xf32> to vector<16x16x8xf32>
    %35 = vector.extract_strided_slice %30 {offsets = [1, 1, 0], sizes = [16, 16, 8], strides = [1, 1, 1]} : vector<18x18x8xf32> to vector<16x16x8xf32>
    %36 = vector.extract_strided_slice %30 {offsets = [1, 2, 0], sizes = [16, 16, 8], strides = [1, 1, 1]} : vector<18x18x8xf32> to vector<16x16x8xf32>
    %37 = vector.extract_strided_slice %30 {offsets = [2, 0, 0], sizes = [16, 16, 8], strides = [1, 1, 1]} : vector<18x18x8xf32> to vector<16x16x8xf32>
    %38 = vector.extract_strided_slice %30 {offsets = [2, 1, 0], sizes = [16, 16, 8], strides = [1, 1, 1]} : vector<18x18x8xf32> to vector<16x16x8xf32>
    %39 = vector.extract_strided_slice %30 {offsets = [2, 2, 0], sizes = [16, 16, 8], strides = [1, 1, 1]} : vector<18x18x8xf32> to vector<16x16x8xf32>
    %40 = tpu.concatenate %31, %32, %33, %34, %35, %36, %37, %38, %39 in 2 : vector<16x16x8xf32>, vector<16x16x8xf32>, vector<16x16x8xf32>, vector<16x16x8xf32>, vector<16x16x8xf32>, vector<16x16x8xf32>, vector<16x16x8xf32>, vector<16x16x8xf32>, vector<16x16x8xf32> -> vector<16x16x72xf32>
    %41 = vector.shape_cast %40 : vector<16x16x72xf32> to vector<256x72xf32>
    %c0_21 = arith.constant 0 : index
    %c0_22 = arith.constant 0 : index
    %42 = vector.load %arg4[%c0_21, %c0_22] : memref<72x8xf32, #tpu.memory_space<vmem>>, vector<72x8xf32>
    %cst_23 = arith.constant dense<0.000000e+00> : vector<256x8xf32>
    %43 = tpu.matmul %41, %42, %cst_23 {dimension_numbers = #tpu.dot_dimension_numbers<[1], [0], [0], [1], [0, 0, 1, 1], [], []>} : vector<256x72xf32>, vector<72x8xf32>, vector<256x8xf32> -> vector<256x8xf32>
    %c0_24 = arith.constant 0 : index
    %c0_25 = arith.constant 0 : index
    %44 = vector.load %arg5[%c0_24, %c0_25] : memref<1x8xf32, #tpu.memory_space<vmem>>, vector<1x8xf32>
    %45 = vector.broadcast %44 : vector<1x8xf32> to vector<256x8xf32>
    %46 = arith.addf %43, %45 : vector<256x8xf32>
    %cst_26 = arith.constant 0.000000e+00 : f32
    %47 = vector.broadcast %cst_26 : f32 to vector<256x8xf32>
    %48 = arith.cmpf oge, %46, %47 : vector<256x8xf32>
    %cst_27 = arith.constant 0.00999999977 : f32
    %49 = vector.broadcast %cst_27 : f32 to vector<256x8xf32>
    %50 = arith.mulf %49, %46 : vector<256x8xf32>
    %51 = arith.select %48, %46, %50 : vector<256x8xi1>, vector<256x8xf32>
    %52 = vector.shape_cast %51 : vector<256x8xf32> to vector<1x256x8xf32>
    %c0_28 = arith.constant 0 : index
    %c0_29 = arith.constant 0 : index
    %c0_30 = arith.constant 0 : index
    %53 = vector.load %arg6[%c0_28, %c0_29, %c0_30] : memref<1x256x8xf32, #tpu.memory_space<vmem>>, vector<1x256x8xf32>
    tpu.vector_store %arg6[%c0_28, %c0_29, %c0_30], %52 {strides = array<i32>} : memref<1x256x8xf32, #tpu.memory_space<vmem>>, vector<1x256x8xf32>,
    return
  }
  func.func @transform_0(%arg0: i32) -> (i32, i32, i32, i32) {
    %c0_i32 = arith.constant 0 : i32
    %c0_i32_0 = arith.constant 0 : i32
    %c0_i32_1 = arith.constant 0 : i32
    %c0_i32_2 = arith.constant 0 : i32
    return %arg0, %c0_i32, %c0_i32_0, %c0_i32_1 : i32, i32, i32, i32
  }
  func.func @transform_1(%arg0: i32) -> (i32, i32) {
    %c0_i32 = arith.constant 0 : i32
    %c0_i32_0 = arith.constant 0 : i32
    %c0_i32_1 = arith.constant 0 : i32
    return %c0_i32, %c0_i32_0 : i32, i32
  }
  func.func @transform_2(%arg0: i32) -> (i32, i32) {
    %c0_i32 = arith.constant 0 : i32
    %c0_i32_0 = arith.constant 0 : i32
    %c0_i32_1 = arith.constant 0 : i32
    return %c0_i32, %c0_i32_0 : i32, i32
  }
  func.func @transform_3(%arg0: i32) -> (i32, i32) {
    %c0_i32 = arith.constant 0 : i32
    %c0_i32_0 = arith.constant 0 : i32
    %c0_i32_1 = arith.constant 0 : i32
    return %c0_i32, %c0_i32_0 : i32, i32
  }
  func.func @transform_4(%arg0: i32) -> (i32, i32) {
    %c0_i32 = arith.constant 0 : i32
    %c0_i32_0 = arith.constant 0 : i32
    %c0_i32_1 = arith.constant 0 : i32
    return %c0_i32, %c0_i32_0 : i32, i32
  }
  func.func @transform_5(%arg0: i32) -> (i32, i32, i32) {
    %c0_i32 = arith.constant 0 : i32
    %c0_i32_0 = arith.constant 0 : i32
    %c0_i32_1 = arith.constant 0 : i32
    return %arg0, %c0_i32, %c0_i32_0 : i32, i32, i32
  }
}

module attributes {stable_mosaic.version = 11 : i64} {
  func.func @conv_block_kernel(%arg0: i32, %arg1: memref<1x8x8x16xf32, #tpu.memory_space<vmem>>, %arg2: memref<144x32xf32, #tpu.memory_space<vmem>>, %arg3: memref<1x32xf32, #tpu.memory_space<vmem>>, %arg4: memref<288x32xf32, #tpu.memory_space<vmem>>, %arg5: memref<1x32xf32, #tpu.memory_space<vmem>>, %arg6: memref<1x16x32xf32, #tpu.memory_space<vmem>>, %arg7: memref<6x6x16xf32, #tpu.memory_space<vmem>>, %arg8: memref<6x6x32xf32, #tpu.memory_space<vmem>>) attributes {dimension_semantics = [#tpu.dimension_semantics<arbitrary>], iteration_bounds = array<i64: 2>, scalar_prefetch = 0 : i64, scratch_operands = 2 : i64, tpu.core_type = #tpu.core_type<tc>, window_params = [{transform_indices = @transform_0, window_bounds = array<i64: 1, 8, 8, 16>}, {pipeline_mode = #tpu.pipeline_mode<synchronous>, transform_indices = @transform_1, window_bounds = array<i64: 144, 32>}, {pipeline_mode = #tpu.pipeline_mode<synchronous>, transform_indices = @transform_2, window_bounds = array<i64: 1, 32>}, {pipeline_mode = #tpu.pipeline_mode<synchronous>, transform_indices = @transform_3, window_bounds = array<i64: 288, 32>}, {pipeline_mode = #tpu.pipeline_mode<synchronous>, transform_indices = @transform_4, window_bounds = array<i64: 1, 32>}, {transform_indices = @transform_5, window_bounds = array<i64: 1, 16, 32>}]} {
    %c0_i32 = arith.constant 0 : i32
    %0 = arith.cmpi eq, %arg0, %c0_i32 : i32
    %1 = arith.extui %0 : i1 to i32
    %c0_i32_0 = arith.constant 0 : i32
    %2 = arith.cmpi ne, %1, %c0_i32_0 : i32
    scf.if %2 {
      %cst_32 = arith.constant 0.000000e+00 : f32
      %62 = vector.broadcast %cst_32 : f32 to vector<6x6x16xf32>
      %c0_33 = arith.constant 0 : index
      %c0_34 = arith.constant 0 : index
      %c0_35 = arith.constant 0 : index
      %63 = vector.load %arg7[%c0_33, %c0_34, %c0_35] : memref<6x6x16xf32, #tpu.memory_space<vmem>>, vector<6x6x16xf32>
      tpu.vector_store %arg7[%c0_33, %c0_34, %c0_35], %62 {strides = array<i32>} : memref<6x6x16xf32, #tpu.memory_space<vmem>>, vector<6x6x16xf32>,
      %cst_36 = arith.constant 0.000000e+00 : f32
      %64 = vector.broadcast %cst_36 : f32 to vector<6x6x32xf32>
      %c0_37 = arith.constant 0 : index
      %c0_38 = arith.constant 0 : index
      %c0_39 = arith.constant 0 : index
      %65 = vector.load %arg8[%c0_37, %c0_38, %c0_39] : memref<6x6x32xf32, #tpu.memory_space<vmem>>, vector<6x6x32xf32>
      tpu.vector_store %arg8[%c0_37, %c0_38, %c0_39], %64 {strides = array<i32>} : memref<6x6x32xf32, #tpu.memory_space<vmem>>, vector<6x6x32xf32>,
    } else {
    }
    %c0 = arith.constant 0 : index
    %c0_1 = arith.constant 0 : index
    %c0_2 = arith.constant 0 : index
    %c0_3 = arith.constant 0 : index
    %3 = vector.load %arg1[%c0, %c0_1, %c0_2, %c0_3] : memref<1x8x8x16xf32, #tpu.memory_space<vmem>>, vector<1x8x8x16xf32>
    %4 = vector.shape_cast %3 : vector<1x8x8x16xf32> to vector<8x8x16xf32>
    %5 = vector.shape_cast %4 : vector<8x8x16xf32> to vector<4x2x8x16xf32>
    %6 = vector.extract_strided_slice %5 {offsets = [0, 0, 0, 0], sizes = [4, 1, 8, 16], strides = [1, 1, 1, 1]} : vector<4x2x8x16xf32> to vector<4x1x8x16xf32>
    %7 = vector.shape_cast %6 : vector<4x1x8x16xf32> to vector<4x8x16xf32>
    %8 = vector.extract_strided_slice %5 {offsets = [0, 1, 0, 0], sizes = [4, 1, 8, 16], strides = [1, 1, 1, 1]} : vector<4x2x8x16xf32> to vector<4x1x8x16xf32>
    %9 = vector.shape_cast %8 : vector<4x1x8x16xf32> to vector<4x8x16xf32>
    %10 = arith.maximumf %7, %9 : vector<4x8x16xf32>
    %11 = vector.shape_cast %10 : vector<4x8x16xf32> to vector<4x4x2x16xf32>
    %cst = arith.constant dense<0xFF800000> : vector<4x4x16xf32>
    %12 = vector.multi_reduction <maximumf>, %11, %cst [2] : vector<4x4x2x16xf32> to vector<4x4x16xf32>
    %c1 = arith.constant 1 : index
    %c1_4 = arith.constant 1 : index
    %c0_5 = arith.constant 0 : index
    %13 = vector.load %arg7[%c1, %c1_4, %c0_5] : memref<6x6x16xf32, #tpu.memory_space<vmem>>, vector<4x4x16xf32>
    tpu.vector_store %arg7[%c1, %c1_4, %c0_5], %12 {strides = array<i32>} : memref<6x6x16xf32, #tpu.memory_space<vmem>>, vector<4x4x16xf32>,
    %c0_6 = arith.constant 0 : index
    %c0_7 = arith.constant 0 : index
    %c0_8 = arith.constant 0 : index
    %14 = vector.load %arg7[%c0_6, %c0_7, %c0_8] : memref<6x6x16xf32, #tpu.memory_space<vmem>>, vector<6x6x16xf32>
    %15 = vector.extract_strided_slice %14 {offsets = [0, 0, 0], sizes = [4, 4, 16], strides = [1, 1, 1]} : vector<6x6x16xf32> to vector<4x4x16xf32>
    %16 = vector.extract_strided_slice %14 {offsets = [0, 1, 0], sizes = [4, 4, 16], strides = [1, 1, 1]} : vector<6x6x16xf32> to vector<4x4x16xf32>
    %17 = vector.extract_strided_slice %14 {offsets = [0, 2, 0], sizes = [4, 4, 16], strides = [1, 1, 1]} : vector<6x6x16xf32> to vector<4x4x16xf32>
    %18 = vector.extract_strided_slice %14 {offsets = [1, 0, 0], sizes = [4, 4, 16], strides = [1, 1, 1]} : vector<6x6x16xf32> to vector<4x4x16xf32>
    %19 = vector.extract_strided_slice %14 {offsets = [1, 1, 0], sizes = [4, 4, 16], strides = [1, 1, 1]} : vector<6x6x16xf32> to vector<4x4x16xf32>
    %20 = vector.extract_strided_slice %14 {offsets = [1, 2, 0], sizes = [4, 4, 16], strides = [1, 1, 1]} : vector<6x6x16xf32> to vector<4x4x16xf32>
    %21 = vector.extract_strided_slice %14 {offsets = [2, 0, 0], sizes = [4, 4, 16], strides = [1, 1, 1]} : vector<6x6x16xf32> to vector<4x4x16xf32>
    %22 = vector.extract_strided_slice %14 {offsets = [2, 1, 0], sizes = [4, 4, 16], strides = [1, 1, 1]} : vector<6x6x16xf32> to vector<4x4x16xf32>
    %23 = vector.extract_strided_slice %14 {offsets = [2, 2, 0], sizes = [4, 4, 16], strides = [1, 1, 1]} : vector<6x6x16xf32> to vector<4x4x16xf32>
    %24 = tpu.concatenate %15, %16, %17, %18, %19, %20, %21, %22, %23 in 2 : vector<4x4x16xf32>, vector<4x4x16xf32>, vector<4x4x16xf32>, vector<4x4x16xf32>, vector<4x4x16xf32>, vector<4x4x16xf32>, vector<4x4x16xf32>, vector<4x4x16xf32>, vector<4x4x16xf32> -> vector<4x4x144xf32>
    %25 = vector.shape_cast %24 : vector<4x4x144xf32> to vector<16x144xf32>
    %c0_9 = arith.constant 0 : index
    %c0_10 = arith.constant 0 : index
    %26 = vector.load %arg2[%c0_9, %c0_10] : memref<144x32xf32, #tpu.memory_space<vmem>>, vector<144x32xf32>
    %cst_11 = arith.constant dense<0.000000e+00> : vector<16x32xf32>
    %27 = tpu.matmul %25, %26, %cst_11 {dimension_numbers = #tpu.dot_dimension_numbers<[1], [0], [0], [1], [0, 0, 1, 1], [], []>} : vector<16x144xf32>, vector<144x32xf32>, vector<16x32xf32> -> vector<16x32xf32>
    %c0_12 = arith.constant 0 : index
    %c0_13 = arith.constant 0 : index
    %28 = vector.load %arg3[%c0_12, %c0_13] : memref<1x32xf32, #tpu.memory_space<vmem>>, vector<1x32xf32>
    %29 = vector.broadcast %28 : vector<1x32xf32> to vector<16x32xf32>
    %30 = arith.addf %27, %29 : vector<16x32xf32>
    %cst_14 = arith.constant 0.000000e+00 : f32
    %31 = vector.broadcast %cst_14 : f32 to vector<16x32xf32>
    %32 = arith.cmpf oge, %30, %31 : vector<16x32xf32>
    %cst_15 = arith.constant 0.00999999977 : f32
    %33 = vector.broadcast %cst_15 : f32 to vector<16x32xf32>
    %34 = arith.mulf %33, %30 : vector<16x32xf32>
    %35 = arith.select %32, %30, %34 : vector<16x32xi1>, vector<16x32xf32>
    %36 = vector.shape_cast %35 : vector<16x32xf32> to vector<4x4x32xf32>
    %c1_16 = arith.constant 1 : index
    %c1_17 = arith.constant 1 : index
    %c0_18 = arith.constant 0 : index
    %37 = vector.load %arg8[%c1_16, %c1_17, %c0_18] : memref<6x6x32xf32, #tpu.memory_space<vmem>>, vector<4x4x32xf32>
    tpu.vector_store %arg8[%c1_16, %c1_17, %c0_18], %36 {strides = array<i32>} : memref<6x6x32xf32, #tpu.memory_space<vmem>>, vector<4x4x32xf32>,
    %c0_19 = arith.constant 0 : index
    %c0_20 = arith.constant 0 : index
    %c0_21 = arith.constant 0 : index
    %38 = vector.load %arg8[%c0_19, %c0_20, %c0_21] : memref<6x6x32xf32, #tpu.memory_space<vmem>>, vector<6x6x32xf32>
    %39 = vector.extract_strided_slice %38 {offsets = [0, 0, 0], sizes = [4, 4, 32], strides = [1, 1, 1]} : vector<6x6x32xf32> to vector<4x4x32xf32>
    %40 = vector.extract_strided_slice %38 {offsets = [0, 1, 0], sizes = [4, 4, 32], strides = [1, 1, 1]} : vector<6x6x32xf32> to vector<4x4x32xf32>
    %41 = vector.extract_strided_slice %38 {offsets = [0, 2, 0], sizes = [4, 4, 32], strides = [1, 1, 1]} : vector<6x6x32xf32> to vector<4x4x32xf32>
    %42 = vector.extract_strided_slice %38 {offsets = [1, 0, 0], sizes = [4, 4, 32], strides = [1, 1, 1]} : vector<6x6x32xf32> to vector<4x4x32xf32>
    %43 = vector.extract_strided_slice %38 {offsets = [1, 1, 0], sizes = [4, 4, 32], strides = [1, 1, 1]} : vector<6x6x32xf32> to vector<4x4x32xf32>
    %44 = vector.extract_strided_slice %38 {offsets = [1, 2, 0], sizes = [4, 4, 32], strides = [1, 1, 1]} : vector<6x6x32xf32> to vector<4x4x32xf32>
    %45 = vector.extract_strided_slice %38 {offsets = [2, 0, 0], sizes = [4, 4, 32], strides = [1, 1, 1]} : vector<6x6x32xf32> to vector<4x4x32xf32>
    %46 = vector.extract_strided_slice %38 {offsets = [2, 1, 0], sizes = [4, 4, 32], strides = [1, 1, 1]} : vector<6x6x32xf32> to vector<4x4x32xf32>
    %47 = vector.extract_strided_slice %38 {offsets = [2, 2, 0], sizes = [4, 4, 32], strides = [1, 1, 1]} : vector<6x6x32xf32> to vector<4x4x32xf32>
    %48 = tpu.concatenate %39, %40, %41, %42, %43, %44, %45, %46, %47 in 2 : vector<4x4x32xf32>, vector<4x4x32xf32>, vector<4x4x32xf32>, vector<4x4x32xf32>, vector<4x4x32xf32>, vector<4x4x32xf32>, vector<4x4x32xf32>, vector<4x4x32xf32>, vector<4x4x32xf32> -> vector<4x4x288xf32>
    %49 = vector.shape_cast %48 : vector<4x4x288xf32> to vector<16x288xf32>
    %c0_22 = arith.constant 0 : index
    %c0_23 = arith.constant 0 : index
    %50 = vector.load %arg4[%c0_22, %c0_23] : memref<288x32xf32, #tpu.memory_space<vmem>>, vector<288x32xf32>
    %cst_24 = arith.constant dense<0.000000e+00> : vector<16x32xf32>
    %51 = tpu.matmul %49, %50, %cst_24 {dimension_numbers = #tpu.dot_dimension_numbers<[1], [0], [0], [1], [0, 0, 1, 1], [], []>} : vector<16x288xf32>, vector<288x32xf32>, vector<16x32xf32> -> vector<16x32xf32>
    %c0_25 = arith.constant 0 : index
    %c0_26 = arith.constant 0 : index
    %52 = vector.load %arg5[%c0_25, %c0_26] : memref<1x32xf32, #tpu.memory_space<vmem>>, vector<1x32xf32>
    %53 = vector.broadcast %52 : vector<1x32xf32> to vector<16x32xf32>
    %54 = arith.addf %51, %53 : vector<16x32xf32>
    %cst_27 = arith.constant 0.000000e+00 : f32
    %55 = vector.broadcast %cst_27 : f32 to vector<16x32xf32>
    %56 = arith.cmpf oge, %54, %55 : vector<16x32xf32>
    %cst_28 = arith.constant 0.00999999977 : f32
    %57 = vector.broadcast %cst_28 : f32 to vector<16x32xf32>
    %58 = arith.mulf %57, %54 : vector<16x32xf32>
    %59 = arith.select %56, %54, %58 : vector<16x32xi1>, vector<16x32xf32>
    %60 = vector.shape_cast %59 : vector<16x32xf32> to vector<1x16x32xf32>
    %c0_29 = arith.constant 0 : index
    %c0_30 = arith.constant 0 : index
    %c0_31 = arith.constant 0 : index
    %61 = vector.load %arg6[%c0_29, %c0_30, %c0_31] : memref<1x16x32xf32, #tpu.memory_space<vmem>>, vector<1x16x32xf32>
    tpu.vector_store %arg6[%c0_29, %c0_30, %c0_31], %60 {strides = array<i32>} : memref<1x16x32xf32, #tpu.memory_space<vmem>>, vector<1x16x32xf32>,
    return
  }
  func.func @transform_0(%arg0: i32) -> (i32, i32, i32, i32) {
    %c0_i32 = arith.constant 0 : i32
    %c0_i32_0 = arith.constant 0 : i32
    %c0_i32_1 = arith.constant 0 : i32
    %c0_i32_2 = arith.constant 0 : i32
    return %arg0, %c0_i32, %c0_i32_0, %c0_i32_1 : i32, i32, i32, i32
  }
  func.func @transform_1(%arg0: i32) -> (i32, i32) {
    %c0_i32 = arith.constant 0 : i32
    %c0_i32_0 = arith.constant 0 : i32
    %c0_i32_1 = arith.constant 0 : i32
    return %c0_i32, %c0_i32_0 : i32, i32
  }
  func.func @transform_2(%arg0: i32) -> (i32, i32) {
    %c0_i32 = arith.constant 0 : i32
    %c0_i32_0 = arith.constant 0 : i32
    %c0_i32_1 = arith.constant 0 : i32
    return %c0_i32, %c0_i32_0 : i32, i32
  }
  func.func @transform_3(%arg0: i32) -> (i32, i32) {
    %c0_i32 = arith.constant 0 : i32
    %c0_i32_0 = arith.constant 0 : i32
    %c0_i32_1 = arith.constant 0 : i32
    return %c0_i32, %c0_i32_0 : i32, i32
  }
  func.func @transform_4(%arg0: i32) -> (i32, i32) {
    %c0_i32 = arith.constant 0 : i32
    %c0_i32_0 = arith.constant 0 : i32
    %c0_i32_1 = arith.constant 0 : i32
    return %c0_i32, %c0_i32_0 : i32, i32
  }
  func.func @transform_5(%arg0: i32) -> (i32, i32, i32) {
    %c0_i32 = arith.constant 0 : i32
    %c0_i32_0 = arith.constant 0 : i32
    %c0_i32_1 = arith.constant 0 : i32
    return %arg0, %c0_i32, %c0_i32_0 : i32, i32, i32
  }
}

module attributes {stable_mosaic.version = 11 : i64} {
  func.func @conv_block_kernel(%arg0: i32, %arg1: memref<1x16x16x8xf32, #tpu.memory_space<vmem>>, %arg2: memref<72x16xf32, #tpu.memory_space<vmem>>, %arg3: memref<1x16xf32, #tpu.memory_space<vmem>>, %arg4: memref<144x16xf32, #tpu.memory_space<vmem>>, %arg5: memref<1x16xf32, #tpu.memory_space<vmem>>, %arg6: memref<1x64x16xf32, #tpu.memory_space<vmem>>, %arg7: memref<10x10x8xf32, #tpu.memory_space<vmem>>, %arg8: memref<10x10x16xf32, #tpu.memory_space<vmem>>) attributes {dimension_semantics = [#tpu.dimension_semantics<arbitrary>], iteration_bounds = array<i64: 2>, scalar_prefetch = 0 : i64, scratch_operands = 2 : i64, tpu.core_type = #tpu.core_type<tc>, window_params = [{transform_indices = @transform_0, window_bounds = array<i64: 1, 16, 16, 8>}, {pipeline_mode = #tpu.pipeline_mode<synchronous>, transform_indices = @transform_1, window_bounds = array<i64: 72, 16>}, {pipeline_mode = #tpu.pipeline_mode<synchronous>, transform_indices = @transform_2, window_bounds = array<i64: 1, 16>}, {pipeline_mode = #tpu.pipeline_mode<synchronous>, transform_indices = @transform_3, window_bounds = array<i64: 144, 16>}, {pipeline_mode = #tpu.pipeline_mode<synchronous>, transform_indices = @transform_4, window_bounds = array<i64: 1, 16>}, {transform_indices = @transform_5, window_bounds = array<i64: 1, 64, 16>}]} {
    %c0_i32 = arith.constant 0 : i32
    %0 = arith.cmpi eq, %arg0, %c0_i32 : i32
    %1 = arith.extui %0 : i1 to i32
    %c0_i32_0 = arith.constant 0 : i32
    %2 = arith.cmpi ne, %1, %c0_i32_0 : i32
    scf.if %2 {
      %cst_32 = arith.constant 0.000000e+00 : f32
      %62 = vector.broadcast %cst_32 : f32 to vector<10x10x8xf32>
      %c0_33 = arith.constant 0 : index
      %c0_34 = arith.constant 0 : index
      %c0_35 = arith.constant 0 : index
      %63 = vector.load %arg7[%c0_33, %c0_34, %c0_35] : memref<10x10x8xf32, #tpu.memory_space<vmem>>, vector<10x10x8xf32>
      tpu.vector_store %arg7[%c0_33, %c0_34, %c0_35], %62 {strides = array<i32>} : memref<10x10x8xf32, #tpu.memory_space<vmem>>, vector<10x10x8xf32>,
      %cst_36 = arith.constant 0.000000e+00 : f32
      %64 = vector.broadcast %cst_36 : f32 to vector<10x10x16xf32>
      %c0_37 = arith.constant 0 : index
      %c0_38 = arith.constant 0 : index
      %c0_39 = arith.constant 0 : index
      %65 = vector.load %arg8[%c0_37, %c0_38, %c0_39] : memref<10x10x16xf32, #tpu.memory_space<vmem>>, vector<10x10x16xf32>
      tpu.vector_store %arg8[%c0_37, %c0_38, %c0_39], %64 {strides = array<i32>} : memref<10x10x16xf32, #tpu.memory_space<vmem>>, vector<10x10x16xf32>,
    } else {
    }
    %c0 = arith.constant 0 : index
    %c0_1 = arith.constant 0 : index
    %c0_2 = arith.constant 0 : index
    %c0_3 = arith.constant 0 : index
    %3 = vector.load %arg1[%c0, %c0_1, %c0_2, %c0_3] : memref<1x16x16x8xf32, #tpu.memory_space<vmem>>, vector<1x16x16x8xf32>
    %4 = vector.shape_cast %3 : vector<1x16x16x8xf32> to vector<16x16x8xf32>
    %5 = vector.shape_cast %4 : vector<16x16x8xf32> to vector<8x2x16x8xf32>
    %6 = vector.extract_strided_slice %5 {offsets = [0, 0, 0, 0], sizes = [8, 1, 16, 8], strides = [1, 1, 1, 1]} : vector<8x2x16x8xf32> to vector<8x1x16x8xf32>
    %7 = vector.shape_cast %6 : vector<8x1x16x8xf32> to vector<8x16x8xf32>
    %8 = vector.extract_strided_slice %5 {offsets = [0, 1, 0, 0], sizes = [8, 1, 16, 8], strides = [1, 1, 1, 1]} : vector<8x2x16x8xf32> to vector<8x1x16x8xf32>
    %9 = vector.shape_cast %8 : vector<8x1x16x8xf32> to vector<8x16x8xf32>
    %10 = arith.maximumf %7, %9 : vector<8x16x8xf32>
    %11 = vector.shape_cast %10 : vector<8x16x8xf32> to vector<8x8x2x8xf32>
    %cst = arith.constant dense<0xFF800000> : vector<8x8x8xf32>
    %12 = vector.multi_reduction <maximumf>, %11, %cst [2] : vector<8x8x2x8xf32> to vector<8x8x8xf32>
    %c1 = arith.constant 1 : index
    %c1_4 = arith.constant 1 : index
    %c0_5 = arith.constant 0 : index
    %13 = vector.load %arg7[%c1, %c1_4, %c0_5] : memref<10x10x8xf32, #tpu.memory_space<vmem>>, vector<8x8x8xf32>
    tpu.vector_store %arg7[%c1, %c1_4, %c0_5], %12 {strides = array<i32>} : memref<10x10x8xf32, #tpu.memory_space<vmem>>, vector<8x8x8xf32>,
    %c0_6 = arith.constant 0 : index
    %c0_7 = arith.constant 0 : index
    %c0_8 = arith.constant 0 : index
    %14 = vector.load %arg7[%c0_6, %c0_7, %c0_8] : memref<10x10x8xf32, #tpu.memory_space<vmem>>, vector<10x10x8xf32>
    %15 = vector.extract_strided_slice %14 {offsets = [0, 0, 0], sizes = [8, 8, 8], strides = [1, 1, 1]} : vector<10x10x8xf32> to vector<8x8x8xf32>
    %16 = vector.extract_strided_slice %14 {offsets = [0, 1, 0], sizes = [8, 8, 8], strides = [1, 1, 1]} : vector<10x10x8xf32> to vector<8x8x8xf32>
    %17 = vector.extract_strided_slice %14 {offsets = [0, 2, 0], sizes = [8, 8, 8], strides = [1, 1, 1]} : vector<10x10x8xf32> to vector<8x8x8xf32>
    %18 = vector.extract_strided_slice %14 {offsets = [1, 0, 0], sizes = [8, 8, 8], strides = [1, 1, 1]} : vector<10x10x8xf32> to vector<8x8x8xf32>
    %19 = vector.extract_strided_slice %14 {offsets = [1, 1, 0], sizes = [8, 8, 8], strides = [1, 1, 1]} : vector<10x10x8xf32> to vector<8x8x8xf32>
    %20 = vector.extract_strided_slice %14 {offsets = [1, 2, 0], sizes = [8, 8, 8], strides = [1, 1, 1]} : vector<10x10x8xf32> to vector<8x8x8xf32>
    %21 = vector.extract_strided_slice %14 {offsets = [2, 0, 0], sizes = [8, 8, 8], strides = [1, 1, 1]} : vector<10x10x8xf32> to vector<8x8x8xf32>
    %22 = vector.extract_strided_slice %14 {offsets = [2, 1, 0], sizes = [8, 8, 8], strides = [1, 1, 1]} : vector<10x10x8xf32> to vector<8x8x8xf32>
    %23 = vector.extract_strided_slice %14 {offsets = [2, 2, 0], sizes = [8, 8, 8], strides = [1, 1, 1]} : vector<10x10x8xf32> to vector<8x8x8xf32>
    %24 = tpu.concatenate %15, %16, %17, %18, %19, %20, %21, %22, %23 in 2 : vector<8x8x8xf32>, vector<8x8x8xf32>, vector<8x8x8xf32>, vector<8x8x8xf32>, vector<8x8x8xf32>, vector<8x8x8xf32>, vector<8x8x8xf32>, vector<8x8x8xf32>, vector<8x8x8xf32> -> vector<8x8x72xf32>
    %25 = vector.shape_cast %24 : vector<8x8x72xf32> to vector<64x72xf32>
    %c0_9 = arith.constant 0 : index
    %c0_10 = arith.constant 0 : index
    %26 = vector.load %arg2[%c0_9, %c0_10] : memref<72x16xf32, #tpu.memory_space<vmem>>, vector<72x16xf32>
    %cst_11 = arith.constant dense<0.000000e+00> : vector<64x16xf32>
    %27 = tpu.matmul %25, %26, %cst_11 {dimension_numbers = #tpu.dot_dimension_numbers<[1], [0], [0], [1], [0, 0, 1, 1], [], []>} : vector<64x72xf32>, vector<72x16xf32>, vector<64x16xf32> -> vector<64x16xf32>
    %c0_12 = arith.constant 0 : index
    %c0_13 = arith.constant 0 : index
    %28 = vector.load %arg3[%c0_12, %c0_13] : memref<1x16xf32, #tpu.memory_space<vmem>>, vector<1x16xf32>
    %29 = vector.broadcast %28 : vector<1x16xf32> to vector<64x16xf32>
    %30 = arith.addf %27, %29 : vector<64x16xf32>
    %cst_14 = arith.constant 0.000000e+00 : f32
    %31 = vector.broadcast %cst_14 : f32 to vector<64x16xf32>
    %32 = arith.cmpf oge, %30, %31 : vector<64x16xf32>
    %cst_15 = arith.constant 0.00999999977 : f32
    %33 = vector.broadcast %cst_15 : f32 to vector<64x16xf32>
    %34 = arith.mulf %33, %30 : vector<64x16xf32>
    %35 = arith.select %32, %30, %34 : vector<64x16xi1>, vector<64x16xf32>
    %36 = vector.shape_cast %35 : vector<64x16xf32> to vector<8x8x16xf32>
    %c1_16 = arith.constant 1 : index
    %c1_17 = arith.constant 1 : index
    %c0_18 = arith.constant 0 : index
    %37 = vector.load %arg8[%c1_16, %c1_17, %c0_18] : memref<10x10x16xf32, #tpu.memory_space<vmem>>, vector<8x8x16xf32>
    tpu.vector_store %arg8[%c1_16, %c1_17, %c0_18], %36 {strides = array<i32>} : memref<10x10x16xf32, #tpu.memory_space<vmem>>, vector<8x8x16xf32>,
    %c0_19 = arith.constant 0 : index
    %c0_20 = arith.constant 0 : index
    %c0_21 = arith.constant 0 : index
    %38 = vector.load %arg8[%c0_19, %c0_20, %c0_21] : memref<10x10x16xf32, #tpu.memory_space<vmem>>, vector<10x10x16xf32>
    %39 = vector.extract_strided_slice %38 {offsets = [0, 0, 0], sizes = [8, 8, 16], strides = [1, 1, 1]} : vector<10x10x16xf32> to vector<8x8x16xf32>
    %40 = vector.extract_strided_slice %38 {offsets = [0, 1, 0], sizes = [8, 8, 16], strides = [1, 1, 1]} : vector<10x10x16xf32> to vector<8x8x16xf32>
    %41 = vector.extract_strided_slice %38 {offsets = [0, 2, 0], sizes = [8, 8, 16], strides = [1, 1, 1]} : vector<10x10x16xf32> to vector<8x8x16xf32>
    %42 = vector.extract_strided_slice %38 {offsets = [1, 0, 0], sizes = [8, 8, 16], strides = [1, 1, 1]} : vector<10x10x16xf32> to vector<8x8x16xf32>
    %43 = vector.extract_strided_slice %38 {offsets = [1, 1, 0], sizes = [8, 8, 16], strides = [1, 1, 1]} : vector<10x10x16xf32> to vector<8x8x16xf32>
    %44 = vector.extract_strided_slice %38 {offsets = [1, 2, 0], sizes = [8, 8, 16], strides = [1, 1, 1]} : vector<10x10x16xf32> to vector<8x8x16xf32>
    %45 = vector.extract_strided_slice %38 {offsets = [2, 0, 0], sizes = [8, 8, 16], strides = [1, 1, 1]} : vector<10x10x16xf32> to vector<8x8x16xf32>
    %46 = vector.extract_strided_slice %38 {offsets = [2, 1, 0], sizes = [8, 8, 16], strides = [1, 1, 1]} : vector<10x10x16xf32> to vector<8x8x16xf32>
    %47 = vector.extract_strided_slice %38 {offsets = [2, 2, 0], sizes = [8, 8, 16], strides = [1, 1, 1]} : vector<10x10x16xf32> to vector<8x8x16xf32>
    %48 = tpu.concatenate %39, %40, %41, %42, %43, %44, %45, %46, %47 in 2 : vector<8x8x16xf32>, vector<8x8x16xf32>, vector<8x8x16xf32>, vector<8x8x16xf32>, vector<8x8x16xf32>, vector<8x8x16xf32>, vector<8x8x16xf32>, vector<8x8x16xf32>, vector<8x8x16xf32> -> vector<8x8x144xf32>
    %49 = vector.shape_cast %48 : vector<8x8x144xf32> to vector<64x144xf32>
    %c0_22 = arith.constant 0 : index
    %c0_23 = arith.constant 0 : index
    %50 = vector.load %arg4[%c0_22, %c0_23] : memref<144x16xf32, #tpu.memory_space<vmem>>, vector<144x16xf32>
    %cst_24 = arith.constant dense<0.000000e+00> : vector<64x16xf32>
    %51 = tpu.matmul %49, %50, %cst_24 {dimension_numbers = #tpu.dot_dimension_numbers<[1], [0], [0], [1], [0, 0, 1, 1], [], []>} : vector<64x144xf32>, vector<144x16xf32>, vector<64x16xf32> -> vector<64x16xf32>
    %c0_25 = arith.constant 0 : index
    %c0_26 = arith.constant 0 : index
    %52 = vector.load %arg5[%c0_25, %c0_26] : memref<1x16xf32, #tpu.memory_space<vmem>>, vector<1x16xf32>
    %53 = vector.broadcast %52 : vector<1x16xf32> to vector<64x16xf32>
    %54 = arith.addf %51, %53 : vector<64x16xf32>
    %cst_27 = arith.constant 0.000000e+00 : f32
    %55 = vector.broadcast %cst_27 : f32 to vector<64x16xf32>
    %56 = arith.cmpf oge, %54, %55 : vector<64x16xf32>
    %cst_28 = arith.constant 0.00999999977 : f32
    %57 = vector.broadcast %cst_28 : f32 to vector<64x16xf32>
    %58 = arith.mulf %57, %54 : vector<64x16xf32>
    %59 = arith.select %56, %54, %58 : vector<64x16xi1>, vector<64x16xf32>
    %60 = vector.shape_cast %59 : vector<64x16xf32> to vector<1x64x16xf32>
    %c0_29 = arith.constant 0 : index
    %c0_30 = arith.constant 0 : index
    %c0_31 = arith.constant 0 : index
    %61 = vector.load %arg6[%c0_29, %c0_30, %c0_31] : memref<1x64x16xf32, #tpu.memory_space<vmem>>, vector<1x64x16xf32>
    tpu.vector_store %arg6[%c0_29, %c0_30, %c0_31], %60 {strides = array<i32>} : memref<1x64x16xf32, #tpu.memory_space<vmem>>, vector<1x64x16xf32>,
    return
  }
  func.func @transform_0(%arg0: i32) -> (i32, i32, i32, i32) {
    %c0_i32 = arith.constant 0 : i32
    %c0_i32_0 = arith.constant 0 : i32
    %c0_i32_1 = arith.constant 0 : i32
    %c0_i32_2 = arith.constant 0 : i32
    return %arg0, %c0_i32, %c0_i32_0, %c0_i32_1 : i32, i32, i32, i32
  }
  func.func @transform_1(%arg0: i32) -> (i32, i32) {
    %c0_i32 = arith.constant 0 : i32
    %c0_i32_0 = arith.constant 0 : i32
    %c0_i32_1 = arith.constant 0 : i32
    return %c0_i32, %c0_i32_0 : i32, i32
  }
  func.func @transform_2(%arg0: i32) -> (i32, i32) {
    %c0_i32 = arith.constant 0 : i32
    %c0_i32_0 = arith.constant 0 : i32
    %c0_i32_1 = arith.constant 0 : i32
    return %c0_i32, %c0_i32_0 : i32, i32
  }
  func.func @transform_3(%arg0: i32) -> (i32, i32) {
    %c0_i32 = arith.constant 0 : i32
    %c0_i32_0 = arith.constant 0 : i32
    %c0_i32_1 = arith.constant 0 : i32
    return %c0_i32, %c0_i32_0 : i32, i32
  }
  func.func @transform_4(%arg0: i32) -> (i32, i32) {
    %c0_i32 = arith.constant 0 : i32
    %c0_i32_0 = arith.constant 0 : i32
    %c0_i32_1 = arith.constant 0 : i32
    return %c0_i32, %c0_i32_0 : i32, i32
  }
  func.func @transform_5(%arg0: i32) -> (i32, i32, i32) {
    %c0_i32 = arith.constant 0 : i32
    %c0_i32_0 = arith.constant 0 : i32
    %c0_i32_1 = arith.constant 0 : i32
    return %arg0, %c0_i32, %c0_i32_0 : i32, i32, i32
  }
}

module attributes {stable_mosaic.version = 11 : i64} {
  func.func @conv_block_kernel(%arg0: i32, %arg1: memref<1x2x2x32xf32, #tpu.memory_space<vmem>>, %arg2: memref<288x64xf32, #tpu.memory_space<vmem>>, %arg3: memref<1x64xf32, #tpu.memory_space<vmem>>, %arg4: memref<576x64xf32, #tpu.memory_space<vmem>>, %arg5: memref<1x64xf32, #tpu.memory_space<vmem>>, %arg6: memref<1x1x64xf32, #tpu.memory_space<vmem>>, %arg7: memref<3x3x32xf32, #tpu.memory_space<vmem>>, %arg8: memref<3x3x64xf32, #tpu.memory_space<vmem>>) attributes {dimension_semantics = [#tpu.dimension_semantics<arbitrary>], iteration_bounds = array<i64: 2>, scalar_prefetch = 0 : i64, scratch_operands = 2 : i64, tpu.core_type = #tpu.core_type<tc>, window_params = [{transform_indices = @transform_0, window_bounds = array<i64: 1, 2, 2, 32>}, {pipeline_mode = #tpu.pipeline_mode<synchronous>, transform_indices = @transform_1, window_bounds = array<i64: 288, 64>}, {pipeline_mode = #tpu.pipeline_mode<synchronous>, transform_indices = @transform_2, window_bounds = array<i64: 1, 64>}, {pipeline_mode = #tpu.pipeline_mode<synchronous>, transform_indices = @transform_3, window_bounds = array<i64: 576, 64>}, {pipeline_mode = #tpu.pipeline_mode<synchronous>, transform_indices = @transform_4, window_bounds = array<i64: 1, 64>}, {transform_indices = @transform_5, window_bounds = array<i64: 1, 1, 64>}]} {
    %c0_i32 = arith.constant 0 : i32
    %0 = arith.cmpi eq, %arg0, %c0_i32 : i32
    %1 = arith.extui %0 : i1 to i32
    %c0_i32_0 = arith.constant 0 : i32
    %2 = arith.cmpi ne, %1, %c0_i32_0 : i32
    scf.if %2 {
      %cst_32 = arith.constant 0.000000e+00 : f32
      %60 = vector.broadcast %cst_32 : f32 to vector<3x3x32xf32>
      %c0_33 = arith.constant 0 : index
      %c0_34 = arith.constant 0 : index
      %c0_35 = arith.constant 0 : index
      %61 = vector.load %arg7[%c0_33, %c0_34, %c0_35] : memref<3x3x32xf32, #tpu.memory_space<vmem>>, vector<3x3x32xf32>
      tpu.vector_store %arg7[%c0_33, %c0_34, %c0_35], %60 {strides = array<i32>} : memref<3x3x32xf32, #tpu.memory_space<vmem>>, vector<3x3x32xf32>,
      %cst_36 = arith.constant 0.000000e+00 : f32
      %62 = vector.broadcast %cst_36 : f32 to vector<3x3x64xf32>
      %c0_37 = arith.constant 0 : index
      %c0_38 = arith.constant 0 : index
      %c0_39 = arith.constant 0 : index
      %63 = vector.load %arg8[%c0_37, %c0_38, %c0_39] : memref<3x3x64xf32, #tpu.memory_space<vmem>>, vector<3x3x64xf32>
      tpu.vector_store %arg8[%c0_37, %c0_38, %c0_39], %62 {strides = array<i32>} : memref<3x3x64xf32, #tpu.memory_space<vmem>>, vector<3x3x64xf32>,
    } else {
    }
    %c0 = arith.constant 0 : index
    %c0_1 = arith.constant 0 : index
    %c0_2 = arith.constant 0 : index
    %c0_3 = arith.constant 0 : index
    %3 = vector.load %arg1[%c0, %c0_1, %c0_2, %c0_3] : memref<1x2x2x32xf32, #tpu.memory_space<vmem>>, vector<1x2x2x32xf32>
    %4 = vector.shape_cast %3 : vector<1x2x2x32xf32> to vector<2x2x32xf32>
    %5 = vector.shape_cast %4 : vector<2x2x32xf32> to vector<1x2x2x32xf32>
    %6 = vector.extract_strided_slice %5 {offsets = [0, 0, 0, 0], sizes = [1, 1, 2, 32], strides = [1, 1, 1, 1]} : vector<1x2x2x32xf32> to vector<1x1x2x32xf32>
    %7 = vector.shape_cast %6 : vector<1x1x2x32xf32> to vector<1x2x32xf32>
    %8 = vector.extract_strided_slice %5 {offsets = [0, 1, 0, 0], sizes = [1, 1, 2, 32], strides = [1, 1, 1, 1]} : vector<1x2x2x32xf32> to vector<1x1x2x32xf32>
    %9 = vector.shape_cast %8 : vector<1x1x2x32xf32> to vector<1x2x32xf32>
    %10 = arith.maximumf %7, %9 : vector<1x2x32xf32>
    %11 = vector.shape_cast %10 : vector<1x2x32xf32> to vector<1x1x2x32xf32>
    %cst = arith.constant dense<0xFF800000> : vector<1x1x32xf32>
    %12 = vector.multi_reduction <maximumf>, %11, %cst [2] : vector<1x1x2x32xf32> to vector<1x1x32xf32>
    %c1 = arith.constant 1 : index
    %c1_4 = arith.constant 1 : index
    %c0_5 = arith.constant 0 : index
    %13 = vector.load %arg7[%c1, %c1_4, %c0_5] : memref<3x3x32xf32, #tpu.memory_space<vmem>>, vector<1x1x32xf32>
    tpu.vector_store %arg7[%c1, %c1_4, %c0_5], %12 {strides = array<i32>} : memref<3x3x32xf32, #tpu.memory_space<vmem>>, vector<1x1x32xf32>,
    %c0_6 = arith.constant 0 : index
    %c0_7 = arith.constant 0 : index
    %c0_8 = arith.constant 0 : index
    %14 = vector.load %arg7[%c0_6, %c0_7, %c0_8] : memref<3x3x32xf32, #tpu.memory_space<vmem>>, vector<3x3x32xf32>
    %15 = vector.extract_strided_slice %14 {offsets = [0, 0, 0], sizes = [1, 1, 32], strides = [1, 1, 1]} : vector<3x3x32xf32> to vector<1x1x32xf32>
    %16 = vector.extract_strided_slice %14 {offsets = [0, 1, 0], sizes = [1, 1, 32], strides = [1, 1, 1]} : vector<3x3x32xf32> to vector<1x1x32xf32>
    %17 = vector.extract_strided_slice %14 {offsets = [0, 2, 0], sizes = [1, 1, 32], strides = [1, 1, 1]} : vector<3x3x32xf32> to vector<1x1x32xf32>
    %18 = vector.extract_strided_slice %14 {offsets = [1, 0, 0], sizes = [1, 1, 32], strides = [1, 1, 1]} : vector<3x3x32xf32> to vector<1x1x32xf32>
    %19 = vector.extract_strided_slice %14 {offsets = [1, 1, 0], sizes = [1, 1, 32], strides = [1, 1, 1]} : vector<3x3x32xf32> to vector<1x1x32xf32>
    %20 = vector.extract_strided_slice %14 {offsets = [1, 2, 0], sizes = [1, 1, 32], strides = [1, 1, 1]} : vector<3x3x32xf32> to vector<1x1x32xf32>
    %21 = vector.extract_strided_slice %14 {offsets = [2, 0, 0], sizes = [1, 1, 32], strides = [1, 1, 1]} : vector<3x3x32xf32> to vector<1x1x32xf32>
    %22 = vector.extract_strided_slice %14 {offsets = [2, 1, 0], sizes = [1, 1, 32], strides = [1, 1, 1]} : vector<3x3x32xf32> to vector<1x1x32xf32>
    %23 = vector.extract_strided_slice %14 {offsets = [2, 2, 0], sizes = [1, 1, 32], strides = [1, 1, 1]} : vector<3x3x32xf32> to vector<1x1x32xf32>
    %24 = tpu.concatenate %15, %16, %17, %18, %19, %20, %21, %22, %23 in 2 : vector<1x1x32xf32>, vector<1x1x32xf32>, vector<1x1x32xf32>, vector<1x1x32xf32>, vector<1x1x32xf32>, vector<1x1x32xf32>, vector<1x1x32xf32>, vector<1x1x32xf32>, vector<1x1x32xf32> -> vector<1x1x288xf32>
    %25 = vector.shape_cast %24 : vector<1x1x288xf32> to vector<1x288xf32>
    %c0_9 = arith.constant 0 : index
    %c0_10 = arith.constant 0 : index
    %26 = vector.load %arg2[%c0_9, %c0_10] : memref<288x64xf32, #tpu.memory_space<vmem>>, vector<288x64xf32>
    %cst_11 = arith.constant dense<0.000000e+00> : vector<1x64xf32>
    %27 = tpu.matmul %25, %26, %cst_11 {dimension_numbers = #tpu.dot_dimension_numbers<[1], [0], [0], [1], [0, 0, 1, 1], [], []>} : vector<1x288xf32>, vector<288x64xf32>, vector<1x64xf32> -> vector<1x64xf32>
    %c0_12 = arith.constant 0 : index
    %c0_13 = arith.constant 0 : index
    %28 = vector.load %arg3[%c0_12, %c0_13] : memref<1x64xf32, #tpu.memory_space<vmem>>, vector<1x64xf32>
    %29 = arith.addf %27, %28 : vector<1x64xf32>
    %cst_14 = arith.constant 0.000000e+00 : f32
    %30 = vector.broadcast %cst_14 : f32 to vector<1x64xf32>
    %31 = arith.cmpf oge, %29, %30 : vector<1x64xf32>
    %cst_15 = arith.constant 0.00999999977 : f32
    %32 = vector.broadcast %cst_15 : f32 to vector<1x64xf32>
    %33 = arith.mulf %32, %29 : vector<1x64xf32>
    %34 = arith.select %31, %29, %33 : vector<1x64xi1>, vector<1x64xf32>
    %35 = vector.shape_cast %34 : vector<1x64xf32> to vector<1x1x64xf32>
    %c1_16 = arith.constant 1 : index
    %c1_17 = arith.constant 1 : index
    %c0_18 = arith.constant 0 : index
    %36 = vector.load %arg8[%c1_16, %c1_17, %c0_18] : memref<3x3x64xf32, #tpu.memory_space<vmem>>, vector<1x1x64xf32>
    tpu.vector_store %arg8[%c1_16, %c1_17, %c0_18], %35 {strides = array<i32>} : memref<3x3x64xf32, #tpu.memory_space<vmem>>, vector<1x1x64xf32>,
    %c0_19 = arith.constant 0 : index
    %c0_20 = arith.constant 0 : index
    %c0_21 = arith.constant 0 : index
    %37 = vector.load %arg8[%c0_19, %c0_20, %c0_21] : memref<3x3x64xf32, #tpu.memory_space<vmem>>, vector<3x3x64xf32>
    %38 = vector.extract_strided_slice %37 {offsets = [0, 0, 0], sizes = [1, 1, 64], strides = [1, 1, 1]} : vector<3x3x64xf32> to vector<1x1x64xf32>
    %39 = vector.extract_strided_slice %37 {offsets = [0, 1, 0], sizes = [1, 1, 64], strides = [1, 1, 1]} : vector<3x3x64xf32> to vector<1x1x64xf32>
    %40 = vector.extract_strided_slice %37 {offsets = [0, 2, 0], sizes = [1, 1, 64], strides = [1, 1, 1]} : vector<3x3x64xf32> to vector<1x1x64xf32>
    %41 = vector.extract_strided_slice %37 {offsets = [1, 0, 0], sizes = [1, 1, 64], strides = [1, 1, 1]} : vector<3x3x64xf32> to vector<1x1x64xf32>
    %42 = vector.extract_strided_slice %37 {offsets = [1, 1, 0], sizes = [1, 1, 64], strides = [1, 1, 1]} : vector<3x3x64xf32> to vector<1x1x64xf32>
    %43 = vector.extract_strided_slice %37 {offsets = [1, 2, 0], sizes = [1, 1, 64], strides = [1, 1, 1]} : vector<3x3x64xf32> to vector<1x1x64xf32>
    %44 = vector.extract_strided_slice %37 {offsets = [2, 0, 0], sizes = [1, 1, 64], strides = [1, 1, 1]} : vector<3x3x64xf32> to vector<1x1x64xf32>
    %45 = vector.extract_strided_slice %37 {offsets = [2, 1, 0], sizes = [1, 1, 64], strides = [1, 1, 1]} : vector<3x3x64xf32> to vector<1x1x64xf32>
    %46 = vector.extract_strided_slice %37 {offsets = [2, 2, 0], sizes = [1, 1, 64], strides = [1, 1, 1]} : vector<3x3x64xf32> to vector<1x1x64xf32>
    %47 = tpu.concatenate %38, %39, %40, %41, %42, %43, %44, %45, %46 in 2 : vector<1x1x64xf32>, vector<1x1x64xf32>, vector<1x1x64xf32>, vector<1x1x64xf32>, vector<1x1x64xf32>, vector<1x1x64xf32>, vector<1x1x64xf32>, vector<1x1x64xf32>, vector<1x1x64xf32> -> vector<1x1x576xf32>
    %48 = vector.shape_cast %47 : vector<1x1x576xf32> to vector<1x576xf32>
    %c0_22 = arith.constant 0 : index
    %c0_23 = arith.constant 0 : index
    %49 = vector.load %arg4[%c0_22, %c0_23] : memref<576x64xf32, #tpu.memory_space<vmem>>, vector<576x64xf32>
    %cst_24 = arith.constant dense<0.000000e+00> : vector<1x64xf32>
    %50 = tpu.matmul %48, %49, %cst_24 {dimension_numbers = #tpu.dot_dimension_numbers<[1], [0], [0], [1], [0, 0, 1, 1], [], []>} : vector<1x576xf32>, vector<576x64xf32>, vector<1x64xf32> -> vector<1x64xf32>
    %c0_25 = arith.constant 0 : index
    %c0_26 = arith.constant 0 : index
    %51 = vector.load %arg5[%c0_25, %c0_26] : memref<1x64xf32, #tpu.memory_space<vmem>>, vector<1x64xf32>
    %52 = arith.addf %50, %51 : vector<1x64xf32>
    %cst_27 = arith.constant 0.000000e+00 : f32
    %53 = vector.broadcast %cst_27 : f32 to vector<1x64xf32>
    %54 = arith.cmpf oge, %52, %53 : vector<1x64xf32>
    %cst_28 = arith.constant 0.00999999977 : f32
    %55 = vector.broadcast %cst_28 : f32 to vector<1x64xf32>
    %56 = arith.mulf %55, %52 : vector<1x64xf32>
    %57 = arith.select %54, %52, %56 : vector<1x64xi1>, vector<1x64xf32>
    %58 = vector.shape_cast %57 : vector<1x64xf32> to vector<1x1x64xf32>
    %c0_29 = arith.constant 0 : index
    %c0_30 = arith.constant 0 : index
    %c0_31 = arith.constant 0 : index
    %59 = vector.load %arg6[%c0_29, %c0_30, %c0_31] : memref<1x1x64xf32, #tpu.memory_space<vmem>>, vector<1x1x64xf32>
    tpu.vector_store %arg6[%c0_29, %c0_30, %c0_31], %58 {strides = array<i32>} : memref<1x1x64xf32, #tpu.memory_space<vmem>>, vector<1x1x64xf32>,
    return
  }
  func.func @transform_0(%arg0: i32) -> (i32, i32, i32, i32) {
    %c0_i32 = arith.constant 0 : i32
    %c0_i32_0 = arith.constant 0 : i32
    %c0_i32_1 = arith.constant 0 : i32
    %c0_i32_2 = arith.constant 0 : i32
    return %arg0, %c0_i32, %c0_i32_0, %c0_i32_1 : i32, i32, i32, i32
  }
  func.func @transform_1(%arg0: i32) -> (i32, i32) {
    %c0_i32 = arith.constant 0 : i32
    %c0_i32_0 = arith.constant 0 : i32
    %c0_i32_1 = arith.constant 0 : i32
    return %c0_i32, %c0_i32_0 : i32, i32
  }
  func.func @transform_2(%arg0: i32) -> (i32, i32) {
    %c0_i32 = arith.constant 0 : i32
    %c0_i32_0 = arith.constant 0 : i32
    %c0_i32_1 = arith.constant 0 : i32
    return %c0_i32, %c0_i32_0 : i32, i32
  }
  func.func @transform_3(%arg0: i32) -> (i32, i32) {
    %c0_i32 = arith.constant 0 : i32
    %c0_i32_0 = arith.constant 0 : i32
    %c0_i32_1 = arith.constant 0 : i32
    return %c0_i32, %c0_i32_0 : i32, i32
  }
  func.func @transform_4(%arg0: i32) -> (i32, i32) {
    %c0_i32 = arith.constant 0 : i32
    %c0_i32_0 = arith.constant 0 : i32
    %c0_i32_1 = arith.constant 0 : i32
    return %c0_i32, %c0_i32_0 : i32, i32
  }
  func.func @transform_5(%arg0: i32) -> (i32, i32, i32) {
    %c0_i32 = arith.constant 0 : i32
    %c0_i32_0 = arith.constant 0 : i32
    %c0_i32_1 = arith.constant 0 : i32
    return %arg0, %c0_i32, %c0_i32_0 : i32, i32, i32
  }
}

</mosaic_0001>

<llo_original>
// kernel: encoder_forward_impl.8
$region0: #{encoder_forward_impl.8}
  #allocation0 [shape = 'u32[]', space=smem, size = 0x4, offset = 0x4, fixed_abs, tag = 'smem constant byte address 0x4 - core index']
  #allocation1 [shape = 'u32[72,128]{1,0:T(1,128)}', space=vmem, size = 0x9000, scoped, tag = 'internal scratch']
  #allocation2 [shape = 'f32[4,4,32]{2,1,0:T(4,128)}', space=vmem, size = 0x2000, scoped, tag = 'scratch operand']
  #allocation3 [shape = 'f32[4,4,32]{2,1,0:T(4,128)}', space=vmem, size = 0x2000, scoped, tag = 'scratch operand']
  %s0 = inlined_call_operand.vmem [shape: f32[2,4,4,32], index: 0, kind: input, shape index: {}]
  %s1 = inlined_call_operand.vmem [shape: f32[288,32], index: 1, kind: input, shape index: {}]
  %s2 = inlined_call_operand.vmem [shape: f32[1,32], index: 2, kind: input, shape index: {}]
  %s3 = inlined_call_operand.vmem [shape: f32[288,32], index: 3, kind: input, shape index: {}]
  %s4 = inlined_call_operand.vmem [shape: f32[1,32], index: 4, kind: input, shape index: {}]
  %s5 = inlined_call_operand.vmem [shape: f32[2,4,32], index: 5, kind: output, shape index: {}]
  %s6 = sld [smem:[#allocation0]]
  $region57: #{encoder_forward_impl.8} parent=0
    _
  %s8 = ssub.s32 1, %s6
  %s9 = scalar_select 0, %s8, %s6
  loop: start=0, step=1, limit=4
  $region2: #{encoder_forward_impl.8} parent=0 // loop_pre_header
    _
  $region3: #{encoder_forward_impl.8} parent=0 // loop_header
    %s11 = sphi 0, %s15
    %p12 = scmp.ge.s32.totalorder %s11, 4
    %s21 = sphi 0, %s23
    %s24 = sphi 0, %s21
    %s25 = sphi 0, %s24
    %s41 = sphi 0, %s25
    %s45 = sphi 0, %s45
    %s47 = sphi 0, %s45
    %s48 = sphi 0, %s47
    %s62 = sphi 0, %s48
    %s66 = sphi 0, %s66
    %s68 = sphi 0, %s66
    %s69 = sphi 0, %s68
    %s83 = sphi 0, %s69
    %s87 = sphi 0, %s87
    %s89 = sphi 0, %s87
    %s90 = sphi 0, %s89
    %s104 = sphi 0, %s90
    %s108 = sphi 0, %s108
    %s110 = sphi 0, %s108
    %s111 = sphi 0, %s110
    %s125 = sphi 0, %s111
    %s131 = sphi 0, %s133
    %s134 = sphi 0, %s131
    %s135 = sphi 0, %s134
    %s151 = sphi 0, %s135
  $region4: #{encoder_forward_impl.8} parent=0 // loop_header_branch
    %14 = sbr.rel (%p12) target = $region8
  $region5: #{encoder_forward_impl.8} parent=0 // loop_body
    %s16 = ssub.s32 %s11, 1
    %s17 = ssub.s32 %s11, 2
    %s18 = sadd.s32 %s11, 1
    %s19 = ssub.s32 %s11, %s18
    %p20 = scmp.eq.s32.totalorder %s19, 0
    %s22 = sadd.s32 %s21, 1
    %s23 = scalar_select %p20, %s21, %s22
    %p26 = pneg %p20
    %p27 = scmp.eq.s32.totalorder %s11, 1
    %p28 = por %p26, %p27
    %p29 = scmp.ne.s32.totalorder %s21, %s24
    %p30 = scmp.eq.s32.totalorder %s11, 0
    %p31 = por %p29, %p30
    %p32 = scmp.ne.s32.totalorder %s21, %s24
    %p33 = scmp.eq.s32.totalorder %s16, 1
    %p34 = por %p32, %p33
    %p35 = scmp.ne.s32.totalorder %s24, %s25
    %p36 = scmp.eq.s32.totalorder %s16, 0
    %p37 = por %p35, %p36
    %p38 = scmp.ne.s32.totalorder %s24, %s25
    %p39 = scmp.eq.s32.totalorder %s17, 1
    %p40 = por %p38, %p39
    %p42 = scmp.ne.s32.totalorder %s25, %s41
    %p43 = scmp.eq.s32.totalorder %s17, 0
    %p44 = por %p42, %p43
    %s46 = sadd.s32 %s45, 1
    %p49 = scmp.eq.s32.totalorder %s11, 1
    %p50 = scmp.ne.s32.totalorder %s45, %s47
    %p51 = scmp.eq.s32.totalorder %s11, 0
    %p52 = por %p50, %p51
    %p53 = scmp.ne.s32.totalorder %s45, %s47
    %p54 = scmp.eq.s32.totalorder %s16, 1
    %p55 = por %p53, %p54
    %p56 = scmp.ne.s32.totalorder %s47, %s48
    %p57 = scmp.eq.s32.totalorder %s16, 0
    %p58 = por %p56, %p57
    %p59 = scmp.ne.s32.totalorder %s47, %s48
    %p60 = scmp.eq.s32.totalorder %s17, 1
    %p61 = por %p59, %p60
    %p63 = scmp.ne.s32.totalorder %s48, %s62
    %p64 = scmp.eq.s32.totalorder %s17, 0
    %p65 = por %p63, %p64
    %s67 = sadd.s32 %s66, 1
    %p70 = scmp.eq.s32.totalorder %s11, 1
    %p71 = scmp.ne.s32.totalorder %s66, %s68
    %p72 = scmp.eq.s32.totalorder %s11, 0
    %p73 = por %p71, %p72
    %p74 = scmp.ne.s32.totalorder %s66, %s68
    %p75 = scmp.eq.s32.totalorder %s16, 1
    %p76 = por %p74, %p75
    %p77 = scmp.ne.s32.totalorder %s68, %s69
    %p78 = scmp.eq.s32.totalorder %s16, 0
    %p79 = por %p77, %p78
    %p80 = scmp.ne.s32.totalorder %s68, %s69
    %p81 = scmp.eq.s32.totalorder %s17, 1
    %p82 = por %p80, %p81
    %p84 = scmp.ne.s32.totalorder %s69, %s83
    %p85 = scmp.eq.s32.totalorder %s17, 0
    %p86 = por %p84, %p85
    %s88 = sadd.s32 %s87, 1
    %p91 = scmp.eq.s32.totalorder %s11, 1
    %p92 = scmp.ne.s32.totalorder %s87, %s89
    %p93 = scmp.eq.s32.totalorder %s11, 0
    %p94 = por %p92, %p93
    %p95 = scmp.ne.s32.totalorder %s87, %s89
    %p96 = scmp.eq.s32.totalorder %s16, 1
    %p97 = por %p95, %p96
    %p98 = scmp.ne.s32.totalorder %s89, %s90
    %p99 = scmp.eq.s32.totalorder %s16, 0
    %p100 = por %p98, %p99
    %p101 = scmp.ne.s32.totalorder %s89, %s90
    %p102 = scmp.eq.s32.totalorder %s17, 1
    %p103 = por %p101, %p102
    %p105 = scmp.ne.s32.totalorder %s90, %s104
    %p106 = scmp.eq.s32.totalorder %s17, 0
    %p107 = por %p105, %p106
    %s109 = sadd.s32 %s108, 1
    %p112 = scmp.eq.s32.totalorder %s11, 1
    %p113 = scmp.ne.s32.totalorder %s108, %s110
    %p114 = scmp.eq.s32.totalorder %s11, 0
    %p115 = por %p113, %p114
    %p116 = scmp.ne.s32.totalorder %s108, %s110
    %p117 = scmp.eq.s32.totalorder %s16, 1
    %p118 = por %p116, %p117
    %p119 = scmp.ne.s32.totalorder %s110, %s111
    %p120 = scmp.eq.s32.totalorder %s16, 0
    %p121 = por %p119, %p120
    %p122 = scmp.ne.s32.totalorder %s110, %s111
    %p123 = scmp.eq.s32.totalorder %s17, 1
    %p124 = por %p122, %p123
    %p126 = scmp.ne.s32.totalorder %s111, %s125
    %p127 = scmp.eq.s32.totalorder %s17, 0
    %p128 = por %p126, %p127
    %s129 = ssub.s32 %s11, %s18
    %p130 = scmp.eq.s32.totalorder %s129, 0
    %s132 = sadd.s32 %s131, 1
    %s133 = scalar_select %p130, %s131, %s132
    %p136 = pneg %p130
    %p137 = scmp.eq.s32.totalorder %s11, 1
    %p138 = por %p136, %p137
    %p139 = scmp.ne.s32.totalorder %s131, %s134
    %p140 = scmp.eq.s32.totalorder %s11, 0
    %p141 = por %p139, %p140
    %p142 = scmp.ne.s32.totalorder %s131, %s134
    %p143 = scmp.eq.s32.totalorder %s16, 1
    %p144 = por %p142, %p143
    %p145 = scmp.ne.s32.totalorder %s134, %s135
    %p146 = scmp.eq.s32.totalorder %s16, 0
    %p147 = por %p145, %p146
    %p148 = scmp.ne.s32.totalorder %s134, %s135
    %p149 = scmp.eq.s32.totalorder %s17, 1
    %p150 = por %p148, %p149
    %p152 = scmp.ne.s32.totalorder %s135, %s151
    %p153 = scmp.eq.s32.totalorder %s17, 0
    %p154 = por %p152, %p153
    %p155 = scmp.le.s32.totalorder 1, %s11
    %p156 = scmp.lt.s32.totalorder %s11, 3
    %p157 = pnand %p155, %p156
    %p158 = pneg %p157
    // Predicated region
    $region9: #{encoder_forward_impl.8} parent=5 // pred_check
      _
    $region10: #{encoder_forward_impl.8} parent=5 // pred_check_branch
      %160 = sbr.rel (%p157) target = $region12
    $region11: #{encoder_forward_impl.8} parent=5 // pred_region
      %s161 = ssub.s32 %s11, 1
      // Predicated region
      $region13: #{encoder_forward_impl.8} parent=11 // pred_check
        %p162 = pneg %p58
      $region14: #{encoder_forward_impl.8} parent=11 // pred_check_branch
        %164 = sbr.rel (%p162) target = $region16
      $region15: #{encoder_forward_impl.8} parent=11 // pred_region
        _
      $region16: #{encoder_forward_impl.8} parent=11 // pred_fallthru
        _
      // Predicated region
      $region17: #{encoder_forward_impl.8} parent=11 // pred_check
        %p165 = pneg %p79
      $region18: #{encoder_forward_impl.8} parent=11 // pred_check_branch
        %167 = sbr.rel (%p165) target = $region20
      $region19: #{encoder_forward_impl.8} parent=11 // pred_region
        _
      $region20: #{encoder_forward_impl.8} parent=11 // pred_fallthru
        _
      // Predicated region
      $region21: #{encoder_forward_impl.8} parent=11 // pred_check
        %p168 = pneg %p100
      $region22: #{encoder_forward_impl.8} parent=11 // pred_check_branch
        %170 = sbr.rel (%p168) target = $region24
      $region23: #{encoder_forward_impl.8} parent=11 // pred_region
        _
      $region24: #{encoder_forward_impl.8} parent=11 // pred_fallthru
        _
      // Predicated region
      $region25: #{encoder_forward_impl.8} parent=11 // pred_check
        %p171 = pneg %p121
      $region26: #{encoder_forward_impl.8} parent=11 // pred_check_branch
        %173 = sbr.rel (%p171) target = $region28
      $region27: #{encoder_forward_impl.8} parent=11 // pred_region
        _
      $region28: #{encoder_forward_impl.8} parent=11 // pred_fallthru
        _
    $region12: #{encoder_forward_impl.8} parent=5 // pred_fallthru
      _
    %p174 = scmp.lt.s32.totalorder %s11, 2
    // Predicated region
    $region29: #{encoder_forward_impl.8} parent=5 // pred_check
      %p175 = pneg %p174
    $region30: #{encoder_forward_impl.8} parent=5 // pred_check_branch
      %177 = sbr.rel (%p175) target = $region32
    $region31: #{encoder_forward_impl.8} parent=5 // pred_region
      // Predicated region
      $region33: #{encoder_forward_impl.8} parent=31 // pred_check
        %p178 = pneg %p31
      $region34: #{encoder_forward_impl.8} parent=31 // pred_check_branch
        %180 = sbr.rel (%p178) target = $region36
      $region35: #{encoder_forward_impl.8} parent=31 // pred_region
        %p181 = scmp.lt.s32.totalorder %s11, 1
        %s182 = scalar_select %p181, %s11, 1
        %s183 = smul.addr %s182, 4
        %s184 = smul.addr %s183, 4
        %s185 = scalar_lea.vmem %s0, %s184
      $region36: #{encoder_forward_impl.8} parent=31 // pred_fallthru
        _
    $region32: #{encoder_forward_impl.8} parent=5 // pred_fallthru
      _
    %p186 = scmp.le.s32.totalorder 1, %s11
    %p187 = scmp.lt.s32.totalorder %s11, 3
    %p188 = pnand %p186, %p187
    %p189 = pneg %p188
    // Predicated region
    $region37: #{encoder_forward_impl.8} parent=5 // pred_check
      _
    $region38: #{encoder_forward_impl.8} parent=5 // pred_check_branch
      %191 = sbr.rel (%p188) target = $region40
    $region39: #{encoder_forward_impl.8} parent=5 // pred_region
      %s192 = ssub.s32 %s11, 1
      %p193 = scmp.lt.s32.totalorder %s16, 1
      %s194 = scalar_select %p193, %s16, 1
      %s195 = smul.addr %s194, 4
      %s196 = smul.addr %s195, 4
      %s197 = scalar_lea.vmem %s0, %s196
      %p198 = pneg %p37
      %p199 = pneg %p34
      %p200 = pneg %p58
      %p201 = pneg %p55
      %p202 = pneg %p79
      %p203 = pneg %p76
      %p204 = pneg %p100
      %p205 = pneg %p97
      %p206 = pneg %p121
      %p207 = pneg %p118
      %p208 = pneg %p147
      %p209 = pneg %p144
      %p210 = scmp.lt.s32.totalorder %s16, 1
      %s211 = scalar_select %p210, %s16, 1
      %s212 = smul.addr %s211, 4
      %s213 = scalar_lea.vmem %s5, %s212
      %p214 = scmp.lt.s32.totalorder %s16, 1
      %s215 = scalar_select %p214, %s16, 1
      %s216 = smul.addr %s215, 4
      %s217 = smul.addr %s216, 4
      %s218 = scalar_lea.vmem %s0, %s217
      %p219 = scmp.lt.s32.totalorder %s16, 1
      %s220 = scalar_select %p219, %s16, 1
      %s221 = smul.addr %s220, 4
      %s222 = scalar_lea.vmem %s5, %s221
      %p223 = scmp.eq.s32.totalorder %s16, 0
      // Predicated region
      $region41: #{encoder_forward_impl.8} parent=39 // pred_check
        %p224 = pneg %p223
      $region42: #{encoder_forward_impl.8} parent=39 // pred_check_branch
        %226 = sbr.rel (%p224) target = $region44
      $region43: #{encoder_forward_impl.8} parent=39 // pred_region
        %vm227 = vcmask 257024
        %228 = vst.msk [vmem:[#allocation2] sm:$0xf] %vm227, 0.0
        %229 = vst.msk [vmem:[#allocation2 + $0x4] sm:$0xf] %vm227, 0.0
        %230 = vst.msk [vmem:[#allocation2 + $0x8] sm:$0xf] %vm227, 0.0
        %231 = vst.msk [vmem:[#allocation2 + $0xc] sm:$0xf] %vm227, 0.0
        %232 = vst.msk [vmem:[#allocation3] sm:$0xf] %vm227, 0.0
        %233 = vst.msk [vmem:[#allocation3 + $0x4] sm:$0xf] %vm227, 0.0
        %234 = vst.msk [vmem:[#allocation3 + $0x8] sm:$0xf] %vm227, 0.0
        %235 = vst.msk [vmem:[#allocation3 + $0xc] sm:$0xf] %vm227, 0.0
      $region44: #{encoder_forward_impl.8} parent=39 // pred_fallthru
        _
      %v236 = vld [vmem:[%s218] sm:$0xf]
      %v237 = vld [vmem:[%s218 + $0x4] sm:$0xf]
      %v238 = vld [vmem:[%s218 + $0x8] sm:$0xf]
      %v239 = vld [vmem:[%s218 + $0xc] sm:$0xf]
      %v240 = vmax.f32 %v236, %v237
      %v241 = vmax.f32 %v238, %v239
      %v244 = vrot.slane %v240, 2
      %v245 = vrot.slane %v241, 2
      %vm248 = vcmask 254976
      %v249 = vsel %vm248, %v240, -inf
      %v250 = vrot.slane %v249, 4
      %v251 = vmax.f32 %v249, %v250
      %v252 = vrot.slane %v251, 2
      %v253 = vmax.f32 %v251, %v252
      %v254 = vrot.slane %v253, 1
      %v255 = vmax.f32 %v253, %v254
      %v256 = vsel %vm248, %v244, -inf
      %v257 = vrot.slane %v256, 4
      %v258 = vmax.f32 %v256, %v257
      %v259 = vrot.slane %v258, 2
      %v260 = vmax.f32 %v258, %v259
      %v261 = vrot.slane %v260, 1
      %v262 = vmax.f32 %v260, %v261
      %v263 = vsel %vm248, %v241, -inf
      %v264 = vrot.slane %v263, 4
      %v265 = vmax.f32 %v263, %v264
      %v266 = vrot.slane %v265, 2
      %v267 = vmax.f32 %v265, %v266
      %v268 = vrot.slane %v267, 1
      %v269 = vmax.f32 %v267, %v268
      %v270 = vsel %vm248, %v245, -inf
      %v271 = vrot.slane %v270, 4
      %v272 = vmax.f32 %v270, %v271
      %v273 = vrot.slane %v272, 2
      %v274 = vmax.f32 %v272, %v273
      %v275 = vrot.slane %v274, 1
      %v276 = vmax.f32 %v274, %v275
      %vm281 = vcmask 1041409
      %v282 = vsel %vm281, %v262, %v255
      %v283 = vsel %vm281, %v276, %v269
      %s286 = scalar_lea.vmem [#allocation2], 4
      %287 = vst.msk [vmem:[%s286 + $0x1] sm:$0x3] %vm248, %v282
      %288 = vst.msk [vmem:[%s286 + $0x5] sm:$0x3] %vm248, %v283
      %v289 = vld [vmem:[#allocation2] sm:$0xf]
      %v290 = vld [vmem:[#allocation2 + $0x4] sm:$0xf]
      %v291 = vld [vmem:[#allocation2 + $0x8] sm:$0xf]
      %v292 = vld [vmem:[#allocation2 + $0xc] sm:$0xf]
      %v295 = vrot.slane %v289, 1
      %v296 = vrot.slane %v290, 1
      %297 = vrot.lane.b32.xlu0 %v295, 32
      %v298 = vpop.permute.xlu0 %297
      %299 = vrot.lane.b32.xlu0 %v296, 32
      %v300 = vpop.permute.xlu0 %299
      %v303 = vrot.slane %v289, 2
      %v304 = vrot.slane %v290, 2
      %305 = vrot.lane.b32.xlu0 %v303, 64
      %v306 = vpop.permute.xlu0 %305
      %307 = vrot.lane.b32.xlu0 %v304, 64
      %v308 = vpop.permute.xlu0 %307
      %312 = vrot.lane.b32.xlu0 %v290, 96
      %v313 = vpop.permute.xlu0 %312
      %314 = vrot.lane.b32.xlu0 %v291, 96
      %v315 = vpop.permute.xlu0 %314
      %v318 = vrot.slane %v291, 1
      %v321 = vrot.slane %v291, 2
      %322 = vrot.lane.b32.xlu0 %v304, 32
      %v323 = vpop.permute.xlu0 %322
      %324 = vrot.lane.b32.xlu0 %v321, 32
      %v325 = vpop.permute.xlu0 %324
      %329 = vrot.lane.b32.xlu0 %v291, 64
      %v330 = vpop.permute.xlu0 %329
      %331 = vrot.lane.b32.xlu0 %v292, 64
      %v332 = vpop.permute.xlu0 %331
      %v335 = vrot.slane %v292, 1
      %336 = vrot.lane.b32.xlu0 %v318, 96
      %v337 = vpop.permute.xlu0 %336
      %338 = vrot.lane.b32.xlu0 %v335, 96
      %v339 = vpop.permute.xlu0 %338
      %v342 = vrot.slane %v292, 2
      %vm343 = vcmask 261120
      %v344 = vsel %vm343, %v289, %v298
      %v345 = vsel %vm343, %v290, %v300
      %vm346 = vcmask 523264
      %v347 = vsel %vm346, %v344, %v306
      %v348 = vsel %vm346, %v345, %v308
      %vm349 = vcmask 785408
      %v350 = vsel %vm349, %v347, %v313
      %v351 = vsel %vm349, %v348, %v315
      %v352 = vsel %vm343, %v296, %v323
      %v353 = vsel %vm343, %v318, %v325
      %v354 = vsel %vm346, %v352, %v330
      %v355 = vsel %vm346, %v353, %v332
      %v356 = vsel %vm349, %v354, %v337
      %v357 = vsel %vm349, %v355, %v339
      %v362 = vrot.slane %v356, 6
      %v363 = vrot.slane %v321, 4
      %v364 = vrot.slane %v357, 6
      %v365 = vrot.slane %v342, 4
      %vm366 = vcmask 1041408
      %v367 = vsel %vm366, %v350, %v362
      %vm368 = vcmask 1043456
      %v369 = vsel %vm368, %v367, %v363
      %v370 = vsel %vm366, %v351, %v364
      %v371 = vsel %vm368, %v370, %v365
      %v372 = vld [vmem:[%s1] sm:$0xff]
      %v373 = vld [vmem:[%s1 + $0x8] sm:$0xff]
      %v374 = vld [vmem:[%s1 + $0x10] sm:$0xff]
      %v375 = vld [vmem:[%s1 + $0x18] sm:$0xff]
      %v376 = vld [vmem:[%s1 + $0x20] sm:$0xff]
      %v377 = vld [vmem:[%s1 + $0x28] sm:$0xff]
      %v378 = vld [vmem:[%s1 + $0x30] sm:$0xff]
      %v379 = vld [vmem:[%s1 + $0x38] sm:$0xff]
      %v380 = vld [vmem:[%s1 + $0x40] sm:$0xff]
      %v381 = vld [vmem:[%s1 + $0x48] sm:$0xff]
      %v382 = vld [vmem:[%s1 + $0x50] sm:$0xff]
      %v383 = vld [vmem:[%s1 + $0x58] sm:$0xff]
      %v384 = vld [vmem:[%s1 + $0x60] sm:$0xff]
      %v385 = vld [vmem:[%s1 + $0x68] sm:$0xff]
      %v386 = vld [vmem:[%s1 + $0x70] sm:$0xff]
      %v387 = vld [vmem:[%s1 + $0x78] sm:$0xff]
      %v388 = vld [vmem:[%s1 + $0x80] sm:$0xff]
      %v389 = vld [vmem:[%s1 + $0x88] sm:$0xff]
      %v390 = vld [vmem:[%s1 + $0x90] sm:$0xff]
      %v391 = vld [vmem:[%s1 + $0x98] sm:$0xff]
      %v392 = vld [vmem:[%s1 + $0xa0] sm:$0xff]
      %v393 = vld [vmem:[%s1 + $0xa8] sm:$0xff]
      %v394 = vld [vmem:[%s1 + $0xb0] sm:$0xff]
      %v395 = vld [vmem:[%s1 + $0xb8] sm:$0xff]
      %v396 = vld [vmem:[%s1 + $0xc0] sm:$0xff]
      %v397 = vld [vmem:[%s1 + $0xc8] sm:$0xff]
      %v398 = vld [vmem:[%s1 + $0xd0] sm:$0xff]
      %v399 = vld [vmem:[%s1 + $0xd8] sm:$0xff]
      %v400 = vld [vmem:[%s1 + $0xe0] sm:$0xff]
      %v401 = vld [vmem:[%s1 + $0xe8] sm:$0xff]
      %v402 = vld [vmem:[%s1 + $0xf0] sm:$0xff]
      %v403 = vld [vmem:[%s1 + $0xf8] sm:$0xff]
      %v404 = vld [vmem:[%s1 + $0x100] sm:$0xff]
      %v405 = vld [vmem:[%s1 + $0x108] sm:$0xff]
      %v406 = vld [vmem:[%s1 + $0x110] sm:$0xff]
      %v407 = vld [vmem:[%s1 + $0x118] sm:$0xff]
      %v408 = vld [vmem:[%s2] sm:$0x1]
      %v410 = vperm.slane %v408, 0
      %412 = vst [vmem:[#allocation1] ss:$4 sm:$0xff] %v369
      %s413 = scalar_lea.vmem [#allocation1], 1
      %414 = vst [vmem:[%s413] ss:$4 sm:$0xff] %v371
      %v415 = vld.sshfl [vmem:[#allocation1] sm:$0xff pattern:$0x73625140]
      %v416 = vld.sshfl [vmem:[#allocation1 + $0x8] sm:$0xff pattern:$0x73625140]
      %v417 = vld.sshfl [vmem:[#allocation1 + $0x10] sm:$0xff pattern:$0x73625140]
      %v420 = vsel %vm343, %v417, 0
      %422 = vmatpush.msra.mxu0 %v387
      %423 = vmatpush.msra.mxu0 %v386
      %424 = vmatpush.msra.mxu0 %v385
      %425 = vmatpush.msra.mxu0 %v384
      %426 = vmatpush.msra.mxu0 %v383
      %427 = vmatpush.msra.mxu0 %v382
      %428 = vmatpush.msra.mxu0 %v381
      %429 = vmatpush.msra.mxu0 %v380
      %430 = vmatpush.msra.mxu0 %v379
      %431 = vmatpush.msra.mxu0 %v378
      %432 = vmatpush.msra.mxu0 %v377
      %433 = vmatpush.msra.mxu0 %v376
      %434 = vmatpush.msra.mxu0 %v375
      %435 = vmatpush.msra.mxu0 %v374
      %436 = vmatpush.msra.mxu0 %v373
      %437 = vmatpush.msra.mxu0 %v372
      %438 = vmatmul.f32.gmra.mxu0 %v415
      %v439 = vpop.f32.mrf.mxu0
      %v440 = vadd.f32 %v410, %v439
      %441 = vdwg.mxu0
      %442 = vmatpush.msra.mxu0 %v403
      %443 = vmatpush.msra.mxu0 %v402
      %444 = vmatpush.msra.mxu0 %v401
      %445 = vmatpush.msra.mxu0 %v400
      %446 = vmatpush.msra.mxu0 %v399
      %447 = vmatpush.msra.mxu0 %v398
      %448 = vmatpush.msra.mxu0 %v397
      %449 = vmatpush.msra.mxu0 %v396
      %450 = vmatpush.msra.mxu0 %v395
      %451 = vmatpush.msra.mxu0 %v394
      %452 = vmatpush.msra.mxu0 %v393
      %453 = vmatpush.msra.mxu0 %v392
      %454 = vmatpush.msra.mxu0 %v391
      %455 = vmatpush.msra.mxu0 %v390
      %456 = vmatpush.msra.mxu0 %v389
      %457 = vmatpush.msra.mxu0 %v388
      %458 = vmatmul.f32.gmra.mxu0 %v416
      %v459 = vpop.f32.mrf.mxu0
      %v460 = vadd.f32 %v440, %v459
      %461 = vdwg.mxu0
      %462 = vmatpush.msra.mxu0 0.0
      %463 = vmatpush.msra.mxu0 0.0
      %464 = vmatpush.msra.mxu0 0.0
      %465 = vmatpush.msra.mxu0 0.0
      %466 = vmatpush.msra.mxu0 0.0
      %467 = vmatpush.msra.mxu0 0.0
      %468 = vmatpush.msra.mxu0 0.0
      %469 = vmatpush.msra.mxu0 0.0
      %470 = vmatpush.msra.mxu0 0.0
      %471 = vmatpush.msra.mxu0 0.0
      %472 = vmatpush.msra.mxu0 0.0
      %473 = vmatpush.msra.mxu0 0.0
      %474 = vmatpush.msra.mxu0 %v407
      %475 = vmatpush.msra.mxu0 %v406
      %476 = vmatpush.msra.mxu0 %v405
      %477 = vmatpush.msra.mxu0 %v404
      %478 = vmatmul.f32.gmra.mxu0 %v420
      %v479 = vpop.f32.mrf.mxu0
      %v480 = vadd.f32 %v460, %v479
      %481 = vdwg.mxu0
      %vm482 = vcmp.ge.f32.partialorder %v480, 0.0
      %v483 = vmul.f32 %v480, 0.01
      %v484 = vsel %vm482, %v480, %v483
      %v486 = vrot.slane %v484, 2
      %s488 = scalar_lea.vmem [#allocation3], 4
      %489 = vst.msk [vmem:[%s488 + $0x1] sm:$0x3] %vm248, %v484
      %490 = vst.msk [vmem:[%s488 + $0x5] sm:$0x3] %vm248, %v486
      %v491 = vld [vmem:[#allocation3] sm:$0xf]
      %v492 = vld [vmem:[#allocation3 + $0x4] sm:$0xf]
      %v493 = vld [vmem:[#allocation3 + $0x8] sm:$0xf]
      %v494 = vld [vmem:[#allocation3 + $0xc] sm:$0xf]
      %v497 = vrot.slane %v491, 1
      %v498 = vrot.slane %v492, 1
      %499 = vrot.lane.b32.xlu0 %v497, 32
      %v500 = vpop.permute.xlu0 %499
      %501 = vrot.lane.b32.xlu0 %v498, 32
      %v502 = vpop.permute.xlu0 %501
      %v505 = vrot.slane %v491, 2
      %v506 = vrot.slane %v492, 2
      %507 = vrot.lane.b32.xlu0 %v505, 64
      %v508 = vpop.permute.xlu0 %507
      %509 = vrot.lane.b32.xlu0 %v506, 64
      %v510 = vpop.permute.xlu0 %509
      %514 = vrot.lane.b32.xlu0 %v492, 96
      %v515 = vpop.permute.xlu0 %514
      %516 = vrot.lane.b32.xlu0 %v493, 96
      %v517 = vpop.permute.xlu0 %516
      %v520 = vrot.slane %v493, 1
      %v523 = vrot.slane %v493, 2
      %524 = vrot.lane.b32.xlu0 %v506, 32
      %v525 = vpop.permute.xlu0 %524
      %526 = vrot.lane.b32.xlu0 %v523, 32
      %v527 = vpop.permute.xlu0 %526
      %531 = vrot.lane.b32.xlu0 %v493, 64
      %v532 = vpop.permute.xlu0 %531
      %533 = vrot.lane.b32.xlu0 %v494, 64
      %v534 = vpop.permute.xlu0 %533
      %v537 = vrot.slane %v494, 1
      %538 = vrot.lane.b32.xlu0 %v520, 96
      %v539 = vpop.permute.xlu0 %538
      %540 = vrot.lane.b32.xlu0 %v537, 96
      %v541 = vpop.permute.xlu0 %540
      %v544 = vrot.slane %v494, 2
      %v545 = vsel %vm343, %v491, %v500
      %v546 = vsel %vm343, %v492, %v502
      %v547 = vsel %vm346, %v545, %v508
      %v548 = vsel %vm346, %v546, %v510
      %v549 = vsel %vm349, %v547, %v515
      %v550 = vsel %vm349, %v548, %v517
      %v551 = vsel %vm343, %v498, %v525
      %v552 = vsel %vm343, %v520, %v527
      %v553 = vsel %vm346, %v551, %v532
      %v554 = vsel %vm346, %v552, %v534
      %v555 = vsel %vm349, %v553, %v539
      %v556 = vsel %vm349, %v554, %v541
      %v561 = vrot.slane %v555, 6
      %v562 = vrot.slane %v523, 4
      %v563 = vrot.slane %v556, 6
      %v564 = vrot.slane %v544, 4
      %v565 = vsel %vm366, %v549, %v561
      %v566 = vsel %vm368, %v565, %v562
      %v567 = vsel %vm366, %v550, %v563
      %v568 = vsel %vm368, %v567, %v564
      %v569 = vld [vmem:[%s3] sm:$0xff]
      %v570 = vld [vmem:[%s3 + $0x8] sm:$0xff]
      %v571 = vld [vmem:[%s3 + $0x10] sm:$0xff]
      %v572 = vld [vmem:[%s3 + $0x18] sm:$0xff]
      %v573 = vld [vmem:[%s3 + $0x20] sm:$0xff]
      %v574 = vld [vmem:[%s3 + $0x28] sm:$0xff]
      %v575 = vld [vmem:[%s3 + $0x30] sm:$0xff]
      %v576 = vld [vmem:[%s3 + $0x38] sm:$0xff]
      %v577 = vld [vmem:[%s3 + $0x40] sm:$0xff]
      %v578 = vld [vmem:[%s3 + $0x48] sm:$0xff]
      %v579 = vld [vmem:[%s3 + $0x50] sm:$0xff]
      %v580 = vld [vmem:[%s3 + $0x58] sm:$0xff]
      %v581 = vld [vmem:[%s3 + $0x60] sm:$0xff]
      %v582 = vld [vmem:[%s3 + $0x68] sm:$0xff]
      %v583 = vld [vmem:[%s3 + $0x70] sm:$0xff]
      %v584 = vld [vmem:[%s3 + $0x78] sm:$0xff]
      %v585 = vld [vmem:[%s3 + $0x80] sm:$0xff]
      %v586 = vld [vmem:[%s3 + $0x88] sm:$0xff]
      %v587 = vld [vmem:[%s3 + $0x90] sm:$0xff]
      %v588 = vld [vmem:[%s3 + $0x98] sm:$0xff]
      %v589 = vld [vmem:[%s3 + $0xa0] sm:$0xff]
      %v590 = vld [vmem:[%s3 + $0xa8] sm:$0xff]
      %v591 = vld [vmem:[%s3 + $0xb0] sm:$0xff]
      %v592 = vld [vmem:[%s3 + $0xb8] sm:$0xff]
      %v593 = vld [vmem:[%s3 + $0xc0] sm:$0xff]
      %v594 = vld [vmem:[%s3 + $0xc8] sm:$0xff]
      %v595 = vld [vmem:[%s3 + $0xd0] sm:$0xff]
      %v596 = vld [vmem:[%s3 + $0xd8] sm:$0xff]
      %v597 = vld [vmem:[%s3 + $0xe0] sm:$0xff]
      %v598 = vld [vmem:[%s3 + $0xe8] sm:$0xff]
      %v599 = vld [vmem:[%s3 + $0xf0] sm:$0xff]
      %v600 = vld [vmem:[%s3 + $0xf8] sm:$0xff]
      %v601 = vld [vmem:[%s3 + $0x100] sm:$0xff]
      %v602 = vld [vmem:[%s3 + $0x108] sm:$0xff]
      %v603 = vld [vmem:[%s3 + $0x110] sm:$0xff]
      %v604 = vld [vmem:[%s3 + $0x118] sm:$0xff]
      %v605 = vld [vmem:[%s4] sm:$0x1]
      %v607 = vperm.slane %v605, 0
      %609 = vst [vmem:[#allocation1] ss:$4 sm:$0xff] %v566
      %s610 = scalar_lea.vmem [#allocation1], 1
      %611 = vst [vmem:[%s610] ss:$4 sm:$0xff] %v568
      %v612 = vld.sshfl [vmem:[#allocation1] sm:$0xff pattern:$0x73625140]
      %v613 = vld.sshfl [vmem:[#allocation1 + $0x8] sm:$0xff pattern:$0x73625140]
      %v614 = vld.sshfl [vmem:[#allocation1 + $0x10] sm:$0xff pattern:$0x73625140]
      %v617 = vsel %vm343, %v614, 0
      %619 = vmatpush.msra.mxu0 %v584
      %620 = vmatpush.msra.mxu0 %v583
      %621 = vmatpush.msra.mxu0 %v582
      %622 = vmatpush.msra.mxu0 %v581
      %623 = vmatpush.msra.mxu0 %v580
      %624 = vmatpush.msra.mxu0 %v579
      %625 = vmatpush.msra.mxu0 %v578
      %626 = vmatpush.msra.mxu0 %v577
      %627 = vmatpush.msra.mxu0 %v576
      %628 = vmatpush.msra.mxu0 %v575
      %629 = vmatpush.msra.mxu0 %v574
      %630 = vmatpush.msra.mxu0 %v573
      %631 = vmatpush.msra.mxu0 %v572
      %632 = vmatpush.msra.mxu0 %v571
      %633 = vmatpush.msra.mxu0 %v570
      %634 = vmatpush.msra.mxu0 %v569
      %635 = vmatmul.f32.gmra.mxu0 %v612
      %v636 = vpop.f32.mrf.mxu0
      %v637 = vadd.f32 %v607, %v636
      %638 = vdwg.mxu0
      %639 = vmatpush.msra.mxu0 %v600
      %640 = vmatpush.msra.mxu0 %v599
      %641 = vmatpush.msra.mxu0 %v598
      %642 = vmatpush.msra.mxu0 %v597
      %643 = vmatpush.msra.mxu0 %v596
      %644 = vmatpush.msra.mxu0 %v595
      %645 = vmatpush.msra.mxu0 %v594
      %646 = vmatpush.msra.mxu0 %v593
      %647 = vmatpush.msra.mxu0 %v592
      %648 = vmatpush.msra.mxu0 %v591
      %649 = vmatpush.msra.mxu0 %v590
      %650 = vmatpush.msra.mxu0 %v589
      %651 = vmatpush.msra.mxu0 %v588
      %652 = vmatpush.msra.mxu0 %v587
      %653 = vmatpush.msra.mxu0 %v586
      %654 = vmatpush.msra.mxu0 %v585
      %655 = vmatmul.f32.gmra.mxu0 %v613
      %v656 = vpop.f32.mrf.mxu0
      %v657 = vadd.f32 %v637, %v656
      %658 = vdwg.mxu0
      %659 = vmatpush.msra.mxu0 0.0
      %660 = vmatpush.msra.mxu0 0.0
      %661 = vmatpush.msra.mxu0 0.0
      %662 = vmatpush.msra.mxu0 0.0
      %663 = vmatpush.msra.mxu0 0.0
      %664 = vmatpush.msra.mxu0 0.0
      %665 = vmatpush.msra.mxu0 0.0
      %666 = vmatpush.msra.mxu0 0.0
      %667 = vmatpush.msra.mxu0 0.0
      %668 = vmatpush.msra.mxu0 0.0
      %669 = vmatpush.msra.mxu0 0.0
      %670 = vmatpush.msra.mxu0 0.0
      %671 = vmatpush.msra.mxu0 %v604
      %672 = vmatpush.msra.mxu0 %v603
      %673 = vmatpush.msra.mxu0 %v602
      %674 = vmatpush.msra.mxu0 %v601
      %675 = vmatmul.f32.gmra.mxu0 %v617
      %v676 = vpop.f32.mrf.mxu0
      %v677 = vadd.f32 %v657, %v676
      %678 = vdwg.mxu0
      %vm679 = vcmp.ge.f32.partialorder %v677, 0.0
      %v680 = vmul.f32 %v677, 0.01
      %v681 = vsel %vm679, %v677, %v680
      %vm682 = vcmask 257024
      %683 = vst.msk [vmem:[%s222] sm:$0xf] %vm682, %v681
      %p684 = scmp.lt.s32.totalorder %s16, 1
      %s685 = scalar_select %p684, %s16, 1
      %s686 = smul.addr %s685, 4
      %s687 = scalar_lea.vmem %s5, %s686
      // Predicated region
      $region45: #{encoder_forward_impl.8} parent=39 // pred_check
        %p688 = pneg %p144
      $region46: #{encoder_forward_impl.8} parent=39 // pred_check_branch
        %690 = sbr.rel (%p688) target = $region48
      $region47: #{encoder_forward_impl.8} parent=39 // pred_region
        _
      $region48: #{encoder_forward_impl.8} parent=39 // pred_fallthru
        _
    $region40: #{encoder_forward_impl.8} parent=5 // pred_fallthru
      _
    %p691 = scmp.le.s32.totalorder 2, %s11
    // Predicated region
    $region49: #{encoder_forward_impl.8} parent=5 // pred_check
      %p692 = pneg %p691
    $region50: #{encoder_forward_impl.8} parent=5 // pred_check_branch
      %694 = sbr.rel (%p692) target = $region52
    $region51: #{encoder_forward_impl.8} parent=5 // pred_region
      %s695 = ssub.s32 %s11, 2
      // Predicated region
      $region53: #{encoder_forward_impl.8} parent=51 // pred_check
        %p696 = pneg %p150
      $region54: #{encoder_forward_impl.8} parent=51 // pred_check_branch
        %698 = sbr.rel (%p696) target = $region56
      $region55: #{encoder_forward_impl.8} parent=51 // pred_region
        %p699 = scmp.lt.s32.totalorder %s17, 1
        %s700 = scalar_select %p699, %s17, 1
        %s701 = smul.addr %s700, 4
        %s702 = scalar_lea.vmem %s5, %s701
      $region56: #{encoder_forward_impl.8} parent=51 // pred_fallthru
        _
    $region52: #{encoder_forward_impl.8} parent=5 // pred_fallthru
      _
  $region6: #{encoder_forward_impl.8} parent=0 // loop_footer
    %s15 = sadd.s32 1, %s11
  $region7: #{encoder_forward_impl.8} parent=0 // loop_footer_branch
    %10 = sbr.rel target = $region3
  $region8: #{encoder_forward_impl.8} parent=0 // loop_exit
    _

// kernel: encoder_forward_impl.7
$region0: #{encoder_forward_impl.7}
  #allocation0 [shape = 'u32[]', space=smem, size = 0x4, offset = 0x4, fixed_abs, tag = 'smem constant byte address 0x4 - core index']
  #allocation1 [shape = 'u32[72,128]{1,0:T(1,128)}', space=vmem, size = 0x9000, scoped, tag = 'internal scratch']
  #allocation2 [shape = 'f32[6,6,16]{2,1,0:T(8,128)}', space=vmem, size = 0x6000, scoped, tag = 'scratch operand']
  #allocation3 [shape = 'f32[6,6,32]{2,1,0:T(8,128)}', space=vmem, size = 0x6000, scoped, tag = 'scratch operand']
  %s0 = inlined_call_operand.vmem [shape: f32[2,8,8,16], index: 0, kind: input, shape index: {}]
  %s1 = inlined_call_operand.vmem [shape: f32[144,32], index: 1, kind: input, shape index: {}]
  %s2 = inlined_call_operand.vmem [shape: f32[1,32], index: 2, kind: input, shape index: {}]
  %s3 = inlined_call_operand.vmem [shape: f32[288,32], index: 3, kind: input, shape index: {}]
  %s4 = inlined_call_operand.vmem [shape: f32[1,32], index: 4, kind: input, shape index: {}]
  %s5 = inlined_call_operand.vmem [shape: f32[2,16,32], index: 5, kind: output, shape index: {}]
  %s6 = sld [smem:[#allocation0]]
  $region57: #{encoder_forward_impl.7} parent=0
    _
  %s8 = ssub.s32 1, %s6
  %s9 = scalar_select 0, %s8, %s6
  loop: start=0, step=1, limit=4
  $region2: #{encoder_forward_impl.7} parent=0 // loop_pre_header
    _
  $region3: #{encoder_forward_impl.7} parent=0 // loop_header
    %s11 = sphi 0, %s15
    %p12 = scmp.ge.s32.totalorder %s11, 4
    %s21 = sphi 0, %s23
    %s24 = sphi 0, %s21
    %s25 = sphi 0, %s24
    %s41 = sphi 0, %s25
    %s45 = sphi 0, %s45
    %s47 = sphi 0, %s45
    %s48 = sphi 0, %s47
    %s62 = sphi 0, %s48
    %s66 = sphi 0, %s66
    %s68 = sphi 0, %s66
    %s69 = sphi 0, %s68
    %s83 = sphi 0, %s69
    %s87 = sphi 0, %s87
    %s89 = sphi 0, %s87
    %s90 = sphi 0, %s89
    %s104 = sphi 0, %s90
    %s108 = sphi 0, %s108
    %s110 = sphi 0, %s108
    %s111 = sphi 0, %s110
    %s125 = sphi 0, %s111
    %s131 = sphi 0, %s133
    %s134 = sphi 0, %s131
    %s135 = sphi 0, %s134
    %s151 = sphi 0, %s135
  $region4: #{encoder_forward_impl.7} parent=0 // loop_header_branch
    %14 = sbr.rel (%p12) target = $region8
  $region5: #{encoder_forward_impl.7} parent=0 // loop_body
    %s16 = ssub.s32 %s11, 1
    %s17 = ssub.s32 %s11, 2
    %s18 = sadd.s32 %s11, 1
    %s19 = ssub.s32 %s11, %s18
    %p20 = scmp.eq.s32.totalorder %s19, 0
    %s22 = sadd.s32 %s21, 1
    %s23 = scalar_select %p20, %s21, %s22
    %p26 = pneg %p20
    %p27 = scmp.eq.s32.totalorder %s11, 1
    %p28 = por %p26, %p27
    %p29 = scmp.ne.s32.totalorder %s21, %s24
    %p30 = scmp.eq.s32.totalorder %s11, 0
    %p31 = por %p29, %p30
    %p32 = scmp.ne.s32.totalorder %s21, %s24
    %p33 = scmp.eq.s32.totalorder %s16, 1
    %p34 = por %p32, %p33
    %p35 = scmp.ne.s32.totalorder %s24, %s25
    %p36 = scmp.eq.s32.totalorder %s16, 0
    %p37 = por %p35, %p36
    %p38 = scmp.ne.s32.totalorder %s24, %s25
    %p39 = scmp.eq.s32.totalorder %s17, 1
    %p40 = por %p38, %p39
    %p42 = scmp.ne.s32.totalorder %s25, %s41
    %p43 = scmp.eq.s32.totalorder %s17, 0
    %p44 = por %p42, %p43
    %s46 = sadd.s32 %s45, 1
    %p49 = scmp.eq.s32.totalorder %s11, 1
    %p50 = scmp.ne.s32.totalorder %s45, %s47
    %p51 = scmp.eq.s32.totalorder %s11, 0
    %p52 = por %p50, %p51
    %p53 = scmp.ne.s32.totalorder %s45, %s47
    %p54 = scmp.eq.s32.totalorder %s16, 1
    %p55 = por %p53, %p54
    %p56 = scmp.ne.s32.totalorder %s47, %s48
    %p57 = scmp.eq.s32.totalorder %s16, 0
    %p58 = por %p56, %p57
    %p59 = scmp.ne.s32.totalorder %s47, %s48
    %p60 = scmp.eq.s32.totalorder %s17, 1
    %p61 = por %p59, %p60
    %p63 = scmp.ne.s32.totalorder %s48, %s62
    %p64 = scmp.eq.s32.totalorder %s17, 0
    %p65 = por %p63, %p64
    %s67 = sadd.s32 %s66, 1
    %p70 = scmp.eq.s32.totalorder %s11, 1
    %p71 = scmp.ne.s32.totalorder %s66, %s68
    %p72 = scmp.eq.s32.totalorder %s11, 0
    %p73 = por %p71, %p72
    %p74 = scmp.ne.s32.totalorder %s66, %s68
    %p75 = scmp.eq.s32.totalorder %s16, 1
    %p76 = por %p74, %p75
    %p77 = scmp.ne.s32.totalorder %s68, %s69
    %p78 = scmp.eq.s32.totalorder %s16, 0
    %p79 = por %p77, %p78
    %p80 = scmp.ne.s32.totalorder %s68, %s69
    %p81 = scmp.eq.s32.totalorder %s17, 1
    %p82 = por %p80, %p81
    %p84 = scmp.ne.s32.totalorder %s69, %s83
    %p85 = scmp.eq.s32.totalorder %s17, 0
    %p86 = por %p84, %p85
    %s88 = sadd.s32 %s87, 1
    %p91 = scmp.eq.s32.totalorder %s11, 1
    %p92 = scmp.ne.s32.totalorder %s87, %s89
    %p93 = scmp.eq.s32.totalorder %s11, 0
    %p94 = por %p92, %p93
    %p95 = scmp.ne.s32.totalorder %s87, %s89
    %p96 = scmp.eq.s32.totalorder %s16, 1
    %p97 = por %p95, %p96
    %p98 = scmp.ne.s32.totalorder %s89, %s90
    %p99 = scmp.eq.s32.totalorder %s16, 0
    %p100 = por %p98, %p99
    %p101 = scmp.ne.s32.totalorder %s89, %s90
    %p102 = scmp.eq.s32.totalorder %s17, 1
    %p103 = por %p101, %p102
    %p105 = scmp.ne.s32.totalorder %s90, %s104
    %p106 = scmp.eq.s32.totalorder %s17, 0
    %p107 = por %p105, %p106
    %s109 = sadd.s32 %s108, 1
    %p112 = scmp.eq.s32.totalorder %s11, 1
    %p113 = scmp.ne.s32.totalorder %s108, %s110
    %p114 = scmp.eq.s32.totalorder %s11, 0
    %p115 = por %p113, %p114
    %p116 = scmp.ne.s32.totalorder %s108, %s110
    %p117 = scmp.eq.s32.totalorder %s16, 1
    %p118 = por %p116, %p117
    %p119 = scmp.ne.s32.totalorder %s110, %s111
    %p120 = scmp.eq.s32.totalorder %s16, 0
    %p121 = por %p119, %p120
    %p122 = scmp.ne.s32.totalorder %s110, %s111
    %p123 = scmp.eq.s32.totalorder %s17, 1
    %p124 = por %p122, %p123
    %p126 = scmp.ne.s32.totalorder %s111, %s125
    %p127 = scmp.eq.s32.totalorder %s17, 0
    %p128 = por %p126, %p127
    %s129 = ssub.s32 %s11, %s18
    %p130 = scmp.eq.s32.totalorder %s129, 0
    %s132 = sadd.s32 %s131, 1
    %s133 = scalar_select %p130, %s131, %s132
    %p136 = pneg %p130
    %p137 = scmp.eq.s32.totalorder %s11, 1
    %p138 = por %p136, %p137
    %p139 = scmp.ne.s32.totalorder %s131, %s134
    %p140 = scmp.eq.s32.totalorder %s11, 0
    %p141 = por %p139, %p140
    %p142 = scmp.ne.s32.totalorder %s131, %s134
    %p143 = scmp.eq.s32.totalorder %s16, 1
    %p144 = por %p142, %p143
    %p145 = scmp.ne.s32.totalorder %s134, %s135
    %p146 = scmp.eq.s32.totalorder %s16, 0
    %p147 = por %p145, %p146
    %p148 = scmp.ne.s32.totalorder %s134, %s135
    %p149 = scmp.eq.s32.totalorder %s17, 1
    %p150 = por %p148, %p149
    %p152 = scmp.ne.s32.totalorder %s135, %s151
    %p153 = scmp.eq.s32.totalorder %s17, 0
    %p154 = por %p152, %p153
    %p155 = scmp.le.s32.totalorder 1, %s11
    %p156 = scmp.lt.s32.totalorder %s11, 3
    %p157 = pnand %p155, %p156
    %p158 = pneg %p157
    // Predicated region
    $region9: #{encoder_forward_impl.7} parent=5 // pred_check
      _
    $region10: #{encoder_forward_impl.7} parent=5 // pred_check_branch
      %160 = sbr.rel (%p157) target = $region12
    $region11: #{encoder_forward_impl.7} parent=5 // pred_region
      %s161 = ssub.s32 %s11, 1
      // Predicated region
      $region13: #{encoder_forward_impl.7} parent=11 // pred_check
        %p162 = pneg %p58
      $region14: #{encoder_forward_impl.7} parent=11 // pred_check_branch
        %164 = sbr.rel (%p162) target = $region16
      $region15: #{encoder_forward_impl.7} parent=11 // pred_region
        _
      $region16: #{encoder_forward_impl.7} parent=11 // pred_fallthru
        _
      // Predicated region
      $region17: #{encoder_forward_impl.7} parent=11 // pred_check
        %p165 = pneg %p79
      $region18: #{encoder_forward_impl.7} parent=11 // pred_check_branch
        %167 = sbr.rel (%p165) target = $region20
      $region19: #{encoder_forward_impl.7} parent=11 // pred_region
        _
      $region20: #{encoder_forward_impl.7} parent=11 // pred_fallthru
        _
      // Predicated region
      $region21: #{encoder_forward_impl.7} parent=11 // pred_check
        %p168 = pneg %p100
      $region22: #{encoder_forward_impl.7} parent=11 // pred_check_branch
        %170 = sbr.rel (%p168) target = $region24
      $region23: #{encoder_forward_impl.7} parent=11 // pred_region
        _
      $region24: #{encoder_forward_impl.7} parent=11 // pred_fallthru
        _
      // Predicated region
      $region25: #{encoder_forward_impl.7} parent=11 // pred_check
        %p171 = pneg %p121
      $region26: #{encoder_forward_impl.7} parent=11 // pred_check_branch
        %173 = sbr.rel (%p171) target = $region28
      $region27: #{encoder_forward_impl.7} parent=11 // pred_region
        _
      $region28: #{encoder_forward_impl.7} parent=11 // pred_fallthru
        _
    $region12: #{encoder_forward_impl.7} parent=5 // pred_fallthru
      _
    %p174 = scmp.lt.s32.totalorder %s11, 2
    // Predicated region
    $region29: #{encoder_forward_impl.7} parent=5 // pred_check
      %p175 = pneg %p174
    $region30: #{encoder_forward_impl.7} parent=5 // pred_check_branch
      %177 = sbr.rel (%p175) target = $region32
    $region31: #{encoder_forward_impl.7} parent=5 // pred_region
      // Predicated region
      $region33: #{encoder_forward_impl.7} parent=31 // pred_check
        %p178 = pneg %p31
      $region34: #{encoder_forward_impl.7} parent=31 // pred_check_branch
        %180 = sbr.rel (%p178) target = $region36
      $region35: #{encoder_forward_impl.7} parent=31 // pred_region
        %p181 = scmp.lt.s32.totalorder %s11, 1
        %s182 = scalar_select %p181, %s11, 1
        %s183 = smul.addr %s182, 8
        %s184 = smul.addr %s183, 8
        %s185 = scalar_lea.vmem %s0, %s184
      $region36: #{encoder_forward_impl.7} parent=31 // pred_fallthru
        _
    $region32: #{encoder_forward_impl.7} parent=5 // pred_fallthru
      _
    %p186 = scmp.le.s32.totalorder 1, %s11
    %p187 = scmp.lt.s32.totalorder %s11, 3
    %p188 = pnand %p186, %p187
    %p189 = pneg %p188
    // Predicated region
    $region37: #{encoder_forward_impl.7} parent=5 // pred_check
      _
    $region38: #{encoder_forward_impl.7} parent=5 // pred_check_branch
      %191 = sbr.rel (%p188) target = $region40
    $region39: #{encoder_forward_impl.7} parent=5 // pred_region
      %s192 = ssub.s32 %s11, 1
      %p193 = scmp.lt.s32.totalorder %s16, 1
      %s194 = scalar_select %p193, %s16, 1
      %s195 = smul.addr %s194, 8
      %s196 = smul.addr %s195, 8
      %s197 = scalar_lea.vmem %s0, %s196
      %p198 = pneg %p37
      %p199 = pneg %p34
      %p200 = pneg %p58
      %p201 = pneg %p55
      %p202 = pneg %p79
      %p203 = pneg %p76
      %p204 = pneg %p100
      %p205 = pneg %p97
      %p206 = pneg %p121
      %p207 = pneg %p118
      %p208 = pneg %p147
      %p209 = pneg %p144
      %p210 = scmp.lt.s32.totalorder %s16, 1
      %s211 = scalar_select %p210, %s16, 1
      %s212 = smul.addr %s211, 2
      %s213 = smul.addr %s212, 8
      %s214 = scalar_lea.vmem %s5, %s213
      %p215 = scmp.lt.s32.totalorder %s16, 1
      %s216 = scalar_select %p215, %s16, 1
      %s217 = smul.addr %s216, 8
      %s218 = smul.addr %s217, 8
      %s219 = scalar_lea.vmem %s0, %s218
      %p220 = scmp.lt.s32.totalorder %s16, 1
      %s221 = scalar_select %p220, %s16, 1
      %s222 = smul.addr %s221, 2
      %s223 = smul.addr %s222, 8
      %s224 = scalar_lea.vmem %s5, %s223
      %p225 = scmp.eq.s32.totalorder %s16, 0
      // Predicated region
      $region41: #{encoder_forward_impl.7} parent=39 // pred_check
        %p226 = pneg %p225
      $region42: #{encoder_forward_impl.7} parent=39 // pred_check_branch
        %228 = sbr.rel (%p226) target = $region44
      $region43: #{encoder_forward_impl.7} parent=39 // pred_region
        %vm229 = vcmask 128000
        %230 = vst.msk [vmem:[#allocation2] sm:$0x3f] %vm229, 0.0
        %231 = vst.msk [vmem:[#allocation2 + $0x8] sm:$0x3f] %vm229, 0.0
        %232 = vst.msk [vmem:[#allocation2 + $0x10] sm:$0x3f] %vm229, 0.0
        %233 = vst.msk [vmem:[#allocation2 + $0x18] sm:$0x3f] %vm229, 0.0
        %234 = vst.msk [vmem:[#allocation2 + $0x20] sm:$0x3f] %vm229, 0.0
        %235 = vst.msk [vmem:[#allocation2 + $0x28] sm:$0x3f] %vm229, 0.0
        %vm236 = vcmask 259072
        %237 = vst.msk [vmem:[#allocation3] sm:$0x3f] %vm236, 0.0
        %238 = vst.msk [vmem:[#allocation3 + $0x8] sm:$0x3f] %vm236, 0.0
        %239 = vst.msk [vmem:[#allocation3 + $0x10] sm:$0x3f] %vm236, 0.0
        %240 = vst.msk [vmem:[#allocation3 + $0x18] sm:$0x3f] %vm236, 0.0
        %241 = vst.msk [vmem:[#allocation3 + $0x20] sm:$0x3f] %vm236, 0.0
        %242 = vst.msk [vmem:[#allocation3 + $0x28] sm:$0x3f] %vm236, 0.0
      $region44: #{encoder_forward_impl.7} parent=39 // pred_fallthru
        _
      %v243 = vld [vmem:[%s219] sm:$0xff]
      %v244 = vld [vmem:[%s219 + $0x8] sm:$0xff]
      %v245 = vld [vmem:[%s219 + $0x10] sm:$0xff]
      %v246 = vld [vmem:[%s219 + $0x18] sm:$0xff]
      %v247 = vld [vmem:[%s219 + $0x20] sm:$0xff]
      %v248 = vld [vmem:[%s219 + $0x28] sm:$0xff]
      %v249 = vld [vmem:[%s219 + $0x30] sm:$0xff]
      %v250 = vld [vmem:[%s219 + $0x38] sm:$0xff]
      %v251 = vmax.f32 %v243, %v244
      %v252 = vmax.f32 %v245, %v246
      %v253 = vmax.f32 %v247, %v248
      %v254 = vmax.f32 %v249, %v250
      %v259 = vrot.slane %v251, 2
      %v260 = vrot.slane %v251, 4
      %v261 = vrot.slane %v251, 6
      %v262 = vrot.slane %v252, 2
      %v263 = vrot.slane %v252, 4
      %v264 = vrot.slane %v252, 6
      %v265 = vrot.slane %v253, 2
      %v266 = vrot.slane %v253, 4
      %v267 = vrot.slane %v253, 6
      %v268 = vrot.slane %v254, 2
      %v269 = vrot.slane %v254, 4
      %v270 = vrot.slane %v254, 6
      %vm283 = vcmask 123904
      %v284 = vsel %vm283, %v251, -inf
      %v285 = vrot.slane %v284, 4
      %v286 = vmax.f32 %v284, %v285
      %v287 = vrot.slane %v286, 2
      %v288 = vmax.f32 %v286, %v287
      %v289 = vrot.slane %v288, 1
      %v290 = vmax.f32 %v288, %v289
      %v291 = vsel %vm283, %v259, -inf
      %v292 = vrot.slane %v291, 4
      %v293 = vmax.f32 %v291, %v292
      %v294 = vrot.slane %v293, 2
      %v295 = vmax.f32 %v293, %v294
      %v296 = vrot.slane %v295, 1
      %v297 = vmax.f32 %v295, %v296
      %v298 = vsel %vm283, %v260, -inf
      %v299 = vrot.slane %v298, 4
      %v300 = vmax.f32 %v298, %v299
      %v301 = vrot.slane %v300, 2
      %v302 = vmax.f32 %v300, %v301
      %v303 = vrot.slane %v302, 1
      %v304 = vmax.f32 %v302, %v303
      %v305 = vsel %vm283, %v261, -inf
      %v306 = vrot.slane %v305, 4
      %v307 = vmax.f32 %v305, %v306
      %v308 = vrot.slane %v307, 2
      %v309 = vmax.f32 %v307, %v308
      %v310 = vrot.slane %v309, 1
      %v311 = vmax.f32 %v309, %v310
      %v312 = vsel %vm283, %v252, -inf
      %v313 = vrot.slane %v312, 4
      %v314 = vmax.f32 %v312, %v313
      %v315 = vrot.slane %v314, 2
      %v316 = vmax.f32 %v314, %v315
      %v317 = vrot.slane %v316, 1
      %v318 = vmax.f32 %v316, %v317
      %v319 = vsel %vm283, %v262, -inf
      %v320 = vrot.slane %v319, 4
      %v321 = vmax.f32 %v319, %v320
      %v322 = vrot.slane %v321, 2
      %v323 = vmax.f32 %v321, %v322
      %v324 = vrot.slane %v323, 1
      %v325 = vmax.f32 %v323, %v324
      %v326 = vsel %vm283, %v263, -inf
      %v327 = vrot.slane %v326, 4
      %v328 = vmax.f32 %v326, %v327
      %v329 = vrot.slane %v328, 2
      %v330 = vmax.f32 %v328, %v329
      %v331 = vrot.slane %v330, 1
      %v332 = vmax.f32 %v330, %v331
      %v333 = vsel %vm283, %v264, -inf
      %v334 = vrot.slane %v333, 4
      %v335 = vmax.f32 %v333, %v334
      %v336 = vrot.slane %v335, 2
      %v337 = vmax.f32 %v335, %v336
      %v338 = vrot.slane %v337, 1
      %v339 = vmax.f32 %v337, %v338
      %v340 = vsel %vm283, %v253, -inf
      %v341 = vrot.slane %v340, 4
      %v342 = vmax.f32 %v340, %v341
      %v343 = vrot.slane %v342, 2
      %v344 = vmax.f32 %v342, %v343
      %v345 = vrot.slane %v344, 1
      %v346 = vmax.f32 %v344, %v345
      %v347 = vsel %vm283, %v265, -inf
      %v348 = vrot.slane %v347, 4
      %v349 = vmax.f32 %v347, %v348
      %v350 = vrot.slane %v349, 2
      %v351 = vmax.f32 %v349, %v350
      %v352 = vrot.slane %v351, 1
      %v353 = vmax.f32 %v351, %v352
      %v354 = vsel %vm283, %v266, -inf
      %v355 = vrot.slane %v354, 4
      %v356 = vmax.f32 %v354, %v355
      %v357 = vrot.slane %v356, 2
      %v358 = vmax.f32 %v356, %v357
      %v359 = vrot.slane %v358, 1
      %v360 = vmax.f32 %v358, %v359
      %v361 = vsel %vm283, %v267, -inf
      %v362 = vrot.slane %v361, 4
      %v363 = vmax.f32 %v361, %v362
      %v364 = vrot.slane %v363, 2
      %v365 = vmax.f32 %v363, %v364
      %v366 = vrot.slane %v365, 1
      %v367 = vmax.f32 %v365, %v366
      %v368 = vsel %vm283, %v254, -inf
      %v369 = vrot.slane %v368, 4
      %v370 = vmax.f32 %v368, %v369
      %v371 = vrot.slane %v370, 2
      %v372 = vmax.f32 %v370, %v371
      %v373 = vrot.slane %v372, 1
      %v374 = vmax.f32 %v372, %v373
      %v375 = vsel %vm283, %v268, -inf
      %v376 = vrot.slane %v375, 4
      %v377 = vmax.f32 %v375, %v376
      %v378 = vrot.slane %v377, 2
      %v379 = vmax.f32 %v377, %v378
      %v380 = vrot.slane %v379, 1
      %v381 = vmax.f32 %v379, %v380
      %v382 = vsel %vm283, %v269, -inf
      %v383 = vrot.slane %v382, 4
      %v384 = vmax.f32 %v382, %v383
      %v385 = vrot.slane %v384, 2
      %v386 = vmax.f32 %v384, %v385
      %v387 = vrot.slane %v386, 1
      %v388 = vmax.f32 %v386, %v387
      %v389 = vsel %vm283, %v270, -inf
      %v390 = vrot.slane %v389, 4
      %v391 = vmax.f32 %v389, %v390
      %v392 = vrot.slane %v391, 2
      %v393 = vmax.f32 %v391, %v392
      %v394 = vrot.slane %v393, 1
      %v395 = vmax.f32 %v393, %v394
      %vm412 = vcmask 1041409
      %v413 = vsel %vm412, %v297, %v290
      %vm414 = vcmask 1042434
      %v415 = vsel %vm414, %v304, %v413
      %vm416 = vcmask 1043459
      %v417 = vsel %vm416, %v311, %v415
      %v418 = vsel %vm412, %v325, %v318
      %v419 = vsel %vm414, %v332, %v418
      %v420 = vsel %vm416, %v339, %v419
      %v421 = vsel %vm412, %v353, %v346
      %v422 = vsel %vm414, %v360, %v421
      %v423 = vsel %vm416, %v367, %v422
      %v424 = vsel %vm412, %v381, %v374
      %v425 = vsel %vm414, %v388, %v424
      %v426 = vsel %vm416, %v395, %v425
      %s431 = scalar_lea.vmem [#allocation2], 8
      %vm432 = vcmask 125952
      %433 = vst.msk [vmem:[%s431 + $0x1] sm:$0xf] %vm432, %v417
      %434 = vst.msk [vmem:[%s431 + $0x9] sm:$0xf] %vm432, %v420
      %435 = vst.msk [vmem:[%s431 + $0x11] sm:$0xf] %vm432, %v423
      %436 = vst.msk [vmem:[%s431 + $0x19] sm:$0xf] %vm432, %v426
      %v437 = vld [vmem:[#allocation2] sm:$0x3f]
      %v438 = vld [vmem:[#allocation2 + $0x8] sm:$0x3f]
      %v439 = vld [vmem:[#allocation2 + $0x10] sm:$0x3f]
      %v440 = vld [vmem:[#allocation2 + $0x18] sm:$0x3f]
      %v441 = vld [vmem:[#allocation2 + $0x20] sm:$0x3f]
      %v442 = vld [vmem:[#allocation2 + $0x28] sm:$0x3f]
      %v447 = vrot.slane %v437, 1
      %v448 = vrot.slane %v438, 1
      %v449 = vrot.slane %v439, 1
      %v450 = vrot.slane %v440, 1
      %451 = vrot.lane.b32.xlu0 %v447, 16
      %v452 = vpop.permute.xlu0 %451
      %453 = vrot.lane.b32.xlu0 %v448, 16
      %v454 = vpop.permute.xlu0 %453
      %455 = vrot.lane.b32.xlu0 %v449, 16
      %v456 = vpop.permute.xlu0 %455
      %457 = vrot.lane.b32.xlu0 %v450, 16
      %v458 = vpop.permute.xlu0 %457
      %v463 = vrot.slane %v437, 2
      %v464 = vrot.slane %v438, 2
      %v465 = vrot.slane %v439, 2
      %v466 = vrot.slane %v440, 2
      %467 = vrot.lane.b32.xlu0 %v463, 32
      %v468 = vpop.permute.xlu0 %467
      %469 = vrot.lane.b32.xlu0 %v464, 32
      %v470 = vpop.permute.xlu0 %469
      %471 = vrot.lane.b32.xlu0 %v465, 32
      %v472 = vpop.permute.xlu0 %471
      %473 = vrot.lane.b32.xlu0 %v466, 32
      %v474 = vpop.permute.xlu0 %473
      %480 = vrot.lane.b32.xlu0 %v438, 48
      %v481 = vpop.permute.xlu0 %480
      %482 = vrot.lane.b32.xlu0 %v439, 48
      %v483 = vpop.permute.xlu0 %482
      %484 = vrot.lane.b32.xlu0 %v440, 48
      %v485 = vpop.permute.xlu0 %484
      %486 = vrot.lane.b32.xlu0 %v441, 48
      %v487 = vpop.permute.xlu0 %486
      %v492 = vrot.slane %v441, 1
      %493 = vrot.lane.b32.xlu0 %v448, 64
      %v494 = vpop.permute.xlu0 %493
      %495 = vrot.lane.b32.xlu0 %v449, 64
      %v496 = vpop.permute.xlu0 %495
      %497 = vrot.lane.b32.xlu0 %v450, 64
      %v498 = vpop.permute.xlu0 %497
      %499 = vrot.lane.b32.xlu0 %v492, 64
      %v500 = vpop.permute.xlu0 %499
      %v505 = vrot.slane %v441, 2
      %506 = vrot.lane.b32.xlu0 %v464, 80
      %v507 = vpop.permute.xlu0 %506
      %508 = vrot.lane.b32.xlu0 %v465, 80
      %v509 = vpop.permute.xlu0 %508
      %510 = vrot.lane.b32.xlu0 %v466, 80
      %v511 = vpop.permute.xlu0 %510
      %512 = vrot.lane.b32.xlu0 %v505, 80
      %v513 = vpop.permute.xlu0 %512
      %519 = vrot.lane.b32.xlu0 %v439, 96
      %v520 = vpop.permute.xlu0 %519
      %521 = vrot.lane.b32.xlu0 %v440, 96
      %v522 = vpop.permute.xlu0 %521
      %523 = vrot.lane.b32.xlu0 %v441, 96
      %v524 = vpop.permute.xlu0 %523
      %525 = vrot.lane.b32.xlu0 %v442, 96
      %v526 = vpop.permute.xlu0 %525
      %v531 = vrot.slane %v442, 1
      %532 = vrot.lane.b32.xlu0 %v449, 112
      %v533 = vpop.permute.xlu0 %532
      %534 = vrot.lane.b32.xlu0 %v450, 112
      %v535 = vpop.permute.xlu0 %534
      %536 = vrot.lane.b32.xlu0 %v492, 112
      %v537 = vpop.permute.xlu0 %536
      %538 = vrot.lane.b32.xlu0 %v531, 112
      %v539 = vpop.permute.xlu0 %538
      %v544 = vrot.slane %v442, 2
      %vm545 = vcmask 130048
      %v546 = vsel %vm545, %v437, %v452
      %v547 = vsel %vm545, %v438, %v454
      %v548 = vsel %vm545, %v439, %v456
      %v549 = vsel %vm545, %v440, %v458
      %vm550 = vcmask 261120
      %v551 = vsel %vm550, %v546, %v468
      %v552 = vsel %vm550, %v547, %v470
      %v553 = vsel %vm550, %v548, %v472
      %v554 = vsel %vm550, %v549, %v474
      %vm555 = vcmask 392192
      %v556 = vsel %vm555, %v551, %v481
      %v557 = vsel %vm555, %v552, %v483
      %v558 = vsel %vm555, %v553, %v485
      %v559 = vsel %vm555, %v554, %v487
      %vm560 = vcmask 523264
      %v561 = vsel %vm560, %v556, %v494
      %v562 = vsel %vm560, %v557, %v496
      %v563 = vsel %vm560, %v558, %v498
      %v564 = vsel %vm560, %v559, %v500
      %vm565 = vcmask 654336
      %v566 = vsel %vm565, %v561, %v507
      %v567 = vsel %vm565, %v562, %v509
      %v568 = vsel %vm565, %v563, %v511
      %v569 = vsel %vm565, %v564, %v513
      %vm570 = vcmask 785408
      %v571 = vsel %vm570, %v566, %v520
      %v572 = vsel %vm570, %v567, %v522
      %v573 = vsel %vm570, %v568, %v524
      %v574 = vsel %vm570, %v569, %v526
      %vm575 = vcmask 916480
      %v576 = vsel %vm575, %v571, %v533
      %v577 = vsel %vm575, %v572, %v535
      %v578 = vsel %vm575, %v573, %v537
      %v579 = vsel %vm575, %v574, %v539
      %v584 = vrot.slane %v465, 4
      %v585 = vrot.slane %v466, 4
      %v586 = vrot.slane %v505, 4
      %v587 = vrot.slane %v544, 4
      %vm588 = vcmask 1043456
      %v589 = vsel %vm588, %v576, %v584
      %v590 = vsel %vm588, %v577, %v585
      %v591 = vsel %vm588, %v578, %v586
      %v592 = vsel %vm588, %v579, %v587
      %v593 = vld [vmem:[%s1] sm:$0xff]
      %v594 = vld [vmem:[%s1 + $0x8] sm:$0xff]
      %v595 = vld [vmem:[%s1 + $0x10] sm:$0xff]
      %v596 = vld [vmem:[%s1 + $0x18] sm:$0xff]
      %v597 = vld [vmem:[%s1 + $0x20] sm:$0xff]
      %v598 = vld [vmem:[%s1 + $0x28] sm:$0xff]
      %v599 = vld [vmem:[%s1 + $0x30] sm:$0xff]
      %v600 = vld [vmem:[%s1 + $0x38] sm:$0xff]
      %v601 = vld [vmem:[%s1 + $0x40] sm:$0xff]
      %v602 = vld [vmem:[%s1 + $0x48] sm:$0xff]
      %v603 = vld [vmem:[%s1 + $0x50] sm:$0xff]
      %v604 = vld [vmem:[%s1 + $0x58] sm:$0xff]
      %v605 = vld [vmem:[%s1 + $0x60] sm:$0xff]
      %v606 = vld [vmem:[%s1 + $0x68] sm:$0xff]
      %v607 = vld [vmem:[%s1 + $0x70] sm:$0xff]
      %v608 = vld [vmem:[%s1 + $0x78] sm:$0xff]
      %v609 = vld [vmem:[%s1 + $0x80] sm:$0xff]
      %v610 = vld [vmem:[%s1 + $0x88] sm:$0xff]
      %v611 = vld [vmem:[%s2] sm:$0x1]
      %v613 = vperm.slane %v611, 0
      %615 = vst [vmem:[#allocation1] ss:$2 sm:$0xff] %v589
      %s616 = scalar_lea.vmem [#allocation1], 1
      %617 = vst [vmem:[%s616] ss:$2 sm:$0xff] %v590
      %s618 = scalar_lea.vmem [#allocation1], 16
      %619 = vst [vmem:[%s618] ss:$2 sm:$0xff] %v591
      %s620 = scalar_lea.vmem [#allocation1], 17
      %621 = vst [vmem:[%s620] ss:$2 sm:$0xff] %v592
      %v622 = vld.sshfl [vmem:[#allocation1] sm:$0xff pattern:$0x75316420]
      %v623 = vld.sshfl [vmem:[#allocation1 + $0x8] sm:$0xff pattern:$0x75316420]
      %v624 = vld.sshfl [vmem:[#allocation1 + $0x10] sm:$0xff pattern:$0x75316420]
      %v625 = vld.sshfl [vmem:[#allocation1 + $0x18] sm:$0xff pattern:$0x75316420]
      %v628 = vsel %vm545, %v623, 0
      %v630 = vsel %vm545, %v625, 0
      %632 = vmatpush.msra.mxu0 %v608
      %633 = vmatpush.msra.mxu0 %v607
      %634 = vmatpush.msra.mxu0 %v606
      %635 = vmatpush.msra.mxu0 %v605
      %636 = vmatpush.msra.mxu0 %v604
      %637 = vmatpush.msra.mxu0 %v603
      %638 = vmatpush.msra.mxu0 %v602
      %639 = vmatpush.msra.mxu0 %v601
      %640 = vmatpush.msra.mxu0 %v600
      %641 = vmatpush.msra.mxu0 %v599
      %642 = vmatpush.msra.mxu0 %v598
      %643 = vmatpush.msra.mxu0 %v597
      %644 = vmatpush.msra.mxu0 %v596
      %645 = vmatpush.msra.mxu0 %v595
      %646 = vmatpush.msra.mxu0 %v594
      %647 = vmatpush.msra.mxu0 %v593
      %648 = vmatmul.f32.gmra.mxu0 %v622
      %v649 = vpop.f32.mrf.mxu0
      %v650 = vadd.f32 %v613, %v649
      %651 = vmatmul.f32.gmra.mxu0 %v624
      %v652 = vpop.f32.mrf.mxu0
      %v653 = vadd.f32 %v613, %v652
      %654 = vdwg.mxu0
      %655 = vmatpush.msra.mxu0 0.0
      %656 = vmatpush.msra.mxu0 0.0
      %657 = vmatpush.msra.mxu0 0.0
      %658 = vmatpush.msra.mxu0 0.0
      %659 = vmatpush.msra.mxu0 0.0
      %660 = vmatpush.msra.mxu0 0.0
      %661 = vmatpush.msra.mxu0 0.0
      %662 = vmatpush.msra.mxu0 0.0
      %663 = vmatpush.msra.mxu0 0.0
      %664 = vmatpush.msra.mxu0 0.0
      %665 = vmatpush.msra.mxu0 0.0
      %666 = vmatpush.msra.mxu0 0.0
      %667 = vmatpush.msra.mxu0 0.0
      %668 = vmatpush.msra.mxu0 0.0
      %669 = vmatpush.msra.mxu0 %v610
      %670 = vmatpush.msra.mxu0 %v609
      %671 = vmatmul.f32.gmra.mxu0 %v628
      %v672 = vpop.f32.mrf.mxu0
      %v673 = vadd.f32 %v650, %v672
      %674 = vmatmul.f32.gmra.mxu0 %v630
      %v675 = vpop.f32.mrf.mxu0
      %v676 = vadd.f32 %v653, %v675
      %677 = vdwg.mxu0
      %vm678 = vcmp.ge.f32.partialorder %v673, 0.0
      %vm679 = vcmp.ge.f32.partialorder %v676, 0.0
      %v680 = vmul.f32 %v673, 0.01
      %v681 = vmul.f32 %v676, 0.01
      %v682 = vsel %vm678, %v673, %v680
      %v683 = vsel %vm679, %v676, %v681
      %v686 = vrot.slane %v682, 4
      %v687 = vrot.slane %v683, 4
      %s690 = scalar_lea.vmem [#allocation3], 8
      %vm691 = vcmask 257024
      %692 = vst.msk [vmem:[%s690 + $0x1] sm:$0xf] %vm691, %v682
      %693 = vst.msk [vmem:[%s690 + $0x9] sm:$0xf] %vm691, %v686
      %694 = vst.msk [vmem:[%s690 + $0x11] sm:$0xf] %vm691, %v683
      %695 = vst.msk [vmem:[%s690 + $0x19] sm:$0xf] %vm691, %v687
      %v696 = vld [vmem:[#allocation3] sm:$0x3f]
      %v697 = vld [vmem:[#allocation3 + $0x8] sm:$0x3f]
      %v698 = vld [vmem:[#allocation3 + $0x10] sm:$0x3f]
      %v699 = vld [vmem:[#allocation3 + $0x18] sm:$0x3f]
      %v700 = vld [vmem:[#allocation3 + $0x20] sm:$0x3f]
      %v701 = vld [vmem:[#allocation3 + $0x28] sm:$0x3f]
      %v706 = vrot.slane %v696, 1
      %v707 = vrot.slane %v697, 1
      %v708 = vrot.slane %v698, 1
      %v709 = vrot.slane %v699, 1
      %710 = vrot.lane.b32.xlu0 %v706, 32
      %v711 = vpop.permute.xlu0 %710
      %712 = vrot.lane.b32.xlu0 %v707, 32
      %v713 = vpop.permute.xlu0 %712
      %714 = vrot.lane.b32.xlu0 %v708, 32
      %v715 = vpop.permute.xlu0 %714
      %716 = vrot.lane.b32.xlu0 %v709, 32
      %v717 = vpop.permute.xlu0 %716
      %v722 = vrot.slane %v696, 2
      %v723 = vrot.slane %v697, 2
      %v724 = vrot.slane %v698, 2
      %v725 = vrot.slane %v699, 2
      %726 = vrot.lane.b32.xlu0 %v722, 64
      %v727 = vpop.permute.xlu0 %726
      %728 = vrot.lane.b32.xlu0 %v723, 64
      %v729 = vpop.permute.xlu0 %728
      %730 = vrot.lane.b32.xlu0 %v724, 64
      %v731 = vpop.permute.xlu0 %730
      %732 = vrot.lane.b32.xlu0 %v725, 64
      %v733 = vpop.permute.xlu0 %732
      %739 = vrot.lane.b32.xlu0 %v697, 96
      %v740 = vpop.permute.xlu0 %739
      %741 = vrot.lane.b32.xlu0 %v698, 96
      %v742 = vpop.permute.xlu0 %741
      %743 = vrot.lane.b32.xlu0 %v699, 96
      %v744 = vpop.permute.xlu0 %743
      %745 = vrot.lane.b32.xlu0 %v700, 96
      %v746 = vpop.permute.xlu0 %745
      %v751 = vrot.slane %v700, 1
      %v756 = vrot.slane %v700, 2
      %757 = vrot.lane.b32.xlu0 %v723, 32
      %v758 = vpop.permute.xlu0 %757
      %759 = vrot.lane.b32.xlu0 %v724, 32
      %v760 = vpop.permute.xlu0 %759
      %761 = vrot.lane.b32.xlu0 %v725, 32
      %v762 = vpop.permute.xlu0 %761
      %763 = vrot.lane.b32.xlu0 %v756, 32
      %v764 = vpop.permute.xlu0 %763
      %770 = vrot.lane.b32.xlu0 %v698, 64
      %v771 = vpop.permute.xlu0 %770
      %772 = vrot.lane.b32.xlu0 %v699, 64
      %v773 = vpop.permute.xlu0 %772
      %774 = vrot.lane.b32.xlu0 %v700, 64
      %v775 = vpop.permute.xlu0 %774
      %776 = vrot.lane.b32.xlu0 %v701, 64
      %v777 = vpop.permute.xlu0 %776
      %v782 = vrot.slane %v701, 1
      %783 = vrot.lane.b32.xlu0 %v708, 96
      %v784 = vpop.permute.xlu0 %783
      %785 = vrot.lane.b32.xlu0 %v709, 96
      %v786 = vpop.permute.xlu0 %785
      %787 = vrot.lane.b32.xlu0 %v751, 96
      %v788 = vpop.permute.xlu0 %787
      %789 = vrot.lane.b32.xlu0 %v782, 96
      %v790 = vpop.permute.xlu0 %789
      %v795 = vrot.slane %v701, 2
      %v796 = vsel %vm550, %v696, %v711
      %v797 = vsel %vm550, %v697, %v713
      %v798 = vsel %vm550, %v698, %v715
      %v799 = vsel %vm550, %v699, %v717
      %v800 = vsel %vm560, %v796, %v727
      %v801 = vsel %vm560, %v797, %v729
      %v802 = vsel %vm560, %v798, %v731
      %v803 = vsel %vm560, %v799, %v733
      %v804 = vsel %vm570, %v800, %v740
      %v805 = vsel %vm570, %v801, %v742
      %v806 = vsel %vm570, %v802, %v744
      %v807 = vsel %vm570, %v803, %v746
      %v808 = vsel %vm550, %v707, %v758
      %v809 = vsel %vm550, %v708, %v760
      %v810 = vsel %vm550, %v709, %v762
      %v811 = vsel %vm550, %v751, %v764
      %v812 = vsel %vm560, %v808, %v771
      %v813 = vsel %vm560, %v809, %v773
      %v814 = vsel %vm560, %v810, %v775
      %v815 = vsel %vm560, %v811, %v777
      %v816 = vsel %vm570, %v812, %v784
      %v817 = vsel %vm570, %v813, %v786
      %v818 = vsel %vm570, %v814, %v788
      %v819 = vsel %vm570, %v815, %v790
      %v828 = vrot.slane %v816, 4
      %v829 = vrot.slane %v817, 4
      %v830 = vrot.slane %v818, 4
      %v831 = vrot.slane %v819, 4
      %v832 = vsel %vm588, %v804, %v828
      %v833 = vsel %vm588, %v805, %v829
      %v834 = vsel %vm588, %v806, %v830
      %v835 = vsel %vm588, %v807, %v831
      %v836 = vld [vmem:[%s3] sm:$0xff]
      %v837 = vld [vmem:[%s3 + $0x8] sm:$0xff]
      %v838 = vld [vmem:[%s3 + $0x10] sm:$0xff]
      %v839 = vld [vmem:[%s3 + $0x18] sm:$0xff]
      %v840 = vld [vmem:[%s3 + $0x20] sm:$0xff]
      %v841 = vld [vmem:[%s3 + $0x28] sm:$0xff]
      %v842 = vld [vmem:[%s3 + $0x30] sm:$0xff]
      %v843 = vld [vmem:[%s3 + $0x38] sm:$0xff]
      %v844 = vld [vmem:[%s3 + $0x40] sm:$0xff]
      %v845 = vld [vmem:[%s3 + $0x48] sm:$0xff]
      %v846 = vld [vmem:[%s3 + $0x50] sm:$0xff]
      %v847 = vld [vmem:[%s3 + $0x58] sm:$0xff]
      %v848 = vld [vmem:[%s3 + $0x60] sm:$0xff]
      %v849 = vld [vmem:[%s3 + $0x68] sm:$0xff]
      %v850 = vld [vmem:[%s3 + $0x70] sm:$0xff]
      %v851 = vld [vmem:[%s3 + $0x78] sm:$0xff]
      %v852 = vld [vmem:[%s3 + $0x80] sm:$0xff]
      %v853 = vld [vmem:[%s3 + $0x88] sm:$0xff]
      %v854 = vld [vmem:[%s3 + $0x90] sm:$0xff]
      %v855 = vld [vmem:[%s3 + $0x98] sm:$0xff]
      %v856 = vld [vmem:[%s3 + $0xa0] sm:$0xff]
      %v857 = vld [vmem:[%s3 + $0xa8] sm:$0xff]
      %v858 = vld [vmem:[%s3 + $0xb0] sm:$0xff]
      %v859 = vld [vmem:[%s3 + $0xb8] sm:$0xff]
      %v860 = vld [vmem:[%s3 + $0xc0] sm:$0xff]
      %v861 = vld [vmem:[%s3 + $0xc8] sm:$0xff]
      %v862 = vld [vmem:[%s3 + $0xd0] sm:$0xff]
      %v863 = vld [vmem:[%s3 + $0xd8] sm:$0xff]
      %v864 = vld [vmem:[%s3 + $0xe0] sm:$0xff]
      %v865 = vld [vmem:[%s3 + $0xe8] sm:$0xff]
      %v866 = vld [vmem:[%s3 + $0xf0] sm:$0xff]
      %v867 = vld [vmem:[%s3 + $0xf8] sm:$0xff]
      %v868 = vld [vmem:[%s3 + $0x100] sm:$0xff]
      %v869 = vld [vmem:[%s3 + $0x108] sm:$0xff]
      %v870 = vld [vmem:[%s3 + $0x110] sm:$0xff]
      %v871 = vld [vmem:[%s3 + $0x118] sm:$0xff]
      %v872 = vld [vmem:[%s4] sm:$0x1]
      %v874 = vperm.slane %v872, 0
      %876 = vst [vmem:[#allocation1] ss:$2 sm:$0xff] %v832
      %s877 = scalar_lea.vmem [#allocation1], 1
      %878 = vst [vmem:[%s877] ss:$2 sm:$0xff] %v833
      %s879 = scalar_lea.vmem [#allocation1], 16
      %880 = vst [vmem:[%s879] ss:$2 sm:$0xff] %v724
      %s881 = scalar_lea.vmem [#allocation1], 17
      %882 = vst [vmem:[%s881] ss:$2 sm:$0xff] %v725
      %s883 = scalar_lea.vmem [#allocation1], 32
      %884 = vst [vmem:[%s883] ss:$2 sm:$0xff] %v834
      %s885 = scalar_lea.vmem [#allocation1], 33
      %886 = vst [vmem:[%s885] ss:$2 sm:$0xff] %v835
      %s887 = scalar_lea.vmem [#allocation1], 48
      %888 = vst [vmem:[%s887] ss:$2 sm:$0xff] %v756
      %s889 = scalar_lea.vmem [#allocation1], 49
      %890 = vst [vmem:[%s889] ss:$2 sm:$0xff] %v795
      %v891 = vld.sshfl [vmem:[#allocation1] sm:$0xff pattern:$0x75316420]
      %v892 = vld.sshfl [vmem:[#allocation1 + $0x8] sm:$0xff pattern:$0x75316420]
      %v893 = vld.sshfl [vmem:[#allocation1 + $0x10] sm:$0xff pattern:$0x75316420]
      %v894 = vld.sshfl [vmem:[#allocation1 + $0x20] sm:$0xff pattern:$0x75316420]
      %v895 = vld.sshfl [vmem:[#allocation1 + $0x28] sm:$0xff pattern:$0x75316420]
      %v896 = vld.sshfl [vmem:[#allocation1 + $0x30] sm:$0xff pattern:$0x75316420]
      %v901 = vsel %vm550, %v893, 0
      %v903 = vsel %vm550, %v896, 0
      %905 = vmatpush.msra.mxu0 %v851
      %906 = vmatpush.msra.mxu0 %v850
      %907 = vmatpush.msra.mxu0 %v849
      %908 = vmatpush.msra.mxu0 %v848
      %909 = vmatpush.msra.mxu0 %v847
      %910 = vmatpush.msra.mxu0 %v846
      %911 = vmatpush.msra.mxu0 %v845
      %912 = vmatpush.msra.mxu0 %v844
      %913 = vmatpush.msra.mxu0 %v843
      %914 = vmatpush.msra.mxu0 %v842
      %915 = vmatpush.msra.mxu0 %v841
      %916 = vmatpush.msra.mxu0 %v840
      %917 = vmatpush.msra.mxu0 %v839
      %918 = vmatpush.msra.mxu0 %v838
      %919 = vmatpush.msra.mxu0 %v837
      %920 = vmatpush.msra.mxu0 %v836
      %921 = vmatmul.f32.gmra.mxu0 %v891
      %v922 = vpop.f32.mrf.mxu0
      %v923 = vadd.f32 %v874, %v922
      %924 = vmatmul.f32.gmra.mxu0 %v894
      %v925 = vpop.f32.mrf.mxu0
      %v926 = vadd.f32 %v874, %v925
      %927 = vdwg.mxu0
      %928 = vmatpush.msra.mxu0 %v867
      %929 = vmatpush.msra.mxu0 %v866
      %930 = vmatpush.msra.mxu0 %v865
      %931 = vmatpush.msra.mxu0 %v864
      %932 = vmatpush.msra.mxu0 %v863
      %933 = vmatpush.msra.mxu0 %v862
      %934 = vmatpush.msra.mxu0 %v861
      %935 = vmatpush.msra.mxu0 %v860
      %936 = vmatpush.msra.mxu0 %v859
      %937 = vmatpush.msra.mxu0 %v858
      %938 = vmatpush.msra.mxu0 %v857
      %939 = vmatpush.msra.mxu0 %v856
      %940 = vmatpush.msra.mxu0 %v855
      %941 = vmatpush.msra.mxu0 %v854
      %942 = vmatpush.msra.mxu0 %v853
      %943 = vmatpush.msra.mxu0 %v852
      %944 = vmatmul.f32.gmra.mxu0 %v892
      %v945 = vpop.f32.mrf.mxu0
      %v946 = vadd.f32 %v923, %v945
      %947 = vmatmul.f32.gmra.mxu0 %v895
      %v948 = vpop.f32.mrf.mxu0
      %v949 = vadd.f32 %v926, %v948
      %950 = vdwg.mxu0
      %951 = vmatpush.msra.mxu0 0.0
      %952 = vmatpush.msra.mxu0 0.0
      %953 = vmatpush.msra.mxu0 0.0
      %954 = vmatpush.msra.mxu0 0.0
      %955 = vmatpush.msra.mxu0 0.0
      %956 = vmatpush.msra.mxu0 0.0
      %957 = vmatpush.msra.mxu0 0.0
      %958 = vmatpush.msra.mxu0 0.0
      %959 = vmatpush.msra.mxu0 0.0
      %960 = vmatpush.msra.mxu0 0.0
      %961 = vmatpush.msra.mxu0 0.0
      %962 = vmatpush.msra.mxu0 0.0
      %963 = vmatpush.msra.mxu0 %v871
      %964 = vmatpush.msra.mxu0 %v870
      %965 = vmatpush.msra.mxu0 %v869
      %966 = vmatpush.msra.mxu0 %v868
      %967 = vmatmul.f32.gmra.mxu0 %v901
      %v968 = vpop.f32.mrf.mxu0
      %v969 = vadd.f32 %v946, %v968
      %970 = vmatmul.f32.gmra.mxu0 %v903
      %v971 = vpop.f32.mrf.mxu0
      %v972 = vadd.f32 %v949, %v971
      %973 = vdwg.mxu0
      %vm974 = vcmp.ge.f32.partialorder %v969, 0.0
      %vm975 = vcmp.ge.f32.partialorder %v972, 0.0
      %v976 = vmul.f32 %v969, 0.01
      %v977 = vmul.f32 %v972, 0.01
      %v978 = vsel %vm974, %v969, %v976
      %v979 = vsel %vm975, %v972, %v977
      %980 = vst.msk [vmem:[%s224] sm:$0xff] %vm550, %v978
      %981 = vst.msk [vmem:[%s224 + $0x8] sm:$0xff] %vm550, %v979
      %p982 = scmp.lt.s32.totalorder %s16, 1
      %s983 = scalar_select %p982, %s16, 1
      %s984 = smul.addr %s983, 2
      %s985 = smul.addr %s984, 8
      %s986 = scalar_lea.vmem %s5, %s985
      // Predicated region
      $region45: #{encoder_forward_impl.7} parent=39 // pred_check
        %p987 = pneg %p144
      $region46: #{encoder_forward_impl.7} parent=39 // pred_check_branch
        %989 = sbr.rel (%p987) target = $region48
      $region47: #{encoder_forward_impl.7} parent=39 // pred_region
        _
      $region48: #{encoder_forward_impl.7} parent=39 // pred_fallthru
        _
    $region40: #{encoder_forward_impl.7} parent=5 // pred_fallthru
      _
    %p990 = scmp.le.s32.totalorder 2, %s11
    // Predicated region
    $region49: #{encoder_forward_impl.7} parent=5 // pred_check
      %p991 = pneg %p990
    $region50: #{encoder_forward_impl.7} parent=5 // pred_check_branch
      %993 = sbr.rel (%p991) target = $region52
    $region51: #{encoder_forward_impl.7} parent=5 // pred_region
      %s994 = ssub.s32 %s11, 2
      // Predicated region
      $region53: #{encoder_forward_impl.7} parent=51 // pred_check
        %p995 = pneg %p150
      $region54: #{encoder_forward_impl.7} parent=51 // pred_check_branch
        %997 = sbr.rel (%p995) target = $region56
      $region55: #{encoder_forward_impl.7} parent=51 // pred_region
        %p998 = scmp.lt.s32.totalorder %s17, 1
        %s999 = scalar_select %p998, %s17, 1
        %s1000 = smul.addr %s999, 2
        %s1001 = smul.addr %s1000, 8
        %s1002 = scalar_lea.vmem %s5, %s1001
      $region56: #{encoder_forward_impl.7} parent=51 // pred_fallthru
        _
    $region52: #{encoder_forward_impl.7} parent=5 // pred_fallthru
      _
  $region6: #{encoder_forward_impl.7} parent=0 // loop_footer
    %s15 = sadd.s32 1, %s11
  $region7: #{encoder_forward_impl.7} parent=0 // loop_footer_branch
    %10 = sbr.rel target = $region3
  $region8: #{encoder_forward_impl.7} parent=0 // loop_exit
    _

// kernel: encoder_forward_impl.6
$region0: #{encoder_forward_impl.6}
  #allocation0 [shape = 'u32[]', space=smem, size = 0x4, offset = 0x4, fixed_abs, tag = 'smem constant byte address 0x4 - core index']
  #allocation1 [shape = 'u32[72,128]{1,0:T(1,128)}', space=vmem, size = 0x9000, scoped, tag = 'internal scratch']
  #allocation2 [shape = 'f32[10,10,8]{2,1,0:T(8,128)}', space=vmem, size = 0x14000, scoped, tag = 'scratch operand']
  #allocation3 [shape = 'f32[10,10,16]{2,1,0:T(8,128)}', space=vmem, size = 0x14000, scoped, tag = 'scratch operand']
  %s0 = inlined_call_operand.vmem [shape: f32[2,16,16,8], index: 0, kind: input, shape index: {}]
  %s1 = inlined_call_operand.vmem [shape: f32[72,16], index: 1, kind: input, shape index: {}]
  %s2 = inlined_call_operand.vmem [shape: f32[1,16], index: 2, kind: input, shape index: {}]
  %s3 = inlined_call_operand.vmem [shape: f32[144,16], index: 3, kind: input, shape index: {}]
  %s4 = inlined_call_operand.vmem [shape: f32[1,16], index: 4, kind: input, shape index: {}]
  %s5 = inlined_call_operand.vmem [shape: f32[2,64,16], index: 5, kind: output, shape index: {}]
  %s6 = sld [smem:[#allocation0]]
  $region57: #{encoder_forward_impl.6} parent=0
    _
  %s8 = ssub.s32 1, %s6
  %s9 = scalar_select 0, %s8, %s6
  loop: start=0, step=1, limit=4
  $region2: #{encoder_forward_impl.6} parent=0 // loop_pre_header
    _
  $region3: #{encoder_forward_impl.6} parent=0 // loop_header
    %s11 = sphi 0, %s15
    %p12 = scmp.ge.s32.totalorder %s11, 4
    %s21 = sphi 0, %s23
    %s24 = sphi 0, %s21
    %s25 = sphi 0, %s24
    %s41 = sphi 0, %s25
    %s45 = sphi 0, %s45
    %s47 = sphi 0, %s45
    %s48 = sphi 0, %s47
    %s62 = sphi 0, %s48
    %s66 = sphi 0, %s66
    %s68 = sphi 0, %s66
    %s69 = sphi 0, %s68
    %s83 = sphi 0, %s69
    %s87 = sphi 0, %s87
    %s89 = sphi 0, %s87
    %s90 = sphi 0, %s89
    %s104 = sphi 0, %s90
    %s108 = sphi 0, %s108
    %s110 = sphi 0, %s108
    %s111 = sphi 0, %s110
    %s125 = sphi 0, %s111
    %s131 = sphi 0, %s133
    %s134 = sphi 0, %s131
    %s135 = sphi 0, %s134
    %s151 = sphi 0, %s135
  $region4: #{encoder_forward_impl.6} parent=0 // loop_header_branch
    %14 = sbr.rel (%p12) target = $region8
  $region5: #{encoder_forward_impl.6} parent=0 // loop_body
    %s16 = ssub.s32 %s11, 1
    %s17 = ssub.s32 %s11, 2
    %s18 = sadd.s32 %s11, 1
    %s19 = ssub.s32 %s11, %s18
    %p20 = scmp.eq.s32.totalorder %s19, 0
    %s22 = sadd.s32 %s21, 1
    %s23 = scalar_select %p20, %s21, %s22
    %p26 = pneg %p20
    %p27 = scmp.eq.s32.totalorder %s11, 1
    %p28 = por %p26, %p27
    %p29 = scmp.ne.s32.totalorder %s21, %s24
    %p30 = scmp.eq.s32.totalorder %s11, 0
    %p31 = por %p29, %p30
    %p32 = scmp.ne.s32.totalorder %s21, %s24
    %p33 = scmp.eq.s32.totalorder %s16, 1
    %p34 = por %p32, %p33
    %p35 = scmp.ne.s32.totalorder %s24, %s25
    %p36 = scmp.eq.s32.totalorder %s16, 0
    %p37 = por %p35, %p36
    %p38 = scmp.ne.s32.totalorder %s24, %s25
    %p39 = scmp.eq.s32.totalorder %s17, 1
    %p40 = por %p38, %p39
    %p42 = scmp.ne.s32.totalorder %s25, %s41
    %p43 = scmp.eq.s32.totalorder %s17, 0
    %p44 = por %p42, %p43
    %s46 = sadd.s32 %s45, 1
    %p49 = scmp.eq.s32.totalorder %s11, 1
    %p50 = scmp.ne.s32.totalorder %s45, %s47
    %p51 = scmp.eq.s32.totalorder %s11, 0
    %p52 = por %p50, %p51
    %p53 = scmp.ne.s32.totalorder %s45, %s47
    %p54 = scmp.eq.s32.totalorder %s16, 1
    %p55 = por %p53, %p54
    %p56 = scmp.ne.s32.totalorder %s47, %s48
    %p57 = scmp.eq.s32.totalorder %s16, 0
    %p58 = por %p56, %p57
    %p59 = scmp.ne.s32.totalorder %s47, %s48
    %p60 = scmp.eq.s32.totalorder %s17, 1
    %p61 = por %p59, %p60
    %p63 = scmp.ne.s32.totalorder %s48, %s62
    %p64 = scmp.eq.s32.totalorder %s17, 0
    %p65 = por %p63, %p64
    %s67 = sadd.s32 %s66, 1
    %p70 = scmp.eq.s32.totalorder %s11, 1
    %p71 = scmp.ne.s32.totalorder %s66, %s68
    %p72 = scmp.eq.s32.totalorder %s11, 0
    %p73 = por %p71, %p72
    %p74 = scmp.ne.s32.totalorder %s66, %s68
    %p75 = scmp.eq.s32.totalorder %s16, 1
    %p76 = por %p74, %p75
    %p77 = scmp.ne.s32.totalorder %s68, %s69
    %p78 = scmp.eq.s32.totalorder %s16, 0
    %p79 = por %p77, %p78
    %p80 = scmp.ne.s32.totalorder %s68, %s69
    %p81 = scmp.eq.s32.totalorder %s17, 1
    %p82 = por %p80, %p81
    %p84 = scmp.ne.s32.totalorder %s69, %s83
    %p85 = scmp.eq.s32.totalorder %s17, 0
    %p86 = por %p84, %p85
    %s88 = sadd.s32 %s87, 1
    %p91 = scmp.eq.s32.totalorder %s11, 1
    %p92 = scmp.ne.s32.totalorder %s87, %s89
    %p93 = scmp.eq.s32.totalorder %s11, 0
    %p94 = por %p92, %p93
    %p95 = scmp.ne.s32.totalorder %s87, %s89
    %p96 = scmp.eq.s32.totalorder %s16, 1
    %p97 = por %p95, %p96
    %p98 = scmp.ne.s32.totalorder %s89, %s90
    %p99 = scmp.eq.s32.totalorder %s16, 0
    %p100 = por %p98, %p99
    %p101 = scmp.ne.s32.totalorder %s89, %s90
    %p102 = scmp.eq.s32.totalorder %s17, 1
    %p103 = por %p101, %p102
    %p105 = scmp.ne.s32.totalorder %s90, %s104
    %p106 = scmp.eq.s32.totalorder %s17, 0
    %p107 = por %p105, %p106
    %s109 = sadd.s32 %s108, 1
    %p112 = scmp.eq.s32.totalorder %s11, 1
    %p113 = scmp.ne.s32.totalorder %s108, %s110
    %p114 = scmp.eq.s32.totalorder %s11, 0
    %p115 = por %p113, %p114
    %p116 = scmp.ne.s32.totalorder %s108, %s110
    %p117 = scmp.eq.s32.totalorder %s16, 1
    %p118 = por %p116, %p117
    %p119 = scmp.ne.s32.totalorder %s110, %s111
    %p120 = scmp.eq.s32.totalorder %s16, 0
    %p121 = por %p119, %p120
    %p122 = scmp.ne.s32.totalorder %s110, %s111
    %p123 = scmp.eq.s32.totalorder %s17, 1
    %p124 = por %p122, %p123
    %p126 = scmp.ne.s32.totalorder %s111, %s125
    %p127 = scmp.eq.s32.totalorder %s17, 0
    %p128 = por %p126, %p127
    %s129 = ssub.s32 %s11, %s18
    %p130 = scmp.eq.s32.totalorder %s129, 0
    %s132 = sadd.s32 %s131, 1
    %s133 = scalar_select %p130, %s131, %s132
    %p136 = pneg %p130
    %p137 = scmp.eq.s32.totalorder %s11, 1
    %p138 = por %p136, %p137
    %p139 = scmp.ne.s32.totalorder %s131, %s134
    %p140 = scmp.eq.s32.totalorder %s11, 0
    %p141 = por %p139, %p140
    %p142 = scmp.ne.s32.totalorder %s131, %s134
    %p143 = scmp.eq.s32.totalorder %s16, 1
    %p144 = por %p142, %p143
    %p145 = scmp.ne.s32.totalorder %s134, %s135
    %p146 = scmp.eq.s32.totalorder %s16, 0
    %p147 = por %p145, %p146
    %p148 = scmp.ne.s32.totalorder %s134, %s135
    %p149 = scmp.eq.s32.totalorder %s17, 1
    %p150 = por %p148, %p149
    %p152 = scmp.ne.s32.totalorder %s135, %s151
    %p153 = scmp.eq.s32.totalorder %s17, 0
    %p154 = por %p152, %p153
    %p155 = scmp.le.s32.totalorder 1, %s11
    %p156 = scmp.lt.s32.totalorder %s11, 3
    %p157 = pnand %p155, %p156
    %p158 = pneg %p157
    // Predicated region
    $region9: #{encoder_forward_impl.6} parent=5 // pred_check
      _
    $region10: #{encoder_forward_impl.6} parent=5 // pred_check_branch
      %160 = sbr.rel (%p157) target = $region12
    $region11: #{encoder_forward_impl.6} parent=5 // pred_region
      %s161 = ssub.s32 %s11, 1
      // Predicated region
      $region13: #{encoder_forward_impl.6} parent=11 // pred_check
        %p162 = pneg %p58
      $region14: #{encoder_forward_impl.6} parent=11 // pred_check_branch
        %164 = sbr.rel (%p162) target = $region16
      $region15: #{encoder_forward_impl.6} parent=11 // pred_region
        _
      $region16: #{encoder_forward_impl.6} parent=11 // pred_fallthru
        _
      // Predicated region
      $region17: #{encoder_forward_impl.6} parent=11 // pred_check
        %p165 = pneg %p79
      $region18: #{encoder_forward_impl.6} parent=11 // pred_check_branch
        %167 = sbr.rel (%p165) target = $region20
      $region19: #{encoder_forward_impl.6} parent=11 // pred_region
        _
      $region20: #{encoder_forward_impl.6} parent=11 // pred_fallthru
        _
      // Predicated region
      $region21: #{encoder_forward_impl.6} parent=11 // pred_check
        %p168 = pneg %p100
      $region22: #{encoder_forward_impl.6} parent=11 // pred_check_branch
        %170 = sbr.rel (%p168) target = $region24
      $region23: #{encoder_forward_impl.6} parent=11 // pred_region
        _
      $region24: #{encoder_forward_impl.6} parent=11 // pred_fallthru
        _
      // Predicated region
      $region25: #{encoder_forward_impl.6} parent=11 // pred_check
        %p171 = pneg %p121
      $region26: #{encoder_forward_impl.6} parent=11 // pred_check_branch
        %173 = sbr.rel (%p171) target = $region28
      $region27: #{encoder_forward_impl.6} parent=11 // pred_region
        _
      $region28: #{encoder_forward_impl.6} parent=11 // pred_fallthru
        _
    $region12: #{encoder_forward_impl.6} parent=5 // pred_fallthru
      _
    %p174 = scmp.lt.s32.totalorder %s11, 2
    // Predicated region
    $region29: #{encoder_forward_impl.6} parent=5 // pred_check
      %p175 = pneg %p174
    $region30: #{encoder_forward_impl.6} parent=5 // pred_check_branch
      %177 = sbr.rel (%p175) target = $region32
    $region31: #{encoder_forward_impl.6} parent=5 // pred_region
      // Predicated region
      $region33: #{encoder_forward_impl.6} parent=31 // pred_check
        %p178 = pneg %p31
      $region34: #{encoder_forward_impl.6} parent=31 // pred_check_branch
        %180 = sbr.rel (%p178) target = $region36
      $region35: #{encoder_forward_impl.6} parent=31 // pred_region
        %p181 = scmp.lt.s32.totalorder %s11, 1
        %s182 = scalar_select %p181, %s11, 1
        %s183 = smul.addr %s182, 32
        %s184 = smul.addr %s183, 8
        %s185 = scalar_lea.vmem %s0, %s184
      $region36: #{encoder_forward_impl.6} parent=31 // pred_fallthru
        _
    $region32: #{encoder_forward_impl.6} parent=5 // pred_fallthru
      _
    %p186 = scmp.le.s32.totalorder 1, %s11
    %p187 = scmp.lt.s32.totalorder %s11, 3
    %p188 = pnand %p186, %p187
    %p189 = pneg %p188
    // Predicated region
    $region37: #{encoder_forward_impl.6} parent=5 // pred_check
      _
    $region38: #{encoder_forward_impl.6} parent=5 // pred_check_branch
      %191 = sbr.rel (%p188) target = $region40
    $region39: #{encoder_forward_impl.6} parent=5 // pred_region
      %s192 = ssub.s32 %s11, 1
      %p193 = scmp.lt.s32.totalorder %s16, 1
      %s194 = scalar_select %p193, %s16, 1
      %s195 = smul.addr %s194, 32
      %s196 = smul.addr %s195, 8
      %s197 = scalar_lea.vmem %s0, %s196
      %p198 = pneg %p37
      %p199 = pneg %p34
      %p200 = pneg %p58
      %p201 = pneg %p55
      %p202 = pneg %p79
      %p203 = pneg %p76
      %p204 = pneg %p100
      %p205 = pneg %p97
      %p206 = pneg %p121
      %p207 = pneg %p118
      %p208 = pneg %p147
      %p209 = pneg %p144
      %p210 = scmp.lt.s32.totalorder %s16, 1
      %s211 = scalar_select %p210, %s16, 1
      %s212 = smul.addr %s211, 8
      %s213 = smul.addr %s212, 8
      %s214 = scalar_lea.vmem %s5, %s213
      %p215 = scmp.lt.s32.totalorder %s16, 1
      %s216 = scalar_select %p215, %s16, 1
      %s217 = smul.addr %s216, 32
      %s218 = smul.addr %s217, 8
      %s219 = scalar_lea.vmem %s0, %s218
      %p220 = scmp.lt.s32.totalorder %s16, 1
      %s221 = scalar_select %p220, %s16, 1
      %s222 = smul.addr %s221, 8
      %s223 = smul.addr %s222, 8
      %s224 = scalar_lea.vmem %s5, %s223
      %p225 = scmp.eq.s32.totalorder %s16, 0
      // Predicated region
      $region41: #{encoder_forward_impl.6} parent=39 // pred_check
        %p226 = pneg %p225
      $region42: #{encoder_forward_impl.6} parent=39 // pred_check_branch
        %228 = sbr.rel (%p226) target = $region44
      $region43: #{encoder_forward_impl.6} parent=39 // pred_region
        %vm229 = vcmask 64512
        %230 = vst.msk [vmem:[#allocation2] sm:$0xff] %vm229, 0.0
        %vm231 = vcmask 58368
        %232 = vst.msk [vmem:[#allocation2 + $0x8] sm:$0x3] %vm231, 0.0
        %233 = vst.msk [vmem:[#allocation2 + $0x10] sm:$0xff] %vm229, 0.0
        %234 = vst.msk [vmem:[#allocation2 + $0x18] sm:$0x3] %vm231, 0.0
        %235 = vst.msk [vmem:[#allocation2 + $0x20] sm:$0xff] %vm229, 0.0
        %236 = vst.msk [vmem:[#allocation2 + $0x28] sm:$0x3] %vm231, 0.0
        %237 = vst.msk [vmem:[#allocation2 + $0x30] sm:$0xff] %vm229, 0.0
        %238 = vst.msk [vmem:[#allocation2 + $0x38] sm:$0x3] %vm231, 0.0
        %239 = vst.msk [vmem:[#allocation2 + $0x40] sm:$0xff] %vm229, 0.0
        %240 = vst.msk [vmem:[#allocation2 + $0x48] sm:$0x3] %vm231, 0.0
        %241 = vst.msk [vmem:[#allocation2 + $0x50] sm:$0xff] %vm229, 0.0
        %242 = vst.msk [vmem:[#allocation2 + $0x58] sm:$0x3] %vm231, 0.0
        %243 = vst.msk [vmem:[#allocation2 + $0x60] sm:$0xff] %vm229, 0.0
        %244 = vst.msk [vmem:[#allocation2 + $0x68] sm:$0x3] %vm231, 0.0
        %245 = vst.msk [vmem:[#allocation2 + $0x70] sm:$0xff] %vm229, 0.0
        %246 = vst.msk [vmem:[#allocation2 + $0x78] sm:$0x3] %vm231, 0.0
        %247 = vst.msk [vmem:[#allocation2 + $0x80] sm:$0xff] %vm229, 0.0
        %248 = vst.msk [vmem:[#allocation2 + $0x88] sm:$0x3] %vm231, 0.0
        %249 = vst.msk [vmem:[#allocation2 + $0x90] sm:$0xff] %vm229, 0.0
        %250 = vst.msk [vmem:[#allocation2 + $0x98] sm:$0x3] %vm231, 0.0
        %vm251 = vcmask 130048
        %252 = vst.msk [vmem:[#allocation3] sm:$0xff] %vm251, 0.0
        %vm253 = vcmask 123904
        %254 = vst.msk [vmem:[#allocation3 + $0x8] sm:$0x3] %vm253, 0.0
        %255 = vst.msk [vmem:[#allocation3 + $0x10] sm:$0xff] %vm251, 0.0
        %256 = vst.msk [vmem:[#allocation3 + $0x18] sm:$0x3] %vm253, 0.0
        %257 = vst.msk [vmem:[#allocation3 + $0x20] sm:$0xff] %vm251, 0.0
        %258 = vst.msk [vmem:[#allocation3 + $0x28] sm:$0x3] %vm253, 0.0
        %259 = vst.msk [vmem:[#allocation3 + $0x30] sm:$0xff] %vm251, 0.0
        %260 = vst.msk [vmem:[#allocation3 + $0x38] sm:$0x3] %vm253, 0.0
        %261 = vst.msk [vmem:[#allocation3 + $0x40] sm:$0xff] %vm251, 0.0
        %262 = vst.msk [vmem:[#allocation3 + $0x48] sm:$0x3] %vm253, 0.0
        %263 = vst.msk [vmem:[#allocation3 + $0x50] sm:$0xff] %vm251, 0.0
        %264 = vst.msk [vmem:[#allocation3 + $0x58] sm:$0x3] %vm253, 0.0
        %265 = vst.msk [vmem:[#allocation3 + $0x60] sm:$0xff] %vm251, 0.0
        %266 = vst.msk [vmem:[#allocation3 + $0x68] sm:$0x3] %vm253, 0.0
        %267 = vst.msk [vmem:[#allocation3 + $0x70] sm:$0xff] %vm251, 0.0
        %268 = vst.msk [vmem:[#allocation3 + $0x78] sm:$0x3] %vm253, 0.0
        %269 = vst.msk [vmem:[#allocation3 + $0x80] sm:$0xff] %vm251, 0.0
        %270 = vst.msk [vmem:[#allocation3 + $0x88] sm:$0x3] %vm253, 0.0
        %271 = vst.msk [vmem:[#allocation3 + $0x90] sm:$0xff] %vm251, 0.0
        %272 = vst.msk [vmem:[#allocation3 + $0x98] sm:$0x3] %vm253, 0.0
      $region44: #{encoder_forward_impl.6} parent=39 // pred_fallthru
        _
      %v273 = vld [vmem:[%s219] sm:$0xff]
      %v274 = vld [vmem:[%s219 + $0x8] sm:$0xff]
      %v275 = vld [vmem:[%s219 + $0x10] sm:$0xff]
      %v276 = vld [vmem:[%s219 + $0x18] sm:$0xff]
      %v277 = vld [vmem:[%s219 + $0x20] sm:$0xff]
      %v278 = vld [vmem:[%s219 + $0x28] sm:$0xff]
      %v279 = vld [vmem:[%s219 + $0x30] sm:$0xff]
      %v280 = vld [vmem:[%s219 + $0x38] sm:$0xff]
      %v281 = vld [vmem:[%s219 + $0x40] sm:$0xff]
      %v282 = vld [vmem:[%s219 + $0x48] sm:$0xff]
      %v283 = vld [vmem:[%s219 + $0x50] sm:$0xff]
      %v284 = vld [vmem:[%s219 + $0x58] sm:$0xff]
      %v285 = vld [vmem:[%s219 + $0x60] sm:$0xff]
      %v286 = vld [vmem:[%s219 + $0x68] sm:$0xff]
      %v287 = vld [vmem:[%s219 + $0x70] sm:$0xff]
      %v288 = vld [vmem:[%s219 + $0x78] sm:$0xff]
      %v289 = vld [vmem:[%s219 + $0x80] sm:$0xff]
      %v290 = vld [vmem:[%s219 + $0x88] sm:$0xff]
      %v291 = vld [vmem:[%s219 + $0x90] sm:$0xff]
      %v292 = vld [vmem:[%s219 + $0x98] sm:$0xff]
      %v293 = vld [vmem:[%s219 + $0xa0] sm:$0xff]
      %v294 = vld [vmem:[%s219 + $0xa8] sm:$0xff]
      %v295 = vld [vmem:[%s219 + $0xb0] sm:$0xff]
      %v296 = vld [vmem:[%s219 + $0xb8] sm:$0xff]
      %v297 = vld [vmem:[%s219 + $0xc0] sm:$0xff]
      %v298 = vld [vmem:[%s219 + $0xc8] sm:$0xff]
      %v299 = vld [vmem:[%s219 + $0xd0] sm:$0xff]
      %v300 = vld [vmem:[%s219 + $0xd8] sm:$0xff]
      %v301 = vld [vmem:[%s219 + $0xe0] sm:$0xff]
      %v302 = vld [vmem:[%s219 + $0xe8] sm:$0xff]
      %v303 = vld [vmem:[%s219 + $0xf0] sm:$0xff]
      %v304 = vld [vmem:[%s219 + $0xf8] sm:$0xff]
      %v305 = vmax.f32 %v273, %v275
      %v306 = vmax.f32 %v274, %v276
      %v307 = vmax.f32 %v277, %v279
      %v308 = vmax.f32 %v278, %v280
      %v309 = vmax.f32 %v281, %v283
      %v310 = vmax.f32 %v282, %v284
      %v311 = vmax.f32 %v285, %v287
      %v312 = vmax.f32 %v286, %v288
      %v313 = vmax.f32 %v289, %v291
      %v314 = vmax.f32 %v290, %v292
      %v315 = vmax.f32 %v293, %v295
      %v316 = vmax.f32 %v294, %v296
      %v317 = vmax.f32 %v297, %v299
      %v318 = vmax.f32 %v298, %v300
      %v319 = vmax.f32 %v301, %v303
      %v320 = vmax.f32 %v302, %v304
      %v337 = vrot.slane %v305, 2
      %v338 = vrot.slane %v305, 4
      %v339 = vrot.slane %v305, 6
      %v340 = vrot.slane %v306, 2
      %v341 = vrot.slane %v306, 4
      %v342 = vrot.slane %v306, 6
      %v343 = vrot.slane %v307, 2
      %v344 = vrot.slane %v307, 4
      %v345 = vrot.slane %v307, 6
      %v346 = vrot.slane %v308, 2
      %v347 = vrot.slane %v308, 4
      %v348 = vrot.slane %v308, 6
      %v349 = vrot.slane %v309, 2
      %v350 = vrot.slane %v309, 4
      %v351 = vrot.slane %v309, 6
      %v352 = vrot.slane %v310, 2
      %v353 = vrot.slane %v310, 4
      %v354 = vrot.slane %v310, 6
      %v355 = vrot.slane %v311, 2
      %v356 = vrot.slane %v311, 4
      %v357 = vrot.slane %v311, 6
      %v358 = vrot.slane %v312, 2
      %v359 = vrot.slane %v312, 4
      %v360 = vrot.slane %v312, 6
      %v361 = vrot.slane %v313, 2
      %v362 = vrot.slane %v313, 4
      %v363 = vrot.slane %v313, 6
      %v364 = vrot.slane %v314, 2
      %v365 = vrot.slane %v314, 4
      %v366 = vrot.slane %v314, 6
      %v367 = vrot.slane %v315, 2
      %v368 = vrot.slane %v315, 4
      %v369 = vrot.slane %v315, 6
      %v370 = vrot.slane %v316, 2
      %v371 = vrot.slane %v316, 4
      %v372 = vrot.slane %v316, 6
      %v373 = vrot.slane %v317, 2
      %v374 = vrot.slane %v317, 4
      %v375 = vrot.slane %v317, 6
      %v376 = vrot.slane %v318, 2
      %v377 = vrot.slane %v318, 4
      %v378 = vrot.slane %v318, 6
      %v379 = vrot.slane %v319, 2
      %v380 = vrot.slane %v319, 4
      %v381 = vrot.slane %v319, 6
      %v382 = vrot.slane %v320, 2
      %v383 = vrot.slane %v320, 4
      %v384 = vrot.slane %v320, 6
      %vm433 = vcmask 58368
      %v434 = vsel %vm433, %v305, -inf
      %v435 = vrot.slane %v434, 4
      %v436 = vmax.f32 %v434, %v435
      %v437 = vrot.slane %v436, 2
      %v438 = vmax.f32 %v436, %v437
      %v439 = vrot.slane %v438, 1
      %v440 = vmax.f32 %v438, %v439
      %v441 = vsel %vm433, %v337, -inf
      %v442 = vrot.slane %v441, 4
      %v443 = vmax.f32 %v441, %v442
      %v444 = vrot.slane %v443, 2
      %v445 = vmax.f32 %v443, %v444
      %v446 = vrot.slane %v445, 1
      %v447 = vmax.f32 %v445, %v446
      %v448 = vsel %vm433, %v338, -inf
      %v449 = vrot.slane %v448, 4
      %v450 = vmax.f32 %v448, %v449
      %v451 = vrot.slane %v450, 2
      %v452 = vmax.f32 %v450, %v451
      %v453 = vrot.slane %v452, 1
      %v454 = vmax.f32 %v452, %v453
      %v455 = vsel %vm433, %v339, -inf
      %v456 = vrot.slane %v455, 4
      %v457 = vmax.f32 %v455, %v456
      %v458 = vrot.slane %v457, 2
      %v459 = vmax.f32 %v457, %v458
      %v460 = vrot.slane %v459, 1
      %v461 = vmax.f32 %v459, %v460
      %v462 = vsel %vm433, %v306, -inf
      %v463 = vrot.slane %v462, 4
      %v464 = vmax.f32 %v462, %v463
      %v465 = vrot.slane %v464, 2
      %v466 = vmax.f32 %v464, %v465
      %v467 = vrot.slane %v466, 1
      %v468 = vmax.f32 %v466, %v467
      %v469 = vsel %vm433, %v340, -inf
      %v470 = vrot.slane %v469, 4
      %v471 = vmax.f32 %v469, %v470
      %v472 = vrot.slane %v471, 2
      %v473 = vmax.f32 %v471, %v472
      %v474 = vrot.slane %v473, 1
      %v475 = vmax.f32 %v473, %v474
      %v476 = vsel %vm433, %v341, -inf
      %v477 = vrot.slane %v476, 4
      %v478 = vmax.f32 %v476, %v477
      %v479 = vrot.slane %v478, 2
      %v480 = vmax.f32 %v478, %v479
      %v481 = vrot.slane %v480, 1
      %v482 = vmax.f32 %v480, %v481
      %v483 = vsel %vm433, %v342, -inf
      %v484 = vrot.slane %v483, 4
      %v485 = vmax.f32 %v483, %v484
      %v486 = vrot.slane %v485, 2
      %v487 = vmax.f32 %v485, %v486
      %v488 = vrot.slane %v487, 1
      %v489 = vmax.f32 %v487, %v488
      %v490 = vsel %vm433, %v307, -inf
      %v491 = vrot.slane %v490, 4
      %v492 = vmax.f32 %v490, %v491
      %v493 = vrot.slane %v492, 2
      %v494 = vmax.f32 %v492, %v493
      %v495 = vrot.slane %v494, 1
      %v496 = vmax.f32 %v494, %v495
      %v497 = vsel %vm433, %v343, -inf
      %v498 = vrot.slane %v497, 4
      %v499 = vmax.f32 %v497, %v498
      %v500 = vrot.slane %v499, 2
      %v501 = vmax.f32 %v499, %v500
      %v502 = vrot.slane %v501, 1
      %v503 = vmax.f32 %v501, %v502
      %v504 = vsel %vm433, %v344, -inf
      %v505 = vrot.slane %v504, 4
      %v506 = vmax.f32 %v504, %v505
      %v507 = vrot.slane %v506, 2
      %v508 = vmax.f32 %v506, %v507
      %v509 = vrot.slane %v508, 1
      %v510 = vmax.f32 %v508, %v509
      %v511 = vsel %vm433, %v345, -inf
      %v512 = vrot.slane %v511, 4
      %v513 = vmax.f32 %v511, %v512
      %v514 = vrot.slane %v513, 2
      %v515 = vmax.f32 %v513, %v514
      %v516 = vrot.slane %v515, 1
      %v517 = vmax.f32 %v515, %v516
      %v518 = vsel %vm433, %v308, -inf
      %v519 = vrot.slane %v518, 4
      %v520 = vmax.f32 %v518, %v519
      %v521 = vrot.slane %v520, 2
      %v522 = vmax.f32 %v520, %v521
      %v523 = vrot.slane %v522, 1
      %v524 = vmax.f32 %v522, %v523
      %v525 = vsel %vm433, %v346, -inf
      %v526 = vrot.slane %v525, 4
      %v527 = vmax.f32 %v525, %v526
      %v528 = vrot.slane %v527, 2
      %v529 = vmax.f32 %v527, %v528
      %v530 = vrot.slane %v529, 1
      %v531 = vmax.f32 %v529, %v530
      %v532 = vsel %vm433, %v347, -inf
      %v533 = vrot.slane %v532, 4
      %v534 = vmax.f32 %v532, %v533
      %v535 = vrot.slane %v534, 2
      %v536 = vmax.f32 %v534, %v535
      %v537 = vrot.slane %v536, 1
      %v538 = vmax.f32 %v536, %v537
      %v539 = vsel %vm433, %v348, -inf
      %v540 = vrot.slane %v539, 4
      %v541 = vmax.f32 %v539, %v540
      %v542 = vrot.slane %v541, 2
      %v543 = vmax.f32 %v541, %v542
      %v544 = vrot.slane %v543, 1
      %v545 = vmax.f32 %v543, %v544
      %v546 = vsel %vm433, %v309, -inf
      %v547 = vrot.slane %v546, 4
      %v548 = vmax.f32 %v546, %v547
      %v549 = vrot.slane %v548, 2
      %v550 = vmax.f32 %v548, %v549
      %v551 = vrot.slane %v550, 1
      %v552 = vmax.f32 %v550, %v551
      %v553 = vsel %vm433, %v349, -inf
      %v554 = vrot.slane %v553, 4
      %v555 = vmax.f32 %v553, %v554
      %v556 = vrot.slane %v555, 2
      %v557 = vmax.f32 %v555, %v556
      %v558 = vrot.slane %v557, 1
      %v559 = vmax.f32 %v557, %v558
      %v560 = vsel %vm433, %v350, -inf
      %v561 = vrot.slane %v560, 4
      %v562 = vmax.f32 %v560, %v561
      %v563 = vrot.slane %v562, 2
      %v564 = vmax.f32 %v562, %v563
      %v565 = vrot.slane %v564, 1
      %v566 = vmax.f32 %v564, %v565
      %v567 = vsel %vm433, %v351, -inf
      %v568 = vrot.slane %v567, 4
      %v569 = vmax.f32 %v567, %v568
      %v570 = vrot.slane %v569, 2
      %v571 = vmax.f32 %v569, %v570
      %v572 = vrot.slane %v571, 1
      %v573 = vmax.f32 %v571, %v572
      %v574 = vsel %vm433, %v310, -inf
      %v575 = vrot.slane %v574, 4
      %v576 = vmax.f32 %v574, %v575
      %v577 = vrot.slane %v576, 2
      %v578 = vmax.f32 %v576, %v577
      %v579 = vrot.slane %v578, 1
      %v580 = vmax.f32 %v578, %v579
      %v581 = vsel %vm433, %v352, -inf
      %v582 = vrot.slane %v581, 4
      %v583 = vmax.f32 %v581, %v582
      %v584 = vrot.slane %v583, 2
      %v585 = vmax.f32 %v583, %v584
      %v586 = vrot.slane %v585, 1
      %v587 = vmax.f32 %v585, %v586
      %v588 = vsel %vm433, %v353, -inf
      %v589 = vrot.slane %v588, 4
      %v590 = vmax.f32 %v588, %v589
      %v591 = vrot.slane %v590, 2
      %v592 = vmax.f32 %v590, %v591
      %v593 = vrot.slane %v592, 1
      %v594 = vmax.f32 %v592, %v593
      %v595 = vsel %vm433, %v354, -inf
      %v596 = vrot.slane %v595, 4
      %v597 = vmax.f32 %v595, %v596
      %v598 = vrot.slane %v597, 2
      %v599 = vmax.f32 %v597, %v598
      %v600 = vrot.slane %v599, 1
      %v601 = vmax.f32 %v599, %v600
      %v602 = vsel %vm433, %v311, -inf
      %v603 = vrot.slane %v602, 4
      %v604 = vmax.f32 %v602, %v603
      %v605 = vrot.slane %v604, 2
      %v606 = vmax.f32 %v604, %v605
      %v607 = vrot.slane %v606, 1
      %v608 = vmax.f32 %v606, %v607
      %v609 = vsel %vm433, %v355, -inf
      %v610 = vrot.slane %v609, 4
      %v611 = vmax.f32 %v609, %v610
      %v612 = vrot.slane %v611, 2
      %v613 = vmax.f32 %v611, %v612
      %v614 = vrot.slane %v613, 1
      %v615 = vmax.f32 %v613, %v614
      %v616 = vsel %vm433, %v356, -inf
      %v617 = vrot.slane %v616, 4
      %v618 = vmax.f32 %v616, %v617
      %v619 = vrot.slane %v618, 2
      %v620 = vmax.f32 %v618, %v619
      %v621 = vrot.slane %v620, 1
      %v622 = vmax.f32 %v620, %v621
      %v623 = vsel %vm433, %v357, -inf
      %v624 = vrot.slane %v623, 4
      %v625 = vmax.f32 %v623, %v624
      %v626 = vrot.slane %v625, 2
      %v627 = vmax.f32 %v625, %v626
      %v628 = vrot.slane %v627, 1
      %v629 = vmax.f32 %v627, %v628
      %v630 = vsel %vm433, %v312, -inf
      %v631 = vrot.slane %v630, 4
      %v632 = vmax.f32 %v630, %v631
      %v633 = vrot.slane %v632, 2
      %v634 = vmax.f32 %v632, %v633
      %v635 = vrot.slane %v634, 1
      %v636 = vmax.f32 %v634, %v635
      %v637 = vsel %vm433, %v358, -inf
      %v638 = vrot.slane %v637, 4
      %v639 = vmax.f32 %v637, %v638
      %v640 = vrot.slane %v639, 2
      %v641 = vmax.f32 %v639, %v640
      %v642 = vrot.slane %v641, 1
      %v643 = vmax.f32 %v641, %v642
      %v644 = vsel %vm433, %v359, -inf
      %v645 = vrot.slane %v644, 4
      %v646 = vmax.f32 %v644, %v645
      %v647 = vrot.slane %v646, 2
      %v648 = vmax.f32 %v646, %v647
      %v649 = vrot.slane %v648, 1
      %v650 = vmax.f32 %v648, %v649
      %v651 = vsel %vm433, %v360, -inf
      %v652 = vrot.slane %v651, 4
      %v653 = vmax.f32 %v651, %v652
      %v654 = vrot.slane %v653, 2
      %v655 = vmax.f32 %v653, %v654
      %v656 = vrot.slane %v655, 1
      %v657 = vmax.f32 %v655, %v656
      %v658 = vsel %vm433, %v313, -inf
      %v659 = vrot.slane %v658, 4
      %v660 = vmax.f32 %v658, %v659
      %v661 = vrot.slane %v660, 2
      %v662 = vmax.f32 %v660, %v661
      %v663 = vrot.slane %v662, 1
      %v664 = vmax.f32 %v662, %v663
      %v665 = vsel %vm433, %v361, -inf
      %v666 = vrot.slane %v665, 4
      %v667 = vmax.f32 %v665, %v666
      %v668 = vrot.slane %v667, 2
      %v669 = vmax.f32 %v667, %v668
      %v670 = vrot.slane %v669, 1
      %v671 = vmax.f32 %v669, %v670
      %v672 = vsel %vm433, %v362, -inf
      %v673 = vrot.slane %v672, 4
      %v674 = vmax.f32 %v672, %v673
      %v675 = vrot.slane %v674, 2
      %v676 = vmax.f32 %v674, %v675
      %v677 = vrot.slane %v676, 1
      %v678 = vmax.f32 %v676, %v677
      %v679 = vsel %vm433, %v363, -inf
      %v680 = vrot.slane %v679, 4
      %v681 = vmax.f32 %v679, %v680
      %v682 = vrot.slane %v681, 2
      %v683 = vmax.f32 %v681, %v682
      %v684 = vrot.slane %v683, 1
      %v685 = vmax.f32 %v683, %v684
      %v686 = vsel %vm433, %v314, -inf
      %v687 = vrot.slane %v686, 4
      %v688 = vmax.f32 %v686, %v687
      %v689 = vrot.slane %v688, 2
      %v690 = vmax.f32 %v688, %v689
      %v691 = vrot.slane %v690, 1
      %v692 = vmax.f32 %v690, %v691
      %v693 = vsel %vm433, %v364, -inf
      %v694 = vrot.slane %v693, 4
      %v695 = vmax.f32 %v693, %v694
      %v696 = vrot.slane %v695, 2
      %v697 = vmax.f32 %v695, %v696
      %v698 = vrot.slane %v697, 1
      %v699 = vmax.f32 %v697, %v698
      %v700 = vsel %vm433, %v365, -inf
      %v701 = vrot.slane %v700, 4
      %v702 = vmax.f32 %v700, %v701
      %v703 = vrot.slane %v702, 2
      %v704 = vmax.f32 %v702, %v703
      %v705 = vrot.slane %v704, 1
      %v706 = vmax.f32 %v704, %v705
      %v707 = vsel %vm433, %v366, -inf
      %v708 = vrot.slane %v707, 4
      %v709 = vmax.f32 %v707, %v708
      %v710 = vrot.slane %v709, 2
      %v711 = vmax.f32 %v709, %v710
      %v712 = vrot.slane %v711, 1
      %v713 = vmax.f32 %v711, %v712
      %v714 = vsel %vm433, %v315, -inf
      %v715 = vrot.slane %v714, 4
      %v716 = vmax.f32 %v714, %v715
      %v717 = vrot.slane %v716, 2
      %v718 = vmax.f32 %v716, %v717
      %v719 = vrot.slane %v718, 1
      %v720 = vmax.f32 %v718, %v719
      %v721 = vsel %vm433, %v367, -inf
      %v722 = vrot.slane %v721, 4
      %v723 = vmax.f32 %v721, %v722
      %v724 = vrot.slane %v723, 2
      %v725 = vmax.f32 %v723, %v724
      %v726 = vrot.slane %v725, 1
      %v727 = vmax.f32 %v725, %v726
      %v728 = vsel %vm433, %v368, -inf
      %v729 = vrot.slane %v728, 4
      %v730 = vmax.f32 %v728, %v729
      %v731 = vrot.slane %v730, 2
      %v732 = vmax.f32 %v730, %v731
      %v733 = vrot.slane %v732, 1
      %v734 = vmax.f32 %v732, %v733
      %v735 = vsel %vm433, %v369, -inf
      %v736 = vrot.slane %v735, 4
      %v737 = vmax.f32 %v735, %v736
      %v738 = vrot.slane %v737, 2
      %v739 = vmax.f32 %v737, %v738
      %v740 = vrot.slane %v739, 1
      %v741 = vmax.f32 %v739, %v740
      %v742 = vsel %vm433, %v316, -inf
      %v743 = vrot.slane %v742, 4
      %v744 = vmax.f32 %v742, %v743
      %v745 = vrot.slane %v744, 2
      %v746 = vmax.f32 %v744, %v745
      %v747 = vrot.slane %v746, 1
      %v748 = vmax.f32 %v746, %v747
      %v749 = vsel %vm433, %v370, -inf
      %v750 = vrot.slane %v749, 4
      %v751 = vmax.f32 %v749, %v750
      %v752 = vrot.slane %v751, 2
      %v753 = vmax.f32 %v751, %v752
      %v754 = vrot.slane %v753, 1
      %v755 = vmax.f32 %v753, %v754
      %v756 = vsel %vm433, %v371, -inf
      %v757 = vrot.slane %v756, 4
      %v758 = vmax.f32 %v756, %v757
      %v759 = vrot.slane %v758, 2
      %v760 = vmax.f32 %v758, %v759
      %v761 = vrot.slane %v760, 1
      %v762 = vmax.f32 %v760, %v761
      %v763 = vsel %vm433, %v372, -inf
      %v764 = vrot.slane %v763, 4
      %v765 = vmax.f32 %v763, %v764
      %v766 = vrot.slane %v765, 2
      %v767 = vmax.f32 %v765, %v766
      %v768 = vrot.slane %v767, 1
      %v769 = vmax.f32 %v767, %v768
      %v770 = vsel %vm433, %v317, -inf
      %v771 = vrot.slane %v770, 4
      %v772 = vmax.f32 %v770, %v771
      %v773 = vrot.slane %v772, 2
      %v774 = vmax.f32 %v772, %v773
      %v775 = vrot.slane %v774, 1
      %v776 = vmax.f32 %v774, %v775
      %v777 = vsel %vm433, %v373, -inf
      %v778 = vrot.slane %v777, 4
      %v779 = vmax.f32 %v777, %v778
      %v780 = vrot.slane %v779, 2
      %v781 = vmax.f32 %v779, %v780
      %v782 = vrot.slane %v781, 1
      %v783 = vmax.f32 %v781, %v782
      %v784 = vsel %vm433, %v374, -inf
      %v785 = vrot.slane %v784, 4
      %v786 = vmax.f32 %v784, %v785
      %v787 = vrot.slane %v786, 2
      %v788 = vmax.f32 %v786, %v787
      %v789 = vrot.slane %v788, 1
      %v790 = vmax.f32 %v788, %v789
      %v791 = vsel %vm433, %v375, -inf
      %v792 = vrot.slane %v791, 4
      %v793 = vmax.f32 %v791, %v792
      %v794 = vrot.slane %v793, 2
      %v795 = vmax.f32 %v793, %v794
      %v796 = vrot.slane %v795, 1
      %v797 = vmax.f32 %v795, %v796
      %v798 = vsel %vm433, %v318, -inf
      %v799 = vrot.slane %v798, 4
      %v800 = vmax.f32 %v798, %v799
      %v801 = vrot.slane %v800, 2
      %v802 = vmax.f32 %v800, %v801
      %v803 = vrot.slane %v802, 1
      %v804 = vmax.f32 %v802, %v803
      %v805 = vsel %vm433, %v376, -inf
      %v806 = vrot.slane %v805, 4
      %v807 = vmax.f32 %v805, %v806
      %v808 = vrot.slane %v807, 2
      %v809 = vmax.f32 %v807, %v808
      %v810 = vrot.slane %v809, 1
      %v811 = vmax.f32 %v809, %v810
      %v812 = vsel %vm433, %v377, -inf
      %v813 = vrot.slane %v812, 4
      %v814 = vmax.f32 %v812, %v813
      %v815 = vrot.slane %v814, 2
      %v816 = vmax.f32 %v814, %v815
      %v817 = vrot.slane %v816, 1
      %v818 = vmax.f32 %v816, %v817
      %v819 = vsel %vm433, %v378, -inf
      %v820 = vrot.slane %v819, 4
      %v821 = vmax.f32 %v819, %v820
      %v822 = vrot.slane %v821, 2
      %v823 = vmax.f32 %v821, %v822
      %v824 = vrot.slane %v823, 1
      %v825 = vmax.f32 %v823, %v824
      %v826 = vsel %vm433, %v319, -inf
      %v827 = vrot.slane %v826, 4
      %v828 = vmax.f32 %v826, %v827
      %v829 = vrot.slane %v828, 2
      %v830 = vmax.f32 %v828, %v829
      %v831 = vrot.slane %v830, 1
      %v832 = vmax.f32 %v830, %v831
      %v833 = vsel %vm433, %v379, -inf
      %v834 = vrot.slane %v833, 4
      %v835 = vmax.f32 %v833, %v834
      %v836 = vrot.slane %v835, 2
      %v837 = vmax.f32 %v835, %v836
      %v838 = vrot.slane %v837, 1
      %v839 = vmax.f32 %v837, %v838
      %v840 = vsel %vm433, %v380, -inf
      %v841 = vrot.slane %v840, 4
      %v842 = vmax.f32 %v840, %v841
      %v843 = vrot.slane %v842, 2
      %v844 = vmax.f32 %v842, %v843
      %v845 = vrot.slane %v844, 1
      %v846 = vmax.f32 %v844, %v845
      %v847 = vsel %vm433, %v381, -inf
      %v848 = vrot.slane %v847, 4
      %v849 = vmax.f32 %v847, %v848
      %v850 = vrot.slane %v849, 2
      %v851 = vmax.f32 %v849, %v850
      %v852 = vrot.slane %v851, 1
      %v853 = vmax.f32 %v851, %v852
      %v854 = vsel %vm433, %v320, -inf
      %v855 = vrot.slane %v854, 4
      %v856 = vmax.f32 %v854, %v855
      %v857 = vrot.slane %v856, 2
      %v858 = vmax.f32 %v856, %v857
      %v859 = vrot.slane %v858, 1
      %v860 = vmax.f32 %v858, %v859
      %v861 = vsel %vm433, %v382, -inf
      %v862 = vrot.slane %v861, 4
      %v863 = vmax.f32 %v861, %v862
      %v864 = vrot.slane %v863, 2
      %v865 = vmax.f32 %v863, %v864
      %v866 = vrot.slane %v865, 1
      %v867 = vmax.f32 %v865, %v866
      %v868 = vsel %vm433, %v383, -inf
      %v869 = vrot.slane %v868, 4
      %v870 = vmax.f32 %v868, %v869
      %v871 = vrot.slane %v870, 2
      %v872 = vmax.f32 %v870, %v871
      %v873 = vrot.slane %v872, 1
      %v874 = vmax.f32 %v872, %v873
      %v875 = vsel %vm433, %v384, -inf
      %v876 = vrot.slane %v875, 4
      %v877 = vmax.f32 %v875, %v876
      %v878 = vrot.slane %v877, 2
      %v879 = vmax.f32 %v877, %v878
      %v880 = vrot.slane %v879, 1
      %v881 = vmax.f32 %v879, %v880
      %vm946 = vcmask 1041409
      %v947 = vsel %vm946, %v447, %v440
      %vm948 = vcmask 1042434
      %v949 = vsel %vm948, %v454, %v947
      %vm950 = vcmask 1043459
      %v951 = vsel %vm950, %v461, %v949
      %vm952 = vcmask 1044484
      %v953 = vsel %vm952, %v468, %v951
      %vm954 = vcmask 1045509
      %v955 = vsel %vm954, %v475, %v953
      %vm956 = vcmask 1046534
      %v957 = vsel %vm956, %v482, %v955
      %vm958 = vcmask 1047559
      %v959 = vsel %vm958, %v489, %v957
      %v960 = vsel %vm946, %v503, %v496
      %v961 = vsel %vm948, %v510, %v960
      %v962 = vsel %vm950, %v517, %v961
      %v963 = vsel %vm952, %v524, %v962
      %v964 = vsel %vm954, %v531, %v963
      %v965 = vsel %vm956, %v538, %v964
      %v966 = vsel %vm958, %v545, %v965
      %v967 = vsel %vm946, %v559, %v552
      %v968 = vsel %vm948, %v566, %v967
      %v969 = vsel %vm950, %v573, %v968
      %v970 = vsel %vm952, %v580, %v969
      %v971 = vsel %vm954, %v587, %v970
      %v972 = vsel %vm956, %v594, %v971
      %v973 = vsel %vm958, %v601, %v972
      %v974 = vsel %vm946, %v615, %v608
      %v975 = vsel %vm948, %v622, %v974
      %v976 = vsel %vm950, %v629, %v975
      %v977 = vsel %vm952, %v636, %v976
      %v978 = vsel %vm954, %v643, %v977
      %v979 = vsel %vm956, %v650, %v978
      %v980 = vsel %vm958, %v657, %v979
      %v981 = vsel %vm946, %v671, %v664
      %v982 = vsel %vm948, %v678, %v981
      %v983 = vsel %vm950, %v685, %v982
      %v984 = vsel %vm952, %v692, %v983
      %v985 = vsel %vm954, %v699, %v984
      %v986 = vsel %vm956, %v706, %v985
      %v987 = vsel %vm958, %v713, %v986
      %v988 = vsel %vm946, %v727, %v720
      %v989 = vsel %vm948, %v734, %v988
      %v990 = vsel %vm950, %v741, %v989
      %v991 = vsel %vm952, %v748, %v990
      %v992 = vsel %vm954, %v755, %v991
      %v993 = vsel %vm956, %v762, %v992
      %v994 = vsel %vm958, %v769, %v993
      %v995 = vsel %vm946, %v783, %v776
      %v996 = vsel %vm948, %v790, %v995
      %v997 = vsel %vm950, %v797, %v996
      %v998 = vsel %vm952, %v804, %v997
      %v999 = vsel %vm954, %v811, %v998
      %v1000 = vsel %vm956, %v818, %v999
      %v1001 = vsel %vm958, %v825, %v1000
      %v1002 = vsel %vm946, %v839, %v832
      %v1003 = vsel %vm948, %v846, %v1002
      %v1004 = vsel %vm950, %v853, %v1003
      %v1005 = vsel %vm952, %v860, %v1004
      %v1006 = vsel %vm954, %v867, %v1005
      %v1007 = vsel %vm956, %v874, %v1006
      %v1008 = vsel %vm958, %v881, %v1007
      %s1017 = scalar_lea.vmem [#allocation2], 16
      %vm1018 = vcmask 64512
      %1019 = vst.msk [vmem:[%s1017 + $0x1] sm:$0xff] %vm1018, %v959
      %1020 = vst.msk [vmem:[%s1017 + $0x11] sm:$0xff] %vm1018, %v966
      %1021 = vst.msk [vmem:[%s1017 + $0x21] sm:$0xff] %vm1018, %v973
      %1022 = vst.msk [vmem:[%s1017 + $0x31] sm:$0xff] %vm1018, %v980
      %1023 = vst.msk [vmem:[%s1017 + $0x41] sm:$0xff] %vm1018, %v987
      %1024 = vst.msk [vmem:[%s1017 + $0x51] sm:$0xff] %vm1018, %v994
      %1025 = vst.msk [vmem:[%s1017 + $0x61] sm:$0xff] %vm1018, %v1001
      %1026 = vst.msk [vmem:[%s1017 + $0x71] sm:$0xff] %vm1018, %v1008
      %v1027 = vld [vmem:[#allocation2] sm:$0xff]
      %v1028 = vld [vmem:[#allocation2 + $0x8] sm:$0x3]
      %v1029 = vld [vmem:[#allocation2 + $0x10] sm:$0xff]
      %v1030 = vld [vmem:[#allocation2 + $0x18] sm:$0x3]
      %v1031 = vld [vmem:[#allocation2 + $0x20] sm:$0xff]
      %v1032 = vld [vmem:[#allocation2 + $0x28] sm:$0x3]
      %v1033 = vld [vmem:[#allocation2 + $0x30] sm:$0xff]
      %v1034 = vld [vmem:[#allocation2 + $0x38] sm:$0x3]
      %v1035 = vld [vmem:[#allocation2 + $0x40] sm:$0xff]
      %v1036 = vld [vmem:[#allocation2 + $0x48] sm:$0x3]
      %v1037 = vld [vmem:[#allocation2 + $0x50] sm:$0xff]
      %v1038 = vld [vmem:[#allocation2 + $0x58] sm:$0x3]
      %v1039 = vld [vmem:[#allocation2 + $0x60] sm:$0xff]
      %v1040 = vld [vmem:[#allocation2 + $0x68] sm:$0x3]
      %v1041 = vld [vmem:[#allocation2 + $0x70] sm:$0xff]
      %v1042 = vld [vmem:[#allocation2 + $0x78] sm:$0x3]
      %v1043 = vld [vmem:[#allocation2 + $0x80] sm:$0xff]
      %v1044 = vld [vmem:[#allocation2 + $0x88] sm:$0x3]
      %v1045 = vld [vmem:[#allocation2 + $0x90] sm:$0xff]
      %v1046 = vld [vmem:[#allocation2 + $0x98] sm:$0x3]
      %vm1063 = vcmask 1046528
      %v1064 = vrot.slane %v1027, 1
      %v1065 = vrot.slane %v1028, 1
      %v1066 = vsel %vm1063, %v1064, %v1065
      %v1067 = vrot.slane %v1029, 1
      %v1068 = vrot.slane %v1030, 1
      %v1069 = vsel %vm1063, %v1067, %v1068
      %v1070 = vrot.slane %v1031, 1
      %v1071 = vrot.slane %v1032, 1
      %v1072 = vsel %vm1063, %v1070, %v1071
      %v1073 = vrot.slane %v1033, 1
      %v1074 = vrot.slane %v1034, 1
      %v1075 = vsel %vm1063, %v1073, %v1074
      %v1076 = vrot.slane %v1035, 1
      %v1077 = vrot.slane %v1036, 1
      %v1078 = vsel %vm1063, %v1076, %v1077
      %v1079 = vrot.slane %v1037, 1
      %v1080 = vrot.slane %v1038, 1
      %v1081 = vsel %vm1063, %v1079, %v1080
      %v1082 = vrot.slane %v1039, 1
      %v1083 = vrot.slane %v1040, 1
      %v1084 = vsel %vm1063, %v1082, %v1083
      %v1085 = vrot.slane %v1041, 1
      %v1086 = vrot.slane %v1042, 1
      %v1087 = vsel %vm1063, %v1085, %v1086
      %1088 = vrot.lane.b32.xlu0 %v1066, 8
      %v1089 = vpop.permute.xlu0 %1088
      %1090 = vrot.lane.b32.xlu0 %v1069, 8
      %v1091 = vpop.permute.xlu0 %1090
      %1092 = vrot.lane.b32.xlu0 %v1072, 8
      %v1093 = vpop.permute.xlu0 %1092
      %1094 = vrot.lane.b32.xlu0 %v1075, 8
      %v1095 = vpop.permute.xlu0 %1094
      %1096 = vrot.lane.b32.xlu0 %v1078, 8
      %v1097 = vpop.permute.xlu0 %1096
      %1098 = vrot.lane.b32.xlu0 %v1081, 8
      %v1099 = vpop.permute.xlu0 %1098
      %1100 = vrot.lane.b32.xlu0 %v1084, 8
      %v1101 = vpop.permute.xlu0 %1100
      %1102 = vrot.lane.b32.xlu0 %v1087, 8
      %v1103 = vpop.permute.xlu0 %1102
      %vm1112 = vcmask 1045504
      %v1113 = vrot.slane %v1027, 2
      %v1114 = vrot.slane %v1028, 2
      %v1115 = vsel %vm1112, %v1113, %v1114
      %v1116 = vrot.slane %v1029, 2
      %v1117 = vrot.slane %v1030, 2
      %v1118 = vsel %vm1112, %v1116, %v1117
      %v1119 = vrot.slane %v1031, 2
      %v1120 = vrot.slane %v1032, 2
      %v1121 = vsel %vm1112, %v1119, %v1120
      %v1122 = vrot.slane %v1033, 2
      %v1123 = vrot.slane %v1034, 2
      %v1124 = vsel %vm1112, %v1122, %v1123
      %v1125 = vrot.slane %v1035, 2
      %v1126 = vrot.slane %v1036, 2
      %v1127 = vsel %vm1112, %v1125, %v1126
      %v1128 = vrot.slane %v1037, 2
      %v1129 = vrot.slane %v1038, 2
      %v1130 = vsel %vm1112, %v1128, %v1129
      %v1131 = vrot.slane %v1039, 2
      %v1132 = vrot.slane %v1040, 2
      %v1133 = vsel %vm1112, %v1131, %v1132
      %v1134 = vrot.slane %v1041, 2
      %v1135 = vrot.slane %v1042, 2
      %v1136 = vsel %vm1112, %v1134, %v1135
      %1137 = vrot.lane.b32.xlu0 %v1115, 16
      %v1138 = vpop.permute.xlu0 %1137
      %1139 = vrot.lane.b32.xlu0 %v1118, 16
      %v1140 = vpop.permute.xlu0 %1139
      %1141 = vrot.lane.b32.xlu0 %v1121, 16
      %v1142 = vpop.permute.xlu0 %1141
      %1143 = vrot.lane.b32.xlu0 %v1124, 16
      %v1144 = vpop.permute.xlu0 %1143
      %1145 = vrot.lane.b32.xlu0 %v1127, 16
      %v1146 = vpop.permute.xlu0 %1145
      %1147 = vrot.lane.b32.xlu0 %v1130, 16
      %v1148 = vpop.permute.xlu0 %1147
      %1149 = vrot.lane.b32.xlu0 %v1133, 16
      %v1150 = vpop.permute.xlu0 %1149
      %1151 = vrot.lane.b32.xlu0 %v1136, 16
      %v1152 = vpop.permute.xlu0 %1151
      %1162 = vrot.lane.b32.xlu0 %v1029, 24
      %v1163 = vpop.permute.xlu0 %1162
      %1164 = vrot.lane.b32.xlu0 %v1031, 24
      %v1165 = vpop.permute.xlu0 %1164
      %1166 = vrot.lane.b32.xlu0 %v1033, 24
      %v1167 = vpop.permute.xlu0 %1166
      %1168 = vrot.lane.b32.xlu0 %v1035, 24
      %v1169 = vpop.permute.xlu0 %1168
      %1170 = vrot.lane.b32.xlu0 %v1037, 24
      %v1171 = vpop.permute.xlu0 %1170
      %1172 = vrot.lane.b32.xlu0 %v1039, 24
      %v1173 = vpop.permute.xlu0 %1172
      %1174 = vrot.lane.b32.xlu0 %v1041, 24
      %v1175 = vpop.permute.xlu0 %1174
      %1176 = vrot.lane.b32.xlu0 %v1043, 24
      %v1177 = vpop.permute.xlu0 %1176
      %v1187 = vrot.slane %v1043, 1
      %v1188 = vrot.slane %v1044, 1
      %v1189 = vsel %vm1063, %v1187, %v1188
      %1190 = vrot.lane.b32.xlu0 %v1069, 32
      %v1191 = vpop.permute.xlu0 %1190
      %1192 = vrot.lane.b32.xlu0 %v1072, 32
      %v1193 = vpop.permute.xlu0 %1192
      %1194 = vrot.lane.b32.xlu0 %v1075, 32
      %v1195 = vpop.permute.xlu0 %1194
      %1196 = vrot.lane.b32.xlu0 %v1078, 32
      %v1197 = vpop.permute.xlu0 %1196
      %1198 = vrot.lane.b32.xlu0 %v1081, 32
      %v1199 = vpop.permute.xlu0 %1198
      %1200 = vrot.lane.b32.xlu0 %v1084, 32
      %v1201 = vpop.permute.xlu0 %1200
      %1202 = vrot.lane.b32.xlu0 %v1087, 32
      %v1203 = vpop.permute.xlu0 %1202
      %1204 = vrot.lane.b32.xlu0 %v1189, 32
      %v1205 = vpop.permute.xlu0 %1204
      %v1214 = vrot.slane %v1043, 2
      %v1215 = vrot.slane %v1044, 2
      %v1216 = vsel %vm1112, %v1214, %v1215
      %1217 = vrot.lane.b32.xlu0 %v1118, 40
      %v1218 = vpop.permute.xlu0 %1217
      %1219 = vrot.lane.b32.xlu0 %v1121, 40
      %v1220 = vpop.permute.xlu0 %1219
      %1221 = vrot.lane.b32.xlu0 %v1124, 40
      %v1222 = vpop.permute.xlu0 %1221
      %1223 = vrot.lane.b32.xlu0 %v1127, 40
      %v1224 = vpop.permute.xlu0 %1223
      %1225 = vrot.lane.b32.xlu0 %v1130, 40
      %v1226 = vpop.permute.xlu0 %1225
      %1227 = vrot.lane.b32.xlu0 %v1133, 40
      %v1228 = vpop.permute.xlu0 %1227
      %1229 = vrot.lane.b32.xlu0 %v1136, 40
      %v1230 = vpop.permute.xlu0 %1229
      %1231 = vrot.lane.b32.xlu0 %v1216, 40
      %v1232 = vpop.permute.xlu0 %1231
      %1242 = vrot.lane.b32.xlu0 %v1031, 48
      %v1243 = vpop.permute.xlu0 %1242
      %1244 = vrot.lane.b32.xlu0 %v1033, 48
      %v1245 = vpop.permute.xlu0 %1244
      %1246 = vrot.lane.b32.xlu0 %v1035, 48
      %v1247 = vpop.permute.xlu0 %1246
      %1248 = vrot.lane.b32.xlu0 %v1037, 48
      %v1249 = vpop.permute.xlu0 %1248
      %1250 = vrot.lane.b32.xlu0 %v1039, 48
      %v1251 = vpop.permute.xlu0 %1250
      %1252 = vrot.lane.b32.xlu0 %v1041, 48
      %v1253 = vpop.permute.xlu0 %1252
      %1254 = vrot.lane.b32.xlu0 %v1043, 48
      %v1255 = vpop.permute.xlu0 %1254
      %1256 = vrot.lane.b32.xlu0 %v1045, 48
      %v1257 = vpop.permute.xlu0 %1256
      %v1267 = vrot.slane %v1045, 1
      %v1268 = vrot.slane %v1046, 1
      %v1269 = vsel %vm1063, %v1267, %v1268
      %1270 = vrot.lane.b32.xlu0 %v1072, 56
      %v1271 = vpop.permute.xlu0 %1270
      %1272 = vrot.lane.b32.xlu0 %v1075, 56
      %v1273 = vpop.permute.xlu0 %1272
      %1274 = vrot.lane.b32.xlu0 %v1078, 56
      %v1275 = vpop.permute.xlu0 %1274
      %1276 = vrot.lane.b32.xlu0 %v1081, 56
      %v1277 = vpop.permute.xlu0 %1276
      %1278 = vrot.lane.b32.xlu0 %v1084, 56
      %v1279 = vpop.permute.xlu0 %1278
      %1280 = vrot.lane.b32.xlu0 %v1087, 56
      %v1281 = vpop.permute.xlu0 %1280
      %1282 = vrot.lane.b32.xlu0 %v1189, 56
      %v1283 = vpop.permute.xlu0 %1282
      %1284 = vrot.lane.b32.xlu0 %v1269, 56
      %v1285 = vpop.permute.xlu0 %1284
      %v1294 = vrot.slane %v1045, 2
      %v1295 = vrot.slane %v1046, 2
      %v1296 = vsel %vm1112, %v1294, %v1295
      %1297 = vrot.lane.b32.xlu0 %v1121, 64
      %v1298 = vpop.permute.xlu0 %1297
      %1299 = vrot.lane.b32.xlu0 %v1124, 64
      %v1300 = vpop.permute.xlu0 %1299
      %1301 = vrot.lane.b32.xlu0 %v1127, 64
      %v1302 = vpop.permute.xlu0 %1301
      %1303 = vrot.lane.b32.xlu0 %v1130, 64
      %v1304 = vpop.permute.xlu0 %1303
      %1305 = vrot.lane.b32.xlu0 %v1133, 64
      %v1306 = vpop.permute.xlu0 %1305
      %1307 = vrot.lane.b32.xlu0 %v1136, 64
      %v1308 = vpop.permute.xlu0 %1307
      %1309 = vrot.lane.b32.xlu0 %v1216, 64
      %v1310 = vpop.permute.xlu0 %1309
      %1311 = vrot.lane.b32.xlu0 %v1296, 64
      %v1312 = vpop.permute.xlu0 %1311
      %v1321 = vsel %vm1018, %v1027, %v1089
      %v1322 = vsel %vm1018, %v1029, %v1091
      %v1323 = vsel %vm1018, %v1031, %v1093
      %v1324 = vsel %vm1018, %v1033, %v1095
      %v1325 = vsel %vm1018, %v1035, %v1097
      %v1326 = vsel %vm1018, %v1037, %v1099
      %v1327 = vsel %vm1018, %v1039, %v1101
      %v1328 = vsel %vm1018, %v1041, %v1103
      %vm1329 = vcmask 130048
      %v1330 = vsel %vm1329, %v1321, %v1138
      %v1331 = vsel %vm1329, %v1322, %v1140
      %v1332 = vsel %vm1329, %v1323, %v1142
      %v1333 = vsel %vm1329, %v1324, %v1144
      %v1334 = vsel %vm1329, %v1325, %v1146
      %v1335 = vsel %vm1329, %v1326, %v1148
      %v1336 = vsel %vm1329, %v1327, %v1150
      %v1337 = vsel %vm1329, %v1328, %v1152
      %vm1338 = vcmask 195584
      %v1339 = vsel %vm1338, %v1330, %v1163
      %v1340 = vsel %vm1338, %v1331, %v1165
      %v1341 = vsel %vm1338, %v1332, %v1167
      %v1342 = vsel %vm1338, %v1333, %v1169
      %v1343 = vsel %vm1338, %v1334, %v1171
      %v1344 = vsel %vm1338, %v1335, %v1173
      %v1345 = vsel %vm1338, %v1336, %v1175
      %v1346 = vsel %vm1338, %v1337, %v1177
      %vm1347 = vcmask 261120
      %v1348 = vsel %vm1347, %v1339, %v1191
      %v1349 = vsel %vm1347, %v1340, %v1193
      %v1350 = vsel %vm1347, %v1341, %v1195
      %v1351 = vsel %vm1347, %v1342, %v1197
      %v1352 = vsel %vm1347, %v1343, %v1199
      %v1353 = vsel %vm1347, %v1344, %v1201
      %v1354 = vsel %vm1347, %v1345, %v1203
      %v1355 = vsel %vm1347, %v1346, %v1205
      %vm1356 = vcmask 326656
      %v1357 = vsel %vm1356, %v1348, %v1218
      %v1358 = vsel %vm1356, %v1349, %v1220
      %v1359 = vsel %vm1356, %v1350, %v1222
      %v1360 = vsel %vm1356, %v1351, %v1224
      %v1361 = vsel %vm1356, %v1352, %v1226
      %v1362 = vsel %vm1356, %v1353, %v1228
      %v1363 = vsel %vm1356, %v1354, %v1230
      %v1364 = vsel %vm1356, %v1355, %v1232
      %vm1365 = vcmask 392192
      %v1366 = vsel %vm1365, %v1357, %v1243
      %v1367 = vsel %vm1365, %v1358, %v1245
      %v1368 = vsel %vm1365, %v1359, %v1247
      %v1369 = vsel %vm1365, %v1360, %v1249
      %v1370 = vsel %vm1365, %v1361, %v1251
      %v1371 = vsel %vm1365, %v1362, %v1253
      %v1372 = vsel %vm1365, %v1363, %v1255
      %v1373 = vsel %vm1365, %v1364, %v1257
      %vm1374 = vcmask 457728
      %v1375 = vsel %vm1374, %v1366, %v1271
      %v1376 = vsel %vm1374, %v1367, %v1273
      %v1377 = vsel %vm1374, %v1368, %v1275
      %v1378 = vsel %vm1374, %v1369, %v1277
      %v1379 = vsel %vm1374, %v1370, %v1279
      %v1380 = vsel %vm1374, %v1371, %v1281
      %v1381 = vsel %vm1374, %v1372, %v1283
      %v1382 = vsel %vm1374, %v1373, %v1285
      %vm1383 = vcmask 523264
      %v1384 = vsel %vm1383, %v1375, %v1298
      %v1385 = vsel %vm1383, %v1376, %v1300
      %v1386 = vsel %vm1383, %v1377, %v1302
      %v1387 = vsel %vm1383, %v1378, %v1304
      %v1388 = vsel %vm1383, %v1379, %v1306
      %v1389 = vsel %vm1383, %v1380, %v1308
      %v1390 = vsel %vm1383, %v1381, %v1310
      %v1391 = vsel %vm1383, %v1382, %v1312
      %v1392 = vld [vmem:[%s1] sm:$0xff]
      %v1393 = vld [vmem:[%s1 + $0x8] sm:$0xff]
      %v1394 = vld [vmem:[%s1 + $0x10] sm:$0xff]
      %v1395 = vld [vmem:[%s1 + $0x18] sm:$0xff]
      %v1396 = vld [vmem:[%s1 + $0x20] sm:$0xff]
      %v1397 = vld [vmem:[%s1 + $0x28] sm:$0xff]
      %v1398 = vld [vmem:[%s1 + $0x30] sm:$0xff]
      %v1399 = vld [vmem:[%s1 + $0x38] sm:$0xff]
      %v1400 = vld [vmem:[%s1 + $0x40] sm:$0xff]
      %v1401 = vld [vmem:[%s2] sm:$0x1]
      %v1403 = vperm.slane %v1401, 0
      %vm1405 = vcmask 588800
      %v1407 = vsel %vm1405, %v1384, 0
      %v1410 = vsel %vm1405, %v1385, 0
      %v1413 = vsel %vm1405, %v1386, 0
      %v1416 = vsel %vm1405, %v1387, 0
      %v1419 = vsel %vm1405, %v1388, 0
      %v1422 = vsel %vm1405, %v1389, 0
      %v1425 = vsel %vm1405, %v1390, 0
      %v1428 = vsel %vm1405, %v1391, 0
      %1430 = vmatpush.msra.mxu0 0.0
      %1431 = vmatpush.msra.mxu0 0.0
      %1432 = vmatpush.msra.mxu0 0.0
      %1433 = vmatpush.msra.mxu0 0.0
      %1434 = vmatpush.msra.mxu0 0.0
      %1435 = vmatpush.msra.mxu0 0.0
      %1436 = vmatpush.msra.mxu0 0.0
      %1437 = vmatpush.msra.mxu0 %v1400
      %1438 = vmatpush.msra.mxu0 %v1399
      %1439 = vmatpush.msra.mxu0 %v1398
      %1440 = vmatpush.msra.mxu0 %v1397
      %1441 = vmatpush.msra.mxu0 %v1396
      %1442 = vmatpush.msra.mxu0 %v1395
      %1443 = vmatpush.msra.mxu0 %v1394
      %1444 = vmatpush.msra.mxu0 %v1393
      %1445 = vmatpush.msra.mxu0 %v1392
      %1446 = vmatmul.f32.gmra.mxu0 %v1407
      %v1447 = vpop.f32.mrf.mxu0
      %v1448 = vadd.f32 %v1403, %v1447
      %1449 = vmatmul.f32.gmra.mxu0 %v1410
      %v1450 = vpop.f32.mrf.mxu0
      %v1451 = vadd.f32 %v1403, %v1450
      %1452 = vmatmul.f32.gmra.mxu0 %v1413
      %v1453 = vpop.f32.mrf.mxu0
      %v1454 = vadd.f32 %v1403, %v1453
      %1455 = vmatmul.f32.gmra.mxu0 %v1416
      %v1456 = vpop.f32.mrf.mxu0
      %v1457 = vadd.f32 %v1403, %v1456
      %1458 = vmatmul.f32.gmra.mxu0 %v1419
      %v1459 = vpop.f32.mrf.mxu0
      %v1460 = vadd.f32 %v1403, %v1459
      %1461 = vmatmul.f32.gmra.mxu0 %v1422
      %v1462 = vpop.f32.mrf.mxu0
      %v1463 = vadd.f32 %v1403, %v1462
      %1464 = vmatmul.f32.gmra.mxu0 %v1425
      %v1465 = vpop.f32.mrf.mxu0
      %v1466 = vadd.f32 %v1403, %v1465
      %1467 = vmatmul.f32.gmra.mxu0 %v1428
      %v1468 = vpop.f32.mrf.mxu0
      %v1469 = vadd.f32 %v1403, %v1468
      %1470 = vdwg.mxu0
      %vm1471 = vcmp.ge.f32.partialorder %v1448, 0.0
      %vm1472 = vcmp.ge.f32.partialorder %v1451, 0.0
      %vm1473 = vcmp.ge.f32.partialorder %v1454, 0.0
      %vm1474 = vcmp.ge.f32.partialorder %v1457, 0.0
      %vm1475 = vcmp.ge.f32.partialorder %v1460, 0.0
      %vm1476 = vcmp.ge.f32.partialorder %v1463, 0.0
      %vm1477 = vcmp.ge.f32.partialorder %v1466, 0.0
      %vm1478 = vcmp.ge.f32.partialorder %v1469, 0.0
      %v1479 = vmul.f32 %v1448, 0.01
      %v1480 = vmul.f32 %v1451, 0.01
      %v1481 = vmul.f32 %v1454, 0.01
      %v1482 = vmul.f32 %v1457, 0.01
      %v1483 = vmul.f32 %v1460, 0.01
      %v1484 = vmul.f32 %v1463, 0.01
      %v1485 = vmul.f32 %v1466, 0.01
      %v1486 = vmul.f32 %v1469, 0.01
      %v1487 = vsel %vm1471, %v1448, %v1479
      %v1488 = vsel %vm1472, %v1451, %v1480
      %v1489 = vsel %vm1473, %v1454, %v1481
      %v1490 = vsel %vm1474, %v1457, %v1482
      %v1491 = vsel %vm1475, %v1460, %v1483
      %v1492 = vsel %vm1476, %v1463, %v1484
      %v1493 = vsel %vm1477, %v1466, %v1485
      %v1494 = vsel %vm1478, %v1469, %v1486
      %s1495 = scalar_lea.vmem [#allocation3], 16
      %1496 = vst.msk [vmem:[%s1495 + $0x1] sm:$0xff] %vm1329, %v1487
      %1497 = vst.msk [vmem:[%s1495 + $0x11] sm:$0xff] %vm1329, %v1488
      %1498 = vst.msk [vmem:[%s1495 + $0x21] sm:$0xff] %vm1329, %v1489
      %1499 = vst.msk [vmem:[%s1495 + $0x31] sm:$0xff] %vm1329, %v1490
      %1500 = vst.msk [vmem:[%s1495 + $0x41] sm:$0xff] %vm1329, %v1491
      %1501 = vst.msk [vmem:[%s1495 + $0x51] sm:$0xff] %vm1329, %v1492
      %1502 = vst.msk [vmem:[%s1495 + $0x61] sm:$0xff] %vm1329, %v1493
      %1503 = vst.msk [vmem:[%s1495 + $0x71] sm:$0xff] %vm1329, %v1494
      %v1504 = vld [vmem:[#allocation3] sm:$0xff]
      %v1505 = vld [vmem:[#allocation3 + $0x8] sm:$0x3]
      %v1506 = vld [vmem:[#allocation3 + $0x10] sm:$0xff]
      %v1507 = vld [vmem:[#allocation3 + $0x18] sm:$0x3]
      %v1508 = vld [vmem:[#allocation3 + $0x20] sm:$0xff]
      %v1509 = vld [vmem:[#allocation3 + $0x28] sm:$0x3]
      %v1510 = vld [vmem:[#allocation3 + $0x30] sm:$0xff]
      %v1511 = vld [vmem:[#allocation3 + $0x38] sm:$0x3]
      %v1512 = vld [vmem:[#allocation3 + $0x40] sm:$0xff]
      %v1513 = vld [vmem:[#allocation3 + $0x48] sm:$0x3]
      %v1514 = vld [vmem:[#allocation3 + $0x50] sm:$0xff]
      %v1515 = vld [vmem:[#allocation3 + $0x58] sm:$0x3]
      %v1516 = vld [vmem:[#allocation3 + $0x60] sm:$0xff]
      %v1517 = vld [vmem:[#allocation3 + $0x68] sm:$0x3]
      %v1518 = vld [vmem:[#allocation3 + $0x70] sm:$0xff]
      %v1519 = vld [vmem:[#allocation3 + $0x78] sm:$0x3]
      %v1520 = vld [vmem:[#allocation3 + $0x80] sm:$0xff]
      %v1521 = vld [vmem:[#allocation3 + $0x88] sm:$0x3]
      %v1522 = vld [vmem:[#allocation3 + $0x90] sm:$0xff]
      %v1523 = vld [vmem:[#allocation3 + $0x98] sm:$0x3]
      %v1540 = vrot.slane %v1504, 1
      %v1541 = vrot.slane %v1505, 1
      %v1542 = vsel %vm1063, %v1540, %v1541
      %v1543 = vrot.slane %v1506, 1
      %v1544 = vrot.slane %v1507, 1
      %v1545 = vsel %vm1063, %v1543, %v1544
      %v1546 = vrot.slane %v1508, 1
      %v1547 = vrot.slane %v1509, 1
      %v1548 = vsel %vm1063, %v1546, %v1547
      %v1549 = vrot.slane %v1510, 1
      %v1550 = vrot.slane %v1511, 1
      %v1551 = vsel %vm1063, %v1549, %v1550
      %v1552 = vrot.slane %v1512, 1
      %v1553 = vrot.slane %v1513, 1
      %v1554 = vsel %vm1063, %v1552, %v1553
      %v1555 = vrot.slane %v1514, 1
      %v1556 = vrot.slane %v1515, 1
      %v1557 = vsel %vm1063, %v1555, %v1556
      %v1558 = vrot.slane %v1516, 1
      %v1559 = vrot.slane %v1517, 1
      %v1560 = vsel %vm1063, %v1558, %v1559
      %v1561 = vrot.slane %v1518, 1
      %v1562 = vrot.slane %v1519, 1
      %v1563 = vsel %vm1063, %v1561, %v1562
      %1564 = vrot.lane.b32.xlu0 %v1542, 16
      %v1565 = vpop.permute.xlu0 %1564
      %1566 = vrot.lane.b32.xlu0 %v1545, 16
      %v1567 = vpop.permute.xlu0 %1566
      %1568 = vrot.lane.b32.xlu0 %v1548, 16
      %v1569 = vpop.permute.xlu0 %1568
      %1570 = vrot.lane.b32.xlu0 %v1551, 16
      %v1571 = vpop.permute.xlu0 %1570
      %1572 = vrot.lane.b32.xlu0 %v1554, 16
      %v1573 = vpop.permute.xlu0 %1572
      %1574 = vrot.lane.b32.xlu0 %v1557, 16
      %v1575 = vpop.permute.xlu0 %1574
      %1576 = vrot.lane.b32.xlu0 %v1560, 16
      %v1577 = vpop.permute.xlu0 %1576
      %1578 = vrot.lane.b32.xlu0 %v1563, 16
      %v1579 = vpop.permute.xlu0 %1578
      %v1588 = vrot.slane %v1504, 2
      %v1589 = vrot.slane %v1505, 2
      %v1590 = vsel %vm1112, %v1588, %v1589
      %v1591 = vrot.slane %v1506, 2
      %v1592 = vrot.slane %v1507, 2
      %v1593 = vsel %vm1112, %v1591, %v1592
      %v1594 = vrot.slane %v1508, 2
      %v1595 = vrot.slane %v1509, 2
      %v1596 = vsel %vm1112, %v1594, %v1595
      %v1597 = vrot.slane %v1510, 2
      %v1598 = vrot.slane %v1511, 2
      %v1599 = vsel %vm1112, %v1597, %v1598
      %v1600 = vrot.slane %v1512, 2
      %v1601 = vrot.slane %v1513, 2
      %v1602 = vsel %vm1112, %v1600, %v1601
      %v1603 = vrot.slane %v1514, 2
      %v1604 = vrot.slane %v1515, 2
      %v1605 = vsel %vm1112, %v1603, %v1604
      %v1606 = vrot.slane %v1516, 2
      %v1607 = vrot.slane %v1517, 2
      %v1608 = vsel %vm1112, %v1606, %v1607
      %v1609 = vrot.slane %v1518, 2
      %v1610 = vrot.slane %v1519, 2
      %v1611 = vsel %vm1112, %v1609, %v1610
      %1612 = vrot.lane.b32.xlu0 %v1590, 32
      %v1613 = vpop.permute.xlu0 %1612
      %1614 = vrot.lane.b32.xlu0 %v1593, 32
      %v1615 = vpop.permute.xlu0 %1614
      %1616 = vrot.lane.b32.xlu0 %v1596, 32
      %v1617 = vpop.permute.xlu0 %1616
      %1618 = vrot.lane.b32.xlu0 %v1599, 32
      %v1619 = vpop.permute.xlu0 %1618
      %1620 = vrot.lane.b32.xlu0 %v1602, 32
      %v1621 = vpop.permute.xlu0 %1620
      %1622 = vrot.lane.b32.xlu0 %v1605, 32
      %v1623 = vpop.permute.xlu0 %1622
      %1624 = vrot.lane.b32.xlu0 %v1608, 32
      %v1625 = vpop.permute.xlu0 %1624
      %1626 = vrot.lane.b32.xlu0 %v1611, 32
      %v1627 = vpop.permute.xlu0 %1626
      %1637 = vrot.lane.b32.xlu0 %v1506, 48
      %v1638 = vpop.permute.xlu0 %1637
      %1639 = vrot.lane.b32.xlu0 %v1508, 48
      %v1640 = vpop.permute.xlu0 %1639
      %1641 = vrot.lane.b32.xlu0 %v1510, 48
      %v1642 = vpop.permute.xlu0 %1641
      %1643 = vrot.lane.b32.xlu0 %v1512, 48
      %v1644 = vpop.permute.xlu0 %1643
      %1645 = vrot.lane.b32.xlu0 %v1514, 48
      %v1646 = vpop.permute.xlu0 %1645
      %1647 = vrot.lane.b32.xlu0 %v1516, 48
      %v1648 = vpop.permute.xlu0 %1647
      %1649 = vrot.lane.b32.xlu0 %v1518, 48
      %v1650 = vpop.permute.xlu0 %1649
      %1651 = vrot.lane.b32.xlu0 %v1520, 48
      %v1652 = vpop.permute.xlu0 %1651
      %v1662 = vrot.slane %v1520, 1
      %v1663 = vrot.slane %v1521, 1
      %v1664 = vsel %vm1063, %v1662, %v1663
      %1665 = vrot.lane.b32.xlu0 %v1545, 64
      %v1666 = vpop.permute.xlu0 %1665
      %1667 = vrot.lane.b32.xlu0 %v1548, 64
      %v1668 = vpop.permute.xlu0 %1667
      %1669 = vrot.lane.b32.xlu0 %v1551, 64
      %v1670 = vpop.permute.xlu0 %1669
      %1671 = vrot.lane.b32.xlu0 %v1554, 64
      %v1672 = vpop.permute.xlu0 %1671
      %1673 = vrot.lane.b32.xlu0 %v1557, 64
      %v1674 = vpop.permute.xlu0 %1673
      %1675 = vrot.lane.b32.xlu0 %v1560, 64
      %v1676 = vpop.permute.xlu0 %1675
      %1677 = vrot.lane.b32.xlu0 %v1563, 64
      %v1678 = vpop.permute.xlu0 %1677
      %1679 = vrot.lane.b32.xlu0 %v1664, 64
      %v1680 = vpop.permute.xlu0 %1679
      %v1689 = vrot.slane %v1520, 2
      %v1690 = vrot.slane %v1521, 2
      %v1691 = vsel %vm1112, %v1689, %v1690
      %1692 = vrot.lane.b32.xlu0 %v1593, 80
      %v1693 = vpop.permute.xlu0 %1692
      %1694 = vrot.lane.b32.xlu0 %v1596, 80
      %v1695 = vpop.permute.xlu0 %1694
      %1696 = vrot.lane.b32.xlu0 %v1599, 80
      %v1697 = vpop.permute.xlu0 %1696
      %1698 = vrot.lane.b32.xlu0 %v1602, 80
      %v1699 = vpop.permute.xlu0 %1698
      %1700 = vrot.lane.b32.xlu0 %v1605, 80
      %v1701 = vpop.permute.xlu0 %1700
      %1702 = vrot.lane.b32.xlu0 %v1608, 80
      %v1703 = vpop.permute.xlu0 %1702
      %1704 = vrot.lane.b32.xlu0 %v1611, 80
      %v1705 = vpop.permute.xlu0 %1704
      %1706 = vrot.lane.b32.xlu0 %v1691, 80
      %v1707 = vpop.permute.xlu0 %1706
      %1717 = vrot.lane.b32.xlu0 %v1508, 96
      %v1718 = vpop.permute.xlu0 %1717
      %1719 = vrot.lane.b32.xlu0 %v1510, 96
      %v1720 = vpop.permute.xlu0 %1719
      %1721 = vrot.lane.b32.xlu0 %v1512, 96
      %v1722 = vpop.permute.xlu0 %1721
      %1723 = vrot.lane.b32.xlu0 %v1514, 96
      %v1724 = vpop.permute.xlu0 %1723
      %1725 = vrot.lane.b32.xlu0 %v1516, 96
      %v1726 = vpop.permute.xlu0 %1725
      %1727 = vrot.lane.b32.xlu0 %v1518, 96
      %v1728 = vpop.permute.xlu0 %1727
      %1729 = vrot.lane.b32.xlu0 %v1520, 96
      %v1730 = vpop.permute.xlu0 %1729
      %1731 = vrot.lane.b32.xlu0 %v1522, 96
      %v1732 = vpop.permute.xlu0 %1731
      %v1742 = vrot.slane %v1522, 1
      %v1743 = vrot.slane %v1523, 1
      %v1744 = vsel %vm1063, %v1742, %v1743
      %1745 = vrot.lane.b32.xlu0 %v1548, 112
      %v1746 = vpop.permute.xlu0 %1745
      %1747 = vrot.lane.b32.xlu0 %v1551, 112
      %v1748 = vpop.permute.xlu0 %1747
      %1749 = vrot.lane.b32.xlu0 %v1554, 112
      %v1750 = vpop.permute.xlu0 %1749
      %1751 = vrot.lane.b32.xlu0 %v1557, 112
      %v1752 = vpop.permute.xlu0 %1751
      %1753 = vrot.lane.b32.xlu0 %v1560, 112
      %v1754 = vpop.permute.xlu0 %1753
      %1755 = vrot.lane.b32.xlu0 %v1563, 112
      %v1756 = vpop.permute.xlu0 %1755
      %1757 = vrot.lane.b32.xlu0 %v1664, 112
      %v1758 = vpop.permute.xlu0 %1757
      %1759 = vrot.lane.b32.xlu0 %v1744, 112
      %v1760 = vpop.permute.xlu0 %1759
      %v1769 = vrot.slane %v1522, 2
      %v1770 = vrot.slane %v1523, 2
      %v1771 = vsel %vm1112, %v1769, %v1770
      %v1772 = vsel %vm1329, %v1504, %v1565
      %v1773 = vsel %vm1329, %v1506, %v1567
      %v1774 = vsel %vm1329, %v1508, %v1569
      %v1775 = vsel %vm1329, %v1510, %v1571
      %v1776 = vsel %vm1329, %v1512, %v1573
      %v1777 = vsel %vm1329, %v1514, %v1575
      %v1778 = vsel %vm1329, %v1516, %v1577
      %v1779 = vsel %vm1329, %v1518, %v1579
      %v1780 = vsel %vm1347, %v1772, %v1613
      %v1781 = vsel %vm1347, %v1773, %v1615
      %v1782 = vsel %vm1347, %v1774, %v1617
      %v1783 = vsel %vm1347, %v1775, %v1619
      %v1784 = vsel %vm1347, %v1776, %v1621
      %v1785 = vsel %vm1347, %v1777, %v1623
      %v1786 = vsel %vm1347, %v1778, %v1625
      %v1787 = vsel %vm1347, %v1779, %v1627
      %v1788 = vsel %vm1365, %v1780, %v1638
      %v1789 = vsel %vm1365, %v1781, %v1640
      %v1790 = vsel %vm1365, %v1782, %v1642
      %v1791 = vsel %vm1365, %v1783, %v1644
      %v1792 = vsel %vm1365, %v1784, %v1646
      %v1793 = vsel %vm1365, %v1785, %v1648
      %v1794 = vsel %vm1365, %v1786, %v1650
      %v1795 = vsel %vm1365, %v1787, %v1652
      %v1796 = vsel %vm1383, %v1788, %v1666
      %v1797 = vsel %vm1383, %v1789, %v1668
      %v1798 = vsel %vm1383, %v1790, %v1670
      %v1799 = vsel %vm1383, %v1791, %v1672
      %v1800 = vsel %vm1383, %v1792, %v1674
      %v1801 = vsel %vm1383, %v1793, %v1676
      %v1802 = vsel %vm1383, %v1794, %v1678
      %v1803 = vsel %vm1383, %v1795, %v1680
      %vm1804 = vcmask 654336
      %v1805 = vsel %vm1804, %v1796, %v1693
      %v1806 = vsel %vm1804, %v1797, %v1695
      %v1807 = vsel %vm1804, %v1798, %v1697
      %v1808 = vsel %vm1804, %v1799, %v1699
      %v1809 = vsel %vm1804, %v1800, %v1701
      %v1810 = vsel %vm1804, %v1801, %v1703
      %v1811 = vsel %vm1804, %v1802, %v1705
      %v1812 = vsel %vm1804, %v1803, %v1707
      %vm1813 = vcmask 785408
      %v1814 = vsel %vm1813, %v1805, %v1718
      %v1815 = vsel %vm1813, %v1806, %v1720
      %v1816 = vsel %vm1813, %v1807, %v1722
      %v1817 = vsel %vm1813, %v1808, %v1724
      %v1818 = vsel %vm1813, %v1809, %v1726
      %v1819 = vsel %vm1813, %v1810, %v1728
      %v1820 = vsel %vm1813, %v1811, %v1730
      %v1821 = vsel %vm1813, %v1812, %v1732
      %vm1822 = vcmask 916480
      %v1823 = vsel %vm1822, %v1814, %v1746
      %v1824 = vsel %vm1822, %v1815, %v1748
      %v1825 = vsel %vm1822, %v1816, %v1750
      %v1826 = vsel %vm1822, %v1817, %v1752
      %v1827 = vsel %vm1822, %v1818, %v1754
      %v1828 = vsel %vm1822, %v1819, %v1756
      %v1829 = vsel %vm1822, %v1820, %v1758
      %v1830 = vsel %vm1822, %v1821, %v1760
      %v1831 = vld [vmem:[%s3] sm:$0xff]
      %v1832 = vld [vmem:[%s3 + $0x8] sm:$0xff]
      %v1833 = vld [vmem:[%s3 + $0x10] sm:$0xff]
      %v1834 = vld [vmem:[%s3 + $0x18] sm:$0xff]
      %v1835 = vld [vmem:[%s3 + $0x20] sm:$0xff]
      %v1836 = vld [vmem:[%s3 + $0x28] sm:$0xff]
      %v1837 = vld [vmem:[%s3 + $0x30] sm:$0xff]
      %v1838 = vld [vmem:[%s3 + $0x38] sm:$0xff]
      %v1839 = vld [vmem:[%s3 + $0x40] sm:$0xff]
      %v1840 = vld [vmem:[%s3 + $0x48] sm:$0xff]
      %v1841 = vld [vmem:[%s3 + $0x50] sm:$0xff]
      %v1842 = vld [vmem:[%s3 + $0x58] sm:$0xff]
      %v1843 = vld [vmem:[%s3 + $0x60] sm:$0xff]
      %v1844 = vld [vmem:[%s3 + $0x68] sm:$0xff]
      %v1845 = vld [vmem:[%s3 + $0x70] sm:$0xff]
      %v1846 = vld [vmem:[%s3 + $0x78] sm:$0xff]
      %v1847 = vld [vmem:[%s3 + $0x80] sm:$0xff]
      %v1848 = vld [vmem:[%s3 + $0x88] sm:$0xff]
      %v1849 = vld [vmem:[%s4] sm:$0x1]
      %v1851 = vperm.slane %v1849, 0
      %v1853 = vsel %vm1329, %v1596, 0
      %v1855 = vsel %vm1329, %v1599, 0
      %v1857 = vsel %vm1329, %v1602, 0
      %v1859 = vsel %vm1329, %v1605, 0
      %v1861 = vsel %vm1329, %v1608, 0
      %v1863 = vsel %vm1329, %v1611, 0
      %v1865 = vsel %vm1329, %v1691, 0
      %v1867 = vsel %vm1329, %v1771, 0
      %1869 = vmatpush.msra.mxu0 %v1846
      %1870 = vmatpush.msra.mxu0 %v1845
      %1871 = vmatpush.msra.mxu0 %v1844
      %1872 = vmatpush.msra.mxu0 %v1843
      %1873 = vmatpush.msra.mxu0 %v1842
      %1874 = vmatpush.msra.mxu0 %v1841
      %1875 = vmatpush.msra.mxu0 %v1840
      %1876 = vmatpush.msra.mxu0 %v1839
      %1877 = vmatpush.msra.mxu0 %v1838
      %1878 = vmatpush.msra.mxu0 %v1837
      %1879 = vmatpush.msra.mxu0 %v1836
      %1880 = vmatpush.msra.mxu0 %v1835
      %1881 = vmatpush.msra.mxu0 %v1834
      %1882 = vmatpush.msra.mxu0 %v1833
      %1883 = vmatpush.msra.mxu0 %v1832
      %1884 = vmatpush.msra.mxu0 %v1831
      %1885 = vmatmul.f32.gmra.mxu0 %v1823
      %v1886 = vpop.f32.mrf.mxu0
      %v1887 = vadd.f32 %v1851, %v1886
      %1888 = vmatmul.f32.gmra.mxu0 %v1824
      %v1889 = vpop.f32.mrf.mxu0
      %v1890 = vadd.f32 %v1851, %v1889
      %1891 = vmatmul.f32.gmra.mxu0 %v1825
      %v1892 = vpop.f32.mrf.mxu0
      %v1893 = vadd.f32 %v1851, %v1892
      %1894 = vmatmul.f32.gmra.mxu0 %v1826
      %v1895 = vpop.f32.mrf.mxu0
      %v1896 = vadd.f32 %v1851, %v1895
      %1897 = vmatmul.f32.gmra.mxu0 %v1827
      %v1898 = vpop.f32.mrf.mxu0
      %v1899 = vadd.f32 %v1851, %v1898
      %1900 = vmatmul.f32.gmra.mxu0 %v1828
      %v1901 = vpop.f32.mrf.mxu0
      %v1902 = vadd.f32 %v1851, %v1901
      %1903 = vmatmul.f32.gmra.mxu0 %v1829
      %v1904 = vpop.f32.mrf.mxu0
      %v1905 = vadd.f32 %v1851, %v1904
      %1906 = vmatmul.f32.gmra.mxu0 %v1830
      %v1907 = vpop.f32.mrf.mxu0
      %v1908 = vadd.f32 %v1851, %v1907
      %1909 = vdwg.mxu0
      %1910 = vmatpush.msra.mxu0 0.0
      %1911 = vmatpush.msra.mxu0 0.0
      %1912 = vmatpush.msra.mxu0 0.0
      %1913 = vmatpush.msra.mxu0 0.0
      %1914 = vmatpush.msra.mxu0 0.0
      %1915 = vmatpush.msra.mxu0 0.0
      %1916 = vmatpush.msra.mxu0 0.0
      %1917 = vmatpush.msra.mxu0 0.0
      %1918 = vmatpush.msra.mxu0 0.0
      %1919 = vmatpush.msra.mxu0 0.0
      %1920 = vmatpush.msra.mxu0 0.0
      %1921 = vmatpush.msra.mxu0 0.0
      %1922 = vmatpush.msra.mxu0 0.0
      %1923 = vmatpush.msra.mxu0 0.0
      %1924 = vmatpush.msra.mxu0 %v1848
      %1925 = vmatpush.msra.mxu0 %v1847
      %1926 = vmatmul.f32.gmra.mxu0 %v1853
      %v1927 = vpop.f32.mrf.mxu0
      %v1928 = vadd.f32 %v1887, %v1927
      %1929 = vmatmul.f32.gmra.mxu0 %v1855
      %v1930 = vpop.f32.mrf.mxu0
      %v1931 = vadd.f32 %v1890, %v1930
      %1932 = vmatmul.f32.gmra.mxu0 %v1857
      %v1933 = vpop.f32.mrf.mxu0
      %v1934 = vadd.f32 %v1893, %v1933
      %1935 = vmatmul.f32.gmra.mxu0 %v1859
      %v1936 = vpop.f32.mrf.mxu0
      %v1937 = vadd.f32 %v1896, %v1936
      %1938 = vmatmul.f32.gmra.mxu0 %v1861
      %v1939 = vpop.f32.mrf.mxu0
      %v1940 = vadd.f32 %v1899, %v1939
      %1941 = vmatmul.f32.gmra.mxu0 %v1863
      %v1942 = vpop.f32.mrf.mxu0
      %v1943 = vadd.f32 %v1902, %v1942
      %1944 = vmatmul.f32.gmra.mxu0 %v1865
      %v1945 = vpop.f32.mrf.mxu0
      %v1946 = vadd.f32 %v1905, %v1945
      %1947 = vmatmul.f32.gmra.mxu0 %v1867
      %v1948 = vpop.f32.mrf.mxu0
      %v1949 = vadd.f32 %v1908, %v1948
      %1950 = vdwg.mxu0
      %vm1951 = vcmp.ge.f32.partialorder %v1928, 0.0
      %vm1952 = vcmp.ge.f32.partialorder %v1931, 0.0
      %vm1953 = vcmp.ge.f32.partialorder %v1934, 0.0
      %vm1954 = vcmp.ge.f32.partialorder %v1937, 0.0
      %vm1955 = vcmp.ge.f32.partialorder %v1940, 0.0
      %vm1956 = vcmp.ge.f32.partialorder %v1943, 0.0
      %vm1957 = vcmp.ge.f32.partialorder %v1946, 0.0
      %vm1958 = vcmp.ge.f32.partialorder %v1949, 0.0
      %v1959 = vmul.f32 %v1928, 0.01
      %v1960 = vmul.f32 %v1931, 0.01
      %v1961 = vmul.f32 %v1934, 0.01
      %v1962 = vmul.f32 %v1937, 0.01
      %v1963 = vmul.f32 %v1940, 0.01
      %v1964 = vmul.f32 %v1943, 0.01
      %v1965 = vmul.f32 %v1946, 0.01
      %v1966 = vmul.f32 %v1949, 0.01
      %v1967 = vsel %vm1951, %v1928, %v1959
      %v1968 = vsel %vm1952, %v1931, %v1960
      %v1969 = vsel %vm1953, %v1934, %v1961
      %v1970 = vsel %vm1954, %v1937, %v1962
      %v1971 = vsel %vm1955, %v1940, %v1963
      %v1972 = vsel %vm1956, %v1943, %v1964
      %v1973 = vsel %vm1957, %v1946, %v1965
      %v1974 = vsel %vm1958, %v1949, %v1966
      %1975 = vst.msk [vmem:[%s224] sm:$0xff] %vm1329, %v1967
      %1976 = vst.msk [vmem:[%s224 + $0x8] sm:$0xff] %vm1329, %v1968
      %1977 = vst.msk [vmem:[%s224 + $0x10] sm:$0xff] %vm1329, %v1969
      %1978 = vst.msk [vmem:[%s224 + $0x18] sm:$0xff] %vm1329, %v1970
      %1979 = vst.msk [vmem:[%s224 + $0x20] sm:$0xff] %vm1329, %v1971
      %1980 = vst.msk [vmem:[%s224 + $0x28] sm:$0xff] %vm1329, %v1972
      %1981 = vst.msk [vmem:[%s224 + $0x30] sm:$0xff] %vm1329, %v1973
      %1982 = vst.msk [vmem:[%s224 + $0x38] sm:$0xff] %vm1329, %v1974
      %p1983 = scmp.lt.s32.totalorder %s16, 1
      %s1984 = scalar_select %p1983, %s16, 1
      %s1985 = smul.addr %s1984, 8
      %s1986 = smul.addr %s1985, 8
      %s1987 = scalar_lea.vmem %s5, %s1986
      // Predicated region
      $region45: #{encoder_forward_impl.6} parent=39 // pred_check
        %p1988 = pneg %p144
      $region46: #{encoder_forward_impl.6} parent=39 // pred_check_branch
        %1990 = sbr.rel (%p1988) target = $region48
      $region47: #{encoder_forward_impl.6} parent=39 // pred_region
        _
      $region48: #{encoder_forward_impl.6} parent=39 // pred_fallthru
        _
    $region40: #{encoder_forward_impl.6} parent=5 // pred_fallthru
      _
    %p1991 = scmp.le.s32.totalorder 2, %s11
    // Predicated region
    $region49: #{encoder_forward_impl.6} parent=5 // pred_check
      %p1992 = pneg %p1991
    $region50: #{encoder_forward_impl.6} parent=5 // pred_check_branch
      %1994 = sbr.rel (%p1992) target = $region52
    $region51: #{encoder_forward_impl.6} parent=5 // pred_region
      %s1995 = ssub.s32 %s11, 2
      // Predicated region
      $region53: #{encoder_forward_impl.6} parent=51 // pred_check
        %p1996 = pneg %p150
      $region54: #{encoder_forward_impl.6} parent=51 // pred_check_branch
        %1998 = sbr.rel (%p1996) target = $region56
      $region55: #{encoder_forward_impl.6} parent=51 // pred_region
        %p1999 = scmp.lt.s32.totalorder %s17, 1
        %s2000 = scalar_select %p1999, %s17, 1
        %s2001 = smul.addr %s2000, 8
        %s2002 = smul.addr %s2001, 8
        %s2003 = scalar_lea.vmem %s5, %s2002
      $region56: #{encoder_forward_impl.6} parent=51 // pred_fallthru
        _
    $region52: #{encoder_forward_impl.6} parent=5 // pred_fallthru
      _
  $region6: #{encoder_forward_impl.6} parent=0 // loop_footer
    %s15 = sadd.s32 1, %s11
  $region7: #{encoder_forward_impl.6} parent=0 // loop_footer_branch
    %10 = sbr.rel target = $region3
  $region8: #{encoder_forward_impl.6} parent=0 // loop_exit
    _

// kernel: encoder_forward_impl.9
$region0: #{encoder_forward_impl.9}
  #allocation0 [shape = 'u32[]', space=smem, size = 0x4, offset = 0x4, fixed_abs, tag = 'smem constant byte address 0x4 - core index']
  #allocation1 [shape = 'u32[72,128]{1,0:T(1,128)}', space=vmem, size = 0x9000, scoped, tag = 'internal scratch']
  #allocation2 [shape = 'f32[3,3,32]{2,1,0:T(4,128)}', space=vmem, size = 0x1800, scoped, tag = 'scratch operand']
  #allocation3 [shape = 'f32[3,3,64]{2,1,0:T(4,128)}', space=vmem, size = 0x1800, scoped, tag = 'scratch operand']
  %s0 = inlined_call_operand.vmem [shape: f32[2,2,2,32], index: 0, kind: input, shape index: {}]
  %s1 = inlined_call_operand.vmem [shape: f32[288,64], index: 1, kind: input, shape index: {}]
  %s2 = inlined_call_operand.vmem [shape: f32[1,64], index: 2, kind: input, shape index: {}]
  %s3 = inlined_call_operand.vmem [shape: f32[576,64], index: 3, kind: input, shape index: {}]
  %s4 = inlined_call_operand.vmem [shape: f32[1,64], index: 4, kind: input, shape index: {}]
  %s5 = inlined_call_operand.hbm [shape: f32[2,1,64], index: 5, kind: output, shape index: {}]
  %s6 = sld [smem:[#allocation0]]
  $region57: #{encoder_forward_impl.9} parent=0
    _
  %s8 = ssub.s32 1, %s6
  %s9 = scalar_select 0, %s8, %s6
  $region1: #{encoder_forward_impl.9} parent=0
    #allocation4 [shape = 'u8[1024]{0}', space=vmem, size = 0x400, scoped, tag = 'output window, operand 0']
    #allocation5 [shape = 's32[2]{0}', space=sflag, size = 0x8, scoped, tag = 'scoped memory for encoder_forward_impl.9']
    %10 = vsyncpa [#allocation5], 0
    %s11 = scalar_lea.sflag [#allocation5], 1
    %12 = vsyncpa %s11, 0
    loop: start=0, step=1, limit=4
    $region2: #{encoder_forward_impl.9} parent=1 // loop_pre_header
      _
    $region3: #{encoder_forward_impl.9} parent=1 // loop_header
      %s14 = sphi 0, %s18
      %p15 = scmp.ge.s32.totalorder %s14, 4
      %s24 = sphi 0, %s26
      %s27 = sphi 0, %s24
      %s28 = sphi 0, %s27
      %s44 = sphi 0, %s28
      %s48 = sphi 0, %s48
      %s50 = sphi 0, %s48
      %s51 = sphi 0, %s50
      %s65 = sphi 0, %s51
      %s69 = sphi 0, %s69
      %s71 = sphi 0, %s69
      %s72 = sphi 0, %s71
      %s86 = sphi 0, %s72
      %s90 = sphi 0, %s90
      %s92 = sphi 0, %s90
      %s93 = sphi 0, %s92
      %s107 = sphi 0, %s93
      %s111 = sphi 0, %s111
      %s113 = sphi 0, %s111
      %s114 = sphi 0, %s113
      %s128 = sphi 0, %s114
      %s134 = sphi 0, %s136
      %s137 = sphi 0, %s134
      %s138 = sphi 0, %s137
      %s154 = sphi 0, %s138
    $region4: #{encoder_forward_impl.9} parent=1 // loop_header_branch
      %17 = sbr.rel (%p15) target = $region8
    $region5: #{encoder_forward_impl.9} parent=1 // loop_body
      %s19 = ssub.s32 %s14, 1
      %s20 = ssub.s32 %s14, 2
      %s21 = sadd.s32 %s14, 1
      %s22 = ssub.s32 %s14, %s21
      %p23 = scmp.eq.s32.totalorder %s22, 0
      %s25 = sadd.s32 %s24, 1
      %s26 = scalar_select %p23, %s24, %s25
      %p29 = pneg %p23
      %p30 = scmp.eq.s32.totalorder %s14, 1
      %p31 = por %p29, %p30
      %p32 = scmp.ne.s32.totalorder %s24, %s27
      %p33 = scmp.eq.s32.totalorder %s14, 0
      %p34 = por %p32, %p33
      %p35 = scmp.ne.s32.totalorder %s24, %s27
      %p36 = scmp.eq.s32.totalorder %s19, 1
      %p37 = por %p35, %p36
      %p38 = scmp.ne.s32.totalorder %s27, %s28
      %p39 = scmp.eq.s32.totalorder %s19, 0
      %p40 = por %p38, %p39
      %p41 = scmp.ne.s32.totalorder %s27, %s28
      %p42 = scmp.eq.s32.totalorder %s20, 1
      %p43 = por %p41, %p42
      %p45 = scmp.ne.s32.totalorder %s28, %s44
      %p46 = scmp.eq.s32.totalorder %s20, 0
      %p47 = por %p45, %p46
      %s49 = sadd.s32 %s48, 1
      %p52 = scmp.eq.s32.totalorder %s14, 1
      %p53 = scmp.ne.s32.totalorder %s48, %s50
      %p54 = scmp.eq.s32.totalorder %s14, 0
      %p55 = por %p53, %p54
      %p56 = scmp.ne.s32.totalorder %s48, %s50
      %p57 = scmp.eq.s32.totalorder %s19, 1
      %p58 = por %p56, %p57
      %p59 = scmp.ne.s32.totalorder %s50, %s51
      %p60 = scmp.eq.s32.totalorder %s19, 0
      %p61 = por %p59, %p60
      %p62 = scmp.ne.s32.totalorder %s50, %s51
      %p63 = scmp.eq.s32.totalorder %s20, 1
      %p64 = por %p62, %p63
      %p66 = scmp.ne.s32.totalorder %s51, %s65
      %p67 = scmp.eq.s32.totalorder %s20, 0
      %p68 = por %p66, %p67
      %s70 = sadd.s32 %s69, 1
      %p73 = scmp.eq.s32.totalorder %s14, 1
      %p74 = scmp.ne.s32.totalorder %s69, %s71
      %p75 = scmp.eq.s32.totalorder %s14, 0
      %p76 = por %p74, %p75
      %p77 = scmp.ne.s32.totalorder %s69, %s71
      %p78 = scmp.eq.s32.totalorder %s19, 1
      %p79 = por %p77, %p78
      %p80 = scmp.ne.s32.totalorder %s71, %s72
      %p81 = scmp.eq.s32.totalorder %s19, 0
      %p82 = por %p80, %p81
      %p83 = scmp.ne.s32.totalorder %s71, %s72
      %p84 = scmp.eq.s32.totalorder %s20, 1
      %p85 = por %p83, %p84
      %p87 = scmp.ne.s32.totalorder %s72, %s86
      %p88 = scmp.eq.s32.totalorder %s20, 0
      %p89 = por %p87, %p88
      %s91 = sadd.s32 %s90, 1
      %p94 = scmp.eq.s32.totalorder %s14, 1
      %p95 = scmp.ne.s32.totalorder %s90, %s92
      %p96 = scmp.eq.s32.totalorder %s14, 0
      %p97 = por %p95, %p96
      %p98 = scmp.ne.s32.totalorder %s90, %s92
      %p99 = scmp.eq.s32.totalorder %s19, 1
      %p100 = por %p98, %p99
      %p101 = scmp.ne.s32.totalorder %s92, %s93
      %p102 = scmp.eq.s32.totalorder %s19, 0
      %p103 = por %p101, %p102
      %p104 = scmp.ne.s32.totalorder %s92, %s93
      %p105 = scmp.eq.s32.totalorder %s20, 1
      %p106 = por %p104, %p105
      %p108 = scmp.ne.s32.totalorder %s93, %s107
      %p109 = scmp.eq.s32.totalorder %s20, 0
      %p110 = por %p108, %p109
      %s112 = sadd.s32 %s111, 1
      %p115 = scmp.eq.s32.totalorder %s14, 1
      %p116 = scmp.ne.s32.totalorder %s111, %s113
      %p117 = scmp.eq.s32.totalorder %s14, 0
      %p118 = por %p116, %p117
      %p119 = scmp.ne.s32.totalorder %s111, %s113
      %p120 = scmp.eq.s32.totalorder %s19, 1
      %p121 = por %p119, %p120
      %p122 = scmp.ne.s32.totalorder %s113, %s114
      %p123 = scmp.eq.s32.totalorder %s19, 0
      %p124 = por %p122, %p123
      %p125 = scmp.ne.s32.totalorder %s113, %s114
      %p126 = scmp.eq.s32.totalorder %s20, 1
      %p127 = por %p125, %p126
      %p129 = scmp.ne.s32.totalorder %s114, %s128
      %p130 = scmp.eq.s32.totalorder %s20, 0
      %p131 = por %p129, %p130
      %s132 = ssub.s32 %s14, %s21
      %p133 = scmp.eq.s32.totalorder %s132, 0
      %s135 = sadd.s32 %s134, 1
      %s136 = scalar_select %p133, %s134, %s135
      %p139 = pneg %p133
      %p140 = scmp.eq.s32.totalorder %s14, 1
      %p141 = por %p139, %p140
      %p142 = scmp.ne.s32.totalorder %s134, %s137
      %p143 = scmp.eq.s32.totalorder %s14, 0
      %p144 = por %p142, %p143
      %p145 = scmp.ne.s32.totalorder %s134, %s137
      %p146 = scmp.eq.s32.totalorder %s19, 1
      %p147 = por %p145, %p146
      %p148 = scmp.ne.s32.totalorder %s137, %s138
      %p149 = scmp.eq.s32.totalorder %s19, 0
      %p150 = por %p148, %p149
      %p151 = scmp.ne.s32.totalorder %s137, %s138
      %p152 = scmp.eq.s32.totalorder %s20, 1
      %p153 = por %p151, %p152
      %p155 = scmp.ne.s32.totalorder %s138, %s154
      %p156 = scmp.eq.s32.totalorder %s20, 0
      %p157 = por %p155, %p156
      %p158 = scmp.le.s32.totalorder 1, %s14
      %p159 = scmp.lt.s32.totalorder %s14, 3
      %p160 = pnand %p158, %p159
      %p161 = pneg %p160
      // Predicated region
      $region9: #{encoder_forward_impl.9} parent=5 // pred_check
        _
      $region10: #{encoder_forward_impl.9} parent=5 // pred_check_branch
        %163 = sbr.rel (%p160) target = $region12
      $region11: #{encoder_forward_impl.9} parent=5 // pred_region
        %s164 = ssub.s32 %s14, 1
        // Predicated region
        $region13: #{encoder_forward_impl.9} parent=11 // pred_check
          %p165 = pneg %p61
        $region14: #{encoder_forward_impl.9} parent=11 // pred_check_branch
          %167 = sbr.rel (%p165) target = $region16
        $region15: #{encoder_forward_impl.9} parent=11 // pred_region
          _
        $region16: #{encoder_forward_impl.9} parent=11 // pred_fallthru
          _
        // Predicated region
        $region17: #{encoder_forward_impl.9} parent=11 // pred_check
          %p168 = pneg %p82
        $region18: #{encoder_forward_impl.9} parent=11 // pred_check_branch
          %170 = sbr.rel (%p168) target = $region20
        $region19: #{encoder_forward_impl.9} parent=11 // pred_region
          _
        $region20: #{encoder_forward_impl.9} parent=11 // pred_fallthru
          _
        // Predicated region
        $region21: #{encoder_forward_impl.9} parent=11 // pred_check
          %p171 = pneg %p103
        $region22: #{encoder_forward_impl.9} parent=11 // pred_check_branch
          %173 = sbr.rel (%p171) target = $region24
        $region23: #{encoder_forward_impl.9} parent=11 // pred_region
          _
        $region24: #{encoder_forward_impl.9} parent=11 // pred_fallthru
          _
        // Predicated region
        $region25: #{encoder_forward_impl.9} parent=11 // pred_check
          %p174 = pneg %p124
        $region26: #{encoder_forward_impl.9} parent=11 // pred_check_branch
          %176 = sbr.rel (%p174) target = $region28
        $region27: #{encoder_forward_impl.9} parent=11 // pred_region
          _
        $region28: #{encoder_forward_impl.9} parent=11 // pred_fallthru
          _
      $region12: #{encoder_forward_impl.9} parent=5 // pred_fallthru
        _
      %p177 = scmp.lt.s32.totalorder %s14, 2
      // Predicated region
      $region29: #{encoder_forward_impl.9} parent=5 // pred_check
        %p178 = pneg %p177
      $region30: #{encoder_forward_impl.9} parent=5 // pred_check_branch
        %180 = sbr.rel (%p178) target = $region32
      $region31: #{encoder_forward_impl.9} parent=5 // pred_region
        // Predicated region
        $region33: #{encoder_forward_impl.9} parent=31 // pred_check
          %p181 = pneg %p34
        $region34: #{encoder_forward_impl.9} parent=31 // pred_check_branch
          %183 = sbr.rel (%p181) target = $region36
        $region35: #{encoder_forward_impl.9} parent=31 // pred_region
          %p184 = scmp.lt.s32.totalorder %s14, 1
          %s185 = scalar_select %p184, %s14, 1
          %s186 = smul.addr %s185, 2
          %s187 = smul.addr %s186, 2
          %s188 = scalar_lea.vmem %s0, %s187
        $region36: #{encoder_forward_impl.9} parent=31 // pred_fallthru
          _
      $region32: #{encoder_forward_impl.9} parent=5 // pred_fallthru
        _
      %p189 = scmp.le.s32.totalorder 1, %s14
      %p190 = scmp.lt.s32.totalorder %s14, 3
      %p191 = pnand %p189, %p190
      %p192 = pneg %p191
      // Predicated region
      $region37: #{encoder_forward_impl.9} parent=5 // pred_check
        _
      $region38: #{encoder_forward_impl.9} parent=5 // pred_check_branch
        %194 = sbr.rel (%p191) target = $region40
      $region39: #{encoder_forward_impl.9} parent=5 // pred_region
        %s195 = ssub.s32 %s14, 1
        %p196 = scmp.lt.s32.totalorder %s19, 1
        %s197 = scalar_select %p196, %s19, 1
        %s198 = smul.addr %s197, 2
        %s199 = smul.addr %s198, 2
        %s200 = scalar_lea.vmem %s0, %s199
        %p201 = pneg %p40
        %p202 = pneg %p37
        %p203 = pneg %p61
        %p204 = pneg %p58
        %p205 = pneg %p82
        %p206 = pneg %p79
        %p207 = pneg %p103
        %p208 = pneg %p100
        %p209 = pneg %p124
        %p210 = pneg %p121
        %p211 = pneg %p150
        %p212 = pneg %p147
        %s213 = sand.u32 %s137, 1
        %s214 = scalar_lea.sflag [#allocation5], %s213
        %s215 = sand.u32 %s137, 1
        %s216 = scalar_lea.vmem [#allocation4], %s215
        %p217 = scmp.lt.s32.totalorder %s19, 1
        %s218 = scalar_select %p217, %s19, 1
        %s219 = smul.addr %s218, 2
        %s220 = smul.addr %s219, 2
        %s221 = scalar_lea.vmem %s0, %s220
        %p222 = scmp.eq.s32.totalorder %s19, 0
        // Predicated region
        $region41: #{encoder_forward_impl.9} parent=39 // pred_check
          %p223 = pneg %p222
        $region42: #{encoder_forward_impl.9} parent=39 // pred_check_branch
          %225 = sbr.rel (%p223) target = $region44
        $region43: #{encoder_forward_impl.9} parent=39 // pred_region
          %vm226 = vcmask 256000
          %227 = vst.msk [vmem:[#allocation2] sm:$0x7] %vm226, 0.0
          %228 = vst.msk [vmem:[#allocation2 + $0x4] sm:$0x7] %vm226, 0.0
          %229 = vst.msk [vmem:[#allocation2 + $0x8] sm:$0x7] %vm226, 0.0
          %vm230 = vcmask 518144
          %231 = vst.msk [vmem:[#allocation3] sm:$0x7] %vm230, 0.0
          %232 = vst.msk [vmem:[#allocation3 + $0x4] sm:$0x7] %vm230, 0.0
          %233 = vst.msk [vmem:[#allocation3 + $0x8] sm:$0x7] %vm230, 0.0
        $region44: #{encoder_forward_impl.9} parent=39 // pred_fallthru
          _
        %v234 = vld [vmem:[%s221] sm:$0x3]
        %v235 = vld [vmem:[%s221 + $0x2] sm:$0x3]
        %v236 = vmax.f32 %v234, %v235
        %vm237 = vcmask 254976
        %v238 = vsel %vm237, %v236, -inf
        %v239 = vrot.slane %v238, 4
        %v240 = vmax.f32 %v238, %v239
        %v241 = vrot.slane %v240, 2
        %v242 = vmax.f32 %v240, %v241
        %v243 = vrot.slane %v242, 1
        %v244 = vmax.f32 %v242, %v243
        %s245 = scalar_lea.vmem [#allocation2], 4
        %vm246 = vcmask 253952
        %247 = vst.msk [vmem:[%s245 + $0x1] sm:$0x1] %vm246, %v244
        %v248 = vld [vmem:[#allocation2] sm:$0x7]
        %v249 = vld [vmem:[#allocation2 + $0x4] sm:$0x7]
        %v250 = vld [vmem:[#allocation2 + $0x8] sm:$0x7]
        %v252 = vrot.slane %v248, 1
        %253 = vrot.lane.b32.xlu0 %v252, 32
        %v254 = vpop.permute.xlu0 %253
        %v256 = vrot.slane %v248, 2
        %257 = vrot.lane.b32.xlu0 %v256, 64
        %v258 = vpop.permute.xlu0 %257
        %261 = vrot.lane.b32.xlu0 %v249, 96
        %v262 = vpop.permute.xlu0 %261
        %v264 = vrot.slane %v249, 1
        %v266 = vrot.slane %v249, 2
        %267 = vrot.lane.b32.xlu0 %v266, 32
        %v268 = vpop.permute.xlu0 %267
        %271 = vrot.lane.b32.xlu0 %v250, 64
        %v272 = vpop.permute.xlu0 %271
        %v274 = vrot.slane %v250, 1
        %275 = vrot.lane.b32.xlu0 %v274, 96
        %v276 = vpop.permute.xlu0 %275
        %v278 = vrot.slane %v250, 2
        %vm279 = vcmask 261120
        %v280 = vsel %vm279, %v248, %v254
        %vm281 = vcmask 523264
        %v282 = vsel %vm281, %v280, %v258
        %vm283 = vcmask 785408
        %v284 = vsel %vm283, %v282, %v262
        %v285 = vsel %vm279, %v264, %v268
        %v286 = vsel %vm281, %v285, %v272
        %v287 = vsel %vm283, %v286, %v276
        %v288 = vld [vmem:[%s1] sm:$0xff]
        %v289 = vld [vmem:[%s1 + $0x8] sm:$0xff]
        %v290 = vld [vmem:[%s1 + $0x10] sm:$0xff]
        %v291 = vld [vmem:[%s1 + $0x18] sm:$0xff]
        %v292 = vld [vmem:[%s1 + $0x20] sm:$0xff]
        %v293 = vld [vmem:[%s1 + $0x28] sm:$0xff]
        %v294 = vld [vmem:[%s1 + $0x30] sm:$0xff]
        %v295 = vld [vmem:[%s1 + $0x38] sm:$0xff]
        %v296 = vld [vmem:[%s1 + $0x40] sm:$0xff]
        %v297 = vld [vmem:[%s1 + $0x48] sm:$0xff]
        %v298 = vld [vmem:[%s1 + $0x50] sm:$0xff]
        %v299 = vld [vmem:[%s1 + $0x58] sm:$0xff]
        %v300 = vld [vmem:[%s1 + $0x60] sm:$0xff]
        %v301 = vld [vmem:[%s1 + $0x68] sm:$0xff]
        %v302 = vld [vmem:[%s1 + $0x70] sm:$0xff]
        %v303 = vld [vmem:[%s1 + $0x78] sm:$0xff]
        %v304 = vld [vmem:[%s1 + $0x80] sm:$0xff]
        %v305 = vld [vmem:[%s1 + $0x88] sm:$0xff]
        %v306 = vld [vmem:[%s1 + $0x90] sm:$0xff]
        %v307 = vld [vmem:[%s1 + $0x98] sm:$0xff]
        %v308 = vld [vmem:[%s1 + $0xa0] sm:$0xff]
        %v309 = vld [vmem:[%s1 + $0xa8] sm:$0xff]
        %v310 = vld [vmem:[%s1 + $0xb0] sm:$0xff]
        %v311 = vld [vmem:[%s1 + $0xb8] sm:$0xff]
        %v312 = vld [vmem:[%s1 + $0xc0] sm:$0xff]
        %v313 = vld [vmem:[%s1 + $0xc8] sm:$0xff]
        %v314 = vld [vmem:[%s1 + $0xd0] sm:$0xff]
        %v315 = vld [vmem:[%s1 + $0xd8] sm:$0xff]
        %v316 = vld [vmem:[%s1 + $0xe0] sm:$0xff]
        %v317 = vld [vmem:[%s1 + $0xe8] sm:$0xff]
        %v318 = vld [vmem:[%s1 + $0xf0] sm:$0xff]
        %v319 = vld [vmem:[%s1 + $0xf8] sm:$0xff]
        %v320 = vld [vmem:[%s1 + $0x100] sm:$0xff]
        %v321 = vld [vmem:[%s1 + $0x108] sm:$0xff]
        %v322 = vld [vmem:[%s1 + $0x110] sm:$0xff]
        %v323 = vld [vmem:[%s1 + $0x118] sm:$0xff]
        %v324 = vld [vmem:[%s2] sm:$0x1]
        %v325 = vsel %vm279, %v278, 0
        %327 = vmatpush.msra.mxu0 %v303
        %328 = vmatpush.msra.mxu0 %v302
        %329 = vmatpush.msra.mxu0 %v301
        %330 = vmatpush.msra.mxu0 %v300
        %331 = vmatpush.msra.mxu0 %v299
        %332 = vmatpush.msra.mxu0 %v298
        %333 = vmatpush.msra.mxu0 %v297
        %334 = vmatpush.msra.mxu0 %v296
        %335 = vmatpush.msra.mxu0 %v295
        %336 = vmatpush.msra.mxu0 %v294
        %337 = vmatpush.msra.mxu0 %v293
        %338 = vmatpush.msra.mxu0 %v292
        %339 = vmatpush.msra.mxu0 %v291
        %340 = vmatpush.msra.mxu0 %v290
        %341 = vmatpush.msra.mxu0 %v289
        %342 = vmatpush.msra.mxu0 %v288
        %343 = vmatmul.f32.gmra.mxu0 %v284
        %v344 = vpop.f32.mrf.mxu0
        %v345 = vadd.f32 %v324, %v344
        %346 = vdwg.mxu0
        %347 = vmatpush.msra.mxu0 %v319
        %348 = vmatpush.msra.mxu0 %v318
        %349 = vmatpush.msra.mxu0 %v317
        %350 = vmatpush.msra.mxu0 %v316
        %351 = vmatpush.msra.mxu0 %v315
        %352 = vmatpush.msra.mxu0 %v314
        %353 = vmatpush.msra.mxu0 %v313
        %354 = vmatpush.msra.mxu0 %v312
        %355 = vmatpush.msra.mxu0 %v311
        %356 = vmatpush.msra.mxu0 %v310
        %357 = vmatpush.msra.mxu0 %v309
        %358 = vmatpush.msra.mxu0 %v308
        %359 = vmatpush.msra.mxu0 %v307
        %360 = vmatpush.msra.mxu0 %v306
        %361 = vmatpush.msra.mxu0 %v305
        %362 = vmatpush.msra.mxu0 %v304
        %363 = vmatmul.f32.gmra.mxu0 %v287
        %v364 = vpop.f32.mrf.mxu0
        %v365 = vadd.f32 %v345, %v364
        %366 = vdwg.mxu0
        %367 = vmatpush.msra.mxu0 0.0
        %368 = vmatpush.msra.mxu0 0.0
        %369 = vmatpush.msra.mxu0 0.0
        %370 = vmatpush.msra.mxu0 0.0
        %371 = vmatpush.msra.mxu0 0.0
        %372 = vmatpush.msra.mxu0 0.0
        %373 = vmatpush.msra.mxu0 0.0
        %374 = vmatpush.msra.mxu0 0.0
        %375 = vmatpush.msra.mxu0 0.0
        %376 = vmatpush.msra.mxu0 0.0
        %377 = vmatpush.msra.mxu0 0.0
        %378 = vmatpush.msra.mxu0 0.0
        %379 = vmatpush.msra.mxu0 %v323
        %380 = vmatpush.msra.mxu0 %v322
        %381 = vmatpush.msra.mxu0 %v321
        %382 = vmatpush.msra.mxu0 %v320
        %383 = vmatmul.f32.gmra.mxu0 %v325
        %v384 = vpop.f32.mrf.mxu0
        %v385 = vadd.f32 %v365, %v384
        %386 = vdwg.mxu0
        %vm387 = vcmp.ge.f32.partialorder %v385, 0.0
        %v388 = vmul.f32 %v385, 0.01
        %v389 = vsel %vm387, %v385, %v388
        %s390 = scalar_lea.vmem [#allocation3], 4
        %vm391 = vcmask 516096
        %392 = vst.msk [vmem:[%s390 + $0x1] sm:$0x1] %vm391, %v389
        %v393 = vld [vmem:[#allocation3] sm:$0x7]
        %v394 = vld [vmem:[#allocation3 + $0x4] sm:$0x7]
        %v395 = vld [vmem:[#allocation3 + $0x8] sm:$0x7]
        %v397 = vrot.slane %v393, 1
        %398 = vrot.lane.b32.xlu0 %v397, 64
        %v399 = vpop.permute.xlu0 %398
        %v401 = vrot.slane %v393, 2
        %404 = vrot.lane.b32.xlu0 %v394, 64
        %v405 = vpop.permute.xlu0 %404
        %v407 = vrot.slane %v394, 1
        %v409 = vrot.slane %v394, 2
        %410 = vrot.lane.b32.xlu0 %v409, 64
        %v411 = vpop.permute.xlu0 %410
        %v414 = vrot.slane %v395, 1
        %415 = vrot.lane.b32.xlu0 %v414, 64
        %v416 = vpop.permute.xlu0 %415
        %v418 = vrot.slane %v395, 2
        %v419 = vsel %vm281, %v393, %v399
        %v420 = vsel %vm281, %v401, %v405
        %v421 = vsel %vm281, %v407, %v411
        %v422 = vsel %vm281, %v395, %v416
        %v423 = vld [vmem:[%s3] sm:$0xff]
        %v424 = vld [vmem:[%s3 + $0x8] sm:$0xff]
        %v425 = vld [vmem:[%s3 + $0x10] sm:$0xff]
        %v426 = vld [vmem:[%s3 + $0x18] sm:$0xff]
        %v427 = vld [vmem:[%s3 + $0x20] sm:$0xff]
        %v428 = vld [vmem:[%s3 + $0x28] sm:$0xff]
        %v429 = vld [vmem:[%s3 + $0x30] sm:$0xff]
        %v430 = vld [vmem:[%s3 + $0x38] sm:$0xff]
        %v431 = vld [vmem:[%s3 + $0x40] sm:$0xff]
        %v432 = vld [vmem:[%s3 + $0x48] sm:$0xff]
        %v433 = vld [vmem:[%s3 + $0x50] sm:$0xff]
        %v434 = vld [vmem:[%s3 + $0x58] sm:$0xff]
        %v435 = vld [vmem:[%s3 + $0x60] sm:$0xff]
        %v436 = vld [vmem:[%s3 + $0x68] sm:$0xff]
        %v437 = vld [vmem:[%s3 + $0x70] sm:$0xff]
        %v438 = vld [vmem:[%s3 + $0x78] sm:$0xff]
        %v439 = vld [vmem:[%s3 + $0x80] sm:$0xff]
        %v440 = vld [vmem:[%s3 + $0x88] sm:$0xff]
        %v441 = vld [vmem:[%s3 + $0x90] sm:$0xff]
        %v442 = vld [vmem:[%s3 + $0x98] sm:$0xff]
        %v443 = vld [vmem:[%s3 + $0xa0] sm:$0xff]
        %v444 = vld [vmem:[%s3 + $0xa8] sm:$0xff]
        %v445 = vld [vmem:[%s3 + $0xb0] sm:$0xff]
        %v446 = vld [vmem:[%s3 + $0xb8] sm:$0xff]
        %v447 = vld [vmem:[%s3 + $0xc0] sm:$0xff]
        %v448 = vld [vmem:[%s3 + $0xc8] sm:$0xff]
        %v449 = vld [vmem:[%s3 + $0xd0] sm:$0xff]
        %v450 = vld [vmem:[%s3 + $0xd8] sm:$0xff]
        %v451 = vld [vmem:[%s3 + $0xe0] sm:$0xff]
        %v452 = vld [vmem:[%s3 + $0xe8] sm:$0xff]
        %v453 = vld [vmem:[%s3 + $0xf0] sm:$0xff]
        %v454 = vld [vmem:[%s3 + $0xf8] sm:$0xff]
        %v455 = vld [vmem:[%s3 + $0x100] sm:$0xff]
        %v456 = vld [vmem:[%s3 + $0x108] sm:$0xff]
        %v457 = vld [vmem:[%s3 + $0x110] sm:$0xff]
        %v458 = vld [vmem:[%s3 + $0x118] sm:$0xff]
        %v459 = vld [vmem:[%s3 + $0x120] sm:$0xff]
        %v460 = vld [vmem:[%s3 + $0x128] sm:$0xff]
        %v461 = vld [vmem:[%s3 + $0x130] sm:$0xff]
        %v462 = vld [vmem:[%s3 + $0x138] sm:$0xff]
        %v463 = vld [vmem:[%s3 + $0x140] sm:$0xff]
        %v464 = vld [vmem:[%s3 + $0x148] sm:$0xff]
        %v465 = vld [vmem:[%s3 + $0x150] sm:$0xff]
        %v466 = vld [vmem:[%s3 + $0x158] sm:$0xff]
        %v467 = vld [vmem:[%s3 + $0x160] sm:$0xff]
        %v468 = vld [vmem:[%s3 + $0x168] sm:$0xff]
        %v469 = vld [vmem:[%s3 + $0x170] sm:$0xff]
        %v470 = vld [vmem:[%s3 + $0x178] sm:$0xff]
        %v471 = vld [vmem:[%s3 + $0x180] sm:$0xff]
        %v472 = vld [vmem:[%s3 + $0x188] sm:$0xff]
        %v473 = vld [vmem:[%s3 + $0x190] sm:$0xff]
        %v474 = vld [vmem:[%s3 + $0x198] sm:$0xff]
        %v475 = vld [vmem:[%s3 + $0x1a0] sm:$0xff]
        %v476 = vld [vmem:[%s3 + $0x1a8] sm:$0xff]
        %v477 = vld [vmem:[%s3 + $0x1b0] sm:$0xff]
        %v478 = vld [vmem:[%s3 + $0x1b8] sm:$0xff]
        %v479 = vld [vmem:[%s3 + $0x1c0] sm:$0xff]
        %v480 = vld [vmem:[%s3 + $0x1c8] sm:$0xff]
        %v481 = vld [vmem:[%s3 + $0x1d0] sm:$0xff]
        %v482 = vld [vmem:[%s3 + $0x1d8] sm:$0xff]
        %v483 = vld [vmem:[%s3 + $0x1e0] sm:$0xff]
        %v484 = vld [vmem:[%s3 + $0x1e8] sm:$0xff]
        %v485 = vld [vmem:[%s3 + $0x1f0] sm:$0xff]
        %v486 = vld [vmem:[%s3 + $0x1f8] sm:$0xff]
        %v487 = vld [vmem:[%s3 + $0x200] sm:$0xff]
        %v488 = vld [vmem:[%s3 + $0x208] sm:$0xff]
        %v489 = vld [vmem:[%s3 + $0x210] sm:$0xff]
        %v490 = vld [vmem:[%s3 + $0x218] sm:$0xff]
        %v491 = vld [vmem:[%s3 + $0x220] sm:$0xff]
        %v492 = vld [vmem:[%s3 + $0x228] sm:$0xff]
        %v493 = vld [vmem:[%s3 + $0x230] sm:$0xff]
        %v494 = vld [vmem:[%s3 + $0x238] sm:$0xff]
        %v495 = vld [vmem:[%s4] sm:$0x1]
        %v496 = vsel %vm281, %v418, 0
        %498 = vmatpush.msra.mxu0 %v438
        %499 = vmatpush.msra.mxu0 %v437
        %500 = vmatpush.msra.mxu0 %v436
        %501 = vmatpush.msra.mxu0 %v435
        %502 = vmatpush.msra.mxu0 %v434
        %503 = vmatpush.msra.mxu0 %v433
        %504 = vmatpush.msra.mxu0 %v432
        %505 = vmatpush.msra.mxu0 %v431
        %506 = vmatpush.msra.mxu0 %v430
        %507 = vmatpush.msra.mxu0 %v429
        %508 = vmatpush.msra.mxu0 %v428
        %509 = vmatpush.msra.mxu0 %v427
        %510 = vmatpush.msra.mxu0 %v426
        %511 = vmatpush.msra.mxu0 %v425
        %512 = vmatpush.msra.mxu0 %v424
        %513 = vmatpush.msra.mxu0 %v423
        %514 = vmatmul.f32.gmra.mxu0 %v419
        %v515 = vpop.f32.mrf.mxu0
        %v516 = vadd.f32 %v495, %v515
        %517 = vdwg.mxu0
        %518 = vmatpush.msra.mxu0 %v454
        %519 = vmatpush.msra.mxu0 %v453
        %520 = vmatpush.msra.mxu0 %v452
        %521 = vmatpush.msra.mxu0 %v451
        %522 = vmatpush.msra.mxu0 %v450
        %523 = vmatpush.msra.mxu0 %v449
        %524 = vmatpush.msra.mxu0 %v448
        %525 = vmatpush.msra.mxu0 %v447
        %526 = vmatpush.msra.mxu0 %v446
        %527 = vmatpush.msra.mxu0 %v445
        %528 = vmatpush.msra.mxu0 %v444
        %529 = vmatpush.msra.mxu0 %v443
        %530 = vmatpush.msra.mxu0 %v442
        %531 = vmatpush.msra.mxu0 %v441
        %532 = vmatpush.msra.mxu0 %v440
        %533 = vmatpush.msra.mxu0 %v439
        %534 = vmatmul.f32.gmra.mxu0 %v420
        %v535 = vpop.f32.mrf.mxu0
        %v536 = vadd.f32 %v516, %v535
        %537 = vdwg.mxu0
        %538 = vmatpush.msra.mxu0 %v470
        %539 = vmatpush.msra.mxu0 %v469
        %540 = vmatpush.msra.mxu0 %v468
        %541 = vmatpush.msra.mxu0 %v467
        %542 = vmatpush.msra.mxu0 %v466
        %543 = vmatpush.msra.mxu0 %v465
        %544 = vmatpush.msra.mxu0 %v464
        %545 = vmatpush.msra.mxu0 %v463
        %546 = vmatpush.msra.mxu0 %v462
        %547 = vmatpush.msra.mxu0 %v461
        %548 = vmatpush.msra.mxu0 %v460
        %549 = vmatpush.msra.mxu0 %v459
        %550 = vmatpush.msra.mxu0 %v458
        %551 = vmatpush.msra.mxu0 %v457
        %552 = vmatpush.msra.mxu0 %v456
        %553 = vmatpush.msra.mxu0 %v455
        %554 = vmatmul.f32.gmra.mxu0 %v421
        %v555 = vpop.f32.mrf.mxu0
        %v556 = vadd.f32 %v536, %v555
        %557 = vdwg.mxu0
        %558 = vmatpush.msra.mxu0 %v486
        %559 = vmatpush.msra.mxu0 %v485
        %560 = vmatpush.msra.mxu0 %v484
        %561 = vmatpush.msra.mxu0 %v483
        %562 = vmatpush.msra.mxu0 %v482
        %563 = vmatpush.msra.mxu0 %v481
        %564 = vmatpush.msra.mxu0 %v480
        %565 = vmatpush.msra.mxu0 %v479
        %566 = vmatpush.msra.mxu0 %v478
        %567 = vmatpush.msra.mxu0 %v477
        %568 = vmatpush.msra.mxu0 %v476
        %569 = vmatpush.msra.mxu0 %v475
        %570 = vmatpush.msra.mxu0 %v474
        %571 = vmatpush.msra.mxu0 %v473
        %572 = vmatpush.msra.mxu0 %v472
        %573 = vmatpush.msra.mxu0 %v471
        %574 = vmatmul.f32.gmra.mxu0 %v422
        %v575 = vpop.f32.mrf.mxu0
        %v576 = vadd.f32 %v556, %v575
        %577 = vdwg.mxu0
        %578 = vmatpush.msra.mxu0 0.0
        %579 = vmatpush.msra.mxu0 0.0
        %580 = vmatpush.msra.mxu0 0.0
        %581 = vmatpush.msra.mxu0 0.0
        %582 = vmatpush.msra.mxu0 0.0
        %583 = vmatpush.msra.mxu0 0.0
        %584 = vmatpush.msra.mxu0 0.0
        %585 = vmatpush.msra.mxu0 0.0
        %586 = vmatpush.msra.mxu0 %v494
        %587 = vmatpush.msra.mxu0 %v493
        %588 = vmatpush.msra.mxu0 %v492
        %589 = vmatpush.msra.mxu0 %v491
        %590 = vmatpush.msra.mxu0 %v490
        %591 = vmatpush.msra.mxu0 %v489
        %592 = vmatpush.msra.mxu0 %v488
        %593 = vmatpush.msra.mxu0 %v487
        %594 = vmatmul.f32.gmra.mxu0 %v496
        %v595 = vpop.f32.mrf.mxu0
        %v596 = vadd.f32 %v576, %v595
        %597 = vdwg.mxu0
        %vm598 = vcmp.ge.f32.partialorder %v596, 0.0
        %v599 = vmul.f32 %v596, 0.01
        %v600 = vsel %vm598, %v596, %v599
        %601 = vst.msk [vmem:[%s216] sm:$0x1] %vm391, %v600
        %s602 = sand.u32 %s137, 1
        %s603 = scalar_lea.sflag [#allocation5], %s602
        %s604 = sand.u32 %s137, 1
        %s605 = scalar_lea.vmem [#allocation4], %s604
        // Predicated region
        $region45: #{encoder_forward_impl.9} parent=39 // pred_check
          %p606 = pneg %p147
        $region46: #{encoder_forward_impl.9} parent=39 // pred_check_branch
          %608 = sbr.rel (%p606) target = $region48
        $region47: #{encoder_forward_impl.9} parent=39 // pred_region
          %610 = vsyncadd %s603, 0
          %s611 = scalar_lea.hbm %s5, %s19
          %s613 = sshll.u32 %s605, 4
          %s614 = int_to_ptr.vmem [resolvable:$true] %s613
          %s615 = sshll.u32 %s611, 4
          %s616 = int_to_ptr.hbm [resolvable:$true] %s615
          %618 = dma.vmem_to_hbm [thread:$0]  %s614, 16, %s616, %s603
        $region48: #{encoder_forward_impl.9} parent=39 // pred_fallthru
          _
      $region40: #{encoder_forward_impl.9} parent=5 // pred_fallthru
        _
      %p619 = scmp.le.s32.totalorder 2, %s14
      // Predicated region
      $region49: #{encoder_forward_impl.9} parent=5 // pred_check
        %p620 = pneg %p619
      $region50: #{encoder_forward_impl.9} parent=5 // pred_check_branch
        %622 = sbr.rel (%p620) target = $region52
      $region51: #{encoder_forward_impl.9} parent=5 // pred_region
        %s623 = ssub.s32 %s14, 2
        // Predicated region
        $region53: #{encoder_forward_impl.9} parent=51 // pred_check
          %p624 = pneg %p153
        $region54: #{encoder_forward_impl.9} parent=51 // pred_check_branch
          %626 = sbr.rel (%p624) target = $region56
        $region55: #{encoder_forward_impl.9} parent=51 // pred_region
          %s627 = sand.u32 %s138, 1
          %s628 = scalar_lea.sflag [#allocation5], %s627
          %s629 = sand.u32 %s138, 1
          %s630 = scalar_lea.vmem [#allocation4], %s629
          %632 = dma.done %s628, 16
        $region56: #{encoder_forward_impl.9} parent=51 // pred_fallthru
          _
      $region52: #{encoder_forward_impl.9} parent=5 // pred_fallthru
        _
    $region6: #{encoder_forward_impl.9} parent=1 // loop_footer
      %s18 = sadd.s32 1, %s14
    $region7: #{encoder_forward_impl.9} parent=1 // loop_footer_branch
      %13 = sbr.rel target = $region3
    $region8: #{encoder_forward_impl.9} parent=1 // loop_exit
      _
    %633 = vsyncpa [#allocation5], 1
    %s634 = scalar_lea.sflag [#allocation5], 1
    %635 = vsyncpa %s634, 1

// kernel: encoder_forward_impl.5
$region0: #{encoder_forward_impl.5}
  #allocation0 [shape = 'u32[]', space=smem, size = 0x4, offset = 0x4, fixed_abs, tag = 'smem constant byte address 0x4 - core index']
  #allocation1 [shape = 'u32[72,128]{1,0:T(1,128)}', space=vmem, size = 0x9000, scoped, tag = 'internal scratch']
  #allocation2 [shape = 'f32[18,18,4]{2,1,0:T(8,128)}', space=vmem, size = 0x36000, scoped, tag = 'scratch operand']
  #allocation3 [shape = 'f32[18,18,8]{2,1,0:T(8,128)}', space=vmem, size = 0x36000, scoped, tag = 'scratch operand']
  %s0 = inlined_call_operand.vmem [shape: f32[2,16,16,4], index: 0, kind: input, shape index: {}]
  %s1 = inlined_call_operand.vmem [shape: f32[36,8], index: 1, kind: input, shape index: {}]
  %s2 = inlined_call_operand.vmem [shape: f32[1,8], index: 2, kind: input, shape index: {}]
  %s3 = inlined_call_operand.vmem [shape: f32[72,8], index: 3, kind: input, shape index: {}]
  %s4 = inlined_call_operand.vmem [shape: f32[1,8], index: 4, kind: input, shape index: {}]
  %s5 = inlined_call_operand.vmem [shape: f32[2,256,8], index: 5, kind: output, shape index: {}]
  %s6 = sld [smem:[#allocation0]]
  $region57: #{encoder_forward_impl.5} parent=0
    _
  %s8 = ssub.s32 1, %s6
  %s9 = scalar_select 0, %s8, %s6
  loop: start=0, step=1, limit=4
  $region2: #{encoder_forward_impl.5} parent=0 // loop_pre_header
    _
  $region3: #{encoder_forward_impl.5} parent=0 // loop_header
    %s11 = sphi 0, %s15
    %p12 = scmp.ge.s32.totalorder %s11, 4
    %s21 = sphi 0, %s23
    %s24 = sphi 0, %s21
    %s25 = sphi 0, %s24
    %s41 = sphi 0, %s25
    %s45 = sphi 0, %s45
    %s47 = sphi 0, %s45
    %s48 = sphi 0, %s47
    %s62 = sphi 0, %s48
    %s66 = sphi 0, %s66
    %s68 = sphi 0, %s66
    %s69 = sphi 0, %s68
    %s83 = sphi 0, %s69
    %s87 = sphi 0, %s87
    %s89 = sphi 0, %s87
    %s90 = sphi 0, %s89
    %s104 = sphi 0, %s90
    %s108 = sphi 0, %s108
    %s110 = sphi 0, %s108
    %s111 = sphi 0, %s110
    %s125 = sphi 0, %s111
    %s131 = sphi 0, %s133
    %s134 = sphi 0, %s131
    %s135 = sphi 0, %s134
    %s151 = sphi 0, %s135
  $region4: #{encoder_forward_impl.5} parent=0 // loop_header_branch
    %14 = sbr.rel (%p12) target = $region8
  $region5: #{encoder_forward_impl.5} parent=0 // loop_body
    %s16 = ssub.s32 %s11, 1
    %s17 = ssub.s32 %s11, 2
    %s18 = sadd.s32 %s11, 1
    %s19 = ssub.s32 %s11, %s18
    %p20 = scmp.eq.s32.totalorder %s19, 0
    %s22 = sadd.s32 %s21, 1
    %s23 = scalar_select %p20, %s21, %s22
    %p26 = pneg %p20
    %p27 = scmp.eq.s32.totalorder %s11, 1
    %p28 = por %p26, %p27
    %p29 = scmp.ne.s32.totalorder %s21, %s24
    %p30 = scmp.eq.s32.totalorder %s11, 0
    %p31 = por %p29, %p30
    %p32 = scmp.ne.s32.totalorder %s21, %s24
    %p33 = scmp.eq.s32.totalorder %s16, 1
    %p34 = por %p32, %p33
    %p35 = scmp.ne.s32.totalorder %s24, %s25
    %p36 = scmp.eq.s32.totalorder %s16, 0
    %p37 = por %p35, %p36
    %p38 = scmp.ne.s32.totalorder %s24, %s25
    %p39 = scmp.eq.s32.totalorder %s17, 1
    %p40 = por %p38, %p39
    %p42 = scmp.ne.s32.totalorder %s25, %s41
    %p43 = scmp.eq.s32.totalorder %s17, 0
    %p44 = por %p42, %p43
    %s46 = sadd.s32 %s45, 1
    %p49 = scmp.eq.s32.totalorder %s11, 1
    %p50 = scmp.ne.s32.totalorder %s45, %s47
    %p51 = scmp.eq.s32.totalorder %s11, 0
    %p52 = por %p50, %p51
    %p53 = scmp.ne.s32.totalorder %s45, %s47
    %p54 = scmp.eq.s32.totalorder %s16, 1
    %p55 = por %p53, %p54
    %p56 = scmp.ne.s32.totalorder %s47, %s48
    %p57 = scmp.eq.s32.totalorder %s16, 0
    %p58 = por %p56, %p57
    %p59 = scmp.ne.s32.totalorder %s47, %s48
    %p60 = scmp.eq.s32.totalorder %s17, 1
    %p61 = por %p59, %p60
    %p63 = scmp.ne.s32.totalorder %s48, %s62
    %p64 = scmp.eq.s32.totalorder %s17, 0
    %p65 = por %p63, %p64
    %s67 = sadd.s32 %s66, 1
    %p70 = scmp.eq.s32.totalorder %s11, 1
    %p71 = scmp.ne.s32.totalorder %s66, %s68
    %p72 = scmp.eq.s32.totalorder %s11, 0
    %p73 = por %p71, %p72
    %p74 = scmp.ne.s32.totalorder %s66, %s68
    %p75 = scmp.eq.s32.totalorder %s16, 1
    %p76 = por %p74, %p75
    %p77 = scmp.ne.s32.totalorder %s68, %s69
    %p78 = scmp.eq.s32.totalorder %s16, 0
    %p79 = por %p77, %p78
    %p80 = scmp.ne.s32.totalorder %s68, %s69
    %p81 = scmp.eq.s32.totalorder %s17, 1
    %p82 = por %p80, %p81
    %p84 = scmp.ne.s32.totalorder %s69, %s83
    %p85 = scmp.eq.s32.totalorder %s17, 0
    %p86 = por %p84, %p85
    %s88 = sadd.s32 %s87, 1
    %p91 = scmp.eq.s32.totalorder %s11, 1
    %p92 = scmp.ne.s32.totalorder %s87, %s89
    %p93 = scmp.eq.s32.totalorder %s11, 0
    %p94 = por %p92, %p93
    %p95 = scmp.ne.s32.totalorder %s87, %s89
    %p96 = scmp.eq.s32.totalorder %s16, 1
    %p97 = por %p95, %p96
    %p98 = scmp.ne.s32.totalorder %s89, %s90
    %p99 = scmp.eq.s32.totalorder %s16, 0
    %p100 = por %p98, %p99
    %p101 = scmp.ne.s32.totalorder %s89, %s90
    %p102 = scmp.eq.s32.totalorder %s17, 1
    %p103 = por %p101, %p102
    %p105 = scmp.ne.s32.totalorder %s90, %s104
    %p106 = scmp.eq.s32.totalorder %s17, 0
    %p107 = por %p105, %p106
    %s109 = sadd.s32 %s108, 1
    %p112 = scmp.eq.s32.totalorder %s11, 1
    %p113 = scmp.ne.s32.totalorder %s108, %s110
    %p114 = scmp.eq.s32.totalorder %s11, 0
    %p115 = por %p113, %p114
    %p116 = scmp.ne.s32.totalorder %s108, %s110
    %p117 = scmp.eq.s32.totalorder %s16, 1
    %p118 = por %p116, %p117
    %p119 = scmp.ne.s32.totalorder %s110, %s111
    %p120 = scmp.eq.s32.totalorder %s16, 0
    %p121 = por %p119, %p120
    %p122 = scmp.ne.s32.totalorder %s110, %s111
    %p123 = scmp.eq.s32.totalorder %s17, 1
    %p124 = por %p122, %p123
    %p126 = scmp.ne.s32.totalorder %s111, %s125
    %p127 = scmp.eq.s32.totalorder %s17, 0
    %p128 = por %p126, %p127
    %s129 = ssub.s32 %s11, %s18
    %p130 = scmp.eq.s32.totalorder %s129, 0
    %s132 = sadd.s32 %s131, 1
    %s133 = scalar_select %p130, %s131, %s132
    %p136 = pneg %p130
    %p137 = scmp.eq.s32.totalorder %s11, 1
    %p138 = por %p136, %p137
    %p139 = scmp.ne.s32.totalorder %s131, %s134
    %p140 = scmp.eq.s32.totalorder %s11, 0
    %p141 = por %p139, %p140
    %p142 = scmp.ne.s32.totalorder %s131, %s134
    %p143 = scmp.eq.s32.totalorder %s16, 1
    %p144 = por %p142, %p143
    %p145 = scmp.ne.s32.totalorder %s134, %s135
    %p146 = scmp.eq.s32.totalorder %s16, 0
    %p147 = por %p145, %p146
    %p148 = scmp.ne.s32.totalorder %s134, %s135
    %p149 = scmp.eq.s32.totalorder %s17, 1
    %p150 = por %p148, %p149
    %p152 = scmp.ne.s32.totalorder %s135, %s151
    %p153 = scmp.eq.s32.totalorder %s17, 0
    %p154 = por %p152, %p153
    %p155 = scmp.le.s32.totalorder 1, %s11
    %p156 = scmp.lt.s32.totalorder %s11, 3
    %p157 = pnand %p155, %p156
    %p158 = pneg %p157
    // Predicated region
    $region9: #{encoder_forward_impl.5} parent=5 // pred_check
      _
    $region10: #{encoder_forward_impl.5} parent=5 // pred_check_branch
      %160 = sbr.rel (%p157) target = $region12
    $region11: #{encoder_forward_impl.5} parent=5 // pred_region
      %s161 = ssub.s32 %s11, 1
      // Predicated region
      $region13: #{encoder_forward_impl.5} parent=11 // pred_check
        %p162 = pneg %p58
      $region14: #{encoder_forward_impl.5} parent=11 // pred_check_branch
        %164 = sbr.rel (%p162) target = $region16
      $region15: #{encoder_forward_impl.5} parent=11 // pred_region
        _
      $region16: #{encoder_forward_impl.5} parent=11 // pred_fallthru
        _
      // Predicated region
      $region17: #{encoder_forward_impl.5} parent=11 // pred_check
        %p165 = pneg %p79
      $region18: #{encoder_forward_impl.5} parent=11 // pred_check_branch
        %167 = sbr.rel (%p165) target = $region20
      $region19: #{encoder_forward_impl.5} parent=11 // pred_region
        _
      $region20: #{encoder_forward_impl.5} parent=11 // pred_fallthru
        _
      // Predicated region
      $region21: #{encoder_forward_impl.5} parent=11 // pred_check
        %p168 = pneg %p100
      $region22: #{encoder_forward_impl.5} parent=11 // pred_check_branch
        %170 = sbr.rel (%p168) target = $region24
      $region23: #{encoder_forward_impl.5} parent=11 // pred_region
        _
      $region24: #{encoder_forward_impl.5} parent=11 // pred_fallthru
        _
      // Predicated region
      $region25: #{encoder_forward_impl.5} parent=11 // pred_check
        %p171 = pneg %p121
      $region26: #{encoder_forward_impl.5} parent=11 // pred_check_branch
        %173 = sbr.rel (%p171) target = $region28
      $region27: #{encoder_forward_impl.5} parent=11 // pred_region
        _
      $region28: #{encoder_forward_impl.5} parent=11 // pred_fallthru
        _
    $region12: #{encoder_forward_impl.5} parent=5 // pred_fallthru
      _
    %p174 = scmp.lt.s32.totalorder %s11, 2
    // Predicated region
    $region29: #{encoder_forward_impl.5} parent=5 // pred_check
      %p175 = pneg %p174
    $region30: #{encoder_forward_impl.5} parent=5 // pred_check_branch
      %177 = sbr.rel (%p175) target = $region32
    $region31: #{encoder_forward_impl.5} parent=5 // pred_region
      // Predicated region
      $region33: #{encoder_forward_impl.5} parent=31 // pred_check
        %p178 = pneg %p31
      $region34: #{encoder_forward_impl.5} parent=31 // pred_check_branch
        %180 = sbr.rel (%p178) target = $region36
      $region35: #{encoder_forward_impl.5} parent=31 // pred_region
        %p181 = scmp.lt.s32.totalorder %s11, 1
        %s182 = scalar_select %p181, %s11, 1
        %s183 = smul.addr %s182, 32
        %s184 = smul.addr %s183, 8
        %s185 = scalar_lea.vmem %s0, %s184
      $region36: #{encoder_forward_impl.5} parent=31 // pred_fallthru
        _
    $region32: #{encoder_forward_impl.5} parent=5 // pred_fallthru
      _
    %p186 = scmp.le.s32.totalorder 1, %s11
    %p187 = scmp.lt.s32.totalorder %s11, 3
    %p188 = pnand %p186, %p187
    %p189 = pneg %p188
    // Predicated region
    $region37: #{encoder_forward_impl.5} parent=5 // pred_check
      _
    $region38: #{encoder_forward_impl.5} parent=5 // pred_check_branch
      %191 = sbr.rel (%p188) target = $region40
    $region39: #{encoder_forward_impl.5} parent=5 // pred_region
      %s192 = ssub.s32 %s11, 1
      %p193 = scmp.lt.s32.totalorder %s16, 1
      %s194 = scalar_select %p193, %s16, 1
      %s195 = smul.addr %s194, 32
      %s196 = smul.addr %s195, 8
      %s197 = scalar_lea.vmem %s0, %s196
      %p198 = pneg %p37
      %p199 = pneg %p34
      %p200 = pneg %p58
      %p201 = pneg %p55
      %p202 = pneg %p79
      %p203 = pneg %p76
      %p204 = pneg %p100
      %p205 = pneg %p97
      %p206 = pneg %p121
      %p207 = pneg %p118
      %p208 = pneg %p147
      %p209 = pneg %p144
      %p210 = scmp.lt.s32.totalorder %s16, 1
      %s211 = scalar_select %p210, %s16, 1
      %s212 = smul.addr %s211, 32
      %s213 = smul.addr %s212, 8
      %s214 = scalar_lea.vmem %s5, %s213
      %p215 = scmp.lt.s32.totalorder %s16, 1
      %s216 = scalar_select %p215, %s16, 1
      %s217 = smul.addr %s216, 32
      %s218 = smul.addr %s217, 8
      %s219 = scalar_lea.vmem %s0, %s218
      %p220 = scmp.lt.s32.totalorder %s16, 1
      %s221 = scalar_select %p220, %s16, 1
      %s222 = smul.addr %s221, 32
      %s223 = smul.addr %s222, 8
      %s224 = scalar_lea.vmem %s5, %s223
      %p225 = scmp.eq.s32.totalorder %s16, 0
      // Predicated region
      $region41: #{encoder_forward_impl.5} parent=39 // pred_check
        %p226 = pneg %p225
      $region42: #{encoder_forward_impl.5} parent=39 // pred_check_branch
        %228 = sbr.rel (%p226) target = $region44
      $region43: #{encoder_forward_impl.5} parent=39 // pred_region
        %vm229 = vcmask 31744
        %230 = vst.msk [vmem:[#allocation2] sm:$0xff] %vm229, 0.0
        %231 = vst.msk [vmem:[#allocation2 + $0x8] sm:$0xff] %vm229, 0.0
        %vm232 = vcmask 25600
        %233 = vst.msk [vmem:[#allocation2 + $0x10] sm:$0x3] %vm232, 0.0
        %234 = vst.msk [vmem:[#allocation2 + $0x18] sm:$0xff] %vm229, 0.0
        %235 = vst.msk [vmem:[#allocation2 + $0x20] sm:$0xff] %vm229, 0.0
        %236 = vst.msk [vmem:[#allocation2 + $0x28] sm:$0x3] %vm232, 0.0
        %237 = vst.msk [vmem:[#allocation2 + $0x30] sm:$0xff] %vm229, 0.0
        %238 = vst.msk [vmem:[#allocation2 + $0x38] sm:$0xff] %vm229, 0.0
        %239 = vst.msk [vmem:[#allocation2 + $0x40] sm:$0x3] %vm232, 0.0
        %240 = vst.msk [vmem:[#allocation2 + $0x48] sm:$0xff] %vm229, 0.0
        %241 = vst.msk [vmem:[#allocation2 + $0x50] sm:$0xff] %vm229, 0.0
        %242 = vst.msk [vmem:[#allocation2 + $0x58] sm:$0x3] %vm232, 0.0
        %243 = vst.msk [vmem:[#allocation2 + $0x60] sm:$0xff] %vm229, 0.0
        %244 = vst.msk [vmem:[#allocation2 + $0x68] sm:$0xff] %vm229, 0.0
        %245 = vst.msk [vmem:[#allocation2 + $0x70] sm:$0x3] %vm232, 0.0
        %246 = vst.msk [vmem:[#allocation2 + $0x78] sm:$0xff] %vm229, 0.0
        %247 = vst.msk [vmem:[#allocation2 + $0x80] sm:$0xff] %vm229, 0.0
        %248 = vst.msk [vmem:[#allocation2 + $0x88] sm:$0x3] %vm232, 0.0
        %249 = vst.msk [vmem:[#allocation2 + $0x90] sm:$0xff] %vm229, 0.0
        %250 = vst.msk [vmem:[#allocation2 + $0x98] sm:$0xff] %vm229, 0.0
        %251 = vst.msk [vmem:[#allocation2 + $0xa0] sm:$0x3] %vm232, 0.0
        %252 = vst.msk [vmem:[#allocation2 + $0xa8] sm:$0xff] %vm229, 0.0
        %253 = vst.msk [vmem:[#allocation2 + $0xb0] sm:$0xff] %vm229, 0.0
        %254 = vst.msk [vmem:[#allocation2 + $0xb8] sm:$0x3] %vm232, 0.0
        %255 = vst.msk [vmem:[#allocation2 + $0xc0] sm:$0xff] %vm229, 0.0
        %256 = vst.msk [vmem:[#allocation2 + $0xc8] sm:$0xff] %vm229, 0.0
        %257 = vst.msk [vmem:[#allocation2 + $0xd0] sm:$0x3] %vm232, 0.0
        %258 = vst.msk [vmem:[#allocation2 + $0xd8] sm:$0xff] %vm229, 0.0
        %259 = vst.msk [vmem:[#allocation2 + $0xe0] sm:$0xff] %vm229, 0.0
        %260 = vst.msk [vmem:[#allocation2 + $0xe8] sm:$0x3] %vm232, 0.0
        %261 = vst.msk [vmem:[#allocation2 + $0xf0] sm:$0xff] %vm229, 0.0
        %262 = vst.msk [vmem:[#allocation2 + $0xf8] sm:$0xff] %vm229, 0.0
        %263 = vst.msk [vmem:[#allocation2 + $0x100] sm:$0x3] %vm232, 0.0
        %264 = vst.msk [vmem:[#allocation2 + $0x108] sm:$0xff] %vm229, 0.0
        %265 = vst.msk [vmem:[#allocation2 + $0x110] sm:$0xff] %vm229, 0.0
        %266 = vst.msk [vmem:[#allocation2 + $0x118] sm:$0x3] %vm232, 0.0
        %267 = vst.msk [vmem:[#allocation2 + $0x120] sm:$0xff] %vm229, 0.0
        %268 = vst.msk [vmem:[#allocation2 + $0x128] sm:$0xff] %vm229, 0.0
        %269 = vst.msk [vmem:[#allocation2 + $0x130] sm:$0x3] %vm232, 0.0
        %270 = vst.msk [vmem:[#allocation2 + $0x138] sm:$0xff] %vm229, 0.0
        %271 = vst.msk [vmem:[#allocation2 + $0x140] sm:$0xff] %vm229, 0.0
        %272 = vst.msk [vmem:[#allocation2 + $0x148] sm:$0x3] %vm232, 0.0
        %273 = vst.msk [vmem:[#allocation2 + $0x150] sm:$0xff] %vm229, 0.0
        %274 = vst.msk [vmem:[#allocation2 + $0x158] sm:$0xff] %vm229, 0.0
        %275 = vst.msk [vmem:[#allocation2 + $0x160] sm:$0x3] %vm232, 0.0
        %276 = vst.msk [vmem:[#allocation2 + $0x168] sm:$0xff] %vm229, 0.0
        %277 = vst.msk [vmem:[#allocation2 + $0x170] sm:$0xff] %vm229, 0.0
        %278 = vst.msk [vmem:[#allocation2 + $0x178] sm:$0x3] %vm232, 0.0
        %279 = vst.msk [vmem:[#allocation2 + $0x180] sm:$0xff] %vm229, 0.0
        %280 = vst.msk [vmem:[#allocation2 + $0x188] sm:$0xff] %vm229, 0.0
        %281 = vst.msk [vmem:[#allocation2 + $0x190] sm:$0x3] %vm232, 0.0
        %282 = vst.msk [vmem:[#allocation2 + $0x198] sm:$0xff] %vm229, 0.0
        %283 = vst.msk [vmem:[#allocation2 + $0x1a0] sm:$0xff] %vm229, 0.0
        %284 = vst.msk [vmem:[#allocation2 + $0x1a8] sm:$0x3] %vm232, 0.0
        %vm285 = vcmask 64512
        %286 = vst.msk [vmem:[#allocation3] sm:$0xff] %vm285, 0.0
        %287 = vst.msk [vmem:[#allocation3 + $0x8] sm:$0xff] %vm285, 0.0
        %vm288 = vcmask 58368
        %289 = vst.msk [vmem:[#allocation3 + $0x10] sm:$0x3] %vm288, 0.0
        %290 = vst.msk [vmem:[#allocation3 + $0x18] sm:$0xff] %vm285, 0.0
        %291 = vst.msk [vmem:[#allocation3 + $0x20] sm:$0xff] %vm285, 0.0
        %292 = vst.msk [vmem:[#allocation3 + $0x28] sm:$0x3] %vm288, 0.0
        %293 = vst.msk [vmem:[#allocation3 + $0x30] sm:$0xff] %vm285, 0.0
        %294 = vst.msk [vmem:[#allocation3 + $0x38] sm:$0xff] %vm285, 0.0
        %295 = vst.msk [vmem:[#allocation3 + $0x40] sm:$0x3] %vm288, 0.0
        %296 = vst.msk [vmem:[#allocation3 + $0x48] sm:$0xff] %vm285, 0.0
        %297 = vst.msk [vmem:[#allocation3 + $0x50] sm:$0xff] %vm285, 0.0
        %298 = vst.msk [vmem:[#allocation3 + $0x58] sm:$0x3] %vm288, 0.0
        %299 = vst.msk [vmem:[#allocation3 + $0x60] sm:$0xff] %vm285, 0.0
        %300 = vst.msk [vmem:[#allocation3 + $0x68] sm:$0xff] %vm285, 0.0
        %301 = vst.msk [vmem:[#allocation3 + $0x70] sm:$0x3] %vm288, 0.0
        %302 = vst.msk [vmem:[#allocation3 + $0x78] sm:$0xff] %vm285, 0.0
        %303 = vst.msk [vmem:[#allocation3 + $0x80] sm:$0xff] %vm285, 0.0
        %304 = vst.msk [vmem:[#allocation3 + $0x88] sm:$0x3] %vm288, 0.0
        %305 = vst.msk [vmem:[#allocation3 + $0x90] sm:$0xff] %vm285, 0.0
        %306 = vst.msk [vmem:[#allocation3 + $0x98] sm:$0xff] %vm285, 0.0
        %307 = vst.msk [vmem:[#allocation3 + $0xa0] sm:$0x3] %vm288, 0.0
        %308 = vst.msk [vmem:[#allocation3 + $0xa8] sm:$0xff] %vm285, 0.0
        %309 = vst.msk [vmem:[#allocation3 + $0xb0] sm:$0xff] %vm285, 0.0
        %310 = vst.msk [vmem:[#allocation3 + $0xb8] sm:$0x3] %vm288, 0.0
        %311 = vst.msk [vmem:[#allocation3 + $0xc0] sm:$0xff] %vm285, 0.0
        %312 = vst.msk [vmem:[#allocation3 + $0xc8] sm:$0xff] %vm285, 0.0
        %313 = vst.msk [vmem:[#allocation3 + $0xd0] sm:$0x3] %vm288, 0.0
        %314 = vst.msk [vmem:[#allocation3 + $0xd8] sm:$0xff] %vm285, 0.0
        %315 = vst.msk [vmem:[#allocation3 + $0xe0] sm:$0xff] %vm285, 0.0
        %316 = vst.msk [vmem:[#allocation3 + $0xe8] sm:$0x3] %vm288, 0.0
        %317 = vst.msk [vmem:[#allocation3 + $0xf0] sm:$0xff] %vm285, 0.0
        %318 = vst.msk [vmem:[#allocation3 + $0xf8] sm:$0xff] %vm285, 0.0
        %319 = vst.msk [vmem:[#allocation3 + $0x100] sm:$0x3] %vm288, 0.0
        %320 = vst.msk [vmem:[#allocation3 + $0x108] sm:$0xff] %vm285, 0.0
        %321 = vst.msk [vmem:[#allocation3 + $0x110] sm:$0xff] %vm285, 0.0
        %322 = vst.msk [vmem:[#allocation3 + $0x118] sm:$0x3] %vm288, 0.0
        %323 = vst.msk [vmem:[#allocation3 + $0x120] sm:$0xff] %vm285, 0.0
        %324 = vst.msk [vmem:[#allocation3 + $0x128] sm:$0xff] %vm285, 0.0
        %325 = vst.msk [vmem:[#allocation3 + $0x130] sm:$0x3] %vm288, 0.0
        %326 = vst.msk [vmem:[#allocation3 + $0x138] sm:$0xff] %vm285, 0.0
        %327 = vst.msk [vmem:[#allocation3 + $0x140] sm:$0xff] %vm285, 0.0
        %328 = vst.msk [vmem:[#allocation3 + $0x148] sm:$0x3] %vm288, 0.0
        %329 = vst.msk [vmem:[#allocation3 + $0x150] sm:$0xff] %vm285, 0.0
        %330 = vst.msk [vmem:[#allocation3 + $0x158] sm:$0xff] %vm285, 0.0
        %331 = vst.msk [vmem:[#allocation3 + $0x160] sm:$0x3] %vm288, 0.0
        %332 = vst.msk [vmem:[#allocation3 + $0x168] sm:$0xff] %vm285, 0.0
        %333 = vst.msk [vmem:[#allocation3 + $0x170] sm:$0xff] %vm285, 0.0
        %334 = vst.msk [vmem:[#allocation3 + $0x178] sm:$0x3] %vm288, 0.0
        %335 = vst.msk [vmem:[#allocation3 + $0x180] sm:$0xff] %vm285, 0.0
        %336 = vst.msk [vmem:[#allocation3 + $0x188] sm:$0xff] %vm285, 0.0
        %337 = vst.msk [vmem:[#allocation3 + $0x190] sm:$0x3] %vm288, 0.0
        %338 = vst.msk [vmem:[#allocation3 + $0x198] sm:$0xff] %vm285, 0.0
        %339 = vst.msk [vmem:[#allocation3 + $0x1a0] sm:$0xff] %vm285, 0.0
        %340 = vst.msk [vmem:[#allocation3 + $0x1a8] sm:$0x3] %vm288, 0.0
      $region44: #{encoder_forward_impl.5} parent=39 // pred_fallthru
        _
      %v341 = vld [vmem:[%s219] sm:$0xff]
      %v342 = vld [vmem:[%s219 + $0x8] sm:$0xff]
      %v343 = vld [vmem:[%s219 + $0x10] sm:$0xff]
      %v344 = vld [vmem:[%s219 + $0x18] sm:$0xff]
      %v345 = vld [vmem:[%s219 + $0x20] sm:$0xff]
      %v346 = vld [vmem:[%s219 + $0x28] sm:$0xff]
      %v347 = vld [vmem:[%s219 + $0x30] sm:$0xff]
      %v348 = vld [vmem:[%s219 + $0x38] sm:$0xff]
      %v349 = vld [vmem:[%s219 + $0x40] sm:$0xff]
      %v350 = vld [vmem:[%s219 + $0x48] sm:$0xff]
      %v351 = vld [vmem:[%s219 + $0x50] sm:$0xff]
      %v352 = vld [vmem:[%s219 + $0x58] sm:$0xff]
      %v353 = vld [vmem:[%s219 + $0x60] sm:$0xff]
      %v354 = vld [vmem:[%s219 + $0x68] sm:$0xff]
      %v355 = vld [vmem:[%s219 + $0x70] sm:$0xff]
      %v356 = vld [vmem:[%s219 + $0x78] sm:$0xff]
      %v357 = vld [vmem:[%s219 + $0x80] sm:$0xff]
      %v358 = vld [vmem:[%s219 + $0x88] sm:$0xff]
      %v359 = vld [vmem:[%s219 + $0x90] sm:$0xff]
      %v360 = vld [vmem:[%s219 + $0x98] sm:$0xff]
      %v361 = vld [vmem:[%s219 + $0xa0] sm:$0xff]
      %v362 = vld [vmem:[%s219 + $0xa8] sm:$0xff]
      %v363 = vld [vmem:[%s219 + $0xb0] sm:$0xff]
      %v364 = vld [vmem:[%s219 + $0xb8] sm:$0xff]
      %v365 = vld [vmem:[%s219 + $0xc0] sm:$0xff]
      %v366 = vld [vmem:[%s219 + $0xc8] sm:$0xff]
      %v367 = vld [vmem:[%s219 + $0xd0] sm:$0xff]
      %v368 = vld [vmem:[%s219 + $0xd8] sm:$0xff]
      %v369 = vld [vmem:[%s219 + $0xe0] sm:$0xff]
      %v370 = vld [vmem:[%s219 + $0xe8] sm:$0xff]
      %v371 = vld [vmem:[%s219 + $0xf0] sm:$0xff]
      %v372 = vld [vmem:[%s219 + $0xf8] sm:$0xff]
      %s373 = scalar_lea.vmem [#allocation2], 24
      %vm374 = vcmask 31744
      %375 = vst.msk [vmem:[%s373 + $0x1] sm:$0xff] %vm374, %v341
      %376 = vst.msk [vmem:[%s373 + $0x9] sm:$0xff] %vm374, %v342
      %377 = vst.msk [vmem:[%s373 + $0x19] sm:$0xff] %vm374, %v343
      %378 = vst.msk [vmem:[%s373 + $0x21] sm:$0xff] %vm374, %v344
      %379 = vst.msk [vmem:[%s373 + $0x31] sm:$0xff] %vm374, %v345
      %380 = vst.msk [vmem:[%s373 + $0x39] sm:$0xff] %vm374, %v346
      %381 = vst.msk [vmem:[%s373 + $0x49] sm:$0xff] %vm374, %v347
      %382 = vst.msk [vmem:[%s373 + $0x51] sm:$0xff] %vm374, %v348
      %383 = vst.msk [vmem:[%s373 + $0x61] sm:$0xff] %vm374, %v349
      %384 = vst.msk [vmem:[%s373 + $0x69] sm:$0xff] %vm374, %v350
      %385 = vst.msk [vmem:[%s373 + $0x79] sm:$0xff] %vm374, %v351
      %386 = vst.msk [vmem:[%s373 + $0x81] sm:$0xff] %vm374, %v352
      %387 = vst.msk [vmem:[%s373 + $0x91] sm:$0xff] %vm374, %v353
      %388 = vst.msk [vmem:[%s373 + $0x99] sm:$0xff] %vm374, %v354
      %389 = vst.msk [vmem:[%s373 + $0xa9] sm:$0xff] %vm374, %v355
      %390 = vst.msk [vmem:[%s373 + $0xb1] sm:$0xff] %vm374, %v356
      %391 = vst.msk [vmem:[%s373 + $0xc1] sm:$0xff] %vm374, %v357
      %392 = vst.msk [vmem:[%s373 + $0xc9] sm:$0xff] %vm374, %v358
      %393 = vst.msk [vmem:[%s373 + $0xd9] sm:$0xff] %vm374, %v359
      %394 = vst.msk [vmem:[%s373 + $0xe1] sm:$0xff] %vm374, %v360
      %395 = vst.msk [vmem:[%s373 + $0xf1] sm:$0xff] %vm374, %v361
      %396 = vst.msk [vmem:[%s373 + $0xf9] sm:$0xff] %vm374, %v362
      %397 = vst.msk [vmem:[%s373 + $0x109] sm:$0xff] %vm374, %v363
      %398 = vst.msk [vmem:[%s373 + $0x111] sm:$0xff] %vm374, %v364
      %399 = vst.msk [vmem:[%s373 + $0x121] sm:$0xff] %vm374, %v365
      %400 = vst.msk [vmem:[%s373 + $0x129] sm:$0xff] %vm374, %v366
      %401 = vst.msk [vmem:[%s373 + $0x139] sm:$0xff] %vm374, %v367
      %402 = vst.msk [vmem:[%s373 + $0x141] sm:$0xff] %vm374, %v368
      %403 = vst.msk [vmem:[%s373 + $0x151] sm:$0xff] %vm374, %v369
      %404 = vst.msk [vmem:[%s373 + $0x159] sm:$0xff] %vm374, %v370
      %405 = vst.msk [vmem:[%s373 + $0x169] sm:$0xff] %vm374, %v371
      %406 = vst.msk [vmem:[%s373 + $0x171] sm:$0xff] %vm374, %v372
      %v407 = vld [vmem:[#allocation2] sm:$0xff]
      %v408 = vld [vmem:[#allocation2 + $0x8] sm:$0xff]
      %v409 = vld [vmem:[#allocation2 + $0x10] sm:$0x3]
      %v410 = vld [vmem:[#allocation2 + $0x18] sm:$0xff]
      %v411 = vld [vmem:[#allocation2 + $0x20] sm:$0xff]
      %v412 = vld [vmem:[#allocation2 + $0x28] sm:$0x3]
      %v413 = vld [vmem:[#allocation2 + $0x30] sm:$0xff]
      %v414 = vld [vmem:[#allocation2 + $0x38] sm:$0xff]
      %v415 = vld [vmem:[#allocation2 + $0x40] sm:$0x3]
      %v416 = vld [vmem:[#allocation2 + $0x48] sm:$0xff]
      %v417 = vld [vmem:[#allocation2 + $0x50] sm:$0xff]
      %v418 = vld [vmem:[#allocation2 + $0x58] sm:$0x3]
      %v419 = vld [vmem:[#allocation2 + $0x60] sm:$0xff]
      %v420 = vld [vmem:[#allocation2 + $0x68] sm:$0xff]
      %v421 = vld [vmem:[#allocation2 + $0x70] sm:$0x3]
      %v422 = vld [vmem:[#allocation2 + $0x78] sm:$0xff]
      %v423 = vld [vmem:[#allocation2 + $0x80] sm:$0xff]
      %v424 = vld [vmem:[#allocation2 + $0x88] sm:$0x3]
      %v425 = vld [vmem:[#allocation2 + $0x90] sm:$0xff]
      %v426 = vld [vmem:[#allocation2 + $0x98] sm:$0xff]
      %v427 = vld [vmem:[#allocation2 + $0xa0] sm:$0x3]
      %v428 = vld [vmem:[#allocation2 + $0xa8] sm:$0xff]
      %v429 = vld [vmem:[#allocation2 + $0xb0] sm:$0xff]
      %v430 = vld [vmem:[#allocation2 + $0xb8] sm:$0x3]
      %v431 = vld [vmem:[#allocation2 + $0xc0] sm:$0xff]
      %v432 = vld [vmem:[#allocation2 + $0xc8] sm:$0xff]
      %v433 = vld [vmem:[#allocation2 + $0xd0] sm:$0x3]
      %v434 = vld [vmem:[#allocation2 + $0xd8] sm:$0xff]
      %v435 = vld [vmem:[#allocation2 + $0xe0] sm:$0xff]
      %v436 = vld [vmem:[#allocation2 + $0xe8] sm:$0x3]
      %v437 = vld [vmem:[#allocation2 + $0xf0] sm:$0xff]
      %v438 = vld [vmem:[#allocation2 + $0xf8] sm:$0xff]
      %v439 = vld [vmem:[#allocation2 + $0x100] sm:$0x3]
      %v440 = vld [vmem:[#allocation2 + $0x108] sm:$0xff]
      %v441 = vld [vmem:[#allocation2 + $0x110] sm:$0xff]
      %v442 = vld [vmem:[#allocation2 + $0x118] sm:$0x3]
      %v443 = vld [vmem:[#allocation2 + $0x120] sm:$0xff]
      %v444 = vld [vmem:[#allocation2 + $0x128] sm:$0xff]
      %v445 = vld [vmem:[#allocation2 + $0x130] sm:$0x3]
      %v446 = vld [vmem:[#allocation2 + $0x138] sm:$0xff]
      %v447 = vld [vmem:[#allocation2 + $0x140] sm:$0xff]
      %v448 = vld [vmem:[#allocation2 + $0x148] sm:$0x3]
      %v449 = vld [vmem:[#allocation2 + $0x150] sm:$0xff]
      %v450 = vld [vmem:[#allocation2 + $0x158] sm:$0xff]
      %v451 = vld [vmem:[#allocation2 + $0x160] sm:$0x3]
      %v452 = vld [vmem:[#allocation2 + $0x168] sm:$0xff]
      %v453 = vld [vmem:[#allocation2 + $0x170] sm:$0xff]
      %v454 = vld [vmem:[#allocation2 + $0x178] sm:$0x3]
      %v455 = vld [vmem:[#allocation2 + $0x180] sm:$0xff]
      %v456 = vld [vmem:[#allocation2 + $0x188] sm:$0xff]
      %v457 = vld [vmem:[#allocation2 + $0x190] sm:$0x3]
      %v458 = vld [vmem:[#allocation2 + $0x198] sm:$0xff]
      %v459 = vld [vmem:[#allocation2 + $0x1a0] sm:$0xff]
      %v460 = vld [vmem:[#allocation2 + $0x1a8] sm:$0x3]
      %vm509 = vcmask 1046528
      %v510 = vrot.slane %v407, 1
      %v511 = vrot.slane %v408, 1
      %v512 = vsel %vm509, %v510, %v511
      %v513 = vrot.slane %v409, 1
      %v514 = vsel %vm509, %v511, %v513
      %v515 = vrot.slane %v410, 1
      %v516 = vrot.slane %v411, 1
      %v517 = vsel %vm509, %v515, %v516
      %v518 = vrot.slane %v412, 1
      %v519 = vsel %vm509, %v516, %v518
      %v520 = vrot.slane %v413, 1
      %v521 = vrot.slane %v414, 1
      %v522 = vsel %vm509, %v520, %v521
      %v523 = vrot.slane %v415, 1
      %v524 = vsel %vm509, %v521, %v523
      %v525 = vrot.slane %v416, 1
      %v526 = vrot.slane %v417, 1
      %v527 = vsel %vm509, %v525, %v526
      %v528 = vrot.slane %v418, 1
      %v529 = vsel %vm509, %v526, %v528
      %v530 = vrot.slane %v419, 1
      %v531 = vrot.slane %v420, 1
      %v532 = vsel %vm509, %v530, %v531
      %v533 = vrot.slane %v421, 1
      %v534 = vsel %vm509, %v531, %v533
      %v535 = vrot.slane %v422, 1
      %v536 = vrot.slane %v423, 1
      %v537 = vsel %vm509, %v535, %v536
      %v538 = vrot.slane %v424, 1
      %v539 = vsel %vm509, %v536, %v538
      %v540 = vrot.slane %v425, 1
      %v541 = vrot.slane %v426, 1
      %v542 = vsel %vm509, %v540, %v541
      %v543 = vrot.slane %v427, 1
      %v544 = vsel %vm509, %v541, %v543
      %v545 = vrot.slane %v428, 1
      %v546 = vrot.slane %v429, 1
      %v547 = vsel %vm509, %v545, %v546
      %v548 = vrot.slane %v430, 1
      %v549 = vsel %vm509, %v546, %v548
      %v550 = vrot.slane %v431, 1
      %v551 = vrot.slane %v432, 1
      %v552 = vsel %vm509, %v550, %v551
      %v553 = vrot.slane %v433, 1
      %v554 = vsel %vm509, %v551, %v553
      %v555 = vrot.slane %v434, 1
      %v556 = vrot.slane %v435, 1
      %v557 = vsel %vm509, %v555, %v556
      %v558 = vrot.slane %v436, 1
      %v559 = vsel %vm509, %v556, %v558
      %v560 = vrot.slane %v437, 1
      %v561 = vrot.slane %v438, 1
      %v562 = vsel %vm509, %v560, %v561
      %v563 = vrot.slane %v439, 1
      %v564 = vsel %vm509, %v561, %v563
      %v565 = vrot.slane %v440, 1
      %v566 = vrot.slane %v441, 1
      %v567 = vsel %vm509, %v565, %v566
      %v568 = vrot.slane %v442, 1
      %v569 = vsel %vm509, %v566, %v568
      %v570 = vrot.slane %v443, 1
      %v571 = vrot.slane %v444, 1
      %v572 = vsel %vm509, %v570, %v571
      %v573 = vrot.slane %v445, 1
      %v574 = vsel %vm509, %v571, %v573
      %v575 = vrot.slane %v446, 1
      %v576 = vrot.slane %v447, 1
      %v577 = vsel %vm509, %v575, %v576
      %v578 = vrot.slane %v448, 1
      %v579 = vsel %vm509, %v576, %v578
      %v580 = vrot.slane %v449, 1
      %v581 = vrot.slane %v450, 1
      %v582 = vsel %vm509, %v580, %v581
      %v583 = vrot.slane %v451, 1
      %v584 = vsel %vm509, %v581, %v583
      %v585 = vrot.slane %v452, 1
      %v586 = vrot.slane %v453, 1
      %v587 = vsel %vm509, %v585, %v586
      %v588 = vrot.slane %v454, 1
      %v589 = vsel %vm509, %v586, %v588
      %590 = vrot.lane.b32.xlu0 %v512, 4
      %v591 = vpop.permute.xlu0 %590
      %592 = vrot.lane.b32.xlu0 %v514, 4
      %v593 = vpop.permute.xlu0 %592
      %594 = vrot.lane.b32.xlu0 %v517, 4
      %v595 = vpop.permute.xlu0 %594
      %596 = vrot.lane.b32.xlu0 %v519, 4
      %v597 = vpop.permute.xlu0 %596
      %598 = vrot.lane.b32.xlu0 %v522, 4
      %v599 = vpop.permute.xlu0 %598
      %600 = vrot.lane.b32.xlu0 %v524, 4
      %v601 = vpop.permute.xlu0 %600
      %602 = vrot.lane.b32.xlu0 %v527, 4
      %v603 = vpop.permute.xlu0 %602
      %604 = vrot.lane.b32.xlu0 %v529, 4
      %v605 = vpop.permute.xlu0 %604
      %606 = vrot.lane.b32.xlu0 %v532, 4
      %v607 = vpop.permute.xlu0 %606
      %608 = vrot.lane.b32.xlu0 %v534, 4
      %v609 = vpop.permute.xlu0 %608
      %610 = vrot.lane.b32.xlu0 %v537, 4
      %v611 = vpop.permute.xlu0 %610
      %612 = vrot.lane.b32.xlu0 %v539, 4
      %v613 = vpop.permute.xlu0 %612
      %614 = vrot.lane.b32.xlu0 %v542, 4
      %v615 = vpop.permute.xlu0 %614
      %616 = vrot.lane.b32.xlu0 %v544, 4
      %v617 = vpop.permute.xlu0 %616
      %618 = vrot.lane.b32.xlu0 %v547, 4
      %v619 = vpop.permute.xlu0 %618
      %620 = vrot.lane.b32.xlu0 %v549, 4
      %v621 = vpop.permute.xlu0 %620
      %622 = vrot.lane.b32.xlu0 %v552, 4
      %v623 = vpop.permute.xlu0 %622
      %624 = vrot.lane.b32.xlu0 %v554, 4
      %v625 = vpop.permute.xlu0 %624
      %626 = vrot.lane.b32.xlu0 %v557, 4
      %v627 = vpop.permute.xlu0 %626
      %628 = vrot.lane.b32.xlu0 %v559, 4
      %v629 = vpop.permute.xlu0 %628
      %630 = vrot.lane.b32.xlu0 %v562, 4
      %v631 = vpop.permute.xlu0 %630
      %632 = vrot.lane.b32.xlu0 %v564, 4
      %v633 = vpop.permute.xlu0 %632
      %634 = vrot.lane.b32.xlu0 %v567, 4
      %v635 = vpop.permute.xlu0 %634
      %636 = vrot.lane.b32.xlu0 %v569, 4
      %v637 = vpop.permute.xlu0 %636
      %638 = vrot.lane.b32.xlu0 %v572, 4
      %v639 = vpop.permute.xlu0 %638
      %640 = vrot.lane.b32.xlu0 %v574, 4
      %v641 = vpop.permute.xlu0 %640
      %642 = vrot.lane.b32.xlu0 %v577, 4
      %v643 = vpop.permute.xlu0 %642
      %644 = vrot.lane.b32.xlu0 %v579, 4
      %v645 = vpop.permute.xlu0 %644
      %646 = vrot.lane.b32.xlu0 %v582, 4
      %v647 = vpop.permute.xlu0 %646
      %648 = vrot.lane.b32.xlu0 %v584, 4
      %v649 = vpop.permute.xlu0 %648
      %650 = vrot.lane.b32.xlu0 %v587, 4
      %v651 = vpop.permute.xlu0 %650
      %652 = vrot.lane.b32.xlu0 %v589, 4
      %v653 = vpop.permute.xlu0 %652
      %vm686 = vcmask 1045504
      %v687 = vrot.slane %v407, 2
      %v688 = vrot.slane %v408, 2
      %v689 = vsel %vm686, %v687, %v688
      %v690 = vrot.slane %v409, 2
      %v691 = vsel %vm686, %v688, %v690
      %v692 = vrot.slane %v410, 2
      %v693 = vrot.slane %v411, 2
      %v694 = vsel %vm686, %v692, %v693
      %v695 = vrot.slane %v412, 2
      %v696 = vsel %vm686, %v693, %v695
      %v697 = vrot.slane %v413, 2
      %v698 = vrot.slane %v414, 2
      %v699 = vsel %vm686, %v697, %v698
      %v700 = vrot.slane %v415, 2
      %v701 = vsel %vm686, %v698, %v700
      %v702 = vrot.slane %v416, 2
      %v703 = vrot.slane %v417, 2
      %v704 = vsel %vm686, %v702, %v703
      %v705 = vrot.slane %v418, 2
      %v706 = vsel %vm686, %v703, %v705
      %v707 = vrot.slane %v419, 2
      %v708 = vrot.slane %v420, 2
      %v709 = vsel %vm686, %v707, %v708
      %v710 = vrot.slane %v421, 2
      %v711 = vsel %vm686, %v708, %v710
      %v712 = vrot.slane %v422, 2
      %v713 = vrot.slane %v423, 2
      %v714 = vsel %vm686, %v712, %v713
      %v715 = vrot.slane %v424, 2
      %v716 = vsel %vm686, %v713, %v715
      %v717 = vrot.slane %v425, 2
      %v718 = vrot.slane %v426, 2
      %v719 = vsel %vm686, %v717, %v718
      %v720 = vrot.slane %v427, 2
      %v721 = vsel %vm686, %v718, %v720
      %v722 = vrot.slane %v428, 2
      %v723 = vrot.slane %v429, 2
      %v724 = vsel %vm686, %v722, %v723
      %v725 = vrot.slane %v430, 2
      %v726 = vsel %vm686, %v723, %v725
      %v727 = vrot.slane %v431, 2
      %v728 = vrot.slane %v432, 2
      %v729 = vsel %vm686, %v727, %v728
      %v730 = vrot.slane %v433, 2
      %v731 = vsel %vm686, %v728, %v730
      %v732 = vrot.slane %v434, 2
      %v733 = vrot.slane %v435, 2
      %v734 = vsel %vm686, %v732, %v733
      %v735 = vrot.slane %v436, 2
      %v736 = vsel %vm686, %v733, %v735
      %v737 = vrot.slane %v437, 2
      %v738 = vrot.slane %v438, 2
      %v739 = vsel %vm686, %v737, %v738
      %v740 = vrot.slane %v439, 2
      %v741 = vsel %vm686, %v738, %v740
      %v742 = vrot.slane %v440, 2
      %v743 = vrot.slane %v441, 2
      %v744 = vsel %vm686, %v742, %v743
      %v745 = vrot.slane %v442, 2
      %v746 = vsel %vm686, %v743, %v745
      %v747 = vrot.slane %v443, 2
      %v748 = vrot.slane %v444, 2
      %v749 = vsel %vm686, %v747, %v748
      %v750 = vrot.slane %v445, 2
      %v751 = vsel %vm686, %v748, %v750
      %v752 = vrot.slane %v446, 2
      %v753 = vrot.slane %v447, 2
      %v754 = vsel %vm686, %v752, %v753
      %v755 = vrot.slane %v448, 2
      %v756 = vsel %vm686, %v753, %v755
      %v757 = vrot.slane %v449, 2
      %v758 = vrot.slane %v450, 2
      %v759 = vsel %vm686, %v757, %v758
      %v760 = vrot.slane %v451, 2
      %v761 = vsel %vm686, %v758, %v760
      %v762 = vrot.slane %v452, 2
      %v763 = vrot.slane %v453, 2
      %v764 = vsel %vm686, %v762, %v763
      %v765 = vrot.slane %v454, 2
      %v766 = vsel %vm686, %v763, %v765
      %767 = vrot.lane.b32.xlu0 %v689, 8
      %v768 = vpop.permute.xlu0 %767
      %769 = vrot.lane.b32.xlu0 %v691, 8
      %v770 = vpop.permute.xlu0 %769
      %771 = vrot.lane.b32.xlu0 %v694, 8
      %v772 = vpop.permute.xlu0 %771
      %773 = vrot.lane.b32.xlu0 %v696, 8
      %v774 = vpop.permute.xlu0 %773
      %775 = vrot.lane.b32.xlu0 %v699, 8
      %v776 = vpop.permute.xlu0 %775
      %777 = vrot.lane.b32.xlu0 %v701, 8
      %v778 = vpop.permute.xlu0 %777
      %779 = vrot.lane.b32.xlu0 %v704, 8
      %v780 = vpop.permute.xlu0 %779
      %781 = vrot.lane.b32.xlu0 %v706, 8
      %v782 = vpop.permute.xlu0 %781
      %783 = vrot.lane.b32.xlu0 %v709, 8
      %v784 = vpop.permute.xlu0 %783
      %785 = vrot.lane.b32.xlu0 %v711, 8
      %v786 = vpop.permute.xlu0 %785
      %787 = vrot.lane.b32.xlu0 %v714, 8
      %v788 = vpop.permute.xlu0 %787
      %789 = vrot.lane.b32.xlu0 %v716, 8
      %v790 = vpop.permute.xlu0 %789
      %791 = vrot.lane.b32.xlu0 %v719, 8
      %v792 = vpop.permute.xlu0 %791
      %793 = vrot.lane.b32.xlu0 %v721, 8
      %v794 = vpop.permute.xlu0 %793
      %795 = vrot.lane.b32.xlu0 %v724, 8
      %v796 = vpop.permute.xlu0 %795
      %797 = vrot.lane.b32.xlu0 %v726, 8
      %v798 = vpop.permute.xlu0 %797
      %799 = vrot.lane.b32.xlu0 %v729, 8
      %v800 = vpop.permute.xlu0 %799
      %801 = vrot.lane.b32.xlu0 %v731, 8
      %v802 = vpop.permute.xlu0 %801
      %803 = vrot.lane.b32.xlu0 %v734, 8
      %v804 = vpop.permute.xlu0 %803
      %805 = vrot.lane.b32.xlu0 %v736, 8
      %v806 = vpop.permute.xlu0 %805
      %807 = vrot.lane.b32.xlu0 %v739, 8
      %v808 = vpop.permute.xlu0 %807
      %809 = vrot.lane.b32.xlu0 %v741, 8
      %v810 = vpop.permute.xlu0 %809
      %811 = vrot.lane.b32.xlu0 %v744, 8
      %v812 = vpop.permute.xlu0 %811
      %813 = vrot.lane.b32.xlu0 %v746, 8
      %v814 = vpop.permute.xlu0 %813
      %815 = vrot.lane.b32.xlu0 %v749, 8
      %v816 = vpop.permute.xlu0 %815
      %817 = vrot.lane.b32.xlu0 %v751, 8
      %v818 = vpop.permute.xlu0 %817
      %819 = vrot.lane.b32.xlu0 %v754, 8
      %v820 = vpop.permute.xlu0 %819
      %821 = vrot.lane.b32.xlu0 %v756, 8
      %v822 = vpop.permute.xlu0 %821
      %823 = vrot.lane.b32.xlu0 %v759, 8
      %v824 = vpop.permute.xlu0 %823
      %825 = vrot.lane.b32.xlu0 %v761, 8
      %v826 = vpop.permute.xlu0 %825
      %827 = vrot.lane.b32.xlu0 %v764, 8
      %v828 = vpop.permute.xlu0 %827
      %829 = vrot.lane.b32.xlu0 %v766, 8
      %v830 = vpop.permute.xlu0 %829
      %865 = vrot.lane.b32.xlu0 %v410, 12
      %v866 = vpop.permute.xlu0 %865
      %867 = vrot.lane.b32.xlu0 %v411, 12
      %v868 = vpop.permute.xlu0 %867
      %869 = vrot.lane.b32.xlu0 %v413, 12
      %v870 = vpop.permute.xlu0 %869
      %871 = vrot.lane.b32.xlu0 %v414, 12
      %v872 = vpop.permute.xlu0 %871
      %873 = vrot.lane.b32.xlu0 %v416, 12
      %v874 = vpop.permute.xlu0 %873
      %875 = vrot.lane.b32.xlu0 %v417, 12
      %v876 = vpop.permute.xlu0 %875
      %877 = vrot.lane.b32.xlu0 %v419, 12
      %v878 = vpop.permute.xlu0 %877
      %879 = vrot.lane.b32.xlu0 %v420, 12
      %v880 = vpop.permute.xlu0 %879
      %881 = vrot.lane.b32.xlu0 %v422, 12
      %v882 = vpop.permute.xlu0 %881
      %883 = vrot.lane.b32.xlu0 %v423, 12
      %v884 = vpop.permute.xlu0 %883
      %885 = vrot.lane.b32.xlu0 %v425, 12
      %v886 = vpop.permute.xlu0 %885
      %887 = vrot.lane.b32.xlu0 %v426, 12
      %v888 = vpop.permute.xlu0 %887
      %889 = vrot.lane.b32.xlu0 %v428, 12
      %v890 = vpop.permute.xlu0 %889
      %891 = vrot.lane.b32.xlu0 %v429, 12
      %v892 = vpop.permute.xlu0 %891
      %893 = vrot.lane.b32.xlu0 %v431, 12
      %v894 = vpop.permute.xlu0 %893
      %895 = vrot.lane.b32.xlu0 %v432, 12
      %v896 = vpop.permute.xlu0 %895
      %897 = vrot.lane.b32.xlu0 %v434, 12
      %v898 = vpop.permute.xlu0 %897
      %899 = vrot.lane.b32.xlu0 %v435, 12
      %v900 = vpop.permute.xlu0 %899
      %901 = vrot.lane.b32.xlu0 %v437, 12
      %v902 = vpop.permute.xlu0 %901
      %903 = vrot.lane.b32.xlu0 %v438, 12
      %v904 = vpop.permute.xlu0 %903
      %905 = vrot.lane.b32.xlu0 %v440, 12
      %v906 = vpop.permute.xlu0 %905
      %907 = vrot.lane.b32.xlu0 %v441, 12
      %v908 = vpop.permute.xlu0 %907
      %909 = vrot.lane.b32.xlu0 %v443, 12
      %v910 = vpop.permute.xlu0 %909
      %911 = vrot.lane.b32.xlu0 %v444, 12
      %v912 = vpop.permute.xlu0 %911
      %913 = vrot.lane.b32.xlu0 %v446, 12
      %v914 = vpop.permute.xlu0 %913
      %915 = vrot.lane.b32.xlu0 %v447, 12
      %v916 = vpop.permute.xlu0 %915
      %917 = vrot.lane.b32.xlu0 %v449, 12
      %v918 = vpop.permute.xlu0 %917
      %919 = vrot.lane.b32.xlu0 %v450, 12
      %v920 = vpop.permute.xlu0 %919
      %921 = vrot.lane.b32.xlu0 %v452, 12
      %v922 = vpop.permute.xlu0 %921
      %923 = vrot.lane.b32.xlu0 %v453, 12
      %v924 = vpop.permute.xlu0 %923
      %925 = vrot.lane.b32.xlu0 %v455, 12
      %v926 = vpop.permute.xlu0 %925
      %927 = vrot.lane.b32.xlu0 %v456, 12
      %v928 = vpop.permute.xlu0 %927
      %v962 = vrot.slane %v455, 1
      %v963 = vrot.slane %v456, 1
      %v964 = vsel %vm509, %v962, %v963
      %v965 = vrot.slane %v457, 1
      %v966 = vsel %vm509, %v963, %v965
      %967 = vrot.lane.b32.xlu0 %v517, 16
      %v968 = vpop.permute.xlu0 %967
      %969 = vrot.lane.b32.xlu0 %v519, 16
      %v970 = vpop.permute.xlu0 %969
      %971 = vrot.lane.b32.xlu0 %v522, 16
      %v972 = vpop.permute.xlu0 %971
      %973 = vrot.lane.b32.xlu0 %v524, 16
      %v974 = vpop.permute.xlu0 %973
      %975 = vrot.lane.b32.xlu0 %v527, 16
      %v976 = vpop.permute.xlu0 %975
      %977 = vrot.lane.b32.xlu0 %v529, 16
      %v978 = vpop.permute.xlu0 %977
      %979 = vrot.lane.b32.xlu0 %v532, 16
      %v980 = vpop.permute.xlu0 %979
      %981 = vrot.lane.b32.xlu0 %v534, 16
      %v982 = vpop.permute.xlu0 %981
      %983 = vrot.lane.b32.xlu0 %v537, 16
      %v984 = vpop.permute.xlu0 %983
      %985 = vrot.lane.b32.xlu0 %v539, 16
      %v986 = vpop.permute.xlu0 %985
      %987 = vrot.lane.b32.xlu0 %v542, 16
      %v988 = vpop.permute.xlu0 %987
      %989 = vrot.lane.b32.xlu0 %v544, 16
      %v990 = vpop.permute.xlu0 %989
      %991 = vrot.lane.b32.xlu0 %v547, 16
      %v992 = vpop.permute.xlu0 %991
      %993 = vrot.lane.b32.xlu0 %v549, 16
      %v994 = vpop.permute.xlu0 %993
      %995 = vrot.lane.b32.xlu0 %v552, 16
      %v996 = vpop.permute.xlu0 %995
      %997 = vrot.lane.b32.xlu0 %v554, 16
      %v998 = vpop.permute.xlu0 %997
      %999 = vrot.lane.b32.xlu0 %v557, 16
      %v1000 = vpop.permute.xlu0 %999
      %1001 = vrot.lane.b32.xlu0 %v559, 16
      %v1002 = vpop.permute.xlu0 %1001
      %1003 = vrot.lane.b32.xlu0 %v562, 16
      %v1004 = vpop.permute.xlu0 %1003
      %1005 = vrot.lane.b32.xlu0 %v564, 16
      %v1006 = vpop.permute.xlu0 %1005
      %1007 = vrot.lane.b32.xlu0 %v567, 16
      %v1008 = vpop.permute.xlu0 %1007
      %1009 = vrot.lane.b32.xlu0 %v569, 16
      %v1010 = vpop.permute.xlu0 %1009
      %1011 = vrot.lane.b32.xlu0 %v572, 16
      %v1012 = vpop.permute.xlu0 %1011
      %1013 = vrot.lane.b32.xlu0 %v574, 16
      %v1014 = vpop.permute.xlu0 %1013
      %1015 = vrot.lane.b32.xlu0 %v577, 16
      %v1016 = vpop.permute.xlu0 %1015
      %1017 = vrot.lane.b32.xlu0 %v579, 16
      %v1018 = vpop.permute.xlu0 %1017
      %1019 = vrot.lane.b32.xlu0 %v582, 16
      %v1020 = vpop.permute.xlu0 %1019
      %1021 = vrot.lane.b32.xlu0 %v584, 16
      %v1022 = vpop.permute.xlu0 %1021
      %1023 = vrot.lane.b32.xlu0 %v587, 16
      %v1024 = vpop.permute.xlu0 %1023
      %1025 = vrot.lane.b32.xlu0 %v589, 16
      %v1026 = vpop.permute.xlu0 %1025
      %1027 = vrot.lane.b32.xlu0 %v964, 16
      %v1028 = vpop.permute.xlu0 %1027
      %1029 = vrot.lane.b32.xlu0 %v966, 16
      %v1030 = vpop.permute.xlu0 %1029
      %v1063 = vrot.slane %v455, 2
      %v1064 = vrot.slane %v456, 2
      %v1065 = vsel %vm686, %v1063, %v1064
      %v1066 = vrot.slane %v457, 2
      %v1067 = vsel %vm686, %v1064, %v1066
      %1068 = vrot.lane.b32.xlu0 %v694, 20
      %v1069 = vpop.permute.xlu0 %1068
      %1070 = vrot.lane.b32.xlu0 %v696, 20
      %v1071 = vpop.permute.xlu0 %1070
      %1072 = vrot.lane.b32.xlu0 %v699, 20
      %v1073 = vpop.permute.xlu0 %1072
      %1074 = vrot.lane.b32.xlu0 %v701, 20
      %v1075 = vpop.permute.xlu0 %1074
      %1076 = vrot.lane.b32.xlu0 %v704, 20
      %v1077 = vpop.permute.xlu0 %1076
      %1078 = vrot.lane.b32.xlu0 %v706, 20
      %v1079 = vpop.permute.xlu0 %1078
      %1080 = vrot.lane.b32.xlu0 %v709, 20
      %v1081 = vpop.permute.xlu0 %1080
      %1082 = vrot.lane.b32.xlu0 %v711, 20
      %v1083 = vpop.permute.xlu0 %1082
      %1084 = vrot.lane.b32.xlu0 %v714, 20
      %v1085 = vpop.permute.xlu0 %1084
      %1086 = vrot.lane.b32.xlu0 %v716, 20
      %v1087 = vpop.permute.xlu0 %1086
      %1088 = vrot.lane.b32.xlu0 %v719, 20
      %v1089 = vpop.permute.xlu0 %1088
      %1090 = vrot.lane.b32.xlu0 %v721, 20
      %v1091 = vpop.permute.xlu0 %1090
      %1092 = vrot.lane.b32.xlu0 %v724, 20
      %v1093 = vpop.permute.xlu0 %1092
      %1094 = vrot.lane.b32.xlu0 %v726, 20
      %v1095 = vpop.permute.xlu0 %1094
      %1096 = vrot.lane.b32.xlu0 %v729, 20
      %v1097 = vpop.permute.xlu0 %1096
      %1098 = vrot.lane.b32.xlu0 %v731, 20
      %v1099 = vpop.permute.xlu0 %1098
      %1100 = vrot.lane.b32.xlu0 %v734, 20
      %v1101 = vpop.permute.xlu0 %1100
      %1102 = vrot.lane.b32.xlu0 %v736, 20
      %v1103 = vpop.permute.xlu0 %1102
      %1104 = vrot.lane.b32.xlu0 %v739, 20
      %v1105 = vpop.permute.xlu0 %1104
      %1106 = vrot.lane.b32.xlu0 %v741, 20
      %v1107 = vpop.permute.xlu0 %1106
      %1108 = vrot.lane.b32.xlu0 %v744, 20
      %v1109 = vpop.permute.xlu0 %1108
      %1110 = vrot.lane.b32.xlu0 %v746, 20
      %v1111 = vpop.permute.xlu0 %1110
      %1112 = vrot.lane.b32.xlu0 %v749, 20
      %v1113 = vpop.permute.xlu0 %1112
      %1114 = vrot.lane.b32.xlu0 %v751, 20
      %v1115 = vpop.permute.xlu0 %1114
      %1116 = vrot.lane.b32.xlu0 %v754, 20
      %v1117 = vpop.permute.xlu0 %1116
      %1118 = vrot.lane.b32.xlu0 %v756, 20
      %v1119 = vpop.permute.xlu0 %1118
      %1120 = vrot.lane.b32.xlu0 %v759, 20
      %v1121 = vpop.permute.xlu0 %1120
      %1122 = vrot.lane.b32.xlu0 %v761, 20
      %v1123 = vpop.permute.xlu0 %1122
      %1124 = vrot.lane.b32.xlu0 %v764, 20
      %v1125 = vpop.permute.xlu0 %1124
      %1126 = vrot.lane.b32.xlu0 %v766, 20
      %v1127 = vpop.permute.xlu0 %1126
      %1128 = vrot.lane.b32.xlu0 %v1065, 20
      %v1129 = vpop.permute.xlu0 %1128
      %1130 = vrot.lane.b32.xlu0 %v1067, 20
      %v1131 = vpop.permute.xlu0 %1130
      %1166 = vrot.lane.b32.xlu0 %v413, 24
      %v1167 = vpop.permute.xlu0 %1166
      %1168 = vrot.lane.b32.xlu0 %v414, 24
      %v1169 = vpop.permute.xlu0 %1168
      %1170 = vrot.lane.b32.xlu0 %v416, 24
      %v1171 = vpop.permute.xlu0 %1170
      %1172 = vrot.lane.b32.xlu0 %v417, 24
      %v1173 = vpop.permute.xlu0 %1172
      %1174 = vrot.lane.b32.xlu0 %v419, 24
      %v1175 = vpop.permute.xlu0 %1174
      %1176 = vrot.lane.b32.xlu0 %v420, 24
      %v1177 = vpop.permute.xlu0 %1176
      %1178 = vrot.lane.b32.xlu0 %v422, 24
      %v1179 = vpop.permute.xlu0 %1178
      %1180 = vrot.lane.b32.xlu0 %v423, 24
      %v1181 = vpop.permute.xlu0 %1180
      %1182 = vrot.lane.b32.xlu0 %v425, 24
      %v1183 = vpop.permute.xlu0 %1182
      %1184 = vrot.lane.b32.xlu0 %v426, 24
      %v1185 = vpop.permute.xlu0 %1184
      %1186 = vrot.lane.b32.xlu0 %v428, 24
      %v1187 = vpop.permute.xlu0 %1186
      %1188 = vrot.lane.b32.xlu0 %v429, 24
      %v1189 = vpop.permute.xlu0 %1188
      %1190 = vrot.lane.b32.xlu0 %v431, 24
      %v1191 = vpop.permute.xlu0 %1190
      %1192 = vrot.lane.b32.xlu0 %v432, 24
      %v1193 = vpop.permute.xlu0 %1192
      %1194 = vrot.lane.b32.xlu0 %v434, 24
      %v1195 = vpop.permute.xlu0 %1194
      %1196 = vrot.lane.b32.xlu0 %v435, 24
      %v1197 = vpop.permute.xlu0 %1196
      %1198 = vrot.lane.b32.xlu0 %v437, 24
      %v1199 = vpop.permute.xlu0 %1198
      %1200 = vrot.lane.b32.xlu0 %v438, 24
      %v1201 = vpop.permute.xlu0 %1200
      %1202 = vrot.lane.b32.xlu0 %v440, 24
      %v1203 = vpop.permute.xlu0 %1202
      %1204 = vrot.lane.b32.xlu0 %v441, 24
      %v1205 = vpop.permute.xlu0 %1204
      %1206 = vrot.lane.b32.xlu0 %v443, 24
      %v1207 = vpop.permute.xlu0 %1206
      %1208 = vrot.lane.b32.xlu0 %v444, 24
      %v1209 = vpop.permute.xlu0 %1208
      %1210 = vrot.lane.b32.xlu0 %v446, 24
      %v1211 = vpop.permute.xlu0 %1210
      %1212 = vrot.lane.b32.xlu0 %v447, 24
      %v1213 = vpop.permute.xlu0 %1212
      %1214 = vrot.lane.b32.xlu0 %v449, 24
      %v1215 = vpop.permute.xlu0 %1214
      %1216 = vrot.lane.b32.xlu0 %v450, 24
      %v1217 = vpop.permute.xlu0 %1216
      %1218 = vrot.lane.b32.xlu0 %v452, 24
      %v1219 = vpop.permute.xlu0 %1218
      %1220 = vrot.lane.b32.xlu0 %v453, 24
      %v1221 = vpop.permute.xlu0 %1220
      %1222 = vrot.lane.b32.xlu0 %v455, 24
      %v1223 = vpop.permute.xlu0 %1222
      %1224 = vrot.lane.b32.xlu0 %v456, 24
      %v1225 = vpop.permute.xlu0 %1224
      %1226 = vrot.lane.b32.xlu0 %v458, 24
      %v1227 = vpop.permute.xlu0 %1226
      %1228 = vrot.lane.b32.xlu0 %v459, 24
      %v1229 = vpop.permute.xlu0 %1228
      %v1263 = vrot.slane %v458, 1
      %v1264 = vrot.slane %v459, 1
      %v1265 = vsel %vm509, %v1263, %v1264
      %v1266 = vrot.slane %v460, 1
      %v1267 = vsel %vm509, %v1264, %v1266
      %1268 = vrot.lane.b32.xlu0 %v522, 28
      %v1269 = vpop.permute.xlu0 %1268
      %1270 = vrot.lane.b32.xlu0 %v524, 28
      %v1271 = vpop.permute.xlu0 %1270
      %1272 = vrot.lane.b32.xlu0 %v527, 28
      %v1273 = vpop.permute.xlu0 %1272
      %1274 = vrot.lane.b32.xlu0 %v529, 28
      %v1275 = vpop.permute.xlu0 %1274
      %1276 = vrot.lane.b32.xlu0 %v532, 28
      %v1277 = vpop.permute.xlu0 %1276
      %1278 = vrot.lane.b32.xlu0 %v534, 28
      %v1279 = vpop.permute.xlu0 %1278
      %1280 = vrot.lane.b32.xlu0 %v537, 28
      %v1281 = vpop.permute.xlu0 %1280
      %1282 = vrot.lane.b32.xlu0 %v539, 28
      %v1283 = vpop.permute.xlu0 %1282
      %1284 = vrot.lane.b32.xlu0 %v542, 28
      %v1285 = vpop.permute.xlu0 %1284
      %1286 = vrot.lane.b32.xlu0 %v544, 28
      %v1287 = vpop.permute.xlu0 %1286
      %1288 = vrot.lane.b32.xlu0 %v547, 28
      %v1289 = vpop.permute.xlu0 %1288
      %1290 = vrot.lane.b32.xlu0 %v549, 28
      %v1291 = vpop.permute.xlu0 %1290
      %1292 = vrot.lane.b32.xlu0 %v552, 28
      %v1293 = vpop.permute.xlu0 %1292
      %1294 = vrot.lane.b32.xlu0 %v554, 28
      %v1295 = vpop.permute.xlu0 %1294
      %1296 = vrot.lane.b32.xlu0 %v557, 28
      %v1297 = vpop.permute.xlu0 %1296
      %1298 = vrot.lane.b32.xlu0 %v559, 28
      %v1299 = vpop.permute.xlu0 %1298
      %1300 = vrot.lane.b32.xlu0 %v562, 28
      %v1301 = vpop.permute.xlu0 %1300
      %1302 = vrot.lane.b32.xlu0 %v564, 28
      %v1303 = vpop.permute.xlu0 %1302
      %1304 = vrot.lane.b32.xlu0 %v567, 28
      %v1305 = vpop.permute.xlu0 %1304
      %1306 = vrot.lane.b32.xlu0 %v569, 28
      %v1307 = vpop.permute.xlu0 %1306
      %1308 = vrot.lane.b32.xlu0 %v572, 28
      %v1309 = vpop.permute.xlu0 %1308
      %1310 = vrot.lane.b32.xlu0 %v574, 28
      %v1311 = vpop.permute.xlu0 %1310
      %1312 = vrot.lane.b32.xlu0 %v577, 28
      %v1313 = vpop.permute.xlu0 %1312
      %1314 = vrot.lane.b32.xlu0 %v579, 28
      %v1315 = vpop.permute.xlu0 %1314
      %1316 = vrot.lane.b32.xlu0 %v582, 28
      %v1317 = vpop.permute.xlu0 %1316
      %1318 = vrot.lane.b32.xlu0 %v584, 28
      %v1319 = vpop.permute.xlu0 %1318
      %1320 = vrot.lane.b32.xlu0 %v587, 28
      %v1321 = vpop.permute.xlu0 %1320
      %1322 = vrot.lane.b32.xlu0 %v589, 28
      %v1323 = vpop.permute.xlu0 %1322
      %1324 = vrot.lane.b32.xlu0 %v964, 28
      %v1325 = vpop.permute.xlu0 %1324
      %1326 = vrot.lane.b32.xlu0 %v966, 28
      %v1327 = vpop.permute.xlu0 %1326
      %1328 = vrot.lane.b32.xlu0 %v1265, 28
      %v1329 = vpop.permute.xlu0 %1328
      %1330 = vrot.lane.b32.xlu0 %v1267, 28
      %v1331 = vpop.permute.xlu0 %1330
      %v1364 = vrot.slane %v458, 2
      %v1365 = vrot.slane %v459, 2
      %v1366 = vsel %vm686, %v1364, %v1365
      %v1367 = vrot.slane %v460, 2
      %v1368 = vsel %vm686, %v1365, %v1367
      %1369 = vrot.lane.b32.xlu0 %v699, 32
      %v1370 = vpop.permute.xlu0 %1369
      %1371 = vrot.lane.b32.xlu0 %v701, 32
      %v1372 = vpop.permute.xlu0 %1371
      %1373 = vrot.lane.b32.xlu0 %v704, 32
      %v1374 = vpop.permute.xlu0 %1373
      %1375 = vrot.lane.b32.xlu0 %v706, 32
      %v1376 = vpop.permute.xlu0 %1375
      %1377 = vrot.lane.b32.xlu0 %v709, 32
      %v1378 = vpop.permute.xlu0 %1377
      %1379 = vrot.lane.b32.xlu0 %v711, 32
      %v1380 = vpop.permute.xlu0 %1379
      %1381 = vrot.lane.b32.xlu0 %v714, 32
      %v1382 = vpop.permute.xlu0 %1381
      %1383 = vrot.lane.b32.xlu0 %v716, 32
      %v1384 = vpop.permute.xlu0 %1383
      %1385 = vrot.lane.b32.xlu0 %v719, 32
      %v1386 = vpop.permute.xlu0 %1385
      %1387 = vrot.lane.b32.xlu0 %v721, 32
      %v1388 = vpop.permute.xlu0 %1387
      %1389 = vrot.lane.b32.xlu0 %v724, 32
      %v1390 = vpop.permute.xlu0 %1389
      %1391 = vrot.lane.b32.xlu0 %v726, 32
      %v1392 = vpop.permute.xlu0 %1391
      %1393 = vrot.lane.b32.xlu0 %v729, 32
      %v1394 = vpop.permute.xlu0 %1393
      %1395 = vrot.lane.b32.xlu0 %v731, 32
      %v1396 = vpop.permute.xlu0 %1395
      %1397 = vrot.lane.b32.xlu0 %v734, 32
      %v1398 = vpop.permute.xlu0 %1397
      %1399 = vrot.lane.b32.xlu0 %v736, 32
      %v1400 = vpop.permute.xlu0 %1399
      %1401 = vrot.lane.b32.xlu0 %v739, 32
      %v1402 = vpop.permute.xlu0 %1401
      %1403 = vrot.lane.b32.xlu0 %v741, 32
      %v1404 = vpop.permute.xlu0 %1403
      %1405 = vrot.lane.b32.xlu0 %v744, 32
      %v1406 = vpop.permute.xlu0 %1405
      %1407 = vrot.lane.b32.xlu0 %v746, 32
      %v1408 = vpop.permute.xlu0 %1407
      %1409 = vrot.lane.b32.xlu0 %v749, 32
      %v1410 = vpop.permute.xlu0 %1409
      %1411 = vrot.lane.b32.xlu0 %v751, 32
      %v1412 = vpop.permute.xlu0 %1411
      %1413 = vrot.lane.b32.xlu0 %v754, 32
      %v1414 = vpop.permute.xlu0 %1413
      %1415 = vrot.lane.b32.xlu0 %v756, 32
      %v1416 = vpop.permute.xlu0 %1415
      %1417 = vrot.lane.b32.xlu0 %v759, 32
      %v1418 = vpop.permute.xlu0 %1417
      %1419 = vrot.lane.b32.xlu0 %v761, 32
      %v1420 = vpop.permute.xlu0 %1419
      %1421 = vrot.lane.b32.xlu0 %v764, 32
      %v1422 = vpop.permute.xlu0 %1421
      %1423 = vrot.lane.b32.xlu0 %v766, 32
      %v1424 = vpop.permute.xlu0 %1423
      %1425 = vrot.lane.b32.xlu0 %v1065, 32
      %v1426 = vpop.permute.xlu0 %1425
      %1427 = vrot.lane.b32.xlu0 %v1067, 32
      %v1428 = vpop.permute.xlu0 %1427
      %1429 = vrot.lane.b32.xlu0 %v1366, 32
      %v1430 = vpop.permute.xlu0 %1429
      %1431 = vrot.lane.b32.xlu0 %v1368, 32
      %v1432 = vpop.permute.xlu0 %1431
      %v1465 = vsel %vm374, %v407, %v591
      %v1466 = vsel %vm374, %v408, %v593
      %v1467 = vsel %vm374, %v410, %v595
      %v1468 = vsel %vm374, %v411, %v597
      %v1469 = vsel %vm374, %v413, %v599
      %v1470 = vsel %vm374, %v414, %v601
      %v1471 = vsel %vm374, %v416, %v603
      %v1472 = vsel %vm374, %v417, %v605
      %v1473 = vsel %vm374, %v419, %v607
      %v1474 = vsel %vm374, %v420, %v609
      %v1475 = vsel %vm374, %v422, %v611
      %v1476 = vsel %vm374, %v423, %v613
      %v1477 = vsel %vm374, %v425, %v615
      %v1478 = vsel %vm374, %v426, %v617
      %v1479 = vsel %vm374, %v428, %v619
      %v1480 = vsel %vm374, %v429, %v621
      %v1481 = vsel %vm374, %v431, %v623
      %v1482 = vsel %vm374, %v432, %v625
      %v1483 = vsel %vm374, %v434, %v627
      %v1484 = vsel %vm374, %v435, %v629
      %v1485 = vsel %vm374, %v437, %v631
      %v1486 = vsel %vm374, %v438, %v633
      %v1487 = vsel %vm374, %v440, %v635
      %v1488 = vsel %vm374, %v441, %v637
      %v1489 = vsel %vm374, %v443, %v639
      %v1490 = vsel %vm374, %v444, %v641
      %v1491 = vsel %vm374, %v446, %v643
      %v1492 = vsel %vm374, %v447, %v645
      %v1493 = vsel %vm374, %v449, %v647
      %v1494 = vsel %vm374, %v450, %v649
      %v1495 = vsel %vm374, %v452, %v651
      %v1496 = vsel %vm374, %v453, %v653
      %vm1497 = vcmask 64512
      %v1498 = vsel %vm1497, %v1465, %v768
      %v1499 = vsel %vm1497, %v1466, %v770
      %v1500 = vsel %vm1497, %v1467, %v772
      %v1501 = vsel %vm1497, %v1468, %v774
      %v1502 = vsel %vm1497, %v1469, %v776
      %v1503 = vsel %vm1497, %v1470, %v778
      %v1504 = vsel %vm1497, %v1471, %v780
      %v1505 = vsel %vm1497, %v1472, %v782
      %v1506 = vsel %vm1497, %v1473, %v784
      %v1507 = vsel %vm1497, %v1474, %v786
      %v1508 = vsel %vm1497, %v1475, %v788
      %v1509 = vsel %vm1497, %v1476, %v790
      %v1510 = vsel %vm1497, %v1477, %v792
      %v1511 = vsel %vm1497, %v1478, %v794
      %v1512 = vsel %vm1497, %v1479, %v796
      %v1513 = vsel %vm1497, %v1480, %v798
      %v1514 = vsel %vm1497, %v1481, %v800
      %v1515 = vsel %vm1497, %v1482, %v802
      %v1516 = vsel %vm1497, %v1483, %v804
      %v1517 = vsel %vm1497, %v1484, %v806
      %v1518 = vsel %vm1497, %v1485, %v808
      %v1519 = vsel %vm1497, %v1486, %v810
      %v1520 = vsel %vm1497, %v1487, %v812
      %v1521 = vsel %vm1497, %v1488, %v814
      %v1522 = vsel %vm1497, %v1489, %v816
      %v1523 = vsel %vm1497, %v1490, %v818
      %v1524 = vsel %vm1497, %v1491, %v820
      %v1525 = vsel %vm1497, %v1492, %v822
      %v1526 = vsel %vm1497, %v1493, %v824
      %v1527 = vsel %vm1497, %v1494, %v826
      %v1528 = vsel %vm1497, %v1495, %v828
      %v1529 = vsel %vm1497, %v1496, %v830
      %vm1530 = vcmask 97280
      %v1531 = vsel %vm1530, %v1498, %v866
      %v1532 = vsel %vm1530, %v1499, %v868
      %v1533 = vsel %vm1530, %v1500, %v870
      %v1534 = vsel %vm1530, %v1501, %v872
      %v1535 = vsel %vm1530, %v1502, %v874
      %v1536 = vsel %vm1530, %v1503, %v876
      %v1537 = vsel %vm1530, %v1504, %v878
      %v1538 = vsel %vm1530, %v1505, %v880
      %v1539 = vsel %vm1530, %v1506, %v882
      %v1540 = vsel %vm1530, %v1507, %v884
      %v1541 = vsel %vm1530, %v1508, %v886
      %v1542 = vsel %vm1530, %v1509, %v888
      %v1543 = vsel %vm1530, %v1510, %v890
      %v1544 = vsel %vm1530, %v1511, %v892
      %v1545 = vsel %vm1530, %v1512, %v894
      %v1546 = vsel %vm1530, %v1513, %v896
      %v1547 = vsel %vm1530, %v1514, %v898
      %v1548 = vsel %vm1530, %v1515, %v900
      %v1549 = vsel %vm1530, %v1516, %v902
      %v1550 = vsel %vm1530, %v1517, %v904
      %v1551 = vsel %vm1530, %v1518, %v906
      %v1552 = vsel %vm1530, %v1519, %v908
      %v1553 = vsel %vm1530, %v1520, %v910
      %v1554 = vsel %vm1530, %v1521, %v912
      %v1555 = vsel %vm1530, %v1522, %v914
      %v1556 = vsel %vm1530, %v1523, %v916
      %v1557 = vsel %vm1530, %v1524, %v918
      %v1558 = vsel %vm1530, %v1525, %v920
      %v1559 = vsel %vm1530, %v1526, %v922
      %v1560 = vsel %vm1530, %v1527, %v924
      %v1561 = vsel %vm1530, %v1528, %v926
      %v1562 = vsel %vm1530, %v1529, %v928
      %vm1563 = vcmask 130048
      %v1564 = vsel %vm1563, %v1531, %v968
      %v1565 = vsel %vm1563, %v1532, %v970
      %v1566 = vsel %vm1563, %v1533, %v972
      %v1567 = vsel %vm1563, %v1534, %v974
      %v1568 = vsel %vm1563, %v1535, %v976
      %v1569 = vsel %vm1563, %v1536, %v978
      %v1570 = vsel %vm1563, %v1537, %v980
      %v1571 = vsel %vm1563, %v1538, %v982
      %v1572 = vsel %vm1563, %v1539, %v984
      %v1573 = vsel %vm1563, %v1540, %v986
      %v1574 = vsel %vm1563, %v1541, %v988
      %v1575 = vsel %vm1563, %v1542, %v990
      %v1576 = vsel %vm1563, %v1543, %v992
      %v1577 = vsel %vm1563, %v1544, %v994
      %v1578 = vsel %vm1563, %v1545, %v996
      %v1579 = vsel %vm1563, %v1546, %v998
      %v1580 = vsel %vm1563, %v1547, %v1000
      %v1581 = vsel %vm1563, %v1548, %v1002
      %v1582 = vsel %vm1563, %v1549, %v1004
      %v1583 = vsel %vm1563, %v1550, %v1006
      %v1584 = vsel %vm1563, %v1551, %v1008
      %v1585 = vsel %vm1563, %v1552, %v1010
      %v1586 = vsel %vm1563, %v1553, %v1012
      %v1587 = vsel %vm1563, %v1554, %v1014
      %v1588 = vsel %vm1563, %v1555, %v1016
      %v1589 = vsel %vm1563, %v1556, %v1018
      %v1590 = vsel %vm1563, %v1557, %v1020
      %v1591 = vsel %vm1563, %v1558, %v1022
      %v1592 = vsel %vm1563, %v1559, %v1024
      %v1593 = vsel %vm1563, %v1560, %v1026
      %v1594 = vsel %vm1563, %v1561, %v1028
      %v1595 = vsel %vm1563, %v1562, %v1030
      %vm1596 = vcmask 162816
      %v1597 = vsel %vm1596, %v1564, %v1069
      %v1598 = vsel %vm1596, %v1565, %v1071
      %v1599 = vsel %vm1596, %v1566, %v1073
      %v1600 = vsel %vm1596, %v1567, %v1075
      %v1601 = vsel %vm1596, %v1568, %v1077
      %v1602 = vsel %vm1596, %v1569, %v1079
      %v1603 = vsel %vm1596, %v1570, %v1081
      %v1604 = vsel %vm1596, %v1571, %v1083
      %v1605 = vsel %vm1596, %v1572, %v1085
      %v1606 = vsel %vm1596, %v1573, %v1087
      %v1607 = vsel %vm1596, %v1574, %v1089
      %v1608 = vsel %vm1596, %v1575, %v1091
      %v1609 = vsel %vm1596, %v1576, %v1093
      %v1610 = vsel %vm1596, %v1577, %v1095
      %v1611 = vsel %vm1596, %v1578, %v1097
      %v1612 = vsel %vm1596, %v1579, %v1099
      %v1613 = vsel %vm1596, %v1580, %v1101
      %v1614 = vsel %vm1596, %v1581, %v1103
      %v1615 = vsel %vm1596, %v1582, %v1105
      %v1616 = vsel %vm1596, %v1583, %v1107
      %v1617 = vsel %vm1596, %v1584, %v1109
      %v1618 = vsel %vm1596, %v1585, %v1111
      %v1619 = vsel %vm1596, %v1586, %v1113
      %v1620 = vsel %vm1596, %v1587, %v1115
      %v1621 = vsel %vm1596, %v1588, %v1117
      %v1622 = vsel %vm1596, %v1589, %v1119
      %v1623 = vsel %vm1596, %v1590, %v1121
      %v1624 = vsel %vm1596, %v1591, %v1123
      %v1625 = vsel %vm1596, %v1592, %v1125
      %v1626 = vsel %vm1596, %v1593, %v1127
      %v1627 = vsel %vm1596, %v1594, %v1129
      %v1628 = vsel %vm1596, %v1595, %v1131
      %vm1629 = vcmask 195584
      %v1630 = vsel %vm1629, %v1597, %v1167
      %v1631 = vsel %vm1629, %v1598, %v1169
      %v1632 = vsel %vm1629, %v1599, %v1171
      %v1633 = vsel %vm1629, %v1600, %v1173
      %v1634 = vsel %vm1629, %v1601, %v1175
      %v1635 = vsel %vm1629, %v1602, %v1177
      %v1636 = vsel %vm1629, %v1603, %v1179
      %v1637 = vsel %vm1629, %v1604, %v1181
      %v1638 = vsel %vm1629, %v1605, %v1183
      %v1639 = vsel %vm1629, %v1606, %v1185
      %v1640 = vsel %vm1629, %v1607, %v1187
      %v1641 = vsel %vm1629, %v1608, %v1189
      %v1642 = vsel %vm1629, %v1609, %v1191
      %v1643 = vsel %vm1629, %v1610, %v1193
      %v1644 = vsel %vm1629, %v1611, %v1195
      %v1645 = vsel %vm1629, %v1612, %v1197
      %v1646 = vsel %vm1629, %v1613, %v1199
      %v1647 = vsel %vm1629, %v1614, %v1201
      %v1648 = vsel %vm1629, %v1615, %v1203
      %v1649 = vsel %vm1629, %v1616, %v1205
      %v1650 = vsel %vm1629, %v1617, %v1207
      %v1651 = vsel %vm1629, %v1618, %v1209
      %v1652 = vsel %vm1629, %v1619, %v1211
      %v1653 = vsel %vm1629, %v1620, %v1213
      %v1654 = vsel %vm1629, %v1621, %v1215
      %v1655 = vsel %vm1629, %v1622, %v1217
      %v1656 = vsel %vm1629, %v1623, %v1219
      %v1657 = vsel %vm1629, %v1624, %v1221
      %v1658 = vsel %vm1629, %v1625, %v1223
      %v1659 = vsel %vm1629, %v1626, %v1225
      %v1660 = vsel %vm1629, %v1627, %v1227
      %v1661 = vsel %vm1629, %v1628, %v1229
      %vm1662 = vcmask 228352
      %v1663 = vsel %vm1662, %v1630, %v1269
      %v1664 = vsel %vm1662, %v1631, %v1271
      %v1665 = vsel %vm1662, %v1632, %v1273
      %v1666 = vsel %vm1662, %v1633, %v1275
      %v1667 = vsel %vm1662, %v1634, %v1277
      %v1668 = vsel %vm1662, %v1635, %v1279
      %v1669 = vsel %vm1662, %v1636, %v1281
      %v1670 = vsel %vm1662, %v1637, %v1283
      %v1671 = vsel %vm1662, %v1638, %v1285
      %v1672 = vsel %vm1662, %v1639, %v1287
      %v1673 = vsel %vm1662, %v1640, %v1289
      %v1674 = vsel %vm1662, %v1641, %v1291
      %v1675 = vsel %vm1662, %v1642, %v1293
      %v1676 = vsel %vm1662, %v1643, %v1295
      %v1677 = vsel %vm1662, %v1644, %v1297
      %v1678 = vsel %vm1662, %v1645, %v1299
      %v1679 = vsel %vm1662, %v1646, %v1301
      %v1680 = vsel %vm1662, %v1647, %v1303
      %v1681 = vsel %vm1662, %v1648, %v1305
      %v1682 = vsel %vm1662, %v1649, %v1307
      %v1683 = vsel %vm1662, %v1650, %v1309
      %v1684 = vsel %vm1662, %v1651, %v1311
      %v1685 = vsel %vm1662, %v1652, %v1313
      %v1686 = vsel %vm1662, %v1653, %v1315
      %v1687 = vsel %vm1662, %v1654, %v1317
      %v1688 = vsel %vm1662, %v1655, %v1319
      %v1689 = vsel %vm1662, %v1656, %v1321
      %v1690 = vsel %vm1662, %v1657, %v1323
      %v1691 = vsel %vm1662, %v1658, %v1325
      %v1692 = vsel %vm1662, %v1659, %v1327
      %v1693 = vsel %vm1662, %v1660, %v1329
      %v1694 = vsel %vm1662, %v1661, %v1331
      %vm1695 = vcmask 261120
      %v1696 = vsel %vm1695, %v1663, %v1370
      %v1697 = vsel %vm1695, %v1664, %v1372
      %v1698 = vsel %vm1695, %v1665, %v1374
      %v1699 = vsel %vm1695, %v1666, %v1376
      %v1700 = vsel %vm1695, %v1667, %v1378
      %v1701 = vsel %vm1695, %v1668, %v1380
      %v1702 = vsel %vm1695, %v1669, %v1382
      %v1703 = vsel %vm1695, %v1670, %v1384
      %v1704 = vsel %vm1695, %v1671, %v1386
      %v1705 = vsel %vm1695, %v1672, %v1388
      %v1706 = vsel %vm1695, %v1673, %v1390
      %v1707 = vsel %vm1695, %v1674, %v1392
      %v1708 = vsel %vm1695, %v1675, %v1394
      %v1709 = vsel %vm1695, %v1676, %v1396
      %v1710 = vsel %vm1695, %v1677, %v1398
      %v1711 = vsel %vm1695, %v1678, %v1400
      %v1712 = vsel %vm1695, %v1679, %v1402
      %v1713 = vsel %vm1695, %v1680, %v1404
      %v1714 = vsel %vm1695, %v1681, %v1406
      %v1715 = vsel %vm1695, %v1682, %v1408
      %v1716 = vsel %vm1695, %v1683, %v1410
      %v1717 = vsel %vm1695, %v1684, %v1412
      %v1718 = vsel %vm1695, %v1685, %v1414
      %v1719 = vsel %vm1695, %v1686, %v1416
      %v1720 = vsel %vm1695, %v1687, %v1418
      %v1721 = vsel %vm1695, %v1688, %v1420
      %v1722 = vsel %vm1695, %v1689, %v1422
      %v1723 = vsel %vm1695, %v1690, %v1424
      %v1724 = vsel %vm1695, %v1691, %v1426
      %v1725 = vsel %vm1695, %v1692, %v1428
      %v1726 = vsel %vm1695, %v1693, %v1430
      %v1727 = vsel %vm1695, %v1694, %v1432
      %v1728 = vld [vmem:[%s1] sm:$0xff]
      %v1729 = vld [vmem:[%s1 + $0x8] sm:$0xff]
      %v1730 = vld [vmem:[%s1 + $0x10] sm:$0xff]
      %v1731 = vld [vmem:[%s1 + $0x18] sm:$0xff]
      %v1732 = vld [vmem:[%s1 + $0x20] sm:$0xf]
      %v1733 = vld [vmem:[%s2] sm:$0x1]
      %v1735 = vperm.slane %v1733, 0
      %vm1737 = vcmask 293888
      %v1739 = vsel %vm1737, %v1696, 0
      %v1742 = vsel %vm1737, %v1697, 0
      %v1745 = vsel %vm1737, %v1698, 0
      %v1748 = vsel %vm1737, %v1699, 0
      %v1751 = vsel %vm1737, %v1700, 0
      %v1754 = vsel %vm1737, %v1701, 0
      %v1757 = vsel %vm1737, %v1702, 0
      %v1760 = vsel %vm1737, %v1703, 0
      %v1763 = vsel %vm1737, %v1704, 0
      %v1766 = vsel %vm1737, %v1705, 0
      %v1769 = vsel %vm1737, %v1706, 0
      %v1772 = vsel %vm1737, %v1707, 0
      %v1775 = vsel %vm1737, %v1708, 0
      %v1778 = vsel %vm1737, %v1709, 0
      %v1781 = vsel %vm1737, %v1710, 0
      %v1784 = vsel %vm1737, %v1711, 0
      %v1787 = vsel %vm1737, %v1712, 0
      %v1790 = vsel %vm1737, %v1713, 0
      %v1793 = vsel %vm1737, %v1714, 0
      %v1796 = vsel %vm1737, %v1715, 0
      %v1799 = vsel %vm1737, %v1716, 0
      %v1802 = vsel %vm1737, %v1717, 0
      %v1805 = vsel %vm1737, %v1718, 0
      %v1808 = vsel %vm1737, %v1719, 0
      %v1811 = vsel %vm1737, %v1720, 0
      %v1814 = vsel %vm1737, %v1721, 0
      %v1817 = vsel %vm1737, %v1722, 0
      %v1820 = vsel %vm1737, %v1723, 0
      %v1823 = vsel %vm1737, %v1724, 0
      %v1826 = vsel %vm1737, %v1725, 0
      %v1829 = vsel %vm1737, %v1726, 0
      %v1832 = vsel %vm1737, %v1727, 0
      %vm1834 = vcmask 1043456
      %v1836 = vsel %vm1834, %v1732, 0
      %1838 = vmatpush.msra.mxu0 0.0
      %1839 = vmatpush.msra.mxu0 0.0
      %1840 = vmatpush.msra.mxu0 0.0
      %1841 = vmatpush.msra.mxu0 0.0
      %1842 = vmatpush.msra.mxu0 0.0
      %1843 = vmatpush.msra.mxu0 0.0
      %1844 = vmatpush.msra.mxu0 0.0
      %1845 = vmatpush.msra.mxu0 0.0
      %1846 = vmatpush.msra.mxu0 0.0
      %1847 = vmatpush.msra.mxu0 0.0
      %1848 = vmatpush.msra.mxu0 0.0
      %1849 = vmatpush.msra.mxu0 %v1836
      %1850 = vmatpush.msra.mxu0 %v1731
      %1851 = vmatpush.msra.mxu0 %v1730
      %1852 = vmatpush.msra.mxu0 %v1729
      %1853 = vmatpush.msra.mxu0 %v1728
      %1854 = vmatmul.f32.gmra.mxu0 %v1739
      %v1855 = vpop.f32.mrf.mxu0
      %v1856 = vadd.f32 %v1735, %v1855
      %1857 = vmatmul.f32.gmra.mxu0 %v1742
      %v1858 = vpop.f32.mrf.mxu0
      %v1859 = vadd.f32 %v1735, %v1858
      %1860 = vmatmul.f32.gmra.mxu0 %v1745
      %v1861 = vpop.f32.mrf.mxu0
      %v1862 = vadd.f32 %v1735, %v1861
      %1863 = vmatmul.f32.gmra.mxu0 %v1748
      %v1864 = vpop.f32.mrf.mxu0
      %v1865 = vadd.f32 %v1735, %v1864
      %1866 = vmatmul.f32.gmra.mxu0 %v1751
      %v1867 = vpop.f32.mrf.mxu0
      %v1868 = vadd.f32 %v1735, %v1867
      %1869 = vmatmul.f32.gmra.mxu0 %v1754
      %v1870 = vpop.f32.mrf.mxu0
      %v1871 = vadd.f32 %v1735, %v1870
      %1872 = vmatmul.f32.gmra.mxu0 %v1757
      %v1873 = vpop.f32.mrf.mxu0
      %v1874 = vadd.f32 %v1735, %v1873
      %1875 = vmatmul.f32.gmra.mxu0 %v1760
      %v1876 = vpop.f32.mrf.mxu0
      %v1877 = vadd.f32 %v1735, %v1876
      %1878 = vmatmul.f32.gmra.mxu0 %v1763
      %v1879 = vpop.f32.mrf.mxu0
      %v1880 = vadd.f32 %v1735, %v1879
      %1881 = vmatmul.f32.gmra.mxu0 %v1766
      %v1882 = vpop.f32.mrf.mxu0
      %v1883 = vadd.f32 %v1735, %v1882
      %1884 = vmatmul.f32.gmra.mxu0 %v1769
      %v1885 = vpop.f32.mrf.mxu0
      %v1886 = vadd.f32 %v1735, %v1885
      %1887 = vmatmul.f32.gmra.mxu0 %v1772
      %v1888 = vpop.f32.mrf.mxu0
      %v1889 = vadd.f32 %v1735, %v1888
      %1890 = vmatmul.f32.gmra.mxu0 %v1775
      %v1891 = vpop.f32.mrf.mxu0
      %v1892 = vadd.f32 %v1735, %v1891
      %1893 = vmatmul.f32.gmra.mxu0 %v1778
      %v1894 = vpop.f32.mrf.mxu0
      %v1895 = vadd.f32 %v1735, %v1894
      %1896 = vmatmul.f32.gmra.mxu0 %v1781
      %v1897 = vpop.f32.mrf.mxu0
      %v1898 = vadd.f32 %v1735, %v1897
      %1899 = vmatmul.f32.gmra.mxu0 %v1784
      %v1900 = vpop.f32.mrf.mxu0
      %v1901 = vadd.f32 %v1735, %v1900
      %1902 = vmatmul.f32.gmra.mxu0 %v1787
      %v1903 = vpop.f32.mrf.mxu0
      %v1904 = vadd.f32 %v1735, %v1903
      %1905 = vmatmul.f32.gmra.mxu0 %v1790
      %v1906 = vpop.f32.mrf.mxu0
      %v1907 = vadd.f32 %v1735, %v1906
      %1908 = vmatmul.f32.gmra.mxu0 %v1793
      %v1909 = vpop.f32.mrf.mxu0
      %v1910 = vadd.f32 %v1735, %v1909
      %1911 = vmatmul.f32.gmra.mxu0 %v1796
      %v1912 = vpop.f32.mrf.mxu0
      %v1913 = vadd.f32 %v1735, %v1912
      %1914 = vmatmul.f32.gmra.mxu0 %v1799
      %v1915 = vpop.f32.mrf.mxu0
      %v1916 = vadd.f32 %v1735, %v1915
      %1917 = vmatmul.f32.gmra.mxu0 %v1802
      %v1918 = vpop.f32.mrf.mxu0
      %v1919 = vadd.f32 %v1735, %v1918
      %1920 = vmatmul.f32.gmra.mxu0 %v1805
      %v1921 = vpop.f32.mrf.mxu0
      %v1922 = vadd.f32 %v1735, %v1921
      %1923 = vmatmul.f32.gmra.mxu0 %v1808
      %v1924 = vpop.f32.mrf.mxu0
      %v1925 = vadd.f32 %v1735, %v1924
      %1926 = vmatmul.f32.gmra.mxu0 %v1811
      %v1927 = vpop.f32.mrf.mxu0
      %v1928 = vadd.f32 %v1735, %v1927
      %1929 = vmatmul.f32.gmra.mxu0 %v1814
      %v1930 = vpop.f32.mrf.mxu0
      %v1931 = vadd.f32 %v1735, %v1930
      %1932 = vmatmul.f32.gmra.mxu0 %v1817
      %v1933 = vpop.f32.mrf.mxu0
      %v1934 = vadd.f32 %v1735, %v1933
      %1935 = vmatmul.f32.gmra.mxu0 %v1820
      %v1936 = vpop.f32.mrf.mxu0
      %v1937 = vadd.f32 %v1735, %v1936
      %1938 = vmatmul.f32.gmra.mxu0 %v1823
      %v1939 = vpop.f32.mrf.mxu0
      %v1940 = vadd.f32 %v1735, %v1939
      %1941 = vmatmul.f32.gmra.mxu0 %v1826
      %v1942 = vpop.f32.mrf.mxu0
      %v1943 = vadd.f32 %v1735, %v1942
      %1944 = vmatmul.f32.gmra.mxu0 %v1829
      %v1945 = vpop.f32.mrf.mxu0
      %v1946 = vadd.f32 %v1735, %v1945
      %1947 = vmatmul.f32.gmra.mxu0 %v1832
      %v1948 = vpop.f32.mrf.mxu0
      %v1949 = vadd.f32 %v1735, %v1948
      %1950 = vdwg.mxu0
      %vm1951 = vcmp.ge.f32.partialorder %v1856, 0.0
      %vm1952 = vcmp.ge.f32.partialorder %v1859, 0.0
      %vm1953 = vcmp.ge.f32.partialorder %v1862, 0.0
      %vm1954 = vcmp.ge.f32.partialorder %v1865, 0.0
      %vm1955 = vcmp.ge.f32.partialorder %v1868, 0.0
      %vm1956 = vcmp.ge.f32.partialorder %v1871, 0.0
      %vm1957 = vcmp.ge.f32.partialorder %v1874, 0.0
      %vm1958 = vcmp.ge.f32.partialorder %v1877, 0.0
      %vm1959 = vcmp.ge.f32.partialorder %v1880, 0.0
      %vm1960 = vcmp.ge.f32.partialorder %v1883, 0.0
      %vm1961 = vcmp.ge.f32.partialorder %v1886, 0.0
      %vm1962 = vcmp.ge.f32.partialorder %v1889, 0.0
      %vm1963 = vcmp.ge.f32.partialorder %v1892, 0.0
      %vm1964 = vcmp.ge.f32.partialorder %v1895, 0.0
      %vm1965 = vcmp.ge.f32.partialorder %v1898, 0.0
      %vm1966 = vcmp.ge.f32.partialorder %v1901, 0.0
      %vm1967 = vcmp.ge.f32.partialorder %v1904, 0.0
      %vm1968 = vcmp.ge.f32.partialorder %v1907, 0.0
      %vm1969 = vcmp.ge.f32.partialorder %v1910, 0.0
      %vm1970 = vcmp.ge.f32.partialorder %v1913, 0.0
      %vm1971 = vcmp.ge.f32.partialorder %v1916, 0.0
      %vm1972 = vcmp.ge.f32.partialorder %v1919, 0.0
      %vm1973 = vcmp.ge.f32.partialorder %v1922, 0.0
      %vm1974 = vcmp.ge.f32.partialorder %v1925, 0.0
      %vm1975 = vcmp.ge.f32.partialorder %v1928, 0.0
      %vm1976 = vcmp.ge.f32.partialorder %v1931, 0.0
      %vm1977 = vcmp.ge.f32.partialorder %v1934, 0.0
      %vm1978 = vcmp.ge.f32.partialorder %v1937, 0.0
      %vm1979 = vcmp.ge.f32.partialorder %v1940, 0.0
      %vm1980 = vcmp.ge.f32.partialorder %v1943, 0.0
      %vm1981 = vcmp.ge.f32.partialorder %v1946, 0.0
      %vm1982 = vcmp.ge.f32.partialorder %v1949, 0.0
      %v1983 = vmul.f32 %v1856, 0.01
      %v1984 = vmul.f32 %v1859, 0.01
      %v1985 = vmul.f32 %v1862, 0.01
      %v1986 = vmul.f32 %v1865, 0.01
      %v1987 = vmul.f32 %v1868, 0.01
      %v1988 = vmul.f32 %v1871, 0.01
      %v1989 = vmul.f32 %v1874, 0.01
      %v1990 = vmul.f32 %v1877, 0.01
      %v1991 = vmul.f32 %v1880, 0.01
      %v1992 = vmul.f32 %v1883, 0.01
      %v1993 = vmul.f32 %v1886, 0.01
      %v1994 = vmul.f32 %v1889, 0.01
      %v1995 = vmul.f32 %v1892, 0.01
      %v1996 = vmul.f32 %v1895, 0.01
      %v1997 = vmul.f32 %v1898, 0.01
      %v1998 = vmul.f32 %v1901, 0.01
      %v1999 = vmul.f32 %v1904, 0.01
      %v2000 = vmul.f32 %v1907, 0.01
      %v2001 = vmul.f32 %v1910, 0.01
      %v2002 = vmul.f32 %v1913, 0.01
      %v2003 = vmul.f32 %v1916, 0.01
      %v2004 = vmul.f32 %v1919, 0.01
      %v2005 = vmul.f32 %v1922, 0.01
      %v2006 = vmul.f32 %v1925, 0.01
      %v2007 = vmul.f32 %v1928, 0.01
      %v2008 = vmul.f32 %v1931, 0.01
      %v2009 = vmul.f32 %v1934, 0.01
      %v2010 = vmul.f32 %v1937, 0.01
      %v2011 = vmul.f32 %v1940, 0.01
      %v2012 = vmul.f32 %v1943, 0.01
      %v2013 = vmul.f32 %v1946, 0.01
      %v2014 = vmul.f32 %v1949, 0.01
      %v2015 = vsel %vm1951, %v1856, %v1983
      %v2016 = vsel %vm1952, %v1859, %v1984
      %v2017 = vsel %vm1953, %v1862, %v1985
      %v2018 = vsel %vm1954, %v1865, %v1986
      %v2019 = vsel %vm1955, %v1868, %v1987
      %v2020 = vsel %vm1956, %v1871, %v1988
      %v2021 = vsel %vm1957, %v1874, %v1989
      %v2022 = vsel %vm1958, %v1877, %v1990
      %v2023 = vsel %vm1959, %v1880, %v1991
      %v2024 = vsel %vm1960, %v1883, %v1992
      %v2025 = vsel %vm1961, %v1886, %v1993
      %v2026 = vsel %vm1962, %v1889, %v1994
      %v2027 = vsel %vm1963, %v1892, %v1995
      %v2028 = vsel %vm1964, %v1895, %v1996
      %v2029 = vsel %vm1965, %v1898, %v1997
      %v2030 = vsel %vm1966, %v1901, %v1998
      %v2031 = vsel %vm1967, %v1904, %v1999
      %v2032 = vsel %vm1968, %v1907, %v2000
      %v2033 = vsel %vm1969, %v1910, %v2001
      %v2034 = vsel %vm1970, %v1913, %v2002
      %v2035 = vsel %vm1971, %v1916, %v2003
      %v2036 = vsel %vm1972, %v1919, %v2004
      %v2037 = vsel %vm1973, %v1922, %v2005
      %v2038 = vsel %vm1974, %v1925, %v2006
      %v2039 = vsel %vm1975, %v1928, %v2007
      %v2040 = vsel %vm1976, %v1931, %v2008
      %v2041 = vsel %vm1977, %v1934, %v2009
      %v2042 = vsel %vm1978, %v1937, %v2010
      %v2043 = vsel %vm1979, %v1940, %v2011
      %v2044 = vsel %vm1980, %v1943, %v2012
      %v2045 = vsel %vm1981, %v1946, %v2013
      %v2046 = vsel %vm1982, %v1949, %v2014
      %s2047 = scalar_lea.vmem [#allocation3], 24
      %2048 = vst.msk [vmem:[%s2047 + $0x1] sm:$0xff] %vm1497, %v2015
      %2049 = vst.msk [vmem:[%s2047 + $0x9] sm:$0xff] %vm1497, %v2016
      %2050 = vst.msk [vmem:[%s2047 + $0x19] sm:$0xff] %vm1497, %v2017
      %2051 = vst.msk [vmem:[%s2047 + $0x21] sm:$0xff] %vm1497, %v2018
      %2052 = vst.msk [vmem:[%s2047 + $0x31] sm:$0xff] %vm1497, %v2019
      %2053 = vst.msk [vmem:[%s2047 + $0x39] sm:$0xff] %vm1497, %v2020
      %2054 = vst.msk [vmem:[%s2047 + $0x49] sm:$0xff] %vm1497, %v2021
      %2055 = vst.msk [vmem:[%s2047 + $0x51] sm:$0xff] %vm1497, %v2022
      %2056 = vst.msk [vmem:[%s2047 + $0x61] sm:$0xff] %vm1497, %v2023
      %2057 = vst.msk [vmem:[%s2047 + $0x69] sm:$0xff] %vm1497, %v2024
      %2058 = vst.msk [vmem:[%s2047 + $0x79] sm:$0xff] %vm1497, %v2025
      %2059 = vst.msk [vmem:[%s2047 + $0x81] sm:$0xff] %vm1497, %v2026
      %2060 = vst.msk [vmem:[%s2047 + $0x91] sm:$0xff] %vm1497, %v2027
      %2061 = vst.msk [vmem:[%s2047 + $0x99] sm:$0xff] %vm1497, %v2028
      %2062 = vst.msk [vmem:[%s2047 + $0xa9] sm:$0xff] %vm1497, %v2029
      %2063 = vst.msk [vmem:[%s2047 + $0xb1] sm:$0xff] %vm1497, %v2030
      %2064 = vst.msk [vmem:[%s2047 + $0xc1] sm:$0xff] %vm1497, %v2031
      %2065 = vst.msk [vmem:[%s2047 + $0xc9] sm:$0xff] %vm1497, %v2032
      %2066 = vst.msk [vmem:[%s2047 + $0xd9] sm:$0xff] %vm1497, %v2033
      %2067 = vst.msk [vmem:[%s2047 + $0xe1] sm:$0xff] %vm1497, %v2034
      %2068 = vst.msk [vmem:[%s2047 + $0xf1] sm:$0xff] %vm1497, %v2035
      %2069 = vst.msk [vmem:[%s2047 + $0xf9] sm:$0xff] %vm1497, %v2036
      %2070 = vst.msk [vmem:[%s2047 + $0x109] sm:$0xff] %vm1497, %v2037
      %2071 = vst.msk [vmem:[%s2047 + $0x111] sm:$0xff] %vm1497, %v2038
      %2072 = vst.msk [vmem:[%s2047 + $0x121] sm:$0xff] %vm1497, %v2039
      %2073 = vst.msk [vmem:[%s2047 + $0x129] sm:$0xff] %vm1497, %v2040
      %2074 = vst.msk [vmem:[%s2047 + $0x139] sm:$0xff] %vm1497, %v2041
      %2075 = vst.msk [vmem:[%s2047 + $0x141] sm:$0xff] %vm1497, %v2042
      %2076 = vst.msk [vmem:[%s2047 + $0x151] sm:$0xff] %vm1497, %v2043
      %2077 = vst.msk [vmem:[%s2047 + $0x159] sm:$0xff] %vm1497, %v2044
      %2078 = vst.msk [vmem:[%s2047 + $0x169] sm:$0xff] %vm1497, %v2045
      %2079 = vst.msk [vmem:[%s2047 + $0x171] sm:$0xff] %vm1497, %v2046
      %v2080 = vld [vmem:[#allocation3] sm:$0xff]
      %v2081 = vld [vmem:[#allocation3 + $0x8] sm:$0xff]
      %v2082 = vld [vmem:[#allocation3 + $0x10] sm:$0x3]
      %v2083 = vld [vmem:[#allocation3 + $0x18] sm:$0xff]
      %v2084 = vld [vmem:[#allocation3 + $0x20] sm:$0xff]
      %v2085 = vld [vmem:[#allocation3 + $0x28] sm:$0x3]
      %v2086 = vld [vmem:[#allocation3 + $0x30] sm:$0xff]
      %v2087 = vld [vmem:[#allocation3 + $0x38] sm:$0xff]
      %v2088 = vld [vmem:[#allocation3 + $0x40] sm:$0x3]
      %v2089 = vld [vmem:[#allocation3 + $0x48] sm:$0xff]
      %v2090 = vld [vmem:[#allocation3 + $0x50] sm:$0xff]
      %v2091 = vld [vmem:[#allocation3 + $0x58] sm:$0x3]
      %v2092 = vld [vmem:[#allocation3 + $0x60] sm:$0xff]
      %v2093 = vld [vmem:[#allocation3 + $0x68] sm:$0xff]
      %v2094 = vld [vmem:[#allocation3 + $0x70] sm:$0x3]
      %v2095 = vld [vmem:[#allocation3 + $0x78] sm:$0xff]
      %v2096 = vld [vmem:[#allocation3 + $0x80] sm:$0xff]
      %v2097 = vld [vmem:[#allocation3 + $0x88] sm:$0x3]
      %v2098 = vld [vmem:[#allocation3 + $0x90] sm:$0xff]
      %v2099 = vld [vmem:[#allocation3 + $0x98] sm:$0xff]
      %v2100 = vld [vmem:[#allocation3 + $0xa0] sm:$0x3]
      %v2101 = vld [vmem:[#allocation3 + $0xa8] sm:$0xff]
      %v2102 = vld [vmem:[#allocation3 + $0xb0] sm:$0xff]
      %v2103 = vld [vmem:[#allocation3 + $0xb8] sm:$0x3]
      %v2104 = vld [vmem:[#allocation3 + $0xc0] sm:$0xff]
      %v2105 = vld [vmem:[#allocation3 + $0xc8] sm:$0xff]
      %v2106 = vld [vmem:[#allocation3 + $0xd0] sm:$0x3]
      %v2107 = vld [vmem:[#allocation3 + $0xd8] sm:$0xff]
      %v2108 = vld [vmem:[#allocation3 + $0xe0] sm:$0xff]
      %v2109 = vld [vmem:[#allocation3 + $0xe8] sm:$0x3]
      %v2110 = vld [vmem:[#allocation3 + $0xf0] sm:$0xff]
      %v2111 = vld [vmem:[#allocation3 + $0xf8] sm:$0xff]
      %v2112 = vld [vmem:[#allocation3 + $0x100] sm:$0x3]
      %v2113 = vld [vmem:[#allocation3 + $0x108] sm:$0xff]
      %v2114 = vld [vmem:[#allocation3 + $0x110] sm:$0xff]
      %v2115 = vld [vmem:[#allocation3 + $0x118] sm:$0x3]
      %v2116 = vld [vmem:[#allocation3 + $0x120] sm:$0xff]
      %v2117 = vld [vmem:[#allocation3 + $0x128] sm:$0xff]
      %v2118 = vld [vmem:[#allocation3 + $0x130] sm:$0x3]
      %v2119 = vld [vmem:[#allocation3 + $0x138] sm:$0xff]
      %v2120 = vld [vmem:[#allocation3 + $0x140] sm:$0xff]
      %v2121 = vld [vmem:[#allocation3 + $0x148] sm:$0x3]
      %v2122 = vld [vmem:[#allocation3 + $0x150] sm:$0xff]
      %v2123 = vld [vmem:[#allocation3 + $0x158] sm:$0xff]
      %v2124 = vld [vmem:[#allocation3 + $0x160] sm:$0x3]
      %v2125 = vld [vmem:[#allocation3 + $0x168] sm:$0xff]
      %v2126 = vld [vmem:[#allocation3 + $0x170] sm:$0xff]
      %v2127 = vld [vmem:[#allocation3 + $0x178] sm:$0x3]
      %v2128 = vld [vmem:[#allocation3 + $0x180] sm:$0xff]
      %v2129 = vld [vmem:[#allocation3 + $0x188] sm:$0xff]
      %v2130 = vld [vmem:[#allocation3 + $0x190] sm:$0x3]
      %v2131 = vld [vmem:[#allocation3 + $0x198] sm:$0xff]
      %v2132 = vld [vmem:[#allocation3 + $0x1a0] sm:$0xff]
      %v2133 = vld [vmem:[#allocation3 + $0x1a8] sm:$0x3]
      %v2182 = vrot.slane %v2080, 1
      %v2183 = vrot.slane %v2081, 1
      %v2184 = vsel %vm509, %v2182, %v2183
      %v2185 = vrot.slane %v2082, 1
      %v2186 = vsel %vm509, %v2183, %v2185
      %v2187 = vrot.slane %v2083, 1
      %v2188 = vrot.slane %v2084, 1
      %v2189 = vsel %vm509, %v2187, %v2188
      %v2190 = vrot.slane %v2085, 1
      %v2191 = vsel %vm509, %v2188, %v2190
      %v2192 = vrot.slane %v2086, 1
      %v2193 = vrot.slane %v2087, 1
      %v2194 = vsel %vm509, %v2192, %v2193
      %v2195 = vrot.slane %v2088, 1
      %v2196 = vsel %vm509, %v2193, %v2195
      %v2197 = vrot.slane %v2089, 1
      %v2198 = vrot.slane %v2090, 1
      %v2199 = vsel %vm509, %v2197, %v2198
      %v2200 = vrot.slane %v2091, 1
      %v2201 = vsel %vm509, %v2198, %v2200
      %v2202 = vrot.slane %v2092, 1
      %v2203 = vrot.slane %v2093, 1
      %v2204 = vsel %vm509, %v2202, %v2203
      %v2205 = vrot.slane %v2094, 1
      %v2206 = vsel %vm509, %v2203, %v2205
      %v2207 = vrot.slane %v2095, 1
      %v2208 = vrot.slane %v2096, 1
      %v2209 = vsel %vm509, %v2207, %v2208
      %v2210 = vrot.slane %v2097, 1
      %v2211 = vsel %vm509, %v2208, %v2210
      %v2212 = vrot.slane %v2098, 1
      %v2213 = vrot.slane %v2099, 1
      %v2214 = vsel %vm509, %v2212, %v2213
      %v2215 = vrot.slane %v2100, 1
      %v2216 = vsel %vm509, %v2213, %v2215
      %v2217 = vrot.slane %v2101, 1
      %v2218 = vrot.slane %v2102, 1
      %v2219 = vsel %vm509, %v2217, %v2218
      %v2220 = vrot.slane %v2103, 1
      %v2221 = vsel %vm509, %v2218, %v2220
      %v2222 = vrot.slane %v2104, 1
      %v2223 = vrot.slane %v2105, 1
      %v2224 = vsel %vm509, %v2222, %v2223
      %v2225 = vrot.slane %v2106, 1
      %v2226 = vsel %vm509, %v2223, %v2225
      %v2227 = vrot.slane %v2107, 1
      %v2228 = vrot.slane %v2108, 1
      %v2229 = vsel %vm509, %v2227, %v2228
      %v2230 = vrot.slane %v2109, 1
      %v2231 = vsel %vm509, %v2228, %v2230
      %v2232 = vrot.slane %v2110, 1
      %v2233 = vrot.slane %v2111, 1
      %v2234 = vsel %vm509, %v2232, %v2233
      %v2235 = vrot.slane %v2112, 1
      %v2236 = vsel %vm509, %v2233, %v2235
      %v2237 = vrot.slane %v2113, 1
      %v2238 = vrot.slane %v2114, 1
      %v2239 = vsel %vm509, %v2237, %v2238
      %v2240 = vrot.slane %v2115, 1
      %v2241 = vsel %vm509, %v2238, %v2240
      %v2242 = vrot.slane %v2116, 1
      %v2243 = vrot.slane %v2117, 1
      %v2244 = vsel %vm509, %v2242, %v2243
      %v2245 = vrot.slane %v2118, 1
      %v2246 = vsel %vm509, %v2243, %v2245
      %v2247 = vrot.slane %v2119, 1
      %v2248 = vrot.slane %v2120, 1
      %v2249 = vsel %vm509, %v2247, %v2248
      %v2250 = vrot.slane %v2121, 1
      %v2251 = vsel %vm509, %v2248, %v2250
      %v2252 = vrot.slane %v2122, 1
      %v2253 = vrot.slane %v2123, 1
      %v2254 = vsel %vm509, %v2252, %v2253
      %v2255 = vrot.slane %v2124, 1
      %v2256 = vsel %vm509, %v2253, %v2255
      %v2257 = vrot.slane %v2125, 1
      %v2258 = vrot.slane %v2126, 1
      %v2259 = vsel %vm509, %v2257, %v2258
      %v2260 = vrot.slane %v2127, 1
      %v2261 = vsel %vm509, %v2258, %v2260
      %2262 = vrot.lane.b32.xlu0 %v2184, 8
      %v2263 = vpop.permute.xlu0 %2262
      %2264 = vrot.lane.b32.xlu0 %v2186, 8
      %v2265 = vpop.permute.xlu0 %2264
      %2266 = vrot.lane.b32.xlu0 %v2189, 8
      %v2267 = vpop.permute.xlu0 %2266
      %2268 = vrot.lane.b32.xlu0 %v2191, 8
      %v2269 = vpop.permute.xlu0 %2268
      %2270 = vrot.lane.b32.xlu0 %v2194, 8
      %v2271 = vpop.permute.xlu0 %2270
      %2272 = vrot.lane.b32.xlu0 %v2196, 8
      %v2273 = vpop.permute.xlu0 %2272
      %2274 = vrot.lane.b32.xlu0 %v2199, 8
      %v2275 = vpop.permute.xlu0 %2274
      %2276 = vrot.lane.b32.xlu0 %v2201, 8
      %v2277 = vpop.permute.xlu0 %2276
      %2278 = vrot.lane.b32.xlu0 %v2204, 8
      %v2279 = vpop.permute.xlu0 %2278
      %2280 = vrot.lane.b32.xlu0 %v2206, 8
      %v2281 = vpop.permute.xlu0 %2280
      %2282 = vrot.lane.b32.xlu0 %v2209, 8
      %v2283 = vpop.permute.xlu0 %2282
      %2284 = vrot.lane.b32.xlu0 %v2211, 8
      %v2285 = vpop.permute.xlu0 %2284
      %2286 = vrot.lane.b32.xlu0 %v2214, 8
      %v2287 = vpop.permute.xlu0 %2286
      %2288 = vrot.lane.b32.xlu0 %v2216, 8
      %v2289 = vpop.permute.xlu0 %2288
      %2290 = vrot.lane.b32.xlu0 %v2219, 8
      %v2291 = vpop.permute.xlu0 %2290
      %2292 = vrot.lane.b32.xlu0 %v2221, 8
      %v2293 = vpop.permute.xlu0 %2292
      %2294 = vrot.lane.b32.xlu0 %v2224, 8
      %v2295 = vpop.permute.xlu0 %2294
      %2296 = vrot.lane.b32.xlu0 %v2226, 8
      %v2297 = vpop.permute.xlu0 %2296
      %2298 = vrot.lane.b32.xlu0 %v2229, 8
      %v2299 = vpop.permute.xlu0 %2298
      %2300 = vrot.lane.b32.xlu0 %v2231, 8
      %v2301 = vpop.permute.xlu0 %2300
      %2302 = vrot.lane.b32.xlu0 %v2234, 8
      %v2303 = vpop.permute.xlu0 %2302
      %2304 = vrot.lane.b32.xlu0 %v2236, 8
      %v2305 = vpop.permute.xlu0 %2304
      %2306 = vrot.lane.b32.xlu0 %v2239, 8
      %v2307 = vpop.permute.xlu0 %2306
      %2308 = vrot.lane.b32.xlu0 %v2241, 8
      %v2309 = vpop.permute.xlu0 %2308
      %2310 = vrot.lane.b32.xlu0 %v2244, 8
      %v2311 = vpop.permute.xlu0 %2310
      %2312 = vrot.lane.b32.xlu0 %v2246, 8
      %v2313 = vpop.permute.xlu0 %2312
      %2314 = vrot.lane.b32.xlu0 %v2249, 8
      %v2315 = vpop.permute.xlu0 %2314
      %2316 = vrot.lane.b32.xlu0 %v2251, 8
      %v2317 = vpop.permute.xlu0 %2316
      %2318 = vrot.lane.b32.xlu0 %v2254, 8
      %v2319 = vpop.permute.xlu0 %2318
      %2320 = vrot.lane.b32.xlu0 %v2256, 8
      %v2321 = vpop.permute.xlu0 %2320
      %2322 = vrot.lane.b32.xlu0 %v2259, 8
      %v2323 = vpop.permute.xlu0 %2322
      %2324 = vrot.lane.b32.xlu0 %v2261, 8
      %v2325 = vpop.permute.xlu0 %2324
      %v2358 = vrot.slane %v2080, 2
      %v2359 = vrot.slane %v2081, 2
      %v2360 = vsel %vm686, %v2358, %v2359
      %v2361 = vrot.slane %v2082, 2
      %v2362 = vsel %vm686, %v2359, %v2361
      %v2363 = vrot.slane %v2083, 2
      %v2364 = vrot.slane %v2084, 2
      %v2365 = vsel %vm686, %v2363, %v2364
      %v2366 = vrot.slane %v2085, 2
      %v2367 = vsel %vm686, %v2364, %v2366
      %v2368 = vrot.slane %v2086, 2
      %v2369 = vrot.slane %v2087, 2
      %v2370 = vsel %vm686, %v2368, %v2369
      %v2371 = vrot.slane %v2088, 2
      %v2372 = vsel %vm686, %v2369, %v2371
      %v2373 = vrot.slane %v2089, 2
      %v2374 = vrot.slane %v2090, 2
      %v2375 = vsel %vm686, %v2373, %v2374
      %v2376 = vrot.slane %v2091, 2
      %v2377 = vsel %vm686, %v2374, %v2376
      %v2378 = vrot.slane %v2092, 2
      %v2379 = vrot.slane %v2093, 2
      %v2380 = vsel %vm686, %v2378, %v2379
      %v2381 = vrot.slane %v2094, 2
      %v2382 = vsel %vm686, %v2379, %v2381
      %v2383 = vrot.slane %v2095, 2
      %v2384 = vrot.slane %v2096, 2
      %v2385 = vsel %vm686, %v2383, %v2384
      %v2386 = vrot.slane %v2097, 2
      %v2387 = vsel %vm686, %v2384, %v2386
      %v2388 = vrot.slane %v2098, 2
      %v2389 = vrot.slane %v2099, 2
      %v2390 = vsel %vm686, %v2388, %v2389
      %v2391 = vrot.slane %v2100, 2
      %v2392 = vsel %vm686, %v2389, %v2391
      %v2393 = vrot.slane %v2101, 2
      %v2394 = vrot.slane %v2102, 2
      %v2395 = vsel %vm686, %v2393, %v2394
      %v2396 = vrot.slane %v2103, 2
      %v2397 = vsel %vm686, %v2394, %v2396
      %v2398 = vrot.slane %v2104, 2
      %v2399 = vrot.slane %v2105, 2
      %v2400 = vsel %vm686, %v2398, %v2399
      %v2401 = vrot.slane %v2106, 2
      %v2402 = vsel %vm686, %v2399, %v2401
      %v2403 = vrot.slane %v2107, 2
      %v2404 = vrot.slane %v2108, 2
      %v2405 = vsel %vm686, %v2403, %v2404
      %v2406 = vrot.slane %v2109, 2
      %v2407 = vsel %vm686, %v2404, %v2406
      %v2408 = vrot.slane %v2110, 2
      %v2409 = vrot.slane %v2111, 2
      %v2410 = vsel %vm686, %v2408, %v2409
      %v2411 = vrot.slane %v2112, 2
      %v2412 = vsel %vm686, %v2409, %v2411
      %v2413 = vrot.slane %v2113, 2
      %v2414 = vrot.slane %v2114, 2
      %v2415 = vsel %vm686, %v2413, %v2414
      %v2416 = vrot.slane %v2115, 2
      %v2417 = vsel %vm686, %v2414, %v2416
      %v2418 = vrot.slane %v2116, 2
      %v2419 = vrot.slane %v2117, 2
      %v2420 = vsel %vm686, %v2418, %v2419
      %v2421 = vrot.slane %v2118, 2
      %v2422 = vsel %vm686, %v2419, %v2421
      %v2423 = vrot.slane %v2119, 2
      %v2424 = vrot.slane %v2120, 2
      %v2425 = vsel %vm686, %v2423, %v2424
      %v2426 = vrot.slane %v2121, 2
      %v2427 = vsel %vm686, %v2424, %v2426
      %v2428 = vrot.slane %v2122, 2
      %v2429 = vrot.slane %v2123, 2
      %v2430 = vsel %vm686, %v2428, %v2429
      %v2431 = vrot.slane %v2124, 2
      %v2432 = vsel %vm686, %v2429, %v2431
      %v2433 = vrot.slane %v2125, 2
      %v2434 = vrot.slane %v2126, 2
      %v2435 = vsel %vm686, %v2433, %v2434
      %v2436 = vrot.slane %v2127, 2
      %v2437 = vsel %vm686, %v2434, %v2436
      %2438 = vrot.lane.b32.xlu0 %v2360, 16
      %v2439 = vpop.permute.xlu0 %2438
      %2440 = vrot.lane.b32.xlu0 %v2362, 16
      %v2441 = vpop.permute.xlu0 %2440
      %2442 = vrot.lane.b32.xlu0 %v2365, 16
      %v2443 = vpop.permute.xlu0 %2442
      %2444 = vrot.lane.b32.xlu0 %v2367, 16
      %v2445 = vpop.permute.xlu0 %2444
      %2446 = vrot.lane.b32.xlu0 %v2370, 16
      %v2447 = vpop.permute.xlu0 %2446
      %2448 = vrot.lane.b32.xlu0 %v2372, 16
      %v2449 = vpop.permute.xlu0 %2448
      %2450 = vrot.lane.b32.xlu0 %v2375, 16
      %v2451 = vpop.permute.xlu0 %2450
      %2452 = vrot.lane.b32.xlu0 %v2377, 16
      %v2453 = vpop.permute.xlu0 %2452
      %2454 = vrot.lane.b32.xlu0 %v2380, 16
      %v2455 = vpop.permute.xlu0 %2454
      %2456 = vrot.lane.b32.xlu0 %v2382, 16
      %v2457 = vpop.permute.xlu0 %2456
      %2458 = vrot.lane.b32.xlu0 %v2385, 16
      %v2459 = vpop.permute.xlu0 %2458
      %2460 = vrot.lane.b32.xlu0 %v2387, 16
      %v2461 = vpop.permute.xlu0 %2460
      %2462 = vrot.lane.b32.xlu0 %v2390, 16
      %v2463 = vpop.permute.xlu0 %2462
      %2464 = vrot.lane.b32.xlu0 %v2392, 16
      %v2465 = vpop.permute.xlu0 %2464
      %2466 = vrot.lane.b32.xlu0 %v2395, 16
      %v2467 = vpop.permute.xlu0 %2466
      %2468 = vrot.lane.b32.xlu0 %v2397, 16
      %v2469 = vpop.permute.xlu0 %2468
      %2470 = vrot.lane.b32.xlu0 %v2400, 16
      %v2471 = vpop.permute.xlu0 %2470
      %2472 = vrot.lane.b32.xlu0 %v2402, 16
      %v2473 = vpop.permute.xlu0 %2472
      %2474 = vrot.lane.b32.xlu0 %v2405, 16
      %v2475 = vpop.permute.xlu0 %2474
      %2476 = vrot.lane.b32.xlu0 %v2407, 16
      %v2477 = vpop.permute.xlu0 %2476
      %2478 = vrot.lane.b32.xlu0 %v2410, 16
      %v2479 = vpop.permute.xlu0 %2478
      %2480 = vrot.lane.b32.xlu0 %v2412, 16
      %v2481 = vpop.permute.xlu0 %2480
      %2482 = vrot.lane.b32.xlu0 %v2415, 16
      %v2483 = vpop.permute.xlu0 %2482
      %2484 = vrot.lane.b32.xlu0 %v2417, 16
      %v2485 = vpop.permute.xlu0 %2484
      %2486 = vrot.lane.b32.xlu0 %v2420, 16
      %v2487 = vpop.permute.xlu0 %2486
      %2488 = vrot.lane.b32.xlu0 %v2422, 16
      %v2489 = vpop.permute.xlu0 %2488
      %2490 = vrot.lane.b32.xlu0 %v2425, 16
      %v2491 = vpop.permute.xlu0 %2490
      %2492 = vrot.lane.b32.xlu0 %v2427, 16
      %v2493 = vpop.permute.xlu0 %2492
      %2494 = vrot.lane.b32.xlu0 %v2430, 16
      %v2495 = vpop.permute.xlu0 %2494
      %2496 = vrot.lane.b32.xlu0 %v2432, 16
      %v2497 = vpop.permute.xlu0 %2496
      %2498 = vrot.lane.b32.xlu0 %v2435, 16
      %v2499 = vpop.permute.xlu0 %2498
      %2500 = vrot.lane.b32.xlu0 %v2437, 16
      %v2501 = vpop.permute.xlu0 %2500
      %2536 = vrot.lane.b32.xlu0 %v2083, 24
      %v2537 = vpop.permute.xlu0 %2536
      %2538 = vrot.lane.b32.xlu0 %v2084, 24
      %v2539 = vpop.permute.xlu0 %2538
      %2540 = vrot.lane.b32.xlu0 %v2086, 24
      %v2541 = vpop.permute.xlu0 %2540
      %2542 = vrot.lane.b32.xlu0 %v2087, 24
      %v2543 = vpop.permute.xlu0 %2542
      %2544 = vrot.lane.b32.xlu0 %v2089, 24
      %v2545 = vpop.permute.xlu0 %2544
      %2546 = vrot.lane.b32.xlu0 %v2090, 24
      %v2547 = vpop.permute.xlu0 %2546
      %2548 = vrot.lane.b32.xlu0 %v2092, 24
      %v2549 = vpop.permute.xlu0 %2548
      %2550 = vrot.lane.b32.xlu0 %v2093, 24
      %v2551 = vpop.permute.xlu0 %2550
      %2552 = vrot.lane.b32.xlu0 %v2095, 24
      %v2553 = vpop.permute.xlu0 %2552
      %2554 = vrot.lane.b32.xlu0 %v2096, 24
      %v2555 = vpop.permute.xlu0 %2554
      %2556 = vrot.lane.b32.xlu0 %v2098, 24
      %v2557 = vpop.permute.xlu0 %2556
      %2558 = vrot.lane.b32.xlu0 %v2099, 24
      %v2559 = vpop.permute.xlu0 %2558
      %2560 = vrot.lane.b32.xlu0 %v2101, 24
      %v2561 = vpop.permute.xlu0 %2560
      %2562 = vrot.lane.b32.xlu0 %v2102, 24
      %v2563 = vpop.permute.xlu0 %2562
      %2564 = vrot.lane.b32.xlu0 %v2104, 24
      %v2565 = vpop.permute.xlu0 %2564
      %2566 = vrot.lane.b32.xlu0 %v2105, 24
      %v2567 = vpop.permute.xlu0 %2566
      %2568 = vrot.lane.b32.xlu0 %v2107, 24
      %v2569 = vpop.permute.xlu0 %2568
      %2570 = vrot.lane.b32.xlu0 %v2108, 24
      %v2571 = vpop.permute.xlu0 %2570
      %2572 = vrot.lane.b32.xlu0 %v2110, 24
      %v2573 = vpop.permute.xlu0 %2572
      %2574 = vrot.lane.b32.xlu0 %v2111, 24
      %v2575 = vpop.permute.xlu0 %2574
      %2576 = vrot.lane.b32.xlu0 %v2113, 24
      %v2577 = vpop.permute.xlu0 %2576
      %2578 = vrot.lane.b32.xlu0 %v2114, 24
      %v2579 = vpop.permute.xlu0 %2578
      %2580 = vrot.lane.b32.xlu0 %v2116, 24
      %v2581 = vpop.permute.xlu0 %2580
      %2582 = vrot.lane.b32.xlu0 %v2117, 24
      %v2583 = vpop.permute.xlu0 %2582
      %2584 = vrot.lane.b32.xlu0 %v2119, 24
      %v2585 = vpop.permute.xlu0 %2584
      %2586 = vrot.lane.b32.xlu0 %v2120, 24
      %v2587 = vpop.permute.xlu0 %2586
      %2588 = vrot.lane.b32.xlu0 %v2122, 24
      %v2589 = vpop.permute.xlu0 %2588
      %2590 = vrot.lane.b32.xlu0 %v2123, 24
      %v2591 = vpop.permute.xlu0 %2590
      %2592 = vrot.lane.b32.xlu0 %v2125, 24
      %v2593 = vpop.permute.xlu0 %2592
      %2594 = vrot.lane.b32.xlu0 %v2126, 24
      %v2595 = vpop.permute.xlu0 %2594
      %2596 = vrot.lane.b32.xlu0 %v2128, 24
      %v2597 = vpop.permute.xlu0 %2596
      %2598 = vrot.lane.b32.xlu0 %v2129, 24
      %v2599 = vpop.permute.xlu0 %2598
      %v2633 = vrot.slane %v2128, 1
      %v2634 = vrot.slane %v2129, 1
      %v2635 = vsel %vm509, %v2633, %v2634
      %v2636 = vrot.slane %v2130, 1
      %v2637 = vsel %vm509, %v2634, %v2636
      %2638 = vrot.lane.b32.xlu0 %v2189, 32
      %v2639 = vpop.permute.xlu0 %2638
      %2640 = vrot.lane.b32.xlu0 %v2191, 32
      %v2641 = vpop.permute.xlu0 %2640
      %2642 = vrot.lane.b32.xlu0 %v2194, 32
      %v2643 = vpop.permute.xlu0 %2642
      %2644 = vrot.lane.b32.xlu0 %v2196, 32
      %v2645 = vpop.permute.xlu0 %2644
      %2646 = vrot.lane.b32.xlu0 %v2199, 32
      %v2647 = vpop.permute.xlu0 %2646
      %2648 = vrot.lane.b32.xlu0 %v2201, 32
      %v2649 = vpop.permute.xlu0 %2648
      %2650 = vrot.lane.b32.xlu0 %v2204, 32
      %v2651 = vpop.permute.xlu0 %2650
      %2652 = vrot.lane.b32.xlu0 %v2206, 32
      %v2653 = vpop.permute.xlu0 %2652
      %2654 = vrot.lane.b32.xlu0 %v2209, 32
      %v2655 = vpop.permute.xlu0 %2654
      %2656 = vrot.lane.b32.xlu0 %v2211, 32
      %v2657 = vpop.permute.xlu0 %2656
      %2658 = vrot.lane.b32.xlu0 %v2214, 32
      %v2659 = vpop.permute.xlu0 %2658
      %2660 = vrot.lane.b32.xlu0 %v2216, 32
      %v2661 = vpop.permute.xlu0 %2660
      %2662 = vrot.lane.b32.xlu0 %v2219, 32
      %v2663 = vpop.permute.xlu0 %2662
      %2664 = vrot.lane.b32.xlu0 %v2221, 32
      %v2665 = vpop.permute.xlu0 %2664
      %2666 = vrot.lane.b32.xlu0 %v2224, 32
      %v2667 = vpop.permute.xlu0 %2666
      %2668 = vrot.lane.b32.xlu0 %v2226, 32
      %v2669 = vpop.permute.xlu0 %2668
      %2670 = vrot.lane.b32.xlu0 %v2229, 32
      %v2671 = vpop.permute.xlu0 %2670
      %2672 = vrot.lane.b32.xlu0 %v2231, 32
      %v2673 = vpop.permute.xlu0 %2672
      %2674 = vrot.lane.b32.xlu0 %v2234, 32
      %v2675 = vpop.permute.xlu0 %2674
      %2676 = vrot.lane.b32.xlu0 %v2236, 32
      %v2677 = vpop.permute.xlu0 %2676
      %2678 = vrot.lane.b32.xlu0 %v2239, 32
      %v2679 = vpop.permute.xlu0 %2678
      %2680 = vrot.lane.b32.xlu0 %v2241, 32
      %v2681 = vpop.permute.xlu0 %2680
      %2682 = vrot.lane.b32.xlu0 %v2244, 32
      %v2683 = vpop.permute.xlu0 %2682
      %2684 = vrot.lane.b32.xlu0 %v2246, 32
      %v2685 = vpop.permute.xlu0 %2684
      %2686 = vrot.lane.b32.xlu0 %v2249, 32
      %v2687 = vpop.permute.xlu0 %2686
      %2688 = vrot.lane.b32.xlu0 %v2251, 32
      %v2689 = vpop.permute.xlu0 %2688
      %2690 = vrot.lane.b32.xlu0 %v2254, 32
      %v2691 = vpop.permute.xlu0 %2690
      %2692 = vrot.lane.b32.xlu0 %v2256, 32
      %v2693 = vpop.permute.xlu0 %2692
      %2694 = vrot.lane.b32.xlu0 %v2259, 32
      %v2695 = vpop.permute.xlu0 %2694
      %2696 = vrot.lane.b32.xlu0 %v2261, 32
      %v2697 = vpop.permute.xlu0 %2696
      %2698 = vrot.lane.b32.xlu0 %v2635, 32
      %v2699 = vpop.permute.xlu0 %2698
      %2700 = vrot.lane.b32.xlu0 %v2637, 32
      %v2701 = vpop.permute.xlu0 %2700
      %v2734 = vrot.slane %v2128, 2
      %v2735 = vrot.slane %v2129, 2
      %v2736 = vsel %vm686, %v2734, %v2735
      %v2737 = vrot.slane %v2130, 2
      %v2738 = vsel %vm686, %v2735, %v2737
      %2739 = vrot.lane.b32.xlu0 %v2365, 40
      %v2740 = vpop.permute.xlu0 %2739
      %2741 = vrot.lane.b32.xlu0 %v2367, 40
      %v2742 = vpop.permute.xlu0 %2741
      %2743 = vrot.lane.b32.xlu0 %v2370, 40
      %v2744 = vpop.permute.xlu0 %2743
      %2745 = vrot.lane.b32.xlu0 %v2372, 40
      %v2746 = vpop.permute.xlu0 %2745
      %2747 = vrot.lane.b32.xlu0 %v2375, 40
      %v2748 = vpop.permute.xlu0 %2747
      %2749 = vrot.lane.b32.xlu0 %v2377, 40
      %v2750 = vpop.permute.xlu0 %2749
      %2751 = vrot.lane.b32.xlu0 %v2380, 40
      %v2752 = vpop.permute.xlu0 %2751
      %2753 = vrot.lane.b32.xlu0 %v2382, 40
      %v2754 = vpop.permute.xlu0 %2753
      %2755 = vrot.lane.b32.xlu0 %v2385, 40
      %v2756 = vpop.permute.xlu0 %2755
      %2757 = vrot.lane.b32.xlu0 %v2387, 40
      %v2758 = vpop.permute.xlu0 %2757
      %2759 = vrot.lane.b32.xlu0 %v2390, 40
      %v2760 = vpop.permute.xlu0 %2759
      %2761 = vrot.lane.b32.xlu0 %v2392, 40
      %v2762 = vpop.permute.xlu0 %2761
      %2763 = vrot.lane.b32.xlu0 %v2395, 40
      %v2764 = vpop.permute.xlu0 %2763
      %2765 = vrot.lane.b32.xlu0 %v2397, 40
      %v2766 = vpop.permute.xlu0 %2765
      %2767 = vrot.lane.b32.xlu0 %v2400, 40
      %v2768 = vpop.permute.xlu0 %2767
      %2769 = vrot.lane.b32.xlu0 %v2402, 40
      %v2770 = vpop.permute.xlu0 %2769
      %2771 = vrot.lane.b32.xlu0 %v2405, 40
      %v2772 = vpop.permute.xlu0 %2771
      %2773 = vrot.lane.b32.xlu0 %v2407, 40
      %v2774 = vpop.permute.xlu0 %2773
      %2775 = vrot.lane.b32.xlu0 %v2410, 40
      %v2776 = vpop.permute.xlu0 %2775
      %2777 = vrot.lane.b32.xlu0 %v2412, 40
      %v2778 = vpop.permute.xlu0 %2777
      %2779 = vrot.lane.b32.xlu0 %v2415, 40
      %v2780 = vpop.permute.xlu0 %2779
      %2781 = vrot.lane.b32.xlu0 %v2417, 40
      %v2782 = vpop.permute.xlu0 %2781
      %2783 = vrot.lane.b32.xlu0 %v2420, 40
      %v2784 = vpop.permute.xlu0 %2783
      %2785 = vrot.lane.b32.xlu0 %v2422, 40
      %v2786 = vpop.permute.xlu0 %2785
      %2787 = vrot.lane.b32.xlu0 %v2425, 40
      %v2788 = vpop.permute.xlu0 %2787
      %2789 = vrot.lane.b32.xlu0 %v2427, 40
      %v2790 = vpop.permute.xlu0 %2789
      %2791 = vrot.lane.b32.xlu0 %v2430, 40
      %v2792 = vpop.permute.xlu0 %2791
      %2793 = vrot.lane.b32.xlu0 %v2432, 40
      %v2794 = vpop.permute.xlu0 %2793
      %2795 = vrot.lane.b32.xlu0 %v2435, 40
      %v2796 = vpop.permute.xlu0 %2795
      %2797 = vrot.lane.b32.xlu0 %v2437, 40
      %v2798 = vpop.permute.xlu0 %2797
      %2799 = vrot.lane.b32.xlu0 %v2736, 40
      %v2800 = vpop.permute.xlu0 %2799
      %2801 = vrot.lane.b32.xlu0 %v2738, 40
      %v2802 = vpop.permute.xlu0 %2801
      %2837 = vrot.lane.b32.xlu0 %v2086, 48
      %v2838 = vpop.permute.xlu0 %2837
      %2839 = vrot.lane.b32.xlu0 %v2087, 48
      %v2840 = vpop.permute.xlu0 %2839
      %2841 = vrot.lane.b32.xlu0 %v2089, 48
      %v2842 = vpop.permute.xlu0 %2841
      %2843 = vrot.lane.b32.xlu0 %v2090, 48
      %v2844 = vpop.permute.xlu0 %2843
      %2845 = vrot.lane.b32.xlu0 %v2092, 48
      %v2846 = vpop.permute.xlu0 %2845
      %2847 = vrot.lane.b32.xlu0 %v2093, 48
      %v2848 = vpop.permute.xlu0 %2847
      %2849 = vrot.lane.b32.xlu0 %v2095, 48
      %v2850 = vpop.permute.xlu0 %2849
      %2851 = vrot.lane.b32.xlu0 %v2096, 48
      %v2852 = vpop.permute.xlu0 %2851
      %2853 = vrot.lane.b32.xlu0 %v2098, 48
      %v2854 = vpop.permute.xlu0 %2853
      %2855 = vrot.lane.b32.xlu0 %v2099, 48
      %v2856 = vpop.permute.xlu0 %2855
      %2857 = vrot.lane.b32.xlu0 %v2101, 48
      %v2858 = vpop.permute.xlu0 %2857
      %2859 = vrot.lane.b32.xlu0 %v2102, 48
      %v2860 = vpop.permute.xlu0 %2859
      %2861 = vrot.lane.b32.xlu0 %v2104, 48
      %v2862 = vpop.permute.xlu0 %2861
      %2863 = vrot.lane.b32.xlu0 %v2105, 48
      %v2864 = vpop.permute.xlu0 %2863
      %2865 = vrot.lane.b32.xlu0 %v2107, 48
      %v2866 = vpop.permute.xlu0 %2865
      %2867 = vrot.lane.b32.xlu0 %v2108, 48
      %v2868 = vpop.permute.xlu0 %2867
      %2869 = vrot.lane.b32.xlu0 %v2110, 48
      %v2870 = vpop.permute.xlu0 %2869
      %2871 = vrot.lane.b32.xlu0 %v2111, 48
      %v2872 = vpop.permute.xlu0 %2871
      %2873 = vrot.lane.b32.xlu0 %v2113, 48
      %v2874 = vpop.permute.xlu0 %2873
      %2875 = vrot.lane.b32.xlu0 %v2114, 48
      %v2876 = vpop.permute.xlu0 %2875
      %2877 = vrot.lane.b32.xlu0 %v2116, 48
      %v2878 = vpop.permute.xlu0 %2877
      %2879 = vrot.lane.b32.xlu0 %v2117, 48
      %v2880 = vpop.permute.xlu0 %2879
      %2881 = vrot.lane.b32.xlu0 %v2119, 48
      %v2882 = vpop.permute.xlu0 %2881
      %2883 = vrot.lane.b32.xlu0 %v2120, 48
      %v2884 = vpop.permute.xlu0 %2883
      %2885 = vrot.lane.b32.xlu0 %v2122, 48
      %v2886 = vpop.permute.xlu0 %2885
      %2887 = vrot.lane.b32.xlu0 %v2123, 48
      %v2888 = vpop.permute.xlu0 %2887
      %2889 = vrot.lane.b32.xlu0 %v2125, 48
      %v2890 = vpop.permute.xlu0 %2889
      %2891 = vrot.lane.b32.xlu0 %v2126, 48
      %v2892 = vpop.permute.xlu0 %2891
      %2893 = vrot.lane.b32.xlu0 %v2128, 48
      %v2894 = vpop.permute.xlu0 %2893
      %2895 = vrot.lane.b32.xlu0 %v2129, 48
      %v2896 = vpop.permute.xlu0 %2895
      %2897 = vrot.lane.b32.xlu0 %v2131, 48
      %v2898 = vpop.permute.xlu0 %2897
      %2899 = vrot.lane.b32.xlu0 %v2132, 48
      %v2900 = vpop.permute.xlu0 %2899
      %v2934 = vrot.slane %v2131, 1
      %v2935 = vrot.slane %v2132, 1
      %v2936 = vsel %vm509, %v2934, %v2935
      %v2937 = vrot.slane %v2133, 1
      %v2938 = vsel %vm509, %v2935, %v2937
      %2939 = vrot.lane.b32.xlu0 %v2194, 56
      %v2940 = vpop.permute.xlu0 %2939
      %2941 = vrot.lane.b32.xlu0 %v2196, 56
      %v2942 = vpop.permute.xlu0 %2941
      %2943 = vrot.lane.b32.xlu0 %v2199, 56
      %v2944 = vpop.permute.xlu0 %2943
      %2945 = vrot.lane.b32.xlu0 %v2201, 56
      %v2946 = vpop.permute.xlu0 %2945
      %2947 = vrot.lane.b32.xlu0 %v2204, 56
      %v2948 = vpop.permute.xlu0 %2947
      %2949 = vrot.lane.b32.xlu0 %v2206, 56
      %v2950 = vpop.permute.xlu0 %2949
      %2951 = vrot.lane.b32.xlu0 %v2209, 56
      %v2952 = vpop.permute.xlu0 %2951
      %2953 = vrot.lane.b32.xlu0 %v2211, 56
      %v2954 = vpop.permute.xlu0 %2953
      %2955 = vrot.lane.b32.xlu0 %v2214, 56
      %v2956 = vpop.permute.xlu0 %2955
      %2957 = vrot.lane.b32.xlu0 %v2216, 56
      %v2958 = vpop.permute.xlu0 %2957
      %2959 = vrot.lane.b32.xlu0 %v2219, 56
      %v2960 = vpop.permute.xlu0 %2959
      %2961 = vrot.lane.b32.xlu0 %v2221, 56
      %v2962 = vpop.permute.xlu0 %2961
      %2963 = vrot.lane.b32.xlu0 %v2224, 56
      %v2964 = vpop.permute.xlu0 %2963
      %2965 = vrot.lane.b32.xlu0 %v2226, 56
      %v2966 = vpop.permute.xlu0 %2965
      %2967 = vrot.lane.b32.xlu0 %v2229, 56
      %v2968 = vpop.permute.xlu0 %2967
      %2969 = vrot.lane.b32.xlu0 %v2231, 56
      %v2970 = vpop.permute.xlu0 %2969
      %2971 = vrot.lane.b32.xlu0 %v2234, 56
      %v2972 = vpop.permute.xlu0 %2971
      %2973 = vrot.lane.b32.xlu0 %v2236, 56
      %v2974 = vpop.permute.xlu0 %2973
      %2975 = vrot.lane.b32.xlu0 %v2239, 56
      %v2976 = vpop.permute.xlu0 %2975
      %2977 = vrot.lane.b32.xlu0 %v2241, 56
      %v2978 = vpop.permute.xlu0 %2977
      %2979 = vrot.lane.b32.xlu0 %v2244, 56
      %v2980 = vpop.permute.xlu0 %2979
      %2981 = vrot.lane.b32.xlu0 %v2246, 56
      %v2982 = vpop.permute.xlu0 %2981
      %2983 = vrot.lane.b32.xlu0 %v2249, 56
      %v2984 = vpop.permute.xlu0 %2983
      %2985 = vrot.lane.b32.xlu0 %v2251, 56
      %v2986 = vpop.permute.xlu0 %2985
      %2987 = vrot.lane.b32.xlu0 %v2254, 56
      %v2988 = vpop.permute.xlu0 %2987
      %2989 = vrot.lane.b32.xlu0 %v2256, 56
      %v2990 = vpop.permute.xlu0 %2989
      %2991 = vrot.lane.b32.xlu0 %v2259, 56
      %v2992 = vpop.permute.xlu0 %2991
      %2993 = vrot.lane.b32.xlu0 %v2261, 56
      %v2994 = vpop.permute.xlu0 %2993
      %2995 = vrot.lane.b32.xlu0 %v2635, 56
      %v2996 = vpop.permute.xlu0 %2995
      %2997 = vrot.lane.b32.xlu0 %v2637, 56
      %v2998 = vpop.permute.xlu0 %2997
      %2999 = vrot.lane.b32.xlu0 %v2936, 56
      %v3000 = vpop.permute.xlu0 %2999
      %3001 = vrot.lane.b32.xlu0 %v2938, 56
      %v3002 = vpop.permute.xlu0 %3001
      %v3035 = vrot.slane %v2131, 2
      %v3036 = vrot.slane %v2132, 2
      %v3037 = vsel %vm686, %v3035, %v3036
      %v3038 = vrot.slane %v2133, 2
      %v3039 = vsel %vm686, %v3036, %v3038
      %3040 = vrot.lane.b32.xlu0 %v2370, 64
      %v3041 = vpop.permute.xlu0 %3040
      %3042 = vrot.lane.b32.xlu0 %v2372, 64
      %v3043 = vpop.permute.xlu0 %3042
      %3044 = vrot.lane.b32.xlu0 %v2375, 64
      %v3045 = vpop.permute.xlu0 %3044
      %3046 = vrot.lane.b32.xlu0 %v2377, 64
      %v3047 = vpop.permute.xlu0 %3046
      %3048 = vrot.lane.b32.xlu0 %v2380, 64
      %v3049 = vpop.permute.xlu0 %3048
      %3050 = vrot.lane.b32.xlu0 %v2382, 64
      %v3051 = vpop.permute.xlu0 %3050
      %3052 = vrot.lane.b32.xlu0 %v2385, 64
      %v3053 = vpop.permute.xlu0 %3052
      %3054 = vrot.lane.b32.xlu0 %v2387, 64
      %v3055 = vpop.permute.xlu0 %3054
      %3056 = vrot.lane.b32.xlu0 %v2390, 64
      %v3057 = vpop.permute.xlu0 %3056
      %3058 = vrot.lane.b32.xlu0 %v2392, 64
      %v3059 = vpop.permute.xlu0 %3058
      %3060 = vrot.lane.b32.xlu0 %v2395, 64
      %v3061 = vpop.permute.xlu0 %3060
      %3062 = vrot.lane.b32.xlu0 %v2397, 64
      %v3063 = vpop.permute.xlu0 %3062
      %3064 = vrot.lane.b32.xlu0 %v2400, 64
      %v3065 = vpop.permute.xlu0 %3064
      %3066 = vrot.lane.b32.xlu0 %v2402, 64
      %v3067 = vpop.permute.xlu0 %3066
      %3068 = vrot.lane.b32.xlu0 %v2405, 64
      %v3069 = vpop.permute.xlu0 %3068
      %3070 = vrot.lane.b32.xlu0 %v2407, 64
      %v3071 = vpop.permute.xlu0 %3070
      %3072 = vrot.lane.b32.xlu0 %v2410, 64
      %v3073 = vpop.permute.xlu0 %3072
      %3074 = vrot.lane.b32.xlu0 %v2412, 64
      %v3075 = vpop.permute.xlu0 %3074
      %3076 = vrot.lane.b32.xlu0 %v2415, 64
      %v3077 = vpop.permute.xlu0 %3076
      %3078 = vrot.lane.b32.xlu0 %v2417, 64
      %v3079 = vpop.permute.xlu0 %3078
      %3080 = vrot.lane.b32.xlu0 %v2420, 64
      %v3081 = vpop.permute.xlu0 %3080
      %3082 = vrot.lane.b32.xlu0 %v2422, 64
      %v3083 = vpop.permute.xlu0 %3082
      %3084 = vrot.lane.b32.xlu0 %v2425, 64
      %v3085 = vpop.permute.xlu0 %3084
      %3086 = vrot.lane.b32.xlu0 %v2427, 64
      %v3087 = vpop.permute.xlu0 %3086
      %3088 = vrot.lane.b32.xlu0 %v2430, 64
      %v3089 = vpop.permute.xlu0 %3088
      %3090 = vrot.lane.b32.xlu0 %v2432, 64
      %v3091 = vpop.permute.xlu0 %3090
      %3092 = vrot.lane.b32.xlu0 %v2435, 64
      %v3093 = vpop.permute.xlu0 %3092
      %3094 = vrot.lane.b32.xlu0 %v2437, 64
      %v3095 = vpop.permute.xlu0 %3094
      %3096 = vrot.lane.b32.xlu0 %v2736, 64
      %v3097 = vpop.permute.xlu0 %3096
      %3098 = vrot.lane.b32.xlu0 %v2738, 64
      %v3099 = vpop.permute.xlu0 %3098
      %3100 = vrot.lane.b32.xlu0 %v3037, 64
      %v3101 = vpop.permute.xlu0 %3100
      %3102 = vrot.lane.b32.xlu0 %v3039, 64
      %v3103 = vpop.permute.xlu0 %3102
      %v3136 = vsel %vm1497, %v2080, %v2263
      %v3137 = vsel %vm1497, %v2081, %v2265
      %v3138 = vsel %vm1497, %v2083, %v2267
      %v3139 = vsel %vm1497, %v2084, %v2269
      %v3140 = vsel %vm1497, %v2086, %v2271
      %v3141 = vsel %vm1497, %v2087, %v2273
      %v3142 = vsel %vm1497, %v2089, %v2275
      %v3143 = vsel %vm1497, %v2090, %v2277
      %v3144 = vsel %vm1497, %v2092, %v2279
      %v3145 = vsel %vm1497, %v2093, %v2281
      %v3146 = vsel %vm1497, %v2095, %v2283
      %v3147 = vsel %vm1497, %v2096, %v2285
      %v3148 = vsel %vm1497, %v2098, %v2287
      %v3149 = vsel %vm1497, %v2099, %v2289
      %v3150 = vsel %vm1497, %v2101, %v2291
      %v3151 = vsel %vm1497, %v2102, %v2293
      %v3152 = vsel %vm1497, %v2104, %v2295
      %v3153 = vsel %vm1497, %v2105, %v2297
      %v3154 = vsel %vm1497, %v2107, %v2299
      %v3155 = vsel %vm1497, %v2108, %v2301
      %v3156 = vsel %vm1497, %v2110, %v2303
      %v3157 = vsel %vm1497, %v2111, %v2305
      %v3158 = vsel %vm1497, %v2113, %v2307
      %v3159 = vsel %vm1497, %v2114, %v2309
      %v3160 = vsel %vm1497, %v2116, %v2311
      %v3161 = vsel %vm1497, %v2117, %v2313
      %v3162 = vsel %vm1497, %v2119, %v2315
      %v3163 = vsel %vm1497, %v2120, %v2317
      %v3164 = vsel %vm1497, %v2122, %v2319
      %v3165 = vsel %vm1497, %v2123, %v2321
      %v3166 = vsel %vm1497, %v2125, %v2323
      %v3167 = vsel %vm1497, %v2126, %v2325
      %v3168 = vsel %vm1563, %v3136, %v2439
      %v3169 = vsel %vm1563, %v3137, %v2441
      %v3170 = vsel %vm1563, %v3138, %v2443
      %v3171 = vsel %vm1563, %v3139, %v2445
      %v3172 = vsel %vm1563, %v3140, %v2447
      %v3173 = vsel %vm1563, %v3141, %v2449
      %v3174 = vsel %vm1563, %v3142, %v2451
      %v3175 = vsel %vm1563, %v3143, %v2453
      %v3176 = vsel %vm1563, %v3144, %v2455
      %v3177 = vsel %vm1563, %v3145, %v2457
      %v3178 = vsel %vm1563, %v3146, %v2459
      %v3179 = vsel %vm1563, %v3147, %v2461
      %v3180 = vsel %vm1563, %v3148, %v2463
      %v3181 = vsel %vm1563, %v3149, %v2465
      %v3182 = vsel %vm1563, %v3150, %v2467
      %v3183 = vsel %vm1563, %v3151, %v2469
      %v3184 = vsel %vm1563, %v3152, %v2471
      %v3185 = vsel %vm1563, %v3153, %v2473
      %v3186 = vsel %vm1563, %v3154, %v2475
      %v3187 = vsel %vm1563, %v3155, %v2477
      %v3188 = vsel %vm1563, %v3156, %v2479
      %v3189 = vsel %vm1563, %v3157, %v2481
      %v3190 = vsel %vm1563, %v3158, %v2483
      %v3191 = vsel %vm1563, %v3159, %v2485
      %v3192 = vsel %vm1563, %v3160, %v2487
      %v3193 = vsel %vm1563, %v3161, %v2489
      %v3194 = vsel %vm1563, %v3162, %v2491
      %v3195 = vsel %vm1563, %v3163, %v2493
      %v3196 = vsel %vm1563, %v3164, %v2495
      %v3197 = vsel %vm1563, %v3165, %v2497
      %v3198 = vsel %vm1563, %v3166, %v2499
      %v3199 = vsel %vm1563, %v3167, %v2501
      %v3200 = vsel %vm1629, %v3168, %v2537
      %v3201 = vsel %vm1629, %v3169, %v2539
      %v3202 = vsel %vm1629, %v3170, %v2541
      %v3203 = vsel %vm1629, %v3171, %v2543
      %v3204 = vsel %vm1629, %v3172, %v2545
      %v3205 = vsel %vm1629, %v3173, %v2547
      %v3206 = vsel %vm1629, %v3174, %v2549
      %v3207 = vsel %vm1629, %v3175, %v2551
      %v3208 = vsel %vm1629, %v3176, %v2553
      %v3209 = vsel %vm1629, %v3177, %v2555
      %v3210 = vsel %vm1629, %v3178, %v2557
      %v3211 = vsel %vm1629, %v3179, %v2559
      %v3212 = vsel %vm1629, %v3180, %v2561
      %v3213 = vsel %vm1629, %v3181, %v2563
      %v3214 = vsel %vm1629, %v3182, %v2565
      %v3215 = vsel %vm1629, %v3183, %v2567
      %v3216 = vsel %vm1629, %v3184, %v2569
      %v3217 = vsel %vm1629, %v3185, %v2571
      %v3218 = vsel %vm1629, %v3186, %v2573
      %v3219 = vsel %vm1629, %v3187, %v2575
      %v3220 = vsel %vm1629, %v3188, %v2577
      %v3221 = vsel %vm1629, %v3189, %v2579
      %v3222 = vsel %vm1629, %v3190, %v2581
      %v3223 = vsel %vm1629, %v3191, %v2583
      %v3224 = vsel %vm1629, %v3192, %v2585
      %v3225 = vsel %vm1629, %v3193, %v2587
      %v3226 = vsel %vm1629, %v3194, %v2589
      %v3227 = vsel %vm1629, %v3195, %v2591
      %v3228 = vsel %vm1629, %v3196, %v2593
      %v3229 = vsel %vm1629, %v3197, %v2595
      %v3230 = vsel %vm1629, %v3198, %v2597
      %v3231 = vsel %vm1629, %v3199, %v2599
      %v3232 = vsel %vm1695, %v3200, %v2639
      %v3233 = vsel %vm1695, %v3201, %v2641
      %v3234 = vsel %vm1695, %v3202, %v2643
      %v3235 = vsel %vm1695, %v3203, %v2645
      %v3236 = vsel %vm1695, %v3204, %v2647
      %v3237 = vsel %vm1695, %v3205, %v2649
      %v3238 = vsel %vm1695, %v3206, %v2651
      %v3239 = vsel %vm1695, %v3207, %v2653
      %v3240 = vsel %vm1695, %v3208, %v2655
      %v3241 = vsel %vm1695, %v3209, %v2657
      %v3242 = vsel %vm1695, %v3210, %v2659
      %v3243 = vsel %vm1695, %v3211, %v2661
      %v3244 = vsel %vm1695, %v3212, %v2663
      %v3245 = vsel %vm1695, %v3213, %v2665
      %v3246 = vsel %vm1695, %v3214, %v2667
      %v3247 = vsel %vm1695, %v3215, %v2669
      %v3248 = vsel %vm1695, %v3216, %v2671
      %v3249 = vsel %vm1695, %v3217, %v2673
      %v3250 = vsel %vm1695, %v3218, %v2675
      %v3251 = vsel %vm1695, %v3219, %v2677
      %v3252 = vsel %vm1695, %v3220, %v2679
      %v3253 = vsel %vm1695, %v3221, %v2681
      %v3254 = vsel %vm1695, %v3222, %v2683
      %v3255 = vsel %vm1695, %v3223, %v2685
      %v3256 = vsel %vm1695, %v3224, %v2687
      %v3257 = vsel %vm1695, %v3225, %v2689
      %v3258 = vsel %vm1695, %v3226, %v2691
      %v3259 = vsel %vm1695, %v3227, %v2693
      %v3260 = vsel %vm1695, %v3228, %v2695
      %v3261 = vsel %vm1695, %v3229, %v2697
      %v3262 = vsel %vm1695, %v3230, %v2699
      %v3263 = vsel %vm1695, %v3231, %v2701
      %vm3264 = vcmask 326656
      %v3265 = vsel %vm3264, %v3232, %v2740
      %v3266 = vsel %vm3264, %v3233, %v2742
      %v3267 = vsel %vm3264, %v3234, %v2744
      %v3268 = vsel %vm3264, %v3235, %v2746
      %v3269 = vsel %vm3264, %v3236, %v2748
      %v3270 = vsel %vm3264, %v3237, %v2750
      %v3271 = vsel %vm3264, %v3238, %v2752
      %v3272 = vsel %vm3264, %v3239, %v2754
      %v3273 = vsel %vm3264, %v3240, %v2756
      %v3274 = vsel %vm3264, %v3241, %v2758
      %v3275 = vsel %vm3264, %v3242, %v2760
      %v3276 = vsel %vm3264, %v3243, %v2762
      %v3277 = vsel %vm3264, %v3244, %v2764
      %v3278 = vsel %vm3264, %v3245, %v2766
      %v3279 = vsel %vm3264, %v3246, %v2768
      %v3280 = vsel %vm3264, %v3247, %v2770
      %v3281 = vsel %vm3264, %v3248, %v2772
      %v3282 = vsel %vm3264, %v3249, %v2774
      %v3283 = vsel %vm3264, %v3250, %v2776
      %v3284 = vsel %vm3264, %v3251, %v2778
      %v3285 = vsel %vm3264, %v3252, %v2780
      %v3286 = vsel %vm3264, %v3253, %v2782
      %v3287 = vsel %vm3264, %v3254, %v2784
      %v3288 = vsel %vm3264, %v3255, %v2786
      %v3289 = vsel %vm3264, %v3256, %v2788
      %v3290 = vsel %vm3264, %v3257, %v2790
      %v3291 = vsel %vm3264, %v3258, %v2792
      %v3292 = vsel %vm3264, %v3259, %v2794
      %v3293 = vsel %vm3264, %v3260, %v2796
      %v3294 = vsel %vm3264, %v3261, %v2798
      %v3295 = vsel %vm3264, %v3262, %v2800
      %v3296 = vsel %vm3264, %v3263, %v2802
      %vm3297 = vcmask 392192
      %v3298 = vsel %vm3297, %v3265, %v2838
      %v3299 = vsel %vm3297, %v3266, %v2840
      %v3300 = vsel %vm3297, %v3267, %v2842
      %v3301 = vsel %vm3297, %v3268, %v2844
      %v3302 = vsel %vm3297, %v3269, %v2846
      %v3303 = vsel %vm3297, %v3270, %v2848
      %v3304 = vsel %vm3297, %v3271, %v2850
      %v3305 = vsel %vm3297, %v3272, %v2852
      %v3306 = vsel %vm3297, %v3273, %v2854
      %v3307 = vsel %vm3297, %v3274, %v2856
      %v3308 = vsel %vm3297, %v3275, %v2858
      %v3309 = vsel %vm3297, %v3276, %v2860
      %v3310 = vsel %vm3297, %v3277, %v2862
      %v3311 = vsel %vm3297, %v3278, %v2864
      %v3312 = vsel %vm3297, %v3279, %v2866
      %v3313 = vsel %vm3297, %v3280, %v2868
      %v3314 = vsel %vm3297, %v3281, %v2870
      %v3315 = vsel %vm3297, %v3282, %v2872
      %v3316 = vsel %vm3297, %v3283, %v2874
      %v3317 = vsel %vm3297, %v3284, %v2876
      %v3318 = vsel %vm3297, %v3285, %v2878
      %v3319 = vsel %vm3297, %v3286, %v2880
      %v3320 = vsel %vm3297, %v3287, %v2882
      %v3321 = vsel %vm3297, %v3288, %v2884
      %v3322 = vsel %vm3297, %v3289, %v2886
      %v3323 = vsel %vm3297, %v3290, %v2888
      %v3324 = vsel %vm3297, %v3291, %v2890
      %v3325 = vsel %vm3297, %v3292, %v2892
      %v3326 = vsel %vm3297, %v3293, %v2894
      %v3327 = vsel %vm3297, %v3294, %v2896
      %v3328 = vsel %vm3297, %v3295, %v2898
      %v3329 = vsel %vm3297, %v3296, %v2900
      %vm3330 = vcmask 457728
      %v3331 = vsel %vm3330, %v3298, %v2940
      %v3332 = vsel %vm3330, %v3299, %v2942
      %v3333 = vsel %vm3330, %v3300, %v2944
      %v3334 = vsel %vm3330, %v3301, %v2946
      %v3335 = vsel %vm3330, %v3302, %v2948
      %v3336 = vsel %vm3330, %v3303, %v2950
      %v3337 = vsel %vm3330, %v3304, %v2952
      %v3338 = vsel %vm3330, %v3305, %v2954
      %v3339 = vsel %vm3330, %v3306, %v2956
      %v3340 = vsel %vm3330, %v3307, %v2958
      %v3341 = vsel %vm3330, %v3308, %v2960
      %v3342 = vsel %vm3330, %v3309, %v2962
      %v3343 = vsel %vm3330, %v3310, %v2964
      %v3344 = vsel %vm3330, %v3311, %v2966
      %v3345 = vsel %vm3330, %v3312, %v2968
      %v3346 = vsel %vm3330, %v3313, %v2970
      %v3347 = vsel %vm3330, %v3314, %v2972
      %v3348 = vsel %vm3330, %v3315, %v2974
      %v3349 = vsel %vm3330, %v3316, %v2976
      %v3350 = vsel %vm3330, %v3317, %v2978
      %v3351 = vsel %vm3330, %v3318, %v2980
      %v3352 = vsel %vm3330, %v3319, %v2982
      %v3353 = vsel %vm3330, %v3320, %v2984
      %v3354 = vsel %vm3330, %v3321, %v2986
      %v3355 = vsel %vm3330, %v3322, %v2988
      %v3356 = vsel %vm3330, %v3323, %v2990
      %v3357 = vsel %vm3330, %v3324, %v2992
      %v3358 = vsel %vm3330, %v3325, %v2994
      %v3359 = vsel %vm3330, %v3326, %v2996
      %v3360 = vsel %vm3330, %v3327, %v2998
      %v3361 = vsel %vm3330, %v3328, %v3000
      %v3362 = vsel %vm3330, %v3329, %v3002
      %vm3363 = vcmask 523264
      %v3364 = vsel %vm3363, %v3331, %v3041
      %v3365 = vsel %vm3363, %v3332, %v3043
      %v3366 = vsel %vm3363, %v3333, %v3045
      %v3367 = vsel %vm3363, %v3334, %v3047
      %v3368 = vsel %vm3363, %v3335, %v3049
      %v3369 = vsel %vm3363, %v3336, %v3051
      %v3370 = vsel %vm3363, %v3337, %v3053
      %v3371 = vsel %vm3363, %v3338, %v3055
      %v3372 = vsel %vm3363, %v3339, %v3057
      %v3373 = vsel %vm3363, %v3340, %v3059
      %v3374 = vsel %vm3363, %v3341, %v3061
      %v3375 = vsel %vm3363, %v3342, %v3063
      %v3376 = vsel %vm3363, %v3343, %v3065
      %v3377 = vsel %vm3363, %v3344, %v3067
      %v3378 = vsel %vm3363, %v3345, %v3069
      %v3379 = vsel %vm3363, %v3346, %v3071
      %v3380 = vsel %vm3363, %v3347, %v3073
      %v3381 = vsel %vm3363, %v3348, %v3075
      %v3382 = vsel %vm3363, %v3349, %v3077
      %v3383 = vsel %vm3363, %v3350, %v3079
      %v3384 = vsel %vm3363, %v3351, %v3081
      %v3385 = vsel %vm3363, %v3352, %v3083
      %v3386 = vsel %vm3363, %v3353, %v3085
      %v3387 = vsel %vm3363, %v3354, %v3087
      %v3388 = vsel %vm3363, %v3355, %v3089
      %v3389 = vsel %vm3363, %v3356, %v3091
      %v3390 = vsel %vm3363, %v3357, %v3093
      %v3391 = vsel %vm3363, %v3358, %v3095
      %v3392 = vsel %vm3363, %v3359, %v3097
      %v3393 = vsel %vm3363, %v3360, %v3099
      %v3394 = vsel %vm3363, %v3361, %v3101
      %v3395 = vsel %vm3363, %v3362, %v3103
      %v3396 = vld [vmem:[%s3] sm:$0xff]
      %v3397 = vld [vmem:[%s3 + $0x8] sm:$0xff]
      %v3398 = vld [vmem:[%s3 + $0x10] sm:$0xff]
      %v3399 = vld [vmem:[%s3 + $0x18] sm:$0xff]
      %v3400 = vld [vmem:[%s3 + $0x20] sm:$0xff]
      %v3401 = vld [vmem:[%s3 + $0x28] sm:$0xff]
      %v3402 = vld [vmem:[%s3 + $0x30] sm:$0xff]
      %v3403 = vld [vmem:[%s3 + $0x38] sm:$0xff]
      %v3404 = vld [vmem:[%s3 + $0x40] sm:$0xff]
      %v3405 = vld [vmem:[%s4] sm:$0x1]
      %v3407 = vperm.slane %v3405, 0
      %vm3409 = vcmask 588800
      %v3411 = vsel %vm3409, %v3364, 0
      %v3414 = vsel %vm3409, %v3365, 0
      %v3417 = vsel %vm3409, %v3366, 0
      %v3420 = vsel %vm3409, %v3367, 0
      %v3423 = vsel %vm3409, %v3368, 0
      %v3426 = vsel %vm3409, %v3369, 0
      %v3429 = vsel %vm3409, %v3370, 0
      %v3432 = vsel %vm3409, %v3371, 0
      %v3435 = vsel %vm3409, %v3372, 0
      %v3438 = vsel %vm3409, %v3373, 0
      %v3441 = vsel %vm3409, %v3374, 0
      %v3444 = vsel %vm3409, %v3375, 0
      %v3447 = vsel %vm3409, %v3376, 0
      %v3450 = vsel %vm3409, %v3377, 0
      %v3453 = vsel %vm3409, %v3378, 0
      %v3456 = vsel %vm3409, %v3379, 0
      %v3459 = vsel %vm3409, %v3380, 0
      %v3462 = vsel %vm3409, %v3381, 0
      %v3465 = vsel %vm3409, %v3382, 0
      %v3468 = vsel %vm3409, %v3383, 0
      %v3471 = vsel %vm3409, %v3384, 0
      %v3474 = vsel %vm3409, %v3385, 0
      %v3477 = vsel %vm3409, %v3386, 0
      %v3480 = vsel %vm3409, %v3387, 0
      %v3483 = vsel %vm3409, %v3388, 0
      %v3486 = vsel %vm3409, %v3389, 0
      %v3489 = vsel %vm3409, %v3390, 0
      %v3492 = vsel %vm3409, %v3391, 0
      %v3495 = vsel %vm3409, %v3392, 0
      %v3498 = vsel %vm3409, %v3393, 0
      %v3501 = vsel %vm3409, %v3394, 0
      %v3504 = vsel %vm3409, %v3395, 0
      %3506 = vmatpush.msra.mxu0 0.0
      %3507 = vmatpush.msra.mxu0 0.0
      %3508 = vmatpush.msra.mxu0 0.0
      %3509 = vmatpush.msra.mxu0 0.0
      %3510 = vmatpush.msra.mxu0 0.0
      %3511 = vmatpush.msra.mxu0 0.0
      %3512 = vmatpush.msra.mxu0 0.0
      %3513 = vmatpush.msra.mxu0 %v3404
      %3514 = vmatpush.msra.mxu0 %v3403
      %3515 = vmatpush.msra.mxu0 %v3402
      %3516 = vmatpush.msra.mxu0 %v3401
      %3517 = vmatpush.msra.mxu0 %v3400
      %3518 = vmatpush.msra.mxu0 %v3399
      %3519 = vmatpush.msra.mxu0 %v3398
      %3520 = vmatpush.msra.mxu0 %v3397
      %3521 = vmatpush.msra.mxu0 %v3396
      %3522 = vmatmul.f32.gmra.mxu0 %v3411
      %v3523 = vpop.f32.mrf.mxu0
      %v3524 = vadd.f32 %v3407, %v3523
      %3525 = vmatmul.f32.gmra.mxu0 %v3414
      %v3526 = vpop.f32.mrf.mxu0
      %v3527 = vadd.f32 %v3407, %v3526
      %3528 = vmatmul.f32.gmra.mxu0 %v3417
      %v3529 = vpop.f32.mrf.mxu0
      %v3530 = vadd.f32 %v3407, %v3529
      %3531 = vmatmul.f32.gmra.mxu0 %v3420
      %v3532 = vpop.f32.mrf.mxu0
      %v3533 = vadd.f32 %v3407, %v3532
      %3534 = vmatmul.f32.gmra.mxu0 %v3423
      %v3535 = vpop.f32.mrf.mxu0
      %v3536 = vadd.f32 %v3407, %v3535
      %3537 = vmatmul.f32.gmra.mxu0 %v3426
      %v3538 = vpop.f32.mrf.mxu0
      %v3539 = vadd.f32 %v3407, %v3538
      %3540 = vmatmul.f32.gmra.mxu0 %v3429
      %v3541 = vpop.f32.mrf.mxu0
      %v3542 = vadd.f32 %v3407, %v3541
      %3543 = vmatmul.f32.gmra.mxu0 %v3432
      %v3544 = vpop.f32.mrf.mxu0
      %v3545 = vadd.f32 %v3407, %v3544
      %3546 = vmatmul.f32.gmra.mxu0 %v3435
      %v3547 = vpop.f32.mrf.mxu0
      %v3548 = vadd.f32 %v3407, %v3547
      %3549 = vmatmul.f32.gmra.mxu0 %v3438
      %v3550 = vpop.f32.mrf.mxu0
      %v3551 = vadd.f32 %v3407, %v3550
      %3552 = vmatmul.f32.gmra.mxu0 %v3441
      %v3553 = vpop.f32.mrf.mxu0
      %v3554 = vadd.f32 %v3407, %v3553
      %3555 = vmatmul.f32.gmra.mxu0 %v3444
      %v3556 = vpop.f32.mrf.mxu0
      %v3557 = vadd.f32 %v3407, %v3556
      %3558 = vmatmul.f32.gmra.mxu0 %v3447
      %v3559 = vpop.f32.mrf.mxu0
      %v3560 = vadd.f32 %v3407, %v3559
      %3561 = vmatmul.f32.gmra.mxu0 %v3450
      %v3562 = vpop.f32.mrf.mxu0
      %v3563 = vadd.f32 %v3407, %v3562
      %3564 = vmatmul.f32.gmra.mxu0 %v3453
      %v3565 = vpop.f32.mrf.mxu0
      %v3566 = vadd.f32 %v3407, %v3565
      %3567 = vmatmul.f32.gmra.mxu0 %v3456
      %v3568 = vpop.f32.mrf.mxu0
      %v3569 = vadd.f32 %v3407, %v3568
      %3570 = vmatmul.f32.gmra.mxu0 %v3459
      %v3571 = vpop.f32.mrf.mxu0
      %v3572 = vadd.f32 %v3407, %v3571
      %3573 = vmatmul.f32.gmra.mxu0 %v3462
      %v3574 = vpop.f32.mrf.mxu0
      %v3575 = vadd.f32 %v3407, %v3574
      %3576 = vmatmul.f32.gmra.mxu0 %v3465
      %v3577 = vpop.f32.mrf.mxu0
      %v3578 = vadd.f32 %v3407, %v3577
      %3579 = vmatmul.f32.gmra.mxu0 %v3468
      %v3580 = vpop.f32.mrf.mxu0
      %v3581 = vadd.f32 %v3407, %v3580
      %3582 = vmatmul.f32.gmra.mxu0 %v3471
      %v3583 = vpop.f32.mrf.mxu0
      %v3584 = vadd.f32 %v3407, %v3583
      %3585 = vmatmul.f32.gmra.mxu0 %v3474
      %v3586 = vpop.f32.mrf.mxu0
      %v3587 = vadd.f32 %v3407, %v3586
      %3588 = vmatmul.f32.gmra.mxu0 %v3477
      %v3589 = vpop.f32.mrf.mxu0
      %v3590 = vadd.f32 %v3407, %v3589
      %3591 = vmatmul.f32.gmra.mxu0 %v3480
      %v3592 = vpop.f32.mrf.mxu0
      %v3593 = vadd.f32 %v3407, %v3592
      %3594 = vmatmul.f32.gmra.mxu0 %v3483
      %v3595 = vpop.f32.mrf.mxu0
      %v3596 = vadd.f32 %v3407, %v3595
      %3597 = vmatmul.f32.gmra.mxu0 %v3486
      %v3598 = vpop.f32.mrf.mxu0
      %v3599 = vadd.f32 %v3407, %v3598
      %3600 = vmatmul.f32.gmra.mxu0 %v3489
      %v3601 = vpop.f32.mrf.mxu0
      %v3602 = vadd.f32 %v3407, %v3601
      %3603 = vmatmul.f32.gmra.mxu0 %v3492
      %v3604 = vpop.f32.mrf.mxu0
      %v3605 = vadd.f32 %v3407, %v3604
      %3606 = vmatmul.f32.gmra.mxu0 %v3495
      %v3607 = vpop.f32.mrf.mxu0
      %v3608 = vadd.f32 %v3407, %v3607
      %3609 = vmatmul.f32.gmra.mxu0 %v3498
      %v3610 = vpop.f32.mrf.mxu0
      %v3611 = vadd.f32 %v3407, %v3610
      %3612 = vmatmul.f32.gmra.mxu0 %v3501
      %v3613 = vpop.f32.mrf.mxu0
      %v3614 = vadd.f32 %v3407, %v3613
      %3615 = vmatmul.f32.gmra.mxu0 %v3504
      %v3616 = vpop.f32.mrf.mxu0
      %v3617 = vadd.f32 %v3407, %v3616
      %3618 = vdwg.mxu0
      %vm3619 = vcmp.ge.f32.partialorder %v3524, 0.0
      %vm3620 = vcmp.ge.f32.partialorder %v3527, 0.0
      %vm3621 = vcmp.ge.f32.partialorder %v3530, 0.0
      %vm3622 = vcmp.ge.f32.partialorder %v3533, 0.0
      %vm3623 = vcmp.ge.f32.partialorder %v3536, 0.0
      %vm3624 = vcmp.ge.f32.partialorder %v3539, 0.0
      %vm3625 = vcmp.ge.f32.partialorder %v3542, 0.0
      %vm3626 = vcmp.ge.f32.partialorder %v3545, 0.0
      %vm3627 = vcmp.ge.f32.partialorder %v3548, 0.0
      %vm3628 = vcmp.ge.f32.partialorder %v3551, 0.0
      %vm3629 = vcmp.ge.f32.partialorder %v3554, 0.0
      %vm3630 = vcmp.ge.f32.partialorder %v3557, 0.0
      %vm3631 = vcmp.ge.f32.partialorder %v3560, 0.0
      %vm3632 = vcmp.ge.f32.partialorder %v3563, 0.0
      %vm3633 = vcmp.ge.f32.partialorder %v3566, 0.0
      %vm3634 = vcmp.ge.f32.partialorder %v3569, 0.0
      %vm3635 = vcmp.ge.f32.partialorder %v3572, 0.0
      %vm3636 = vcmp.ge.f32.partialorder %v3575, 0.0
      %vm3637 = vcmp.ge.f32.partialorder %v3578, 0.0
      %vm3638 = vcmp.ge.f32.partialorder %v3581, 0.0
      %vm3639 = vcmp.ge.f32.partialorder %v3584, 0.0
      %vm3640 = vcmp.ge.f32.partialorder %v3587, 0.0
      %vm3641 = vcmp.ge.f32.partialorder %v3590, 0.0
      %vm3642 = vcmp.ge.f32.partialorder %v3593, 0.0
      %vm3643 = vcmp.ge.f32.partialorder %v3596, 0.0
      %vm3644 = vcmp.ge.f32.partialorder %v3599, 0.0
      %vm3645 = vcmp.ge.f32.partialorder %v3602, 0.0
      %vm3646 = vcmp.ge.f32.partialorder %v3605, 0.0
      %vm3647 = vcmp.ge.f32.partialorder %v3608, 0.0
      %vm3648 = vcmp.ge.f32.partialorder %v3611, 0.0
      %vm3649 = vcmp.ge.f32.partialorder %v3614, 0.0
      %vm3650 = vcmp.ge.f32.partialorder %v3617, 0.0
      %v3651 = vmul.f32 %v3524, 0.01
      %v3652 = vmul.f32 %v3527, 0.01
      %v3653 = vmul.f32 %v3530, 0.01
      %v3654 = vmul.f32 %v3533, 0.01
      %v3655 = vmul.f32 %v3536, 0.01
      %v3656 = vmul.f32 %v3539, 0.01
      %v3657 = vmul.f32 %v3542, 0.01
      %v3658 = vmul.f32 %v3545, 0.01
      %v3659 = vmul.f32 %v3548, 0.01
      %v3660 = vmul.f32 %v3551, 0.01
      %v3661 = vmul.f32 %v3554, 0.01
      %v3662 = vmul.f32 %v3557, 0.01
      %v3663 = vmul.f32 %v3560, 0.01
      %v3664 = vmul.f32 %v3563, 0.01
      %v3665 = vmul.f32 %v3566, 0.01
      %v3666 = vmul.f32 %v3569, 0.01
      %v3667 = vmul.f32 %v3572, 0.01
      %v3668 = vmul.f32 %v3575, 0.01
      %v3669 = vmul.f32 %v3578, 0.01
      %v3670 = vmul.f32 %v3581, 0.01
      %v3671 = vmul.f32 %v3584, 0.01
      %v3672 = vmul.f32 %v3587, 0.01
      %v3673 = vmul.f32 %v3590, 0.01
      %v3674 = vmul.f32 %v3593, 0.01
      %v3675 = vmul.f32 %v3596, 0.01
      %v3676 = vmul.f32 %v3599, 0.01
      %v3677 = vmul.f32 %v3602, 0.01
      %v3678 = vmul.f32 %v3605, 0.01
      %v3679 = vmul.f32 %v3608, 0.01
      %v3680 = vmul.f32 %v3611, 0.01
      %v3681 = vmul.f32 %v3614, 0.01
      %v3682 = vmul.f32 %v3617, 0.01
      %v3683 = vsel %vm3619, %v3524, %v3651
      %v3684 = vsel %vm3620, %v3527, %v3652
      %v3685 = vsel %vm3621, %v3530, %v3653
      %v3686 = vsel %vm3622, %v3533, %v3654
      %v3687 = vsel %vm3623, %v3536, %v3655
      %v3688 = vsel %vm3624, %v3539, %v3656
      %v3689 = vsel %vm3625, %v3542, %v3657
      %v3690 = vsel %vm3626, %v3545, %v3658
      %v3691 = vsel %vm3627, %v3548, %v3659
      %v3692 = vsel %vm3628, %v3551, %v3660
      %v3693 = vsel %vm3629, %v3554, %v3661
      %v3694 = vsel %vm3630, %v3557, %v3662
      %v3695 = vsel %vm3631, %v3560, %v3663
      %v3696 = vsel %vm3632, %v3563, %v3664
      %v3697 = vsel %vm3633, %v3566, %v3665
      %v3698 = vsel %vm3634, %v3569, %v3666
      %v3699 = vsel %vm3635, %v3572, %v3667
      %v3700 = vsel %vm3636, %v3575, %v3668
      %v3701 = vsel %vm3637, %v3578, %v3669
      %v3702 = vsel %vm3638, %v3581, %v3670
      %v3703 = vsel %vm3639, %v3584, %v3671
      %v3704 = vsel %vm3640, %v3587, %v3672
      %v3705 = vsel %vm3641, %v3590, %v3673
      %v3706 = vsel %vm3642, %v3593, %v3674
      %v3707 = vsel %vm3643, %v3596, %v3675
      %v3708 = vsel %vm3644, %v3599, %v3676
      %v3709 = vsel %vm3645, %v3602, %v3677
      %v3710 = vsel %vm3646, %v3605, %v3678
      %v3711 = vsel %vm3647, %v3608, %v3679
      %v3712 = vsel %vm3648, %v3611, %v3680
      %v3713 = vsel %vm3649, %v3614, %v3681
      %v3714 = vsel %vm3650, %v3617, %v3682
      %3715 = vst.msk [vmem:[%s224] sm:$0xff] %vm1497, %v3683
      %3716 = vst.msk [vmem:[%s224 + $0x8] sm:$0xff] %vm1497, %v3684
      %3717 = vst.msk [vmem:[%s224 + $0x10] sm:$0xff] %vm1497, %v3685
      %3718 = vst.msk [vmem:[%s224 + $0x18] sm:$0xff] %vm1497, %v3686
      %3719 = vst.msk [vmem:[%s224 + $0x20] sm:$0xff] %vm1497, %v3687
      %3720 = vst.msk [vmem:[%s224 + $0x28] sm:$0xff] %vm1497, %v3688
      %3721 = vst.msk [vmem:[%s224 + $0x30] sm:$0xff] %vm1497, %v3689
      %3722 = vst.msk [vmem:[%s224 + $0x38] sm:$0xff] %vm1497, %v3690
      %3723 = vst.msk [vmem:[%s224 + $0x40] sm:$0xff] %vm1497, %v3691
      %3724 = vst.msk [vmem:[%s224 + $0x48] sm:$0xff] %vm1497, %v3692
      %3725 = vst.msk [vmem:[%s224 + $0x50] sm:$0xff] %vm1497, %v3693
      %3726 = vst.msk [vmem:[%s224 + $0x58] sm:$0xff] %vm1497, %v3694
      %3727 = vst.msk [vmem:[%s224 + $0x60] sm:$0xff] %vm1497, %v3695
      %3728 = vst.msk [vmem:[%s224 + $0x68] sm:$0xff] %vm1497, %v3696
      %3729 = vst.msk [vmem:[%s224 + $0x70] sm:$0xff] %vm1497, %v3697
      %3730 = vst.msk [vmem:[%s224 + $0x78] sm:$0xff] %vm1497, %v3698
      %3731 = vst.msk [vmem:[%s224 + $0x80] sm:$0xff] %vm1497, %v3699
      %3732 = vst.msk [vmem:[%s224 + $0x88] sm:$0xff] %vm1497, %v3700
      %3733 = vst.msk [vmem:[%s224 + $0x90] sm:$0xff] %vm1497, %v3701
      %3734 = vst.msk [vmem:[%s224 + $0x98] sm:$0xff] %vm1497, %v3702
      %3735 = vst.msk [vmem:[%s224 + $0xa0] sm:$0xff] %vm1497, %v3703
      %3736 = vst.msk [vmem:[%s224 + $0xa8] sm:$0xff] %vm1497, %v3704
      %3737 = vst.msk [vmem:[%s224 + $0xb0] sm:$0xff] %vm1497, %v3705
      %3738 = vst.msk [vmem:[%s224 + $0xb8] sm:$0xff] %vm1497, %v3706
      %3739 = vst.msk [vmem:[%s224 + $0xc0] sm:$0xff] %vm1497, %v3707
      %3740 = vst.msk [vmem:[%s224 + $0xc8] sm:$0xff] %vm1497, %v3708
      %3741 = vst.msk [vmem:[%s224 + $0xd0] sm:$0xff] %vm1497, %v3709
      %3742 = vst.msk [vmem:[%s224 + $0xd8] sm:$0xff] %vm1497, %v3710
      %3743 = vst.msk [vmem:[%s224 + $0xe0] sm:$0xff] %vm1497, %v3711
      %3744 = vst.msk [vmem:[%s224 + $0xe8] sm:$0xff] %vm1497, %v3712
      %3745 = vst.msk [vmem:[%s224 + $0xf0] sm:$0xff] %vm1497, %v3713
      %3746 = vst.msk [vmem:[%s224 + $0xf8] sm:$0xff] %vm1497, %v3714
      %p3747 = scmp.lt.s32.totalorder %s16, 1
      %s3748 = scalar_select %p3747, %s16, 1
      %s3749 = smul.addr %s3748, 32
      %s3750 = smul.addr %s3749, 8
      %s3751 = scalar_lea.vmem %s5, %s3750
      // Predicated region
      $region45: #{encoder_forward_impl.5} parent=39 // pred_check
        %p3752 = pneg %p144
      $region46: #{encoder_forward_impl.5} parent=39 // pred_check_branch
        %3754 = sbr.rel (%p3752) target = $region48
      $region47: #{encoder_forward_impl.5} parent=39 // pred_region
        _
      $region48: #{encoder_forward_impl.5} parent=39 // pred_fallthru
        _
    $region40: #{encoder_forward_impl.5} parent=5 // pred_fallthru
      _
    %p3755 = scmp.le.s32.totalorder 2, %s11
    // Predicated region
    $region49: #{encoder_forward_impl.5} parent=5 // pred_check
      %p3756 = pneg %p3755
    $region50: #{encoder_forward_impl.5} parent=5 // pred_check_branch
      %3758 = sbr.rel (%p3756) target = $region52
    $region51: #{encoder_forward_impl.5} parent=5 // pred_region
      %s3759 = ssub.s32 %s11, 2
      // Predicated region
      $region53: #{encoder_forward_impl.5} parent=51 // pred_check
        %p3760 = pneg %p150
      $region54: #{encoder_forward_impl.5} parent=51 // pred_check_branch
        %3762 = sbr.rel (%p3760) target = $region56
      $region55: #{encoder_forward_impl.5} parent=51 // pred_region
        %p3763 = scmp.lt.s32.totalorder %s17, 1
        %s3764 = scalar_select %p3763, %s17, 1
        %s3765 = smul.addr %s3764, 32
        %s3766 = smul.addr %s3765, 8
        %s3767 = scalar_lea.vmem %s5, %s3766
      $region56: #{encoder_forward_impl.5} parent=51 // pred_fallthru
        _
    $region52: #{encoder_forward_impl.5} parent=5 // pred_fallthru
      _
  $region6: #{encoder_forward_impl.5} parent=0 // loop_footer
    %s15 = sadd.s32 1, %s11
  $region7: #{encoder_forward_impl.5} parent=0 // loop_footer_branch
    %10 = sbr.rel target = $region3
  $region8: #{encoder_forward_impl.5} parent=0 // loop_exit
    _

</llo_original>
